<compile_context>
chip_gen: v5e
topology: v5e:2x2
jax: 0.10.0
libtpu: 0.0.40
codegen_flags: <defaults>
</compile_context>

<pallas_src>
import functools

import jax
import jax.numpy as jnp
from jax.experimental import pallas as pl
from jax.experimental.pallas import tpu as pltpu

# ----------------------------- configuration -------------------------------
ACTION_DIM = 6
ATOM_NUM = 51          # distributional head (config.atom_num)
DUELING = True         # config.dueling

LATENT = 64 * 7 * 7    # 3136 = NHWC-flattened conv3 output
LATENT_PAD = 3200      # 25 * 128, lane-aligned K for the head matmul


def _round_up(x, m):
    return ((x + m - 1) // m) * m


def _tile_m(m, max_tm):
    """Pick an M tile: full extent when small (always legal), else ~max_tm
    rounded to a multiple of 8 sublanes."""
    if m <= max_tm:
        return m
    n_tiles = pl.cdiv(m, max_tm)
    return _round_up(pl.cdiv(m, n_tiles), 8)


# ------------------------------ Pallas kernels ------------------------------
def _linear_kernel(x_ref, w_ref, b_ref, o_ref, *, relu):
    """(tm, K) @ (K, N) + (1, N) on the MXU; f32 accumulate; optional ReLU."""
    acc = jnp.dot(x_ref[...], w_ref[...], preferred_element_type=jnp.float32)
    acc = acc + b_ref[...]
    if relu:
        acc = jnp.maximum(acc, 0.0)
    o_ref[...] = acc.astype(o_ref.dtype)


def _head_kernel(*refs, action_dim, atoms, dueling):
    """Fused head: [q1|s1] matmul + ReLU, per-action q2 matmuls, s2 matmul,
    dueling combine and log-softmax.  Output layout (action, batch_tile, atoms)
    so every store is a leading-dim integer store."""
    if dueling:
        lat_ref, w1_ref, b1_ref, qw_ref, qb_ref, sw_ref, sb_ref, o_ref = refs
    else:
        lat_ref, w1_ref, b1_ref, qw_ref, qb_ref, o_ref = refs

    h = jnp.dot(lat_ref[...], w1_ref[...], preferred_element_type=jnp.float32)
    h = jnp.maximum(h + b1_ref[...], 0.0).astype(jnp.bfloat16)      # (tm, hidden)
    hq = h[:, :256]                                                 # 128-aligned slice

    if dueling:
        hs = h[:, 256:]
        s = jnp.dot(hs, sw_ref[...],
                    preferred_element_type=jnp.float32) + sb_ref[...]   # (tm, atoms)

    qs = []
    for a in range(action_dim):            # static unroll: A tiny MXU matmuls
        qa = jnp.dot(hq, qw_ref[a],
                     preferred_element_type=jnp.float32) + qb_ref[a]    # (tm, atoms)
        qs.append(qa)

    if dueling:
        qmean = qs[0]
        for a in range(1, action_dim):
            qmean = qmean + qs[a]
        qmean = qmean * (1.0 / action_dim)          # mean over actions
        qs = [s + qa - qmean for qa in qs]          # dueling combine

    for a in range(action_dim):
        c = qs[a]
        if atoms > 1:                               # stable log-softmax over atoms
            m = jnp.max(c, axis=-1, keepdims=True)
            c = c - (m + jnp.log(jnp.sum(jnp.exp(c - m), axis=-1, keepdims=True)))
        o_ref[a] = c


# ------------------------------ kernel wrappers ------------------------------
def linear(x, w, b, *, relu, out_dtype, max_tm=512):
    """x:(M,K) bf16, w:(K,N) bf16, b:(1,N) f32 -> (M,N) out_dtype.
    1-D grid over M; weights/bias resident (constant block index)."""
    m, k = x.shape
    n = w.shape[1]
    tm = _tile_m(m, max_tm)
    return pl.pallas_call(
        functools.partial(_linear_kernel, relu=relu),
        out_shape=jax.ShapeDtypeStruct((m, n), out_dtype),
        grid=(pl.cdiv(m, tm),),
        in_specs=[pl.BlockSpec((tm, k), lambda i: (i, 0)),
                  pl.BlockSpec((k, n), lambda i: (0, 0)),
                  pl.BlockSpec((1, n), lambda i: (0, 0))],
        out_specs=pl.BlockSpec((tm, n), lambda i: (i, 0)),
        compiler_params=pltpu.CompilerParams(
            dimension_semantics=("parallel",)),
    )(x, w, b)


def _im2col_nhwc(x, kh, kw, stride):
    """NHWC x -> (B*OH*OW, KH*KW*C) patch matrix, K in (kh, kw, c) order.
    No transposes: the channel axis is already minor."""
    b, hh, ww, c = x.shape
    oh = (hh - kh) // stride + 1
    ow = (ww - kw) // stride + 1
    taps = []
    for i in range(kh):
        for j in range(kw):
            taps.append(x[:, i:i + stride * (oh - 1) + 1:stride,
                          j:j + stride * (ow - 1) + 1:stride, :])       # (B,OH,OW,C)
    p = jnp.concatenate(taps, axis=-1)                                  # (B,OH,OW,KH*KW*C)
    return p.reshape(b * oh * ow, kh * kw * c), oh, ow


# TODO(synk): at training batch sizes, fold the patch extraction into the
# matmul kernel (implicit GEMM over the KHxKW taps) so the 4x-9x expanded
# im2col matrix never round-trips through HBM.
def conv2d_relu_nhwc(x, w_mat, b, kh, kw, stride):
    """NHWC conv (valid padding) + ReLU via im2col + tiled Pallas matmul."""
    bsz = x.shape[0]
    cols, oh, ow = _im2col_nhwc(x, kh, kw, stride)
    y = linear(cols, w_mat, b, relu=True, out_dtype=jnp.bfloat16)       # (M, out_ch)
    return y.reshape(bsz, oh, ow, w_mat.shape[1])                       # stays NHWC


def head_forward(latent, params, *, action_dim, atoms, dueling, max_tm=256):
    """One fused kernel for everything after Flatten. latent: (B, 3200) bf16.
    Returns (A, B, atoms) f32 (transposed to (B, A, atoms) outside)."""
    bsz, kp = latent.shape
    hidden = params["w1"].shape[1]
    tm = _tile_m(bsz, max_tm)
    args = [latent, params["w1"], params["b1"], params["q2_w"], params["q2_b"]]
    in_specs = [
        pl.BlockSpec((tm, kp), lambda i: (i, 0)),
        pl.BlockSpec((kp, hidden), lambda i: (0, 0)),
        pl.BlockSpec((1, hidden), lambda i: (0, 0)),
        pl.BlockSpec((action_dim, 256, atoms), lambda i: (0, 0, 0)),
        pl.BlockSpec((action_dim, 1, atoms), lambda i: (0, 0, 0)),
    ]
    if dueling:
        args += [params["s2_w"], params["s2_b"]]
        in_specs += [pl.BlockSpec((256, atoms), lambda i: (0, 0)),
                     pl.BlockSpec((1, atoms), lambda i: (0, 0))]
    return pl.pallas_call(
        functools.partial(_head_kernel, action_dim=action_dim, atoms=atoms,
                          dueling=dueling),
        out_shape=jax.ShapeDtypeStruct((action_dim, bsz, atoms), jnp.float32),
        grid=(pl.cdiv(bsz, tm),),
        in_specs=in_specs,
        out_specs=pl.BlockSpec((action_dim, tm, atoms), lambda i: (0, i, 0)),
        compiler_params=pltpu.CompilerParams(
            dimension_semantics=("parallel",),
            vmem_limit_bytes=32 * 1024 * 1024),
    )(*args)


# ------------------------------ parameters ----------------------------------
def _xavier(key, shape, fan_in, fan_out, dtype=jnp.bfloat16):
    bound = (6.0 / (fan_in + fan_out)) ** 0.5
    return jax.random.uniform(key, shape, jnp.float32, -bound, bound).astype(dtype)


def init_params(key, action_dim, atom_num, dueling):
    ks = jax.random.split(key, 7)
    p = {}
    # conv weights: (KH*KW*C, out_ch) matrices, rows in (kh, kw, c) order (NHWC im2col).
    p["c1_w"] = _xavier(ks[0], (8 * 8 * 4, 32), 4 * 8 * 8, 32 * 8 * 8)
    p["c1_b"] = jnp.zeros((1, 32), jnp.float32)
    p["c2_w"] = _xavier(ks[1], (4 * 4 * 32, 64), 32 * 4 * 4, 64 * 4 * 4)
    p["c2_b"] = jnp.zeros((1, 64), jnp.float32)
    p["c3_w"] = _xavier(ks[2], (3 * 3 * 64, 64), 64 * 3 * 3, 64 * 3 * 3)
    p["c3_b"] = jnp.zeros((1, 64), jnp.float32)
    # fused q1 | s1 weight (rows in NHWC-flatten order), K zero-padded 3136 -> 3200.
    q1 = _xavier(ks[3], (LATENT, 256), LATENT, 256)
    w1 = q1
    if dueling:
        s1 = _xavier(ks[4], (LATENT, 256), LATENT, 256)
        w1 = jnp.concatenate([q1, s1], axis=1)                       # (3136, 512)
    w1 = jnp.concatenate(
        [w1, jnp.zeros((LATENT_PAD - LATENT, w1.shape[1]), w1.dtype)], axis=0)
    p["w1"] = w1                                                      # (3200, 512|256)
    p["b1"] = jnp.zeros((1, w1.shape[1]), jnp.float32)
    # q2 stored per-action for leading-dim indexing inside the head kernel.
    p["q2_w"] = _xavier(ks[5], (action_dim, 256, atom_num), 256, action_dim * atom_num)
    p["q2_b"] = jnp.zeros((action_dim, 1, atom_num), jnp.float32)
    if dueling:
        p["s2_w"] = _xavier(ks[6], (256, atom_num), 256, atom_num)
        p["s2_b"] = jnp.zeros((1, atom_num), jnp.float32)
    return p


# ------------------------------ forward pass ---------------------------------
def network_forward(params, x, *, action_dim, atom_num, dueling):
    bsz = x.shape[0]
    # one-time NCHW -> NHWC; bf16 MXU operands, f32 accumulation inside kernels.
    x = jnp.transpose(x, (0, 2, 3, 1)).astype(jnp.bfloat16)
    h = conv2d_relu_nhwc(x, params["c1_w"], params["c1_b"], 8, 8, 4)   # (B,20,20,32)
    h = conv2d_relu_nhwc(h, params["c2_w"], params["c2_b"], 4, 4, 2)   # (B, 9, 9,64)
    h = conv2d_relu_nhwc(h, params["c3_w"], params["c3_b"], 3, 3, 1)   # (B, 7, 7,64)
    latent = h.reshape(bsz, -1)                                        # (B, 3136) NHWC order
    latent = jnp.pad(latent, ((0, 0), (0, LATENT_PAD - latent.shape[1])))
    out = head_forward(latent, params, action_dim=action_dim,
                       atoms=atom_num, dueling=dueling)                # (A, B, atoms)
    out = jnp.transpose(out, (1, 0, 2))                                # (B, A, atoms)
    if atom_num == 1:
        return out.reshape(bsz, action_dim)                            # (B, A) q-values
    return out                                                         # log-probs


# ---------------------------------- main -------------------------------------
if __name__ == "__main__":
    key = jax.random.PRNGKey(0)
    k_param, k_x = jax.random.split(key)

    params = init_params(k_param, ACTION_DIM, ATOM_NUM, DUELING)
    # 84x84 spatial size is implied by Linear(3136, ...) = 64*7*7 after the convs.
    x = jax.random.normal(k_x, (2, 4, 84, 84), jnp.float32)

    fwd = jax.jit(functools.partial(network_forward,
                                    action_dim=ACTION_DIM,
                                    atom_num=ATOM_NUM,
                                    dueling=DUELING))
    out = fwd(params, x)
    jax.block_until_ready(out)

    assert out.shape == (2, ACTION_DIM, ATOM_NUM), out.shape
    # log-probabilities along the atom axis must sum to 1 after exp.
    probs_sum = jnp.sum(jnp.exp(out), axis=-1)
    assert bool(jnp.all(jnp.isfinite(out)))
    assert bool(jnp.allclose(probs_sum, 1.0, atol=1e-4))
    print("KERNEL_OK")
</pallas_src>

<mosaic_0001>
module attributes {stable_mosaic.version = 11 : i64} {
  func.func @_linear_kernel(%arg0: i32, %arg1: memref<400x256xbf16, #tpu.memory_space<vmem>>, %arg2: memref<256x32xbf16, #tpu.memory_space<vmem>>, %arg3: memref<1x32xf32, #tpu.memory_space<vmem>>, %arg4: memref<400x32xbf16, #tpu.memory_space<vmem>>) attributes {dimension_semantics = [#tpu.dimension_semantics<parallel>], iteration_bounds = array<i64: 2>, scalar_prefetch = 0 : i64, scratch_operands = 0 : i64, tpu.core_type = #tpu.core_type<tc>, window_params = [{transform_indices = @transform_0, window_bounds = array<i64: 400, 256>}, {pipeline_mode = #tpu.pipeline_mode<synchronous>, transform_indices = @transform_1, window_bounds = array<i64: 256, 32>}, {pipeline_mode = #tpu.pipeline_mode<synchronous>, transform_indices = @transform_2, window_bounds = array<i64: 1, 32>}, {transform_indices = @transform_3, window_bounds = array<i64: 400, 32>}]} {
    %c0 = arith.constant 0 : index
    %c0_0 = arith.constant 0 : index
    %0 = vector.load %arg1[%c0, %c0_0] : memref<400x256xbf16, #tpu.memory_space<vmem>>, vector<400x256xbf16>
    %c0_1 = arith.constant 0 : index
    %c0_2 = arith.constant 0 : index
    %1 = vector.load %arg2[%c0_1, %c0_2] : memref<256x32xbf16, #tpu.memory_space<vmem>>, vector<256x32xbf16>
    %cst = arith.constant dense<0.000000e+00> : vector<400x32xf32>
    %2 = tpu.matmul %0, %1, %cst {dimension_numbers = #tpu.dot_dimension_numbers<[1], [0], [0], [1], [0, 0, 1, 1], [], []>} : vector<400x256xbf16>, vector<256x32xbf16>, vector<400x32xf32> -> vector<400x32xf32>
    %c0_3 = arith.constant 0 : index
    %c0_4 = arith.constant 0 : index
    %3 = vector.load %arg3[%c0_3, %c0_4] : memref<1x32xf32, #tpu.memory_space<vmem>>, vector<1x32xf32>
    %4 = vector.broadcast %3 : vector<1x32xf32> to vector<400x32xf32>
    %5 = arith.addf %2, %4 : vector<400x32xf32>
    %cst_5 = arith.constant 0.000000e+00 : f32
    %6 = vector.broadcast %cst_5 : f32 to vector<400x32xf32>
    %7 = arith.maximumf %5, %6 : vector<400x32xf32>
    %8 = arith.truncf %7 : vector<400x32xf32> to vector<400x32xbf16>
    %c0_6 = arith.constant 0 : index
    %c0_7 = arith.constant 0 : index
    %9 = vector.load %arg4[%c0_6, %c0_7] : memref<400x32xbf16, #tpu.memory_space<vmem>>, vector<400x32xbf16>
    tpu.vector_store %arg4[%c0_6, %c0_7], %8 {strides = array<i32>} : memref<400x32xbf16, #tpu.memory_space<vmem>>, vector<400x32xbf16>,
    return
  }
  func.func @transform_0(%arg0: i32) -> (i32, i32) {
    %c0_i32 = arith.constant 0 : i32
    %c0_i32_0 = arith.constant 0 : i32
    return %arg0, %c0_i32 : i32, i32
  }
  func.func @transform_1(%arg0: i32) -> (i32, i32) {
    %c0_i32 = arith.constant 0 : i32
    %c0_i32_0 = arith.constant 0 : i32
    %c0_i32_1 = arith.constant 0 : i32
    return %c0_i32, %c0_i32_0 : i32, i32
  }
  func.func @transform_2(%arg0: i32) -> (i32, i32) {
    %c0_i32 = arith.constant 0 : i32
    %c0_i32_0 = arith.constant 0 : i32
    %c0_i32_1 = arith.constant 0 : i32
    return %c0_i32, %c0_i32_0 : i32, i32
  }
  func.func @transform_3(%arg0: i32) -> (i32, i32) {
    %c0_i32 = arith.constant 0 : i32
    %c0_i32_0 = arith.constant 0 : i32
    return %arg0, %c0_i32 : i32, i32
  }
}

module attributes {stable_mosaic.version = 11 : i64} {
  func.func @_linear_kernel(%arg0: i32, %arg1: memref<162x512xbf16, #tpu.memory_space<vmem>>, %arg2: memref<512x64xbf16, #tpu.memory_space<vmem>>, %arg3: memref<1x64xf32, #tpu.memory_space<vmem>>, %arg4: memref<162x64xbf16, #tpu.memory_space<vmem>>) attributes {dimension_semantics = [#tpu.dimension_semantics<parallel>], iteration_bounds = array<i64: 1>, scalar_prefetch = 0 : i64, scratch_operands = 0 : i64, tpu.core_type = #tpu.core_type<tc>, window_params = [{transform_indices = @transform_0, window_bounds = array<i64: 162, 512>}, {pipeline_mode = #tpu.pipeline_mode<synchronous>, transform_indices = @transform_1, window_bounds = array<i64: 512, 64>}, {pipeline_mode = #tpu.pipeline_mode<synchronous>, transform_indices = @transform_2, window_bounds = array<i64: 1, 64>}, {transform_indices = @transform_3, window_bounds = array<i64: 162, 64>}]} {
    %c0 = arith.constant 0 : index
    %c0_0 = arith.constant 0 : index
    %0 = vector.load %arg1[%c0, %c0_0] : memref<162x512xbf16, #tpu.memory_space<vmem>>, vector<162x512xbf16>
    %c0_1 = arith.constant 0 : index
    %c0_2 = arith.constant 0 : index
    %1 = vector.load %arg2[%c0_1, %c0_2] : memref<512x64xbf16, #tpu.memory_space<vmem>>, vector<512x64xbf16>
    %cst = arith.constant dense<0.000000e+00> : vector<162x64xf32>
    %2 = tpu.matmul %0, %1, %cst {dimension_numbers = #tpu.dot_dimension_numbers<[1], [0], [0], [1], [0, 0, 1, 1], [], []>} : vector<162x512xbf16>, vector<512x64xbf16>, vector<162x64xf32> -> vector<162x64xf32>
    %c0_3 = arith.constant 0 : index
    %c0_4 = arith.constant 0 : index
    %3 = vector.load %arg3[%c0_3, %c0_4] : memref<1x64xf32, #tpu.memory_space<vmem>>, vector<1x64xf32>
    %4 = vector.broadcast %3 : vector<1x64xf32> to vector<162x64xf32>
    %5 = arith.addf %2, %4 : vector<162x64xf32>
    %cst_5 = arith.constant 0.000000e+00 : f32
    %6 = vector.broadcast %cst_5 : f32 to vector<162x64xf32>
    %7 = arith.maximumf %5, %6 : vector<162x64xf32>
    %8 = arith.truncf %7 : vector<162x64xf32> to vector<162x64xbf16>
    %c0_6 = arith.constant 0 : index
    %c0_7 = arith.constant 0 : index
    %9 = vector.load %arg4[%c0_6, %c0_7] : memref<162x64xbf16, #tpu.memory_space<vmem>>, vector<162x64xbf16>
    tpu.vector_store %arg4[%c0_6, %c0_7], %8 {strides = array<i32>} : memref<162x64xbf16, #tpu.memory_space<vmem>>, vector<162x64xbf16>,
    return
  }
  func.func @transform_0(%arg0: i32) -> (i32, i32) {
    %c0_i32 = arith.constant 0 : i32
    %c0_i32_0 = arith.constant 0 : i32
    return %arg0, %c0_i32 : i32, i32
  }
  func.func @transform_1(%arg0: i32) -> (i32, i32) {
    %c0_i32 = arith.constant 0 : i32
    %c0_i32_0 = arith.constant 0 : i32
    %c0_i32_1 = arith.constant 0 : i32
    return %c0_i32, %c0_i32_0 : i32, i32
  }
  func.func @transform_2(%arg0: i32) -> (i32, i32) {
    %c0_i32 = arith.constant 0 : i32
    %c0_i32_0 = arith.constant 0 : i32
    %c0_i32_1 = arith.constant 0 : i32
    return %c0_i32, %c0_i32_0 : i32, i32
  }
  func.func @transform_3(%arg0: i32) -> (i32, i32) {
    %c0_i32 = arith.constant 0 : i32
    %c0_i32_0 = arith.constant 0 : i32
    return %arg0, %c0_i32 : i32, i32
  }
}

module attributes {stable_mosaic.version = 11 : i64} {
  func.func @_linear_kernel(%arg0: i32, %arg1: memref<98x576xbf16, #tpu.memory_space<vmem>>, %arg2: memref<576x64xbf16, #tpu.memory_space<vmem>>, %arg3: memref<1x64xf32, #tpu.memory_space<vmem>>, %arg4: memref<98x64xbf16, #tpu.memory_space<vmem>>) attributes {dimension_semantics = [#tpu.dimension_semantics<parallel>], iteration_bounds = array<i64: 1>, scalar_prefetch = 0 : i64, scratch_operands = 0 : i64, tpu.core_type = #tpu.core_type<tc>, window_params = [{transform_indices = @transform_0, window_bounds = array<i64: 98, 576>}, {pipeline_mode = #tpu.pipeline_mode<synchronous>, transform_indices = @transform_1, window_bounds = array<i64: 576, 64>}, {pipeline_mode = #tpu.pipeline_mode<synchronous>, transform_indices = @transform_2, window_bounds = array<i64: 1, 64>}, {transform_indices = @transform_3, window_bounds = array<i64: 98, 64>}]} {
    %c0 = arith.constant 0 : index
    %c0_0 = arith.constant 0 : index
    %0 = vector.load %arg1[%c0, %c0_0] : memref<98x576xbf16, #tpu.memory_space<vmem>>, vector<98x576xbf16>
    %c0_1 = arith.constant 0 : index
    %c0_2 = arith.constant 0 : index
    %1 = vector.load %arg2[%c0_1, %c0_2] : memref<576x64xbf16, #tpu.memory_space<vmem>>, vector<576x64xbf16>
    %cst = arith.constant dense<0.000000e+00> : vector<98x64xf32>
    %2 = tpu.matmul %0, %1, %cst {dimension_numbers = #tpu.dot_dimension_numbers<[1], [0], [0], [1], [0, 0, 1, 1], [], []>} : vector<98x576xbf16>, vector<576x64xbf16>, vector<98x64xf32> -> vector<98x64xf32>
    %c0_3 = arith.constant 0 : index
    %c0_4 = arith.constant 0 : index
    %3 = vector.load %arg3[%c0_3, %c0_4] : memref<1x64xf32, #tpu.memory_space<vmem>>, vector<1x64xf32>
    %4 = vector.broadcast %3 : vector<1x64xf32> to vector<98x64xf32>
    %5 = arith.addf %2, %4 : vector<98x64xf32>
    %cst_5 = arith.constant 0.000000e+00 : f32
    %6 = vector.broadcast %cst_5 : f32 to vector<98x64xf32>
    %7 = arith.maximumf %5, %6 : vector<98x64xf32>
    %8 = arith.truncf %7 : vector<98x64xf32> to vector<98x64xbf16>
    %c0_6 = arith.constant 0 : index
    %c0_7 = arith.constant 0 : index
    %9 = vector.load %arg4[%c0_6, %c0_7] : memref<98x64xbf16, #tpu.memory_space<vmem>>, vector<98x64xbf16>
    tpu.vector_store %arg4[%c0_6, %c0_7], %8 {strides = array<i32>} : memref<98x64xbf16, #tpu.memory_space<vmem>>, vector<98x64xbf16>,
    return
  }
  func.func @transform_0(%arg0: i32) -> (i32, i32) {
    %c0_i32 = arith.constant 0 : i32
    %c0_i32_0 = arith.constant 0 : i32
    return %arg0, %c0_i32 : i32, i32
  }
  func.func @transform_1(%arg0: i32) -> (i32, i32) {
    %c0_i32 = arith.constant 0 : i32
    %c0_i32_0 = arith.constant 0 : i32
    %c0_i32_1 = arith.constant 0 : i32
    return %c0_i32, %c0_i32_0 : i32, i32
  }
  func.func @transform_2(%arg0: i32) -> (i32, i32) {
    %c0_i32 = arith.constant 0 : i32
    %c0_i32_0 = arith.constant 0 : i32
    %c0_i32_1 = arith.constant 0 : i32
    return %c0_i32, %c0_i32_0 : i32, i32
  }
  func.func @transform_3(%arg0: i32) -> (i32, i32) {
    %c0_i32 = arith.constant 0 : i32
    %c0_i32_0 = arith.constant 0 : i32
    return %arg0, %c0_i32 : i32, i32
  }
}

module attributes {stable_mosaic.version = 11 : i64} {
  func.func @_head_kernel(%arg0: i32, %arg1: memref<2x3200xbf16, #tpu.memory_space<vmem>>, %arg2: memref<3200x512xbf16, #tpu.memory_space<vmem>>, %arg3: memref<1x512xf32, #tpu.memory_space<vmem>>, %arg4: memref<6x256x51xbf16, #tpu.memory_space<vmem>>, %arg5: memref<6x1x51xf32, #tpu.memory_space<vmem>>, %arg6: memref<256x51xbf16, #tpu.memory_space<vmem>>, %arg7: memref<1x51xf32, #tpu.memory_space<vmem>>, %arg8: memref<6x2x51xf32, #tpu.memory_space<vmem>>) attributes {dimension_semantics = [#tpu.dimension_semantics<parallel>], iteration_bounds = array<i64: 1>, scalar_prefetch = 0 : i64, scratch_operands = 0 : i64, tpu.core_type = #tpu.core_type<tc>, window_params = [{transform_indices = @transform_0, window_bounds = array<i64: 2, 3200>}, {pipeline_mode = #tpu.pipeline_mode<synchronous>, transform_indices = @transform_1, window_bounds = array<i64: 3200, 512>}, {pipeline_mode = #tpu.pipeline_mode<synchronous>, transform_indices = @transform_2, window_bounds = array<i64: 1, 512>}, {pipeline_mode = #tpu.pipeline_mode<synchronous>, transform_indices = @transform_3, window_bounds = array<i64: 6, 256, 51>}, {pipeline_mode = #tpu.pipeline_mode<synchronous>, transform_indices = @transform_4, window_bounds = array<i64: 6, 1, 51>}, {pipeline_mode = #tpu.pipeline_mode<synchronous>, transform_indices = @transform_5, window_bounds = array<i64: 256, 51>}, {pipeline_mode = #tpu.pipeline_mode<synchronous>, transform_indices = @transform_6, window_bounds = array<i64: 1, 51>}, {transform_indices = @transform_7, window_bounds = array<i64: 6, 2, 51>}]} {
    %c0 = arith.constant 0 : index
    %c0_0 = arith.constant 0 : index
    %0 = vector.load %arg1[%c0, %c0_0] : memref<2x3200xbf16, #tpu.memory_space<vmem>>, vector<2x3200xbf16>
    %c0_1 = arith.constant 0 : index
    %c0_2 = arith.constant 0 : index
    %1 = vector.load %arg2[%c0_1, %c0_2] : memref<3200x512xbf16, #tpu.memory_space<vmem>>, vector<3200x512xbf16>
    %cst = arith.constant dense<0.000000e+00> : vector<2x512xf32>
    %2 = tpu.matmul %0, %1, %cst {dimension_numbers = #tpu.dot_dimension_numbers<[1], [0], [0], [1], [0, 0, 1, 1], [], []>} : vector<2x3200xbf16>, vector<3200x512xbf16>, vector<2x512xf32> -> vector<2x512xf32>
    %c0_3 = arith.constant 0 : index
    %c0_4 = arith.constant 0 : index
    %3 = vector.load %arg3[%c0_3, %c0_4] : memref<1x512xf32, #tpu.memory_space<vmem>>, vector<1x512xf32>
    %4 = vector.broadcast %3 : vector<1x512xf32> to vector<2x512xf32>
    %5 = arith.addf %2, %4 : vector<2x512xf32>
    %cst_5 = arith.constant 0.000000e+00 : f32
    %6 = vector.broadcast %cst_5 : f32 to vector<2x512xf32>
    %7 = arith.maximumf %5, %6 : vector<2x512xf32>
    %8 = arith.truncf %7 : vector<2x512xf32> to vector<2x512xbf16>
    %9 = vector.extract_strided_slice %8 {offsets = [0, 0], sizes = [2, 256], strides = [1, 1]} : vector<2x512xbf16> to vector<2x256xbf16>
    %10 = vector.extract_strided_slice %8 {offsets = [0, 256], sizes = [2, 256], strides = [1, 1]} : vector<2x512xbf16> to vector<2x256xbf16>
    %c0_6 = arith.constant 0 : index
    %c0_7 = arith.constant 0 : index
    %11 = vector.load %arg6[%c0_6, %c0_7] : memref<256x51xbf16, #tpu.memory_space<vmem>>, vector<256x51xbf16>
    %cst_8 = arith.constant dense<0.000000e+00> : vector<2x51xf32>
    %12 = tpu.matmul %10, %11, %cst_8 {dimension_numbers = #tpu.dot_dimension_numbers<[1], [0], [0], [1], [0, 0, 1, 1], [], []>} : vector<2x256xbf16>, vector<256x51xbf16>, vector<2x51xf32> -> vector<2x51xf32>
    %c0_9 = arith.constant 0 : index
    %c0_10 = arith.constant 0 : index
    %13 = vector.load %arg7[%c0_9, %c0_10] : memref<1x51xf32, #tpu.memory_space<vmem>>, vector<1x51xf32>
    %14 = vector.broadcast %13 : vector<1x51xf32> to vector<2x51xf32>
    %15 = arith.addf %12, %14 : vector<2x51xf32>
    %c0_11 = arith.constant 0 : index
    %c0_12 = arith.constant 0 : index
    %c0_13 = arith.constant 0 : index
    %16 = vector.load %arg4[%c0_11, %c0_12, %c0_13] : memref<6x256x51xbf16, #tpu.memory_space<vmem>>, vector<1x256x51xbf16>
    %17 = vector.shape_cast %16 : vector<1x256x51xbf16> to vector<256x51xbf16>
    %cst_14 = arith.constant dense<0.000000e+00> : vector<2x51xf32>
    %18 = tpu.matmul %9, %17, %cst_14 {dimension_numbers = #tpu.dot_dimension_numbers<[1], [0], [0], [1], [0, 0, 1, 1], [], []>} : vector<2x256xbf16>, vector<256x51xbf16>, vector<2x51xf32> -> vector<2x51xf32>
    %c0_15 = arith.constant 0 : index
    %c0_16 = arith.constant 0 : index
    %c0_17 = arith.constant 0 : index
    %19 = vector.load %arg5[%c0_15, %c0_16, %c0_17] : memref<6x1x51xf32, #tpu.memory_space<vmem>>, vector<1x1x51xf32>
    %20 = vector.shape_cast %19 : vector<1x1x51xf32> to vector<1x51xf32>
    %21 = vector.broadcast %20 : vector<1x51xf32> to vector<2x51xf32>
    %22 = arith.addf %18, %21 : vector<2x51xf32>
    %c1 = arith.constant 1 : index
    %c0_18 = arith.constant 0 : index
    %c0_19 = arith.constant 0 : index
    %23 = vector.load %arg4[%c1, %c0_18, %c0_19] : memref<6x256x51xbf16, #tpu.memory_space<vmem>>, vector<1x256x51xbf16>
    %24 = vector.shape_cast %23 : vector<1x256x51xbf16> to vector<256x51xbf16>
    %cst_20 = arith.constant dense<0.000000e+00> : vector<2x51xf32>
    %25 = tpu.matmul %9, %24, %cst_20 {dimension_numbers = #tpu.dot_dimension_numbers<[1], [0], [0], [1], [0, 0, 1, 1], [], []>} : vector<2x256xbf16>, vector<256x51xbf16>, vector<2x51xf32> -> vector<2x51xf32>
    %c1_21 = arith.constant 1 : index
    %c0_22 = arith.constant 0 : index
    %c0_23 = arith.constant 0 : index
    %26 = vector.load %arg5[%c1_21, %c0_22, %c0_23] : memref<6x1x51xf32, #tpu.memory_space<vmem>>, vector<1x1x51xf32>
    %27 = vector.shape_cast %26 : vector<1x1x51xf32> to vector<1x51xf32>
    %28 = vector.broadcast %27 : vector<1x51xf32> to vector<2x51xf32>
    %29 = arith.addf %25, %28 : vector<2x51xf32>
    %c2 = arith.constant 2 : index
    %c0_24 = arith.constant 0 : index
    %c0_25 = arith.constant 0 : index
    %30 = vector.load %arg4[%c2, %c0_24, %c0_25] : memref<6x256x51xbf16, #tpu.memory_space<vmem>>, vector<1x256x51xbf16>
    %31 = vector.shape_cast %30 : vector<1x256x51xbf16> to vector<256x51xbf16>
    %cst_26 = arith.constant dense<0.000000e+00> : vector<2x51xf32>
    %32 = tpu.matmul %9, %31, %cst_26 {dimension_numbers = #tpu.dot_dimension_numbers<[1], [0], [0], [1], [0, 0, 1, 1], [], []>} : vector<2x256xbf16>, vector<256x51xbf16>, vector<2x51xf32> -> vector<2x51xf32>
    %c2_27 = arith.constant 2 : index
    %c0_28 = arith.constant 0 : index
    %c0_29 = arith.constant 0 : index
    %33 = vector.load %arg5[%c2_27, %c0_28, %c0_29] : memref<6x1x51xf32, #tpu.memory_space<vmem>>, vector<1x1x51xf32>
    %34 = vector.shape_cast %33 : vector<1x1x51xf32> to vector<1x51xf32>
    %35 = vector.broadcast %34 : vector<1x51xf32> to vector<2x51xf32>
    %36 = arith.addf %32, %35 : vector<2x51xf32>
    %c3 = arith.constant 3 : index
    %c0_30 = arith.constant 0 : index
    %c0_31 = arith.constant 0 : index
    %37 = vector.load %arg4[%c3, %c0_30, %c0_31] : memref<6x256x51xbf16, #tpu.memory_space<vmem>>, vector<1x256x51xbf16>
    %38 = vector.shape_cast %37 : vector<1x256x51xbf16> to vector<256x51xbf16>
    %cst_32 = arith.constant dense<0.000000e+00> : vector<2x51xf32>
    %39 = tpu.matmul %9, %38, %cst_32 {dimension_numbers = #tpu.dot_dimension_numbers<[1], [0], [0], [1], [0, 0, 1, 1], [], []>} : vector<2x256xbf16>, vector<256x51xbf16>, vector<2x51xf32> -> vector<2x51xf32>
    %c3_33 = arith.constant 3 : index
    %c0_34 = arith.constant 0 : index
    %c0_35 = arith.constant 0 : index
    %40 = vector.load %arg5[%c3_33, %c0_34, %c0_35] : memref<6x1x51xf32, #tpu.memory_space<vmem>>, vector<1x1x51xf32>
    %41 = vector.shape_cast %40 : vector<1x1x51xf32> to vector<1x51xf32>
    %42 = vector.broadcast %41 : vector<1x51xf32> to vector<2x51xf32>
    %43 = arith.addf %39, %42 : vector<2x51xf32>
    %c4 = arith.constant 4 : index
    %c0_36 = arith.constant 0 : index
    %c0_37 = arith.constant 0 : index
    %44 = vector.load %arg4[%c4, %c0_36, %c0_37] : memref<6x256x51xbf16, #tpu.memory_space<vmem>>, vector<1x256x51xbf16>
    %45 = vector.shape_cast %44 : vector<1x256x51xbf16> to vector<256x51xbf16>
    %cst_38 = arith.constant dense<0.000000e+00> : vector<2x51xf32>
    %46 = tpu.matmul %9, %45, %cst_38 {dimension_numbers = #tpu.dot_dimension_numbers<[1], [0], [0], [1], [0, 0, 1, 1], [], []>} : vector<2x256xbf16>, vector<256x51xbf16>, vector<2x51xf32> -> vector<2x51xf32>
    %c4_39 = arith.constant 4 : index
    %c0_40 = arith.constant 0 : index
    %c0_41 = arith.constant 0 : index
    %47 = vector.load %arg5[%c4_39, %c0_40, %c0_41] : memref<6x1x51xf32, #tpu.memory_space<vmem>>, vector<1x1x51xf32>
    %48 = vector.shape_cast %47 : vector<1x1x51xf32> to vector<1x51xf32>
    %49 = vector.broadcast %48 : vector<1x51xf32> to vector<2x51xf32>
    %50 = arith.addf %46, %49 : vector<2x51xf32>
    %c5 = arith.constant 5 : index
    %c0_42 = arith.constant 0 : index
    %c0_43 = arith.constant 0 : index
    %51 = vector.load %arg4[%c5, %c0_42, %c0_43] : memref<6x256x51xbf16, #tpu.memory_space<vmem>>, vector<1x256x51xbf16>
    %52 = vector.shape_cast %51 : vector<1x256x51xbf16> to vector<256x51xbf16>
    %cst_44 = arith.constant dense<0.000000e+00> : vector<2x51xf32>
    %53 = tpu.matmul %9, %52, %cst_44 {dimension_numbers = #tpu.dot_dimension_numbers<[1], [0], [0], [1], [0, 0, 1, 1], [], []>} : vector<2x256xbf16>, vector<256x51xbf16>, vector<2x51xf32> -> vector<2x51xf32>
    %c5_45 = arith.constant 5 : index
    %c0_46 = arith.constant 0 : index
    %c0_47 = arith.constant 0 : index
    %54 = vector.load %arg5[%c5_45, %c0_46, %c0_47] : memref<6x1x51xf32, #tpu.memory_space<vmem>>, vector<1x1x51xf32>
    %55 = vector.shape_cast %54 : vector<1x1x51xf32> to vector<1x51xf32>
    %56 = vector.broadcast %55 : vector<1x51xf32> to vector<2x51xf32>
    %57 = arith.addf %53, %56 : vector<2x51xf32>
    %58 = arith.addf %22, %29 : vector<2x51xf32>
    %59 = arith.addf %58, %36 : vector<2x51xf32>
    %60 = arith.addf %59, %43 : vector<2x51xf32>
    %61 = arith.addf %60, %50 : vector<2x51xf32>
    %62 = arith.addf %61, %57 : vector<2x51xf32>
    %cst_48 = arith.constant 0.166666672 : f32
    %63 = vector.broadcast %cst_48 : f32 to vector<2x51xf32>
    %64 = arith.mulf %62, %63 : vector<2x51xf32>
    %65 = arith.addf %15, %22 : vector<2x51xf32>
    %66 = arith.subf %65, %64 : vector<2x51xf32>
    %67 = arith.addf %15, %29 : vector<2x51xf32>
    %68 = arith.subf %67, %64 : vector<2x51xf32>
    %69 = arith.addf %15, %36 : vector<2x51xf32>
    %70 = arith.subf %69, %64 : vector<2x51xf32>
    %71 = arith.addf %15, %43 : vector<2x51xf32>
    %72 = arith.subf %71, %64 : vector<2x51xf32>
    %73 = arith.addf %15, %50 : vector<2x51xf32>
    %74 = arith.subf %73, %64 : vector<2x51xf32>
    %75 = arith.addf %15, %57 : vector<2x51xf32>
    %76 = arith.subf %75, %64 : vector<2x51xf32>
    %cst_49 = arith.constant dense<0xFF800000> : vector<2xf32>
    %77 = vector.multi_reduction <maximumf>, %66, %cst_49 [1] : vector<2x51xf32> to vector<2xf32>
    %78 = vector.shape_cast %77 : vector<2xf32> to vector<2x1xf32>
    %79 = vector.broadcast %78 : vector<2x1xf32> to vector<2x51xf32>
    %80 = arith.subf %66, %79 : vector<2x51xf32>
    %81 = math.exp %80 : vector<2x51xf32>
    %cst_50 = arith.constant dense<0.000000e+00> : vector<2xf32>
    %82 = vector.multi_reduction <add>, %81, %cst_50 [1] : vector<2x51xf32> to vector<2xf32>
    %83 = vector.shape_cast %82 : vector<2xf32> to vector<2x1xf32>
    %84 = math.log %83 : vector<2x1xf32>
    %85 = arith.addf %78, %84 : vector<2x1xf32>
    %86 = vector.broadcast %85 : vector<2x1xf32> to vector<2x51xf32>
    %87 = arith.subf %66, %86 : vector<2x51xf32>
    %c0_51 = arith.constant 0 : index
    %c0_52 = arith.constant 0 : index
    %c0_53 = arith.constant 0 : index
    %88 = vector.load %arg8[%c0_51, %c0_52, %c0_53] : memref<6x2x51xf32, #tpu.memory_space<vmem>>, vector<1x2x51xf32>
    %89 = vector.shape_cast %88 : vector<1x2x51xf32> to vector<2x51xf32>
    %90 = vector.shape_cast %87 : vector<2x51xf32> to vector<1x2x51xf32>
    tpu.vector_store %arg8[%c0_51, %c0_52, %c0_53], %90 {strides = array<i32>} : memref<6x2x51xf32, #tpu.memory_space<vmem>>, vector<1x2x51xf32>,
    %cst_54 = arith.constant dense<0xFF800000> : vector<2xf32>
    %91 = vector.multi_reduction <maximumf>, %68, %cst_54 [1] : vector<2x51xf32> to vector<2xf32>
    %92 = vector.shape_cast %91 : vector<2xf32> to vector<2x1xf32>
    %93 = vector.broadcast %92 : vector<2x1xf32> to vector<2x51xf32>
    %94 = arith.subf %68, %93 : vector<2x51xf32>
    %95 = math.exp %94 : vector<2x51xf32>
    %cst_55 = arith.constant dense<0.000000e+00> : vector<2xf32>
    %96 = vector.multi_reduction <add>, %95, %cst_55 [1] : vector<2x51xf32> to vector<2xf32>
    %97 = vector.shape_cast %96 : vector<2xf32> to vector<2x1xf32>
    %98 = math.log %97 : vector<2x1xf32>
    %99 = arith.addf %92, %98 : vector<2x1xf32>
    %100 = vector.broadcast %99 : vector<2x1xf32> to vector<2x51xf32>
    %101 = arith.subf %68, %100 : vector<2x51xf32>
    %c1_56 = arith.constant 1 : index
    %c0_57 = arith.constant 0 : index
    %c0_58 = arith.constant 0 : index
    %102 = vector.load %arg8[%c1_56, %c0_57, %c0_58] : memref<6x2x51xf32, #tpu.memory_space<vmem>>, vector<1x2x51xf32>
    %103 = vector.shape_cast %102 : vector<1x2x51xf32> to vector<2x51xf32>
    %104 = vector.shape_cast %101 : vector<2x51xf32> to vector<1x2x51xf32>
    tpu.vector_store %arg8[%c1_56, %c0_57, %c0_58], %104 {strides = array<i32>} : memref<6x2x51xf32, #tpu.memory_space<vmem>>, vector<1x2x51xf32>,
    %cst_59 = arith.constant dense<0xFF800000> : vector<2xf32>
    %105 = vector.multi_reduction <maximumf>, %70, %cst_59 [1] : vector<2x51xf32> to vector<2xf32>
    %106 = vector.shape_cast %105 : vector<2xf32> to vector<2x1xf32>
    %107 = vector.broadcast %106 : vector<2x1xf32> to vector<2x51xf32>
    %108 = arith.subf %70, %107 : vector<2x51xf32>
    %109 = math.exp %108 : vector<2x51xf32>
    %cst_60 = arith.constant dense<0.000000e+00> : vector<2xf32>
    %110 = vector.multi_reduction <add>, %109, %cst_60 [1] : vector<2x51xf32> to vector<2xf32>
    %111 = vector.shape_cast %110 : vector<2xf32> to vector<2x1xf32>
    %112 = math.log %111 : vector<2x1xf32>
    %113 = arith.addf %106, %112 : vector<2x1xf32>
    %114 = vector.broadcast %113 : vector<2x1xf32> to vector<2x51xf32>
    %115 = arith.subf %70, %114 : vector<2x51xf32>
    %c2_61 = arith.constant 2 : index
    %c0_62 = arith.constant 0 : index
    %c0_63 = arith.constant 0 : index
    %116 = vector.load %arg8[%c2_61, %c0_62, %c0_63] : memref<6x2x51xf32, #tpu.memory_space<vmem>>, vector<1x2x51xf32>
    %117 = vector.shape_cast %116 : vector<1x2x51xf32> to vector<2x51xf32>
    %118 = vector.shape_cast %115 : vector<2x51xf32> to vector<1x2x51xf32>
    tpu.vector_store %arg8[%c2_61, %c0_62, %c0_63], %118 {strides = array<i32>} : memref<6x2x51xf32, #tpu.memory_space<vmem>>, vector<1x2x51xf32>,
    %cst_64 = arith.constant dense<0xFF800000> : vector<2xf32>
    %119 = vector.multi_reduction <maximumf>, %72, %cst_64 [1] : vector<2x51xf32> to vector<2xf32>
    %120 = vector.shape_cast %119 : vector<2xf32> to vector<2x1xf32>
    %121 = vector.broadcast %120 : vector<2x1xf32> to vector<2x51xf32>
    %122 = arith.subf %72, %121 : vector<2x51xf32>
    %123 = math.exp %122 : vector<2x51xf32>
    %cst_65 = arith.constant dense<0.000000e+00> : vector<2xf32>
    %124 = vector.multi_reduction <add>, %123, %cst_65 [1] : vector<2x51xf32> to vector<2xf32>
    %125 = vector.shape_cast %124 : vector<2xf32> to vector<2x1xf32>
    %126 = math.log %125 : vector<2x1xf32>
    %127 = arith.addf %120, %126 : vector<2x1xf32>
    %128 = vector.broadcast %127 : vector<2x1xf32> to vector<2x51xf32>
    %129 = arith.subf %72, %128 : vector<2x51xf32>
    %c3_66 = arith.constant 3 : index
    %c0_67 = arith.constant 0 : index
    %c0_68 = arith.constant 0 : index
    %130 = vector.load %arg8[%c3_66, %c0_67, %c0_68] : memref<6x2x51xf32, #tpu.memory_space<vmem>>, vector<1x2x51xf32>
    %131 = vector.shape_cast %130 : vector<1x2x51xf32> to vector<2x51xf32>
    %132 = vector.shape_cast %129 : vector<2x51xf32> to vector<1x2x51xf32>
    tpu.vector_store %arg8[%c3_66, %c0_67, %c0_68], %132 {strides = array<i32>} : memref<6x2x51xf32, #tpu.memory_space<vmem>>, vector<1x2x51xf32>,
    %cst_69 = arith.constant dense<0xFF800000> : vector<2xf32>
    %133 = vector.multi_reduction <maximumf>, %74, %cst_69 [1] : vector<2x51xf32> to vector<2xf32>
    %134 = vector.shape_cast %133 : vector<2xf32> to vector<2x1xf32>
    %135 = vector.broadcast %134 : vector<2x1xf32> to vector<2x51xf32>
    %136 = arith.subf %74, %135 : vector<2x51xf32>
    %137 = math.exp %136 : vector<2x51xf32>
    %cst_70 = arith.constant dense<0.000000e+00> : vector<2xf32>
    %138 = vector.multi_reduction <add>, %137, %cst_70 [1] : vector<2x51xf32> to vector<2xf32>
    %139 = vector.shape_cast %138 : vector<2xf32> to vector<2x1xf32>
    %140 = math.log %139 : vector<2x1xf32>
    %141 = arith.addf %134, %140 : vector<2x1xf32>
    %142 = vector.broadcast %141 : vector<2x1xf32> to vector<2x51xf32>
    %143 = arith.subf %74, %142 : vector<2x51xf32>
    %c4_71 = arith.constant 4 : index
    %c0_72 = arith.constant 0 : index
    %c0_73 = arith.constant 0 : index
    %144 = vector.load %arg8[%c4_71, %c0_72, %c0_73] : memref<6x2x51xf32, #tpu.memory_space<vmem>>, vector<1x2x51xf32>
    %145 = vector.shape_cast %144 : vector<1x2x51xf32> to vector<2x51xf32>
    %146 = vector.shape_cast %143 : vector<2x51xf32> to vector<1x2x51xf32>
    tpu.vector_store %arg8[%c4_71, %c0_72, %c0_73], %146 {strides = array<i32>} : memref<6x2x51xf32, #tpu.memory_space<vmem>>, vector<1x2x51xf32>,
    %cst_74 = arith.constant dense<0xFF800000> : vector<2xf32>
    %147 = vector.multi_reduction <maximumf>, %76, %cst_74 [1] : vector<2x51xf32> to vector<2xf32>
    %148 = vector.shape_cast %147 : vector<2xf32> to vector<2x1xf32>
    %149 = vector.broadcast %148 : vector<2x1xf32> to vector<2x51xf32>
    %150 = arith.subf %76, %149 : vector<2x51xf32>
    %151 = math.exp %150 : vector<2x51xf32>
    %cst_75 = arith.constant dense<0.000000e+00> : vector<2xf32>
    %152 = vector.multi_reduction <add>, %151, %cst_75 [1] : vector<2x51xf32> to vector<2xf32>
    %153 = vector.shape_cast %152 : vector<2xf32> to vector<2x1xf32>
    %154 = math.log %153 : vector<2x1xf32>
    %155 = arith.addf %148, %154 : vector<2x1xf32>
    %156 = vector.broadcast %155 : vector<2x1xf32> to vector<2x51xf32>
    %157 = arith.subf %76, %156 : vector<2x51xf32>
    %c5_76 = arith.constant 5 : index
    %c0_77 = arith.constant 0 : index
    %c0_78 = arith.constant 0 : index
    %158 = vector.load %arg8[%c5_76, %c0_77, %c0_78] : memref<6x2x51xf32, #tpu.memory_space<vmem>>, vector<1x2x51xf32>
    %159 = vector.shape_cast %158 : vector<1x2x51xf32> to vector<2x51xf32>
    %160 = vector.shape_cast %157 : vector<2x51xf32> to vector<1x2x51xf32>
    tpu.vector_store %arg8[%c5_76, %c0_77, %c0_78], %160 {strides = array<i32>} : memref<6x2x51xf32, #tpu.memory_space<vmem>>, vector<1x2x51xf32>,
    return
  }
  func.func @transform_0(%arg0: i32) -> (i32, i32) {
    %c0_i32 = arith.constant 0 : i32
    %c0_i32_0 = arith.constant 0 : i32
    return %arg0, %c0_i32 : i32, i32
  }
  func.func @transform_1(%arg0: i32) -> (i32, i32) {
    %c0_i32 = arith.constant 0 : i32
    %c0_i32_0 = arith.constant 0 : i32
    %c0_i32_1 = arith.constant 0 : i32
    return %c0_i32, %c0_i32_0 : i32, i32
  }
  func.func @transform_2(%arg0: i32) -> (i32, i32) {
    %c0_i32 = arith.constant 0 : i32
    %c0_i32_0 = arith.constant 0 : i32
    %c0_i32_1 = arith.constant 0 : i32
    return %c0_i32, %c0_i32_0 : i32, i32
  }
  func.func @transform_3(%arg0: i32) -> (i32, i32, i32) {
    %c0_i32 = arith.constant 0 : i32
    %c0_i32_0 = arith.constant 0 : i32
    %c0_i32_1 = arith.constant 0 : i32
    %c0_i32_2 = arith.constant 0 : i32
    return %c0_i32, %c0_i32_0, %c0_i32_1 : i32, i32, i32
  }
  func.func @transform_4(%arg0: i32) -> (i32, i32, i32) {
    %c0_i32 = arith.constant 0 : i32
    %c0_i32_0 = arith.constant 0 : i32
    %c0_i32_1 = arith.constant 0 : i32
    %c0_i32_2 = arith.constant 0 : i32
    return %c0_i32, %c0_i32_0, %c0_i32_1 : i32, i32, i32
  }
  func.func @transform_5(%arg0: i32) -> (i32, i32) {
    %c0_i32 = arith.constant 0 : i32
    %c0_i32_0 = arith.constant 0 : i32
    %c0_i32_1 = arith.constant 0 : i32
    return %c0_i32, %c0_i32_0 : i32, i32
  }
  func.func @transform_6(%arg0: i32) -> (i32, i32) {
    %c0_i32 = arith.constant 0 : i32
    %c0_i32_0 = arith.constant 0 : i32
    %c0_i32_1 = arith.constant 0 : i32
    return %c0_i32, %c0_i32_0 : i32, i32
  }
  func.func @transform_7(%arg0: i32) -> (i32, i32, i32) {
    %c0_i32 = arith.constant 0 : i32
    %c0_i32_0 = arith.constant 0 : i32
    %c0_i32_1 = arith.constant 0 : i32
    return %c0_i32, %arg0, %c0_i32_0 : i32, i32, i32
  }
}

</mosaic_0001>

<llo_original>
// kernel: network_forward.4
$region0: #{network_forward.4}
  #allocation0 [shape = 'u32[]', space=smem, size = 0x4, offset = 0x4, fixed_abs, tag = 'smem constant byte address 0x4 - core index']
  #allocation1 [shape = 'u32[72,128]{1,0:T(1,128)}', space=vmem, size = 0x9000, scoped, tag = 'internal scratch']
  %s0 = inlined_call_operand.vmem [shape: bf16[800,256], index: 0, kind: input, shape index: {}]
  %s1 = inlined_call_operand.vmem [shape: bf16[256,32], index: 1, kind: input, shape index: {}]
  %s2 = inlined_call_operand.vmem [shape: f32[1,32], index: 2, kind: input, shape index: {}]
  %s3 = inlined_call_operand.vmem [shape: bf16[800,32], index: 3, kind: output, shape index: {}]
  %s4 = sld [smem:[#allocation0]]
  $region45: #{network_forward.4} parent=0
    _
  %s6 = ssub.s32 1, %s4
  %s7 = scalar_select 0, %s6, %s4
  loop: start=0, step=1, limit=4
  $region2: #{network_forward.4} parent=0 // loop_pre_header
    _
  $region3: #{network_forward.4} parent=0 // loop_header
    %s9 = sphi 0, %s13
    %p10 = scmp.ge.s32.totalorder %s9, 4
    %s19 = sphi 0, %s21
    %s22 = sphi 0, %s19
    %s23 = sphi 0, %s22
    %s39 = sphi 0, %s23
    %s43 = sphi 0, %s43
    %s45 = sphi 0, %s43
    %s46 = sphi 0, %s45
    %s60 = sphi 0, %s46
    %s64 = sphi 0, %s64
    %s66 = sphi 0, %s64
    %s67 = sphi 0, %s66
    %s81 = sphi 0, %s67
    %s87 = sphi 0, %s89
    %s90 = sphi 0, %s87
    %s91 = sphi 0, %s90
    %s107 = sphi 0, %s91
  $region4: #{network_forward.4} parent=0 // loop_header_branch
    %12 = sbr.rel (%p10) target = $region8
  $region5: #{network_forward.4} parent=0 // loop_body
    %s14 = ssub.s32 %s9, 1
    %s15 = ssub.s32 %s9, 2
    %s16 = sadd.s32 %s9, 1
    %s17 = ssub.s32 %s9, %s16
    %p18 = scmp.eq.s32.totalorder %s17, 0
    %s20 = sadd.s32 %s19, 1
    %s21 = scalar_select %p18, %s19, %s20
    %p24 = pneg %p18
    %p25 = scmp.eq.s32.totalorder %s9, 1
    %p26 = por %p24, %p25
    %p27 = scmp.ne.s32.totalorder %s19, %s22
    %p28 = scmp.eq.s32.totalorder %s9, 0
    %p29 = por %p27, %p28
    %p30 = scmp.ne.s32.totalorder %s19, %s22
    %p31 = scmp.eq.s32.totalorder %s14, 1
    %p32 = por %p30, %p31
    %p33 = scmp.ne.s32.totalorder %s22, %s23
    %p34 = scmp.eq.s32.totalorder %s14, 0
    %p35 = por %p33, %p34
    %p36 = scmp.ne.s32.totalorder %s22, %s23
    %p37 = scmp.eq.s32.totalorder %s15, 1
    %p38 = por %p36, %p37
    %p40 = scmp.ne.s32.totalorder %s23, %s39
    %p41 = scmp.eq.s32.totalorder %s15, 0
    %p42 = por %p40, %p41
    %s44 = sadd.s32 %s43, 1
    %p47 = scmp.eq.s32.totalorder %s9, 1
    %p48 = scmp.ne.s32.totalorder %s43, %s45
    %p49 = scmp.eq.s32.totalorder %s9, 0
    %p50 = por %p48, %p49
    %p51 = scmp.ne.s32.totalorder %s43, %s45
    %p52 = scmp.eq.s32.totalorder %s14, 1
    %p53 = por %p51, %p52
    %p54 = scmp.ne.s32.totalorder %s45, %s46
    %p55 = scmp.eq.s32.totalorder %s14, 0
    %p56 = por %p54, %p55
    %p57 = scmp.ne.s32.totalorder %s45, %s46
    %p58 = scmp.eq.s32.totalorder %s15, 1
    %p59 = por %p57, %p58
    %p61 = scmp.ne.s32.totalorder %s46, %s60
    %p62 = scmp.eq.s32.totalorder %s15, 0
    %p63 = por %p61, %p62
    %s65 = sadd.s32 %s64, 1
    %p68 = scmp.eq.s32.totalorder %s9, 1
    %p69 = scmp.ne.s32.totalorder %s64, %s66
    %p70 = scmp.eq.s32.totalorder %s9, 0
    %p71 = por %p69, %p70
    %p72 = scmp.ne.s32.totalorder %s64, %s66
    %p73 = scmp.eq.s32.totalorder %s14, 1
    %p74 = por %p72, %p73
    %p75 = scmp.ne.s32.totalorder %s66, %s67
    %p76 = scmp.eq.s32.totalorder %s14, 0
    %p77 = por %p75, %p76
    %p78 = scmp.ne.s32.totalorder %s66, %s67
    %p79 = scmp.eq.s32.totalorder %s15, 1
    %p80 = por %p78, %p79
    %p82 = scmp.ne.s32.totalorder %s67, %s81
    %p83 = scmp.eq.s32.totalorder %s15, 0
    %p84 = por %p82, %p83
    %s85 = ssub.s32 %s9, %s16
    %p86 = scmp.eq.s32.totalorder %s85, 0
    %s88 = sadd.s32 %s87, 1
    %s89 = scalar_select %p86, %s87, %s88
    %p92 = pneg %p86
    %p93 = scmp.eq.s32.totalorder %s9, 1
    %p94 = por %p92, %p93
    %p95 = scmp.ne.s32.totalorder %s87, %s90
    %p96 = scmp.eq.s32.totalorder %s9, 0
    %p97 = por %p95, %p96
    %p98 = scmp.ne.s32.totalorder %s87, %s90
    %p99 = scmp.eq.s32.totalorder %s14, 1
    %p100 = por %p98, %p99
    %p101 = scmp.ne.s32.totalorder %s90, %s91
    %p102 = scmp.eq.s32.totalorder %s14, 0
    %p103 = por %p101, %p102
    %p104 = scmp.ne.s32.totalorder %s90, %s91
    %p105 = scmp.eq.s32.totalorder %s15, 1
    %p106 = por %p104, %p105
    %p108 = scmp.ne.s32.totalorder %s91, %s107
    %p109 = scmp.eq.s32.totalorder %s15, 0
    %p110 = por %p108, %p109
    %p111 = scmp.le.s32.totalorder 1, %s9
    %p112 = scmp.lt.s32.totalorder %s9, 3
    %p113 = pnand %p111, %p112
    %p114 = pneg %p113
    // Predicated region
    $region9: #{network_forward.4} parent=5 // pred_check
      _
    $region10: #{network_forward.4} parent=5 // pred_check_branch
      %116 = sbr.rel (%p113) target = $region12
    $region11: #{network_forward.4} parent=5 // pred_region
      %s117 = ssub.s32 %s9, 1
      // Predicated region
      $region13: #{network_forward.4} parent=11 // pred_check
        %p118 = pneg %p56
      $region14: #{network_forward.4} parent=11 // pred_check_branch
        %120 = sbr.rel (%p118) target = $region16
      $region15: #{network_forward.4} parent=11 // pred_region
        _
      $region16: #{network_forward.4} parent=11 // pred_fallthru
        _
      // Predicated region
      $region17: #{network_forward.4} parent=11 // pred_check
        %p121 = pneg %p77
      $region18: #{network_forward.4} parent=11 // pred_check_branch
        %123 = sbr.rel (%p121) target = $region20
      $region19: #{network_forward.4} parent=11 // pred_region
        _
      $region20: #{network_forward.4} parent=11 // pred_fallthru
        _
    $region12: #{network_forward.4} parent=5 // pred_fallthru
      _
    %p124 = scmp.lt.s32.totalorder %s9, 2
    // Predicated region
    $region21: #{network_forward.4} parent=5 // pred_check
      %p125 = pneg %p124
    $region22: #{network_forward.4} parent=5 // pred_check_branch
      %127 = sbr.rel (%p125) target = $region24
    $region23: #{network_forward.4} parent=5 // pred_region
      // Predicated region
      $region25: #{network_forward.4} parent=23 // pred_check
        %p128 = pneg %p29
      $region26: #{network_forward.4} parent=23 // pred_check_branch
        %130 = sbr.rel (%p128) target = $region28
      $region27: #{network_forward.4} parent=23 // pred_region
        %s131 = smul.u32 50, %s9
        %p132 = scmp.lt.s32.totalorder %s131, 99
        %s133 = scalar_select %p132, %s131, 99
        %s134 = smul.addr %s133, 2
        %s135 = smul.addr %s134, 4
        %s136 = scalar_lea.vmem %s0, %s135
        %s137 = smul.u32 50, %s9
      $region28: #{network_forward.4} parent=23 // pred_fallthru
        _
    $region24: #{network_forward.4} parent=5 // pred_fallthru
      _
    %p138 = scmp.le.s32.totalorder 1, %s9
    %p139 = scmp.lt.s32.totalorder %s9, 3
    %p140 = pnand %p138, %p139
    %p141 = pneg %p140
    // Predicated region
    $region29: #{network_forward.4} parent=5 // pred_check
      _
    $region30: #{network_forward.4} parent=5 // pred_check_branch
      %143 = sbr.rel (%p140) target = $region32
    $region31: #{network_forward.4} parent=5 // pred_region
      %s144 = ssub.s32 %s9, 1
      %s145 = smul.u32 50, %s14
      %p146 = scmp.lt.s32.totalorder %s145, 99
      %s147 = scalar_select %p146, %s145, 99
      %s148 = smul.addr %s147, 2
      %s149 = smul.addr %s148, 4
      %s150 = scalar_lea.vmem %s0, %s149
      %p151 = pneg %p35
      %p152 = pneg %p32
      %p153 = pneg %p56
      %p154 = pneg %p53
      %p155 = pneg %p77
      %p156 = pneg %p74
      %p157 = pneg %p103
      %p158 = pneg %p100
      %s159 = smul.u32 50, %s14
      %p160 = scmp.lt.s32.totalorder %s159, 99
      %s161 = scalar_select %p160, %s159, 99
      %s162 = smul.addr %s161, 4
      %s163 = scalar_lea.vmem %s3, %s162
      %s164 = smul.u32 50, %s14
      %p165 = scmp.lt.s32.totalorder %s164, 99
      %s166 = scalar_select %p165, %s164, 99
      %s167 = smul.addr %s166, 2
      %s168 = smul.addr %s167, 4
      %s169 = scalar_lea.vmem %s0, %s168
      %s170 = smul.u32 50, %s14
      %s171 = smul.u32 50, %s14
      %p172 = scmp.lt.s32.totalorder %s171, 99
      %s173 = scalar_select %p172, %s171, 99
      %s174 = smul.addr %s173, 4
      %s175 = scalar_lea.vmem %s3, %s174
      %s176 = smul.u32 50, %s14
      %v177 = vld [vmem:[%s169] sm:$0xff]
      %v178 = vld [vmem:[%s169 + $0x8] sm:$0xff]
      %v179 = vld [vmem:[%s169 + $0x10] sm:$0xff]
      %v180 = vld [vmem:[%s169 + $0x18] sm:$0xff]
      %v181 = vld [vmem:[%s169 + $0x20] sm:$0xff]
      %v182 = vld [vmem:[%s169 + $0x28] sm:$0xff]
      %v183 = vld [vmem:[%s169 + $0x30] sm:$0xff]
      %v184 = vld [vmem:[%s169 + $0x38] sm:$0xff]
      %v185 = vld [vmem:[%s169 + $0x40] sm:$0xff]
      %v186 = vld [vmem:[%s169 + $0x48] sm:$0xff]
      %v187 = vld [vmem:[%s169 + $0x50] sm:$0xff]
      %v188 = vld [vmem:[%s169 + $0x58] sm:$0xff]
      %v189 = vld [vmem:[%s169 + $0x60] sm:$0xff]
      %v190 = vld [vmem:[%s169 + $0x68] sm:$0xff]
      %v191 = vld [vmem:[%s169 + $0x70] sm:$0xff]
      %v192 = vld [vmem:[%s169 + $0x78] sm:$0xff]
      %v193 = vld [vmem:[%s169 + $0x80] sm:$0xff]
      %v194 = vld [vmem:[%s169 + $0x88] sm:$0xff]
      %v195 = vld [vmem:[%s169 + $0x90] sm:$0xff]
      %v196 = vld [vmem:[%s169 + $0x98] sm:$0xff]
      %v197 = vld [vmem:[%s169 + $0xa0] sm:$0xff]
      %v198 = vld [vmem:[%s169 + $0xa8] sm:$0xff]
      %v199 = vld [vmem:[%s169 + $0xb0] sm:$0xff]
      %v200 = vld [vmem:[%s169 + $0xb8] sm:$0xff]
      %v201 = vld [vmem:[%s169 + $0xc0] sm:$0xff]
      %v202 = vld [vmem:[%s169 + $0xc8] sm:$0xff]
      %v203 = vld [vmem:[%s169 + $0xd0] sm:$0xff]
      %v204 = vld [vmem:[%s169 + $0xd8] sm:$0xff]
      %v205 = vld [vmem:[%s169 + $0xe0] sm:$0xff]
      %v206 = vld [vmem:[%s169 + $0xe8] sm:$0xff]
      %v207 = vld [vmem:[%s169 + $0xf0] sm:$0xff]
      %v208 = vld [vmem:[%s169 + $0xf8] sm:$0xff]
      %v209 = vld [vmem:[%s169 + $0x100] sm:$0xff]
      %v210 = vld [vmem:[%s169 + $0x108] sm:$0xff]
      %v211 = vld [vmem:[%s169 + $0x110] sm:$0xff]
      %v212 = vld [vmem:[%s169 + $0x118] sm:$0xff]
      %v213 = vld [vmem:[%s169 + $0x120] sm:$0xff]
      %v214 = vld [vmem:[%s169 + $0x128] sm:$0xff]
      %v215 = vld [vmem:[%s169 + $0x130] sm:$0xff]
      %v216 = vld [vmem:[%s169 + $0x138] sm:$0xff]
      %v217 = vld [vmem:[%s169 + $0x140] sm:$0xff]
      %v218 = vld [vmem:[%s169 + $0x148] sm:$0xff]
      %v219 = vld [vmem:[%s169 + $0x150] sm:$0xff]
      %v220 = vld [vmem:[%s169 + $0x158] sm:$0xff]
      %v221 = vld [vmem:[%s169 + $0x160] sm:$0xff]
      %v222 = vld [vmem:[%s169 + $0x168] sm:$0xff]
      %v223 = vld [vmem:[%s169 + $0x170] sm:$0xff]
      %v224 = vld [vmem:[%s169 + $0x178] sm:$0xff]
      %v225 = vld [vmem:[%s169 + $0x180] sm:$0xff]
      %v226 = vld [vmem:[%s169 + $0x188] sm:$0xff]
      %v227 = vld [vmem:[%s1] sm:$0xf]
      %v228 = vld [vmem:[%s1 + $0x4] sm:$0xf]
      %v229 = vld [vmem:[%s1 + $0x8] sm:$0xf]
      %v230 = vld [vmem:[%s1 + $0xc] sm:$0xf]
      %v231 = vld [vmem:[%s1 + $0x10] sm:$0xf]
      %v232 = vld [vmem:[%s1 + $0x14] sm:$0xf]
      %v233 = vld [vmem:[%s1 + $0x18] sm:$0xf]
      %v234 = vld [vmem:[%s1 + $0x1c] sm:$0xf]
      %v235 = vld [vmem:[%s1 + $0x20] sm:$0xf]
      %v236 = vld [vmem:[%s1 + $0x24] sm:$0xf]
      %v237 = vld [vmem:[%s1 + $0x28] sm:$0xf]
      %v238 = vld [vmem:[%s1 + $0x2c] sm:$0xf]
      %v239 = vld [vmem:[%s1 + $0x30] sm:$0xf]
      %v240 = vld [vmem:[%s1 + $0x34] sm:$0xf]
      %v241 = vld [vmem:[%s1 + $0x38] sm:$0xf]
      %v242 = vld [vmem:[%s1 + $0x3c] sm:$0xf]
      %v243 = vld [vmem:[%s1 + $0x40] sm:$0xf]
      %v244 = vld [vmem:[%s1 + $0x44] sm:$0xf]
      %v245 = vld [vmem:[%s1 + $0x48] sm:$0xf]
      %v246 = vld [vmem:[%s1 + $0x4c] sm:$0xf]
      %v247 = vld [vmem:[%s1 + $0x50] sm:$0xf]
      %v248 = vld [vmem:[%s1 + $0x54] sm:$0xf]
      %v249 = vld [vmem:[%s1 + $0x58] sm:$0xf]
      %v250 = vld [vmem:[%s1 + $0x5c] sm:$0xf]
      %v251 = vld [vmem:[%s1 + $0x60] sm:$0xf]
      %v252 = vld [vmem:[%s1 + $0x64] sm:$0xf]
      %v253 = vld [vmem:[%s1 + $0x68] sm:$0xf]
      %v254 = vld [vmem:[%s1 + $0x6c] sm:$0xf]
      %v255 = vld [vmem:[%s1 + $0x70] sm:$0xf]
      %v256 = vld [vmem:[%s1 + $0x74] sm:$0xf]
      %v257 = vld [vmem:[%s1 + $0x78] sm:$0xf]
      %v258 = vld [vmem:[%s1 + $0x7c] sm:$0xf]
      %v259 = vld [vmem:[%s2] sm:$0x1]
      %v261 = vperm.slane %v259, 0
      %v313 = vunpack.c.l.b16 %v177
      %v314 = vunpack.c.h.b16 %v177
      %v315 = vunpack.c.l.b16 %v178
      %v316 = vunpack.c.h.b16 %v178
      %v317 = vunpack.c.l.b16 %v179
      %v318 = vunpack.c.h.b16 %v179
      %v319 = vunpack.c.l.b16 %v180
      %v320 = vunpack.c.h.b16 %v180
      %v321 = vunpack.c.l.b16 %v181
      %v322 = vunpack.c.h.b16 %v181
      %v323 = vunpack.c.l.b16 %v182
      %v324 = vunpack.c.h.b16 %v182
      %v325 = vunpack.c.l.b16 %v183
      %v326 = vunpack.c.h.b16 %v183
      %v327 = vunpack.c.l.b16 %v184
      %v328 = vunpack.c.h.b16 %v184
      %v329 = vunpack.c.l.b16 %v185
      %v330 = vunpack.c.h.b16 %v185
      %v331 = vunpack.c.l.b16 %v186
      %v332 = vunpack.c.h.b16 %v186
      %v333 = vunpack.c.l.b16 %v187
      %v334 = vunpack.c.h.b16 %v187
      %v335 = vunpack.c.l.b16 %v188
      %v336 = vunpack.c.h.b16 %v188
      %v337 = vunpack.c.l.b16 %v189
      %v338 = vunpack.c.h.b16 %v189
      %v339 = vunpack.c.l.b16 %v190
      %v340 = vunpack.c.h.b16 %v190
      %v341 = vunpack.c.l.b16 %v191
      %v342 = vunpack.c.h.b16 %v191
      %v343 = vunpack.c.l.b16 %v192
      %v344 = vunpack.c.h.b16 %v192
      %v345 = vunpack.c.l.b16 %v193
      %v346 = vunpack.c.h.b16 %v193
      %v347 = vunpack.c.l.b16 %v194
      %v348 = vunpack.c.h.b16 %v194
      %v349 = vunpack.c.l.b16 %v195
      %v350 = vunpack.c.h.b16 %v195
      %v351 = vunpack.c.l.b16 %v196
      %v352 = vunpack.c.h.b16 %v196
      %v353 = vunpack.c.l.b16 %v197
      %v354 = vunpack.c.h.b16 %v197
      %v355 = vunpack.c.l.b16 %v198
      %v356 = vunpack.c.h.b16 %v198
      %v357 = vunpack.c.l.b16 %v199
      %v358 = vunpack.c.h.b16 %v199
      %v359 = vunpack.c.l.b16 %v200
      %v360 = vunpack.c.h.b16 %v200
      %v361 = vunpack.c.l.b16 %v201
      %v362 = vunpack.c.h.b16 %v201
      %v363 = vunpack.c.l.b16 %v202
      %v364 = vunpack.c.h.b16 %v202
      %v365 = vunpack.c.l.b16 %v203
      %v366 = vunpack.c.h.b16 %v203
      %v367 = vunpack.c.l.b16 %v204
      %v368 = vunpack.c.h.b16 %v204
      %v369 = vunpack.c.l.b16 %v205
      %v370 = vunpack.c.h.b16 %v205
      %v371 = vunpack.c.l.b16 %v206
      %v372 = vunpack.c.h.b16 %v206
      %v373 = vunpack.c.l.b16 %v207
      %v374 = vunpack.c.h.b16 %v207
      %v375 = vunpack.c.l.b16 %v208
      %v376 = vunpack.c.h.b16 %v208
      %v377 = vunpack.c.l.b16 %v209
      %v378 = vunpack.c.h.b16 %v209
      %v379 = vunpack.c.l.b16 %v210
      %v380 = vunpack.c.h.b16 %v210
      %v381 = vunpack.c.l.b16 %v211
      %v382 = vunpack.c.h.b16 %v211
      %v383 = vunpack.c.l.b16 %v212
      %v384 = vunpack.c.h.b16 %v212
      %v385 = vunpack.c.l.b16 %v213
      %v386 = vunpack.c.h.b16 %v213
      %v387 = vunpack.c.l.b16 %v214
      %v388 = vunpack.c.h.b16 %v214
      %v389 = vunpack.c.l.b16 %v215
      %v390 = vunpack.c.h.b16 %v215
      %v391 = vunpack.c.l.b16 %v216
      %v392 = vunpack.c.h.b16 %v216
      %v393 = vunpack.c.l.b16 %v217
      %v394 = vunpack.c.h.b16 %v217
      %v395 = vunpack.c.l.b16 %v218
      %v396 = vunpack.c.h.b16 %v218
      %v397 = vunpack.c.l.b16 %v219
      %v398 = vunpack.c.h.b16 %v219
      %v399 = vunpack.c.l.b16 %v220
      %v400 = vunpack.c.h.b16 %v220
      %v401 = vunpack.c.l.b16 %v221
      %v402 = vunpack.c.h.b16 %v221
      %v403 = vunpack.c.l.b16 %v222
      %v404 = vunpack.c.h.b16 %v222
      %v405 = vunpack.c.l.b16 %v223
      %v406 = vunpack.c.h.b16 %v223
      %v407 = vunpack.c.l.b16 %v224
      %v408 = vunpack.c.h.b16 %v224
      %v409 = vunpack.c.l.b16 %v225
      %v410 = vunpack.c.h.b16 %v225
      %v411 = vunpack.c.l.b16 %v226
      %v412 = vunpack.c.h.b16 %v226
      %v413 = vpack.c.b16 %v315, %v313
      %v414 = vpack.c.b16 %v316, %v314
      %v415 = vpack.c.b16 %v319, %v317
      %v416 = vpack.c.b16 %v320, %v318
      %v417 = vpack.c.b16 %v323, %v321
      %v418 = vpack.c.b16 %v324, %v322
      %v419 = vpack.c.b16 %v327, %v325
      %v420 = vpack.c.b16 %v328, %v326
      %v421 = vpack.c.b16 %v331, %v329
      %v422 = vpack.c.b16 %v332, %v330
      %v423 = vpack.c.b16 %v335, %v333
      %v424 = vpack.c.b16 %v336, %v334
      %v425 = vpack.c.b16 %v339, %v337
      %v426 = vpack.c.b16 %v340, %v338
      %v427 = vpack.c.b16 %v343, %v341
      %v428 = vpack.c.b16 %v344, %v342
      %v429 = vpack.c.b16 %v347, %v345
      %v430 = vpack.c.b16 %v348, %v346
      %v431 = vpack.c.b16 %v351, %v349
      %v432 = vpack.c.b16 %v352, %v350
      %v433 = vpack.c.b16 %v355, %v353
      %v434 = vpack.c.b16 %v356, %v354
      %v435 = vpack.c.b16 %v359, %v357
      %v436 = vpack.c.b16 %v360, %v358
      %v437 = vpack.c.b16 %v363, %v361
      %v438 = vpack.c.b16 %v364, %v362
      %v439 = vpack.c.b16 %v367, %v365
      %v440 = vpack.c.b16 %v368, %v366
      %v441 = vpack.c.b16 %v371, %v369
      %v442 = vpack.c.b16 %v372, %v370
      %v443 = vpack.c.b16 %v375, %v373
      %v444 = vpack.c.b16 %v376, %v374
      %v445 = vpack.c.b16 %v379, %v377
      %v446 = vpack.c.b16 %v380, %v378
      %v447 = vpack.c.b16 %v383, %v381
      %v448 = vpack.c.b16 %v384, %v382
      %v449 = vpack.c.b16 %v387, %v385
      %v450 = vpack.c.b16 %v388, %v386
      %v451 = vpack.c.b16 %v391, %v389
      %v452 = vpack.c.b16 %v392, %v390
      %v453 = vpack.c.b16 %v395, %v393
      %v454 = vpack.c.b16 %v396, %v394
      %v455 = vpack.c.b16 %v399, %v397
      %v456 = vpack.c.b16 %v400, %v398
      %v457 = vpack.c.b16 %v403, %v401
      %v458 = vpack.c.b16 %v404, %v402
      %v459 = vpack.c.b16 %v407, %v405
      %v460 = vpack.c.b16 %v408, %v406
      %v461 = vpack.c.b16 %v411, %v409
      %v462 = vpack.c.b16 %v412, %v410
      %v545 = vunpack.c.l.b16 %v227
      %v546 = vunpack.c.l.b16 %v228
      %v547 = vunpack.c.l.b16 %v229
      %v548 = vunpack.c.l.b16 %v230
      %v549 = vunpack.c.l.b16 %v231
      %v550 = vunpack.c.l.b16 %v232
      %v551 = vunpack.c.l.b16 %v233
      %v552 = vunpack.c.l.b16 %v234
      %v553 = vunpack.c.l.b16 %v235
      %v554 = vunpack.c.l.b16 %v236
      %v555 = vunpack.c.l.b16 %v237
      %v556 = vunpack.c.l.b16 %v238
      %v557 = vunpack.c.l.b16 %v239
      %v558 = vunpack.c.l.b16 %v240
      %v559 = vunpack.c.l.b16 %v241
      %v560 = vunpack.c.l.b16 %v242
      %v561 = vunpack.c.l.b16 %v243
      %v562 = vunpack.c.l.b16 %v244
      %v563 = vunpack.c.l.b16 %v245
      %v564 = vunpack.c.l.b16 %v246
      %v565 = vunpack.c.l.b16 %v247
      %v566 = vunpack.c.l.b16 %v248
      %v567 = vunpack.c.l.b16 %v249
      %v568 = vunpack.c.l.b16 %v250
      %v569 = vunpack.c.l.b16 %v251
      %v570 = vunpack.c.l.b16 %v252
      %v571 = vunpack.c.l.b16 %v253
      %v572 = vunpack.c.l.b16 %v254
      %v573 = vunpack.c.l.b16 %v255
      %v574 = vunpack.c.l.b16 %v256
      %v575 = vunpack.c.l.b16 %v257
      %v576 = vunpack.c.l.b16 %v258
      %v577 = vpack.c.b16 %v546, %v545
      %v578 = vpack.c.b16 %v548, %v547
      %v579 = vpack.c.b16 %v550, %v549
      %v580 = vpack.c.b16 %v552, %v551
      %v581 = vpack.c.b16 %v554, %v553
      %v582 = vpack.c.b16 %v556, %v555
      %v583 = vpack.c.b16 %v558, %v557
      %v584 = vpack.c.b16 %v560, %v559
      %v585 = vpack.c.b16 %v562, %v561
      %v586 = vpack.c.b16 %v564, %v563
      %v587 = vpack.c.b16 %v566, %v565
      %v588 = vpack.c.b16 %v568, %v567
      %v589 = vpack.c.b16 %v570, %v569
      %v590 = vpack.c.b16 %v572, %v571
      %v591 = vpack.c.b16 %v574, %v573
      %v592 = vpack.c.b16 %v576, %v575
      %609 = vmatpush.bf16.msra.mxu0 %v584
      %610 = vmatpush.bf16.msra.mxu0 %v583
      %611 = vmatpush.bf16.msra.mxu0 %v582
      %612 = vmatpush.bf16.msra.mxu0 %v581
      %613 = vmatpush.bf16.msra.mxu0 %v580
      %614 = vmatpush.bf16.msra.mxu0 %v579
      %615 = vmatpush.bf16.msra.mxu0 %v578
      %616 = vmatpush.bf16.msra.mxu0 %v577
      %617 = vmatmul.bf16.gmra.mxu0 %v413
      %v618 = vpop.f32.mrf.mxu0
      %v619 = vadd.f32 %v261, %v618
      %v620 = vpop.f32.mrf.mxu0
      %v621 = vadd.f32 %v261, %v620
      %622 = vmatmul.bf16.gmra.mxu0 %v415
      %v623 = vpop.f32.mrf.mxu0
      %v624 = vadd.f32 %v261, %v623
      %v625 = vpop.f32.mrf.mxu0
      %v626 = vadd.f32 %v261, %v625
      %627 = vmatmul.bf16.gmra.mxu0 %v417
      %v628 = vpop.f32.mrf.mxu0
      %v629 = vadd.f32 %v261, %v628
      %v630 = vpop.f32.mrf.mxu0
      %v631 = vadd.f32 %v261, %v630
      %632 = vmatmul.bf16.gmra.mxu0 %v419
      %v633 = vpop.f32.mrf.mxu0
      %v634 = vadd.f32 %v261, %v633
      %v635 = vpop.f32.mrf.mxu0
      %v636 = vadd.f32 %v261, %v635
      %637 = vmatmul.bf16.gmra.mxu0 %v421
      %v638 = vpop.f32.mrf.mxu0
      %v639 = vadd.f32 %v261, %v638
      %v640 = vpop.f32.mrf.mxu0
      %v641 = vadd.f32 %v261, %v640
      %642 = vmatmul.bf16.gmra.mxu0 %v423
      %v643 = vpop.f32.mrf.mxu0
      %v644 = vadd.f32 %v261, %v643
      %v645 = vpop.f32.mrf.mxu0
      %v646 = vadd.f32 %v261, %v645
      %647 = vmatmul.bf16.gmra.mxu0 %v425
      %v648 = vpop.f32.mrf.mxu0
      %v649 = vadd.f32 %v261, %v648
      %v650 = vpop.f32.mrf.mxu0
      %v651 = vadd.f32 %v261, %v650
      %652 = vmatmul.bf16.gmra.mxu0 %v427
      %v653 = vpop.f32.mrf.mxu0
      %v654 = vadd.f32 %v261, %v653
      %v655 = vpop.f32.mrf.mxu0
      %v656 = vadd.f32 %v261, %v655
      %657 = vmatmul.bf16.gmra.mxu0 %v429
      %v658 = vpop.f32.mrf.mxu0
      %v659 = vadd.f32 %v261, %v658
      %v660 = vpop.f32.mrf.mxu0
      %v661 = vadd.f32 %v261, %v660
      %662 = vmatmul.bf16.gmra.mxu0 %v431
      %v663 = vpop.f32.mrf.mxu0
      %v664 = vadd.f32 %v261, %v663
      %v665 = vpop.f32.mrf.mxu0
      %v666 = vadd.f32 %v261, %v665
      %667 = vmatmul.bf16.gmra.mxu0 %v433
      %v668 = vpop.f32.mrf.mxu0
      %v669 = vadd.f32 %v261, %v668
      %v670 = vpop.f32.mrf.mxu0
      %v671 = vadd.f32 %v261, %v670
      %672 = vmatmul.bf16.gmra.mxu0 %v435
      %v673 = vpop.f32.mrf.mxu0
      %v674 = vadd.f32 %v261, %v673
      %v675 = vpop.f32.mrf.mxu0
      %v676 = vadd.f32 %v261, %v675
      %677 = vmatmul.bf16.gmra.mxu0 %v437
      %v678 = vpop.f32.mrf.mxu0
      %v679 = vadd.f32 %v261, %v678
      %v680 = vpop.f32.mrf.mxu0
      %v681 = vadd.f32 %v261, %v680
      %682 = vmatmul.bf16.gmra.mxu0 %v439
      %v683 = vpop.f32.mrf.mxu0
      %v684 = vadd.f32 %v261, %v683
      %v685 = vpop.f32.mrf.mxu0
      %v686 = vadd.f32 %v261, %v685
      %687 = vmatmul.bf16.gmra.mxu0 %v441
      %v688 = vpop.f32.mrf.mxu0
      %v689 = vadd.f32 %v261, %v688
      %v690 = vpop.f32.mrf.mxu0
      %v691 = vadd.f32 %v261, %v690
      %692 = vmatmul.bf16.gmra.mxu0 %v443
      %v693 = vpop.f32.mrf.mxu0
      %v694 = vadd.f32 %v261, %v693
      %v695 = vpop.f32.mrf.mxu0
      %v696 = vadd.f32 %v261, %v695
      %697 = vmatmul.bf16.gmra.mxu0 %v445
      %v698 = vpop.f32.mrf.mxu0
      %v699 = vadd.f32 %v261, %v698
      %v700 = vpop.f32.mrf.mxu0
      %v701 = vadd.f32 %v261, %v700
      %702 = vmatmul.bf16.gmra.mxu0 %v447
      %v703 = vpop.f32.mrf.mxu0
      %v704 = vadd.f32 %v261, %v703
      %v705 = vpop.f32.mrf.mxu0
      %v706 = vadd.f32 %v261, %v705
      %707 = vmatmul.bf16.gmra.mxu0 %v449
      %v708 = vpop.f32.mrf.mxu0
      %v709 = vadd.f32 %v261, %v708
      %v710 = vpop.f32.mrf.mxu0
      %v711 = vadd.f32 %v261, %v710
      %712 = vmatmul.bf16.gmra.mxu0 %v451
      %v713 = vpop.f32.mrf.mxu0
      %v714 = vadd.f32 %v261, %v713
      %v715 = vpop.f32.mrf.mxu0
      %v716 = vadd.f32 %v261, %v715
      %717 = vmatmul.bf16.gmra.mxu0 %v453
      %v718 = vpop.f32.mrf.mxu0
      %v719 = vadd.f32 %v261, %v718
      %v720 = vpop.f32.mrf.mxu0
      %v721 = vadd.f32 %v261, %v720
      %722 = vmatmul.bf16.gmra.mxu0 %v455
      %v723 = vpop.f32.mrf.mxu0
      %v724 = vadd.f32 %v261, %v723
      %v725 = vpop.f32.mrf.mxu0
      %v726 = vadd.f32 %v261, %v725
      %727 = vmatmul.bf16.gmra.mxu0 %v457
      %v728 = vpop.f32.mrf.mxu0
      %v729 = vadd.f32 %v261, %v728
      %v730 = vpop.f32.mrf.mxu0
      %v731 = vadd.f32 %v261, %v730
      %732 = vmatmul.bf16.gmra.mxu0 %v459
      %v733 = vpop.f32.mrf.mxu0
      %v734 = vadd.f32 %v261, %v733
      %v735 = vpop.f32.mrf.mxu0
      %v736 = vadd.f32 %v261, %v735
      %737 = vmatmul.bf16.gmra.mxu0 %v461
      %v738 = vpop.f32.mrf.mxu0
      %v739 = vadd.f32 %v261, %v738
      %v740 = vpop.f32.mrf.mxu0
      %v741 = vadd.f32 %v261, %v740
      %742 = vdwg.mxu0
      %743 = vmatpush.bf16.msra.mxu0 %v592
      %744 = vmatpush.bf16.msra.mxu0 %v591
      %745 = vmatpush.bf16.msra.mxu0 %v590
      %746 = vmatpush.bf16.msra.mxu0 %v589
      %747 = vmatpush.bf16.msra.mxu0 %v588
      %748 = vmatpush.bf16.msra.mxu0 %v587
      %749 = vmatpush.bf16.msra.mxu0 %v586
      %750 = vmatpush.bf16.msra.mxu0 %v585
      %751 = vmatmul.bf16.gmra.mxu0 %v414
      %v752 = vpop.f32.mrf.mxu0
      %v753 = vadd.f32 %v619, %v752
      %v754 = vpop.f32.mrf.mxu0
      %v755 = vadd.f32 %v621, %v754
      %756 = vmatmul.bf16.gmra.mxu0 %v416
      %v757 = vpop.f32.mrf.mxu0
      %v758 = vadd.f32 %v624, %v757
      %v759 = vpop.f32.mrf.mxu0
      %v760 = vadd.f32 %v626, %v759
      %761 = vmatmul.bf16.gmra.mxu0 %v418
      %v762 = vpop.f32.mrf.mxu0
      %v763 = vadd.f32 %v629, %v762
      %v764 = vpop.f32.mrf.mxu0
      %v765 = vadd.f32 %v631, %v764
      %766 = vmatmul.bf16.gmra.mxu0 %v420
      %v767 = vpop.f32.mrf.mxu0
      %v768 = vadd.f32 %v634, %v767
      %v769 = vpop.f32.mrf.mxu0
      %v770 = vadd.f32 %v636, %v769
      %771 = vmatmul.bf16.gmra.mxu0 %v422
      %v772 = vpop.f32.mrf.mxu0
      %v773 = vadd.f32 %v639, %v772
      %v774 = vpop.f32.mrf.mxu0
      %v775 = vadd.f32 %v641, %v774
      %776 = vmatmul.bf16.gmra.mxu0 %v424
      %v777 = vpop.f32.mrf.mxu0
      %v778 = vadd.f32 %v644, %v777
      %v779 = vpop.f32.mrf.mxu0
      %v780 = vadd.f32 %v646, %v779
      %781 = vmatmul.bf16.gmra.mxu0 %v426
      %v782 = vpop.f32.mrf.mxu0
      %v783 = vadd.f32 %v649, %v782
      %v784 = vpop.f32.mrf.mxu0
      %v785 = vadd.f32 %v651, %v784
      %786 = vmatmul.bf16.gmra.mxu0 %v428
      %v787 = vpop.f32.mrf.mxu0
      %v788 = vadd.f32 %v654, %v787
      %v789 = vpop.f32.mrf.mxu0
      %v790 = vadd.f32 %v656, %v789
      %791 = vmatmul.bf16.gmra.mxu0 %v430
      %v792 = vpop.f32.mrf.mxu0
      %v793 = vadd.f32 %v659, %v792
      %v794 = vpop.f32.mrf.mxu0
      %v795 = vadd.f32 %v661, %v794
      %796 = vmatmul.bf16.gmra.mxu0 %v432
      %v797 = vpop.f32.mrf.mxu0
      %v798 = vadd.f32 %v664, %v797
      %v799 = vpop.f32.mrf.mxu0
      %v800 = vadd.f32 %v666, %v799
      %801 = vmatmul.bf16.gmra.mxu0 %v434
      %v802 = vpop.f32.mrf.mxu0
      %v803 = vadd.f32 %v669, %v802
      %v804 = vpop.f32.mrf.mxu0
      %v805 = vadd.f32 %v671, %v804
      %806 = vmatmul.bf16.gmra.mxu0 %v436
      %v807 = vpop.f32.mrf.mxu0
      %v808 = vadd.f32 %v674, %v807
      %v809 = vpop.f32.mrf.mxu0
      %v810 = vadd.f32 %v676, %v809
      %811 = vmatmul.bf16.gmra.mxu0 %v438
      %v812 = vpop.f32.mrf.mxu0
      %v813 = vadd.f32 %v679, %v812
      %v814 = vpop.f32.mrf.mxu0
      %v815 = vadd.f32 %v681, %v814
      %816 = vmatmul.bf16.gmra.mxu0 %v440
      %v817 = vpop.f32.mrf.mxu0
      %v818 = vadd.f32 %v684, %v817
      %v819 = vpop.f32.mrf.mxu0
      %v820 = vadd.f32 %v686, %v819
      %821 = vmatmul.bf16.gmra.mxu0 %v442
      %v822 = vpop.f32.mrf.mxu0
      %v823 = vadd.f32 %v689, %v822
      %v824 = vpop.f32.mrf.mxu0
      %v825 = vadd.f32 %v691, %v824
      %826 = vmatmul.bf16.gmra.mxu0 %v444
      %v827 = vpop.f32.mrf.mxu0
      %v828 = vadd.f32 %v694, %v827
      %v829 = vpop.f32.mrf.mxu0
      %v830 = vadd.f32 %v696, %v829
      %831 = vmatmul.bf16.gmra.mxu0 %v446
      %v832 = vpop.f32.mrf.mxu0
      %v833 = vadd.f32 %v699, %v832
      %v834 = vpop.f32.mrf.mxu0
      %v835 = vadd.f32 %v701, %v834
      %836 = vmatmul.bf16.gmra.mxu0 %v448
      %v837 = vpop.f32.mrf.mxu0
      %v838 = vadd.f32 %v704, %v837
      %v839 = vpop.f32.mrf.mxu0
      %v840 = vadd.f32 %v706, %v839
      %841 = vmatmul.bf16.gmra.mxu0 %v450
      %v842 = vpop.f32.mrf.mxu0
      %v843 = vadd.f32 %v709, %v842
      %v844 = vpop.f32.mrf.mxu0
      %v845 = vadd.f32 %v711, %v844
      %846 = vmatmul.bf16.gmra.mxu0 %v452
      %v847 = vpop.f32.mrf.mxu0
      %v848 = vadd.f32 %v714, %v847
      %v849 = vpop.f32.mrf.mxu0
      %v850 = vadd.f32 %v716, %v849
      %851 = vmatmul.bf16.gmra.mxu0 %v454
      %v852 = vpop.f32.mrf.mxu0
      %v853 = vadd.f32 %v719, %v852
      %v854 = vpop.f32.mrf.mxu0
      %v855 = vadd.f32 %v721, %v854
      %856 = vmatmul.bf16.gmra.mxu0 %v456
      %v857 = vpop.f32.mrf.mxu0
      %v858 = vadd.f32 %v724, %v857
      %v859 = vpop.f32.mrf.mxu0
      %v860 = vadd.f32 %v726, %v859
      %861 = vmatmul.bf16.gmra.mxu0 %v458
      %v862 = vpop.f32.mrf.mxu0
      %v863 = vadd.f32 %v729, %v862
      %v864 = vpop.f32.mrf.mxu0
      %v865 = vadd.f32 %v731, %v864
      %866 = vmatmul.bf16.gmra.mxu0 %v460
      %v867 = vpop.f32.mrf.mxu0
      %v868 = vadd.f32 %v734, %v867
      %v869 = vpop.f32.mrf.mxu0
      %v870 = vadd.f32 %v736, %v869
      %871 = vmatmul.bf16.gmra.mxu0 %v462
      %v872 = vpop.f32.mrf.mxu0
      %v873 = vadd.f32 %v739, %v872
      %v874 = vpop.f32.mrf.mxu0
      %v875 = vadd.f32 %v741, %v874
      %876 = vdwg.mxu0
      %v877 = vmax.f32 %v753, 0.0
      %v878 = vmax.f32 %v755, 0.0
      %v879 = vmax.f32 %v758, 0.0
      %v880 = vmax.f32 %v760, 0.0
      %v881 = vmax.f32 %v763, 0.0
      %v882 = vmax.f32 %v765, 0.0
      %v883 = vmax.f32 %v768, 0.0
      %v884 = vmax.f32 %v770, 0.0
      %v885 = vmax.f32 %v773, 0.0
      %v886 = vmax.f32 %v775, 0.0
      %v887 = vmax.f32 %v778, 0.0
      %v888 = vmax.f32 %v780, 0.0
      %v889 = vmax.f32 %v783, 0.0
      %v890 = vmax.f32 %v785, 0.0
      %v891 = vmax.f32 %v788, 0.0
      %v892 = vmax.f32 %v790, 0.0
      %v893 = vmax.f32 %v793, 0.0
      %v894 = vmax.f32 %v795, 0.0
      %v895 = vmax.f32 %v798, 0.0
      %v896 = vmax.f32 %v800, 0.0
      %v897 = vmax.f32 %v803, 0.0
      %v898 = vmax.f32 %v805, 0.0
      %v899 = vmax.f32 %v808, 0.0
      %v900 = vmax.f32 %v810, 0.0
      %v901 = vmax.f32 %v813, 0.0
      %v902 = vmax.f32 %v815, 0.0
      %v903 = vmax.f32 %v818, 0.0
      %v904 = vmax.f32 %v820, 0.0
      %v905 = vmax.f32 %v823, 0.0
      %v906 = vmax.f32 %v825, 0.0
      %v907 = vmax.f32 %v828, 0.0
      %v908 = vmax.f32 %v830, 0.0
      %v909 = vmax.f32 %v833, 0.0
      %v910 = vmax.f32 %v835, 0.0
      %v911 = vmax.f32 %v838, 0.0
      %v912 = vmax.f32 %v840, 0.0
      %v913 = vmax.f32 %v843, 0.0
      %v914 = vmax.f32 %v845, 0.0
      %v915 = vmax.f32 %v848, 0.0
      %v916 = vmax.f32 %v850, 0.0
      %v917 = vmax.f32 %v853, 0.0
      %v918 = vmax.f32 %v855, 0.0
      %v919 = vmax.f32 %v858, 0.0
      %v920 = vmax.f32 %v860, 0.0
      %v921 = vmax.f32 %v863, 0.0
      %v922 = vmax.f32 %v865, 0.0
      %v923 = vmax.f32 %v868, 0.0
      %v924 = vmax.f32 %v870, 0.0
      %v925 = vmax.f32 %v873, 0.0
      %v926 = vmax.f32 %v875, 0.0
      %v927 = vpack.c.bf16 %v877, %v877
      %v928 = vpack.c.bf16 %v878, %v878
      %v929 = vpack.c.bf16 %v879, %v879
      %v930 = vpack.c.bf16 %v880, %v880
      %v931 = vpack.c.bf16 %v881, %v881
      %v932 = vpack.c.bf16 %v882, %v882
      %v933 = vpack.c.bf16 %v883, %v883
      %v934 = vpack.c.bf16 %v884, %v884
      %v935 = vpack.c.bf16 %v885, %v885
      %v936 = vpack.c.bf16 %v886, %v886
      %v937 = vpack.c.bf16 %v887, %v887
      %v938 = vpack.c.bf16 %v888, %v888
      %v939 = vpack.c.bf16 %v889, %v889
      %v940 = vpack.c.bf16 %v890, %v890
      %v941 = vpack.c.bf16 %v891, %v891
      %v942 = vpack.c.bf16 %v892, %v892
      %v943 = vpack.c.bf16 %v893, %v893
      %v944 = vpack.c.bf16 %v894, %v894
      %v945 = vpack.c.bf16 %v895, %v895
      %v946 = vpack.c.bf16 %v896, %v896
      %v947 = vpack.c.bf16 %v897, %v897
      %v948 = vpack.c.bf16 %v898, %v898
      %v949 = vpack.c.bf16 %v899, %v899
      %v950 = vpack.c.bf16 %v900, %v900
      %v951 = vpack.c.bf16 %v901, %v901
      %v952 = vpack.c.bf16 %v902, %v902
      %v953 = vpack.c.bf16 %v903, %v903
      %v954 = vpack.c.bf16 %v904, %v904
      %v955 = vpack.c.bf16 %v905, %v905
      %v956 = vpack.c.bf16 %v906, %v906
      %v957 = vpack.c.bf16 %v907, %v907
      %v958 = vpack.c.bf16 %v908, %v908
      %v959 = vpack.c.bf16 %v909, %v909
      %v960 = vpack.c.bf16 %v910, %v910
      %v961 = vpack.c.bf16 %v911, %v911
      %v962 = vpack.c.bf16 %v912, %v912
      %v963 = vpack.c.bf16 %v913, %v913
      %v964 = vpack.c.bf16 %v914, %v914
      %v965 = vpack.c.bf16 %v915, %v915
      %v966 = vpack.c.bf16 %v916, %v916
      %v967 = vpack.c.bf16 %v917, %v917
      %v968 = vpack.c.bf16 %v918, %v918
      %v969 = vpack.c.bf16 %v919, %v919
      %v970 = vpack.c.bf16 %v920, %v920
      %v971 = vpack.c.bf16 %v921, %v921
      %v972 = vpack.c.bf16 %v922, %v922
      %v973 = vpack.c.bf16 %v923, %v923
      %v974 = vpack.c.bf16 %v924, %v924
      %v975 = vpack.c.bf16 %v925, %v925
      %v976 = vpack.c.bf16 %v926, %v926
      %vm977 = vcmask 257024
      %978 = vst.msk [vmem:[%s175] sm:$0xf] %vm977, %v927
      %979 = vst.msk [vmem:[%s175 + $0x4] sm:$0xf] %vm977, %v928
      %980 = vst.msk [vmem:[%s175 + $0x8] sm:$0xf] %vm977, %v929
      %981 = vst.msk [vmem:[%s175 + $0xc] sm:$0xf] %vm977, %v930
      %982 = vst.msk [vmem:[%s175 + $0x10] sm:$0xf] %vm977, %v931
      %983 = vst.msk [vmem:[%s175 + $0x14] sm:$0xf] %vm977, %v932
      %984 = vst.msk [vmem:[%s175 + $0x18] sm:$0xf] %vm977, %v933
      %985 = vst.msk [vmem:[%s175 + $0x1c] sm:$0xf] %vm977, %v934
      %986 = vst.msk [vmem:[%s175 + $0x20] sm:$0xf] %vm977, %v935
      %987 = vst.msk [vmem:[%s175 + $0x24] sm:$0xf] %vm977, %v936
      %988 = vst.msk [vmem:[%s175 + $0x28] sm:$0xf] %vm977, %v937
      %989 = vst.msk [vmem:[%s175 + $0x2c] sm:$0xf] %vm977, %v938
      %990 = vst.msk [vmem:[%s175 + $0x30] sm:$0xf] %vm977, %v939
      %991 = vst.msk [vmem:[%s175 + $0x34] sm:$0xf] %vm977, %v940
      %992 = vst.msk [vmem:[%s175 + $0x38] sm:$0xf] %vm977, %v941
      %993 = vst.msk [vmem:[%s175 + $0x3c] sm:$0xf] %vm977, %v942
      %994 = vst.msk [vmem:[%s175 + $0x40] sm:$0xf] %vm977, %v943
      %995 = vst.msk [vmem:[%s175 + $0x44] sm:$0xf] %vm977, %v944
      %996 = vst.msk [vmem:[%s175 + $0x48] sm:$0xf] %vm977, %v945
      %997 = vst.msk [vmem:[%s175 + $0x4c] sm:$0xf] %vm977, %v946
      %998 = vst.msk [vmem:[%s175 + $0x50] sm:$0xf] %vm977, %v947
      %999 = vst.msk [vmem:[%s175 + $0x54] sm:$0xf] %vm977, %v948
      %1000 = vst.msk [vmem:[%s175 + $0x58] sm:$0xf] %vm977, %v949
      %1001 = vst.msk [vmem:[%s175 + $0x5c] sm:$0xf] %vm977, %v950
      %1002 = vst.msk [vmem:[%s175 + $0x60] sm:$0xf] %vm977, %v951
      %1003 = vst.msk [vmem:[%s175 + $0x64] sm:$0xf] %vm977, %v952
      %1004 = vst.msk [vmem:[%s175 + $0x68] sm:$0xf] %vm977, %v953
      %1005 = vst.msk [vmem:[%s175 + $0x6c] sm:$0xf] %vm977, %v954
      %1006 = vst.msk [vmem:[%s175 + $0x70] sm:$0xf] %vm977, %v955
      %1007 = vst.msk [vmem:[%s175 + $0x74] sm:$0xf] %vm977, %v956
      %1008 = vst.msk [vmem:[%s175 + $0x78] sm:$0xf] %vm977, %v957
      %1009 = vst.msk [vmem:[%s175 + $0x7c] sm:$0xf] %vm977, %v958
      %1010 = vst.msk [vmem:[%s175 + $0x80] sm:$0xf] %vm977, %v959
      %1011 = vst.msk [vmem:[%s175 + $0x84] sm:$0xf] %vm977, %v960
      %1012 = vst.msk [vmem:[%s175 + $0x88] sm:$0xf] %vm977, %v961
      %1013 = vst.msk [vmem:[%s175 + $0x8c] sm:$0xf] %vm977, %v962
      %1014 = vst.msk [vmem:[%s175 + $0x90] sm:$0xf] %vm977, %v963
      %1015 = vst.msk [vmem:[%s175 + $0x94] sm:$0xf] %vm977, %v964
      %1016 = vst.msk [vmem:[%s175 + $0x98] sm:$0xf] %vm977, %v965
      %1017 = vst.msk [vmem:[%s175 + $0x9c] sm:$0xf] %vm977, %v966
      %1018 = vst.msk [vmem:[%s175 + $0xa0] sm:$0xf] %vm977, %v967
      %1019 = vst.msk [vmem:[%s175 + $0xa4] sm:$0xf] %vm977, %v968
      %1020 = vst.msk [vmem:[%s175 + $0xa8] sm:$0xf] %vm977, %v969
      %1021 = vst.msk [vmem:[%s175 + $0xac] sm:$0xf] %vm977, %v970
      %1022 = vst.msk [vmem:[%s175 + $0xb0] sm:$0xf] %vm977, %v971
      %1023 = vst.msk [vmem:[%s175 + $0xb4] sm:$0xf] %vm977, %v972
      %1024 = vst.msk [vmem:[%s175 + $0xb8] sm:$0xf] %vm977, %v973
      %1025 = vst.msk [vmem:[%s175 + $0xbc] sm:$0xf] %vm977, %v974
      %1026 = vst.msk [vmem:[%s175 + $0xc0] sm:$0xf] %vm977, %v975
      %1027 = vst.msk [vmem:[%s175 + $0xc4] sm:$0xf] %vm977, %v976
      %s1028 = smul.u32 50, %s14
      %p1029 = scmp.lt.s32.totalorder %s1028, 99
      %s1030 = scalar_select %p1029, %s1028, 99
      %s1031 = smul.addr %s1030, 4
      %s1032 = scalar_lea.vmem %s3, %s1031
      // Predicated region
      $region33: #{network_forward.4} parent=31 // pred_check
        %p1033 = pneg %p100
      $region34: #{network_forward.4} parent=31 // pred_check_branch
        %1035 = sbr.rel (%p1033) target = $region36
      $region35: #{network_forward.4} parent=31 // pred_region
        %s1036 = smul.u32 50, %s14
      $region36: #{network_forward.4} parent=31 // pred_fallthru
        _
    $region32: #{network_forward.4} parent=5 // pred_fallthru
      _
    %p1037 = scmp.le.s32.totalorder 2, %s9
    // Predicated region
    $region37: #{network_forward.4} parent=5 // pred_check
      %p1038 = pneg %p1037
    $region38: #{network_forward.4} parent=5 // pred_check_branch
      %1040 = sbr.rel (%p1038) target = $region40
    $region39: #{network_forward.4} parent=5 // pred_region
      %s1041 = ssub.s32 %s9, 2
      // Predicated region
      $region41: #{network_forward.4} parent=39 // pred_check
        %p1042 = pneg %p106
      $region42: #{network_forward.4} parent=39 // pred_check_branch
        %1044 = sbr.rel (%p1042) target = $region44
      $region43: #{network_forward.4} parent=39 // pred_region
        %s1045 = smul.u32 50, %s15
        %p1046 = scmp.lt.s32.totalorder %s1045, 99
        %s1047 = scalar_select %p1046, %s1045, 99
        %s1048 = smul.addr %s1047, 4
        %s1049 = scalar_lea.vmem %s3, %s1048
      $region44: #{network_forward.4} parent=39 // pred_fallthru
        _
    $region40: #{network_forward.4} parent=5 // pred_fallthru
      _
  $region6: #{network_forward.4} parent=0 // loop_footer
    %s13 = sadd.s32 1, %s9
  $region7: #{network_forward.4} parent=0 // loop_footer_branch
    %8 = sbr.rel target = $region3
  $region8: #{network_forward.4} parent=0 // loop_exit
    _

// kernel: network_forward.5
$region0: #{network_forward.5}
  #allocation0 [shape = 'u32[]', space=smem, size = 0x4, offset = 0x4, fixed_abs, tag = 'smem constant byte address 0x4 - core index']
  #allocation1 [shape = 'u32[72,128]{1,0:T(1,128)}', space=vmem, size = 0x9000, scoped, tag = 'internal scratch']
  %s0 = inlined_call_operand.vmem [shape: bf16[162,512], index: 0, kind: input, shape index: {}]
  %s1 = inlined_call_operand.vmem [shape: bf16[512,64], index: 1, kind: input, shape index: {}]
  %s2 = inlined_call_operand.vmem [shape: f32[1,64], index: 2, kind: input, shape index: {}]
  %s3 = inlined_call_operand.vmem [shape: bf16[162,64], index: 3, kind: output, shape index: {}]
  %s4 = sld [smem:[#allocation0]]
  $region22: #{network_forward.5} parent=0
    _
  %s6 = ssub.s32 1, %s4
  %s7 = scalar_select 0, %s6, %s4
  // Predicated region
  $region2: #{network_forward.5} parent=0 // pred_check
    _
  $region3: #{network_forward.5} parent=0 // pred_check_branch
    %9 = sbr.rel (0) target = $region5
  $region4: #{network_forward.5} parent=0 // pred_region
    _
  $region5: #{network_forward.5} parent=0 // pred_fallthru
    _
  // Predicated region
  $region6: #{network_forward.5} parent=0 // pred_check
    _
  $region7: #{network_forward.5} parent=0 // pred_check_branch
    %11 = sbr.rel (0) target = $region9
  $region8: #{network_forward.5} parent=0 // pred_region
    _
  $region9: #{network_forward.5} parent=0 // pred_fallthru
    _
  // Predicated region
  $region10: #{network_forward.5} parent=0 // pred_check
    _
  $region11: #{network_forward.5} parent=0 // pred_check_branch
    %13 = sbr.rel (0) target = $region13
  $region12: #{network_forward.5} parent=0 // pred_region
    _
  $region13: #{network_forward.5} parent=0 // pred_fallthru
    _
  %v14 = vld [vmem:[%s0] sm:$0xff]
  %v15 = vld [vmem:[%s0 + $0x8] sm:$0xff]
  %v16 = vld [vmem:[%s0 + $0x10] sm:$0xff]
  %v17 = vld [vmem:[%s0 + $0x18] sm:$0xff]
  %v18 = vld [vmem:[%s0 + $0x20] sm:$0xff]
  %v19 = vld [vmem:[%s0 + $0x28] sm:$0xff]
  %v20 = vld [vmem:[%s0 + $0x30] sm:$0xff]
  %v21 = vld [vmem:[%s0 + $0x38] sm:$0xff]
  %v22 = vld [vmem:[%s0 + $0x40] sm:$0xff]
  %v23 = vld [vmem:[%s0 + $0x48] sm:$0xff]
  %v24 = vld [vmem:[%s0 + $0x50] sm:$0xff]
  %v25 = vld [vmem:[%s0 + $0x58] sm:$0xff]
  %v26 = vld [vmem:[%s0 + $0x60] sm:$0xff]
  %v27 = vld [vmem:[%s0 + $0x68] sm:$0xff]
  %v28 = vld [vmem:[%s0 + $0x70] sm:$0xff]
  %v29 = vld [vmem:[%s0 + $0x78] sm:$0xff]
  %v30 = vld [vmem:[%s0 + $0x80] sm:$0xff]
  %v31 = vld [vmem:[%s0 + $0x88] sm:$0xff]
  %v32 = vld [vmem:[%s0 + $0x90] sm:$0xff]
  %v33 = vld [vmem:[%s0 + $0x98] sm:$0xff]
  %v34 = vld [vmem:[%s0 + $0xa0] sm:$0xff]
  %v35 = vld [vmem:[%s0 + $0xa8] sm:$0xff]
  %v36 = vld [vmem:[%s0 + $0xb0] sm:$0xff]
  %v37 = vld [vmem:[%s0 + $0xb8] sm:$0xff]
  %v38 = vld [vmem:[%s0 + $0xc0] sm:$0xff]
  %v39 = vld [vmem:[%s0 + $0xc8] sm:$0xff]
  %v40 = vld [vmem:[%s0 + $0xd0] sm:$0xff]
  %v41 = vld [vmem:[%s0 + $0xd8] sm:$0xff]
  %v42 = vld [vmem:[%s0 + $0xe0] sm:$0xff]
  %v43 = vld [vmem:[%s0 + $0xe8] sm:$0xff]
  %v44 = vld [vmem:[%s0 + $0xf0] sm:$0xff]
  %v45 = vld [vmem:[%s0 + $0xf8] sm:$0xff]
  %v46 = vld [vmem:[%s0 + $0x100] sm:$0xff]
  %v47 = vld [vmem:[%s0 + $0x108] sm:$0xff]
  %v48 = vld [vmem:[%s0 + $0x110] sm:$0xff]
  %v49 = vld [vmem:[%s0 + $0x118] sm:$0xff]
  %v50 = vld [vmem:[%s0 + $0x120] sm:$0xff]
  %v51 = vld [vmem:[%s0 + $0x128] sm:$0xff]
  %v52 = vld [vmem:[%s0 + $0x130] sm:$0xff]
  %v53 = vld [vmem:[%s0 + $0x138] sm:$0xff]
  %v54 = vld [vmem:[%s0 + $0x140] sm:$0x11]
  %v55 = vld [vmem:[%s0 + $0x148] sm:$0x11]
  %v56 = vld [vmem:[%s1] sm:$0xf]
  %v57 = vld [vmem:[%s1 + $0x4] sm:$0xf]
  %v58 = vld [vmem:[%s1 + $0x8] sm:$0xf]
  %v59 = vld [vmem:[%s1 + $0xc] sm:$0xf]
  %v60 = vld [vmem:[%s1 + $0x10] sm:$0xf]
  %v61 = vld [vmem:[%s1 + $0x14] sm:$0xf]
  %v62 = vld [vmem:[%s1 + $0x18] sm:$0xf]
  %v63 = vld [vmem:[%s1 + $0x1c] sm:$0xf]
  %v64 = vld [vmem:[%s1 + $0x20] sm:$0xf]
  %v65 = vld [vmem:[%s1 + $0x24] sm:$0xf]
  %v66 = vld [vmem:[%s1 + $0x28] sm:$0xf]
  %v67 = vld [vmem:[%s1 + $0x2c] sm:$0xf]
  %v68 = vld [vmem:[%s1 + $0x30] sm:$0xf]
  %v69 = vld [vmem:[%s1 + $0x34] sm:$0xf]
  %v70 = vld [vmem:[%s1 + $0x38] sm:$0xf]
  %v71 = vld [vmem:[%s1 + $0x3c] sm:$0xf]
  %v72 = vld [vmem:[%s1 + $0x40] sm:$0xf]
  %v73 = vld [vmem:[%s1 + $0x44] sm:$0xf]
  %v74 = vld [vmem:[%s1 + $0x48] sm:$0xf]
  %v75 = vld [vmem:[%s1 + $0x4c] sm:$0xf]
  %v76 = vld [vmem:[%s1 + $0x50] sm:$0xf]
  %v77 = vld [vmem:[%s1 + $0x54] sm:$0xf]
  %v78 = vld [vmem:[%s1 + $0x58] sm:$0xf]
  %v79 = vld [vmem:[%s1 + $0x5c] sm:$0xf]
  %v80 = vld [vmem:[%s1 + $0x60] sm:$0xf]
  %v81 = vld [vmem:[%s1 + $0x64] sm:$0xf]
  %v82 = vld [vmem:[%s1 + $0x68] sm:$0xf]
  %v83 = vld [vmem:[%s1 + $0x6c] sm:$0xf]
  %v84 = vld [vmem:[%s1 + $0x70] sm:$0xf]
  %v85 = vld [vmem:[%s1 + $0x74] sm:$0xf]
  %v86 = vld [vmem:[%s1 + $0x78] sm:$0xf]
  %v87 = vld [vmem:[%s1 + $0x7c] sm:$0xf]
  %v88 = vld [vmem:[%s1 + $0x80] sm:$0xf]
  %v89 = vld [vmem:[%s1 + $0x84] sm:$0xf]
  %v90 = vld [vmem:[%s1 + $0x88] sm:$0xf]
  %v91 = vld [vmem:[%s1 + $0x8c] sm:$0xf]
  %v92 = vld [vmem:[%s1 + $0x90] sm:$0xf]
  %v93 = vld [vmem:[%s1 + $0x94] sm:$0xf]
  %v94 = vld [vmem:[%s1 + $0x98] sm:$0xf]
  %v95 = vld [vmem:[%s1 + $0x9c] sm:$0xf]
  %v96 = vld [vmem:[%s1 + $0xa0] sm:$0xf]
  %v97 = vld [vmem:[%s1 + $0xa4] sm:$0xf]
  %v98 = vld [vmem:[%s1 + $0xa8] sm:$0xf]
  %v99 = vld [vmem:[%s1 + $0xac] sm:$0xf]
  %v100 = vld [vmem:[%s1 + $0xb0] sm:$0xf]
  %v101 = vld [vmem:[%s1 + $0xb4] sm:$0xf]
  %v102 = vld [vmem:[%s1 + $0xb8] sm:$0xf]
  %v103 = vld [vmem:[%s1 + $0xbc] sm:$0xf]
  %v104 = vld [vmem:[%s1 + $0xc0] sm:$0xf]
  %v105 = vld [vmem:[%s1 + $0xc4] sm:$0xf]
  %v106 = vld [vmem:[%s1 + $0xc8] sm:$0xf]
  %v107 = vld [vmem:[%s1 + $0xcc] sm:$0xf]
  %v108 = vld [vmem:[%s1 + $0xd0] sm:$0xf]
  %v109 = vld [vmem:[%s1 + $0xd4] sm:$0xf]
  %v110 = vld [vmem:[%s1 + $0xd8] sm:$0xf]
  %v111 = vld [vmem:[%s1 + $0xdc] sm:$0xf]
  %v112 = vld [vmem:[%s1 + $0xe0] sm:$0xf]
  %v113 = vld [vmem:[%s1 + $0xe4] sm:$0xf]
  %v114 = vld [vmem:[%s1 + $0xe8] sm:$0xf]
  %v115 = vld [vmem:[%s1 + $0xec] sm:$0xf]
  %v116 = vld [vmem:[%s1 + $0xf0] sm:$0xf]
  %v117 = vld [vmem:[%s1 + $0xf4] sm:$0xf]
  %v118 = vld [vmem:[%s1 + $0xf8] sm:$0xf]
  %v119 = vld [vmem:[%s1 + $0xfc] sm:$0xf]
  %v120 = vld [vmem:[%s2] sm:$0x1]
  %v122 = vperm.slane %v120, 0
  %v166 = vunpack.c.l.b16 %v14
  %v167 = vunpack.c.h.b16 %v14
  %v168 = vunpack.c.l.b16 %v15
  %v169 = vunpack.c.h.b16 %v15
  %v170 = vunpack.c.l.b16 %v16
  %v171 = vunpack.c.h.b16 %v16
  %v172 = vunpack.c.l.b16 %v17
  %v173 = vunpack.c.h.b16 %v17
  %v174 = vunpack.c.l.b16 %v18
  %v175 = vunpack.c.h.b16 %v18
  %v176 = vunpack.c.l.b16 %v19
  %v177 = vunpack.c.h.b16 %v19
  %v178 = vunpack.c.l.b16 %v20
  %v179 = vunpack.c.h.b16 %v20
  %v180 = vunpack.c.l.b16 %v21
  %v181 = vunpack.c.h.b16 %v21
  %v182 = vunpack.c.l.b16 %v22
  %v183 = vunpack.c.h.b16 %v22
  %v184 = vunpack.c.l.b16 %v23
  %v185 = vunpack.c.h.b16 %v23
  %v186 = vunpack.c.l.b16 %v24
  %v187 = vunpack.c.h.b16 %v24
  %v188 = vunpack.c.l.b16 %v25
  %v189 = vunpack.c.h.b16 %v25
  %v190 = vunpack.c.l.b16 %v26
  %v191 = vunpack.c.h.b16 %v26
  %v192 = vunpack.c.l.b16 %v27
  %v193 = vunpack.c.h.b16 %v27
  %v194 = vunpack.c.l.b16 %v28
  %v195 = vunpack.c.h.b16 %v28
  %v196 = vunpack.c.l.b16 %v29
  %v197 = vunpack.c.h.b16 %v29
  %v198 = vunpack.c.l.b16 %v30
  %v199 = vunpack.c.h.b16 %v30
  %v200 = vunpack.c.l.b16 %v31
  %v201 = vunpack.c.h.b16 %v31
  %v202 = vunpack.c.l.b16 %v32
  %v203 = vunpack.c.h.b16 %v32
  %v204 = vunpack.c.l.b16 %v33
  %v205 = vunpack.c.h.b16 %v33
  %v206 = vunpack.c.l.b16 %v34
  %v207 = vunpack.c.h.b16 %v34
  %v208 = vunpack.c.l.b16 %v35
  %v209 = vunpack.c.h.b16 %v35
  %v210 = vunpack.c.l.b16 %v36
  %v211 = vunpack.c.h.b16 %v36
  %v212 = vunpack.c.l.b16 %v37
  %v213 = vunpack.c.h.b16 %v37
  %v214 = vunpack.c.l.b16 %v38
  %v215 = vunpack.c.h.b16 %v38
  %v216 = vunpack.c.l.b16 %v39
  %v217 = vunpack.c.h.b16 %v39
  %v218 = vunpack.c.l.b16 %v40
  %v219 = vunpack.c.h.b16 %v40
  %v220 = vunpack.c.l.b16 %v41
  %v221 = vunpack.c.h.b16 %v41
  %v222 = vunpack.c.l.b16 %v42
  %v223 = vunpack.c.h.b16 %v42
  %v224 = vunpack.c.l.b16 %v43
  %v225 = vunpack.c.h.b16 %v43
  %v226 = vunpack.c.l.b16 %v44
  %v227 = vunpack.c.h.b16 %v44
  %v228 = vunpack.c.l.b16 %v45
  %v229 = vunpack.c.h.b16 %v45
  %v230 = vunpack.c.l.b16 %v46
  %v231 = vunpack.c.h.b16 %v46
  %v232 = vunpack.c.l.b16 %v47
  %v233 = vunpack.c.h.b16 %v47
  %v234 = vunpack.c.l.b16 %v48
  %v235 = vunpack.c.h.b16 %v48
  %v236 = vunpack.c.l.b16 %v49
  %v237 = vunpack.c.h.b16 %v49
  %v238 = vunpack.c.l.b16 %v50
  %v239 = vunpack.c.h.b16 %v50
  %v240 = vunpack.c.l.b16 %v51
  %v241 = vunpack.c.h.b16 %v51
  %v242 = vunpack.c.l.b16 %v52
  %v243 = vunpack.c.h.b16 %v52
  %v244 = vunpack.c.l.b16 %v53
  %v245 = vunpack.c.h.b16 %v53
  %v246 = vunpack.c.l.b16 %v54
  %v247 = vunpack.c.h.b16 %v54
  %v248 = vunpack.c.l.b16 %v55
  %v249 = vunpack.c.h.b16 %v55
  %v250 = vpack.c.b16 %v170, %v166
  %v251 = vpack.c.b16 %v171, %v167
  %v252 = vpack.c.b16 %v172, %v168
  %v253 = vpack.c.b16 %v173, %v169
  %v254 = vpack.c.b16 %v178, %v174
  %v255 = vpack.c.b16 %v179, %v175
  %v256 = vpack.c.b16 %v180, %v176
  %v257 = vpack.c.b16 %v181, %v177
  %v258 = vpack.c.b16 %v186, %v182
  %v259 = vpack.c.b16 %v187, %v183
  %v260 = vpack.c.b16 %v188, %v184
  %v261 = vpack.c.b16 %v189, %v185
  %v262 = vpack.c.b16 %v194, %v190
  %v263 = vpack.c.b16 %v195, %v191
  %v264 = vpack.c.b16 %v196, %v192
  %v265 = vpack.c.b16 %v197, %v193
  %v266 = vpack.c.b16 %v202, %v198
  %v267 = vpack.c.b16 %v203, %v199
  %v268 = vpack.c.b16 %v204, %v200
  %v269 = vpack.c.b16 %v205, %v201
  %v270 = vpack.c.b16 %v210, %v206
  %v271 = vpack.c.b16 %v211, %v207
  %v272 = vpack.c.b16 %v212, %v208
  %v273 = vpack.c.b16 %v213, %v209
  %v274 = vpack.c.b16 %v218, %v214
  %v275 = vpack.c.b16 %v219, %v215
  %v276 = vpack.c.b16 %v220, %v216
  %v277 = vpack.c.b16 %v221, %v217
  %v278 = vpack.c.b16 %v226, %v222
  %v279 = vpack.c.b16 %v227, %v223
  %v280 = vpack.c.b16 %v228, %v224
  %v281 = vpack.c.b16 %v229, %v225
  %v282 = vpack.c.b16 %v234, %v230
  %v283 = vpack.c.b16 %v235, %v231
  %v284 = vpack.c.b16 %v236, %v232
  %v285 = vpack.c.b16 %v237, %v233
  %v286 = vpack.c.b16 %v242, %v238
  %v287 = vpack.c.b16 %v243, %v239
  %v288 = vpack.c.b16 %v244, %v240
  %v289 = vpack.c.b16 %v245, %v241
  %v290 = vpack.c.b16 %v246, %v246
  %v291 = vpack.c.b16 %v247, %v247
  %v292 = vpack.c.b16 %v248, %v248
  %v293 = vpack.c.b16 %v249, %v249
  %v402 = vunpack.c.l.b16 %v56
  %v403 = vunpack.c.l.b16 %v57
  %v404 = vunpack.c.l.b16 %v58
  %v405 = vunpack.c.l.b16 %v59
  %v406 = vunpack.c.l.b16 %v60
  %v407 = vunpack.c.l.b16 %v61
  %v408 = vunpack.c.l.b16 %v62
  %v409 = vunpack.c.l.b16 %v63
  %v410 = vunpack.c.l.b16 %v64
  %v411 = vunpack.c.l.b16 %v65
  %v412 = vunpack.c.l.b16 %v66
  %v413 = vunpack.c.l.b16 %v67
  %v414 = vunpack.c.l.b16 %v68
  %v415 = vunpack.c.l.b16 %v69
  %v416 = vunpack.c.l.b16 %v70
  %v417 = vunpack.c.l.b16 %v71
  %v418 = vunpack.c.l.b16 %v72
  %v419 = vunpack.c.l.b16 %v73
  %v420 = vunpack.c.l.b16 %v74
  %v421 = vunpack.c.l.b16 %v75
  %v422 = vunpack.c.l.b16 %v76
  %v423 = vunpack.c.l.b16 %v77
  %v424 = vunpack.c.l.b16 %v78
  %v425 = vunpack.c.l.b16 %v79
  %v426 = vunpack.c.l.b16 %v80
  %v427 = vunpack.c.l.b16 %v81
  %v428 = vunpack.c.l.b16 %v82
  %v429 = vunpack.c.l.b16 %v83
  %v430 = vunpack.c.l.b16 %v84
  %v431 = vunpack.c.l.b16 %v85
  %v432 = vunpack.c.l.b16 %v86
  %v433 = vunpack.c.l.b16 %v87
  %v434 = vunpack.c.l.b16 %v88
  %v435 = vunpack.c.l.b16 %v89
  %v436 = vunpack.c.l.b16 %v90
  %v437 = vunpack.c.l.b16 %v91
  %v438 = vunpack.c.l.b16 %v92
  %v439 = vunpack.c.l.b16 %v93
  %v440 = vunpack.c.l.b16 %v94
  %v441 = vunpack.c.l.b16 %v95
  %v442 = vunpack.c.l.b16 %v96
  %v443 = vunpack.c.l.b16 %v97
  %v444 = vunpack.c.l.b16 %v98
  %v445 = vunpack.c.l.b16 %v99
  %v446 = vunpack.c.l.b16 %v100
  %v447 = vunpack.c.l.b16 %v101
  %v448 = vunpack.c.l.b16 %v102
  %v449 = vunpack.c.l.b16 %v103
  %v450 = vunpack.c.l.b16 %v104
  %v451 = vunpack.c.l.b16 %v105
  %v452 = vunpack.c.l.b16 %v106
  %v453 = vunpack.c.l.b16 %v107
  %v454 = vunpack.c.l.b16 %v108
  %v455 = vunpack.c.l.b16 %v109
  %v456 = vunpack.c.l.b16 %v110
  %v457 = vunpack.c.l.b16 %v111
  %v458 = vunpack.c.l.b16 %v112
  %v459 = vunpack.c.l.b16 %v113
  %v460 = vunpack.c.l.b16 %v114
  %v461 = vunpack.c.l.b16 %v115
  %v462 = vunpack.c.l.b16 %v116
  %v463 = vunpack.c.l.b16 %v117
  %v464 = vunpack.c.l.b16 %v118
  %v465 = vunpack.c.l.b16 %v119
  %v466 = vpack.c.b16 %v403, %v402
  %v467 = vpack.c.b16 %v405, %v404
  %v468 = vpack.c.b16 %v407, %v406
  %v469 = vpack.c.b16 %v409, %v408
  %v470 = vpack.c.b16 %v411, %v410
  %v471 = vpack.c.b16 %v413, %v412
  %v472 = vpack.c.b16 %v415, %v414
  %v473 = vpack.c.b16 %v417, %v416
  %v474 = vpack.c.b16 %v419, %v418
  %v475 = vpack.c.b16 %v421, %v420
  %v476 = vpack.c.b16 %v423, %v422
  %v477 = vpack.c.b16 %v425, %v424
  %v478 = vpack.c.b16 %v427, %v426
  %v479 = vpack.c.b16 %v429, %v428
  %v480 = vpack.c.b16 %v431, %v430
  %v481 = vpack.c.b16 %v433, %v432
  %v482 = vpack.c.b16 %v435, %v434
  %v483 = vpack.c.b16 %v437, %v436
  %v484 = vpack.c.b16 %v439, %v438
  %v485 = vpack.c.b16 %v441, %v440
  %v486 = vpack.c.b16 %v443, %v442
  %v487 = vpack.c.b16 %v445, %v444
  %v488 = vpack.c.b16 %v447, %v446
  %v489 = vpack.c.b16 %v449, %v448
  %v490 = vpack.c.b16 %v451, %v450
  %v491 = vpack.c.b16 %v453, %v452
  %v492 = vpack.c.b16 %v455, %v454
  %v493 = vpack.c.b16 %v457, %v456
  %v494 = vpack.c.b16 %v459, %v458
  %v495 = vpack.c.b16 %v461, %v460
  %v496 = vpack.c.b16 %v463, %v462
  %v497 = vpack.c.b16 %v465, %v464
  %530 = vmatpush.bf16.msra.mxu0 %v473
  %531 = vmatpush.bf16.msra.mxu0 %v472
  %532 = vmatpush.bf16.msra.mxu0 %v471
  %533 = vmatpush.bf16.msra.mxu0 %v470
  %534 = vmatpush.bf16.msra.mxu0 %v469
  %535 = vmatpush.bf16.msra.mxu0 %v468
  %536 = vmatpush.bf16.msra.mxu0 %v467
  %537 = vmatpush.bf16.msra.mxu0 %v466
  %538 = vmatmul.bf16.gmra.mxu0 %v250
  %v539 = vpop.f32.mrf.mxu0
  %v540 = vadd.f32 %v122, %v539
  %v541 = vpop.f32.mrf.mxu0
  %v542 = vadd.f32 %v122, %v541
  %543 = vmatmul.bf16.gmra.mxu0 %v254
  %v544 = vpop.f32.mrf.mxu0
  %v545 = vadd.f32 %v122, %v544
  %v546 = vpop.f32.mrf.mxu0
  %v547 = vadd.f32 %v122, %v546
  %548 = vmatmul.bf16.gmra.mxu0 %v258
  %v549 = vpop.f32.mrf.mxu0
  %v550 = vadd.f32 %v122, %v549
  %v551 = vpop.f32.mrf.mxu0
  %v552 = vadd.f32 %v122, %v551
  %553 = vmatmul.bf16.gmra.mxu0 %v262
  %v554 = vpop.f32.mrf.mxu0
  %v555 = vadd.f32 %v122, %v554
  %v556 = vpop.f32.mrf.mxu0
  %v557 = vadd.f32 %v122, %v556
  %558 = vmatmul.bf16.gmra.mxu0 %v266
  %v559 = vpop.f32.mrf.mxu0
  %v560 = vadd.f32 %v122, %v559
  %v561 = vpop.f32.mrf.mxu0
  %v562 = vadd.f32 %v122, %v561
  %563 = vmatmul.bf16.gmra.mxu0 %v270
  %v564 = vpop.f32.mrf.mxu0
  %v565 = vadd.f32 %v122, %v564
  %v566 = vpop.f32.mrf.mxu0
  %v567 = vadd.f32 %v122, %v566
  %568 = vmatmul.bf16.gmra.mxu0 %v274
  %v569 = vpop.f32.mrf.mxu0
  %v570 = vadd.f32 %v122, %v569
  %v571 = vpop.f32.mrf.mxu0
  %v572 = vadd.f32 %v122, %v571
  %573 = vmatmul.bf16.gmra.mxu0 %v278
  %v574 = vpop.f32.mrf.mxu0
  %v575 = vadd.f32 %v122, %v574
  %v576 = vpop.f32.mrf.mxu0
  %v577 = vadd.f32 %v122, %v576
  %578 = vmatmul.bf16.gmra.mxu0 %v282
  %v579 = vpop.f32.mrf.mxu0
  %v580 = vadd.f32 %v122, %v579
  %v581 = vpop.f32.mrf.mxu0
  %v582 = vadd.f32 %v122, %v581
  %583 = vmatmul.bf16.gmra.mxu0 %v286
  %v584 = vpop.f32.mrf.mxu0
  %v585 = vadd.f32 %v122, %v584
  %v586 = vpop.f32.mrf.mxu0
  %v587 = vadd.f32 %v122, %v586
  %588 = vmatmul.bf16.gmra.mxu0 %v290
  %v589 = vpop.f32.mrf.mxu0
  %v590 = vadd.f32 %v122, %v589
  %v591 = vpop.f32.mrf.mxu0
  %592 = vdwg.mxu0
  %593 = vmatpush.bf16.msra.mxu0 %v481
  %594 = vmatpush.bf16.msra.mxu0 %v480
  %595 = vmatpush.bf16.msra.mxu0 %v479
  %596 = vmatpush.bf16.msra.mxu0 %v478
  %597 = vmatpush.bf16.msra.mxu0 %v477
  %598 = vmatpush.bf16.msra.mxu0 %v476
  %599 = vmatpush.bf16.msra.mxu0 %v475
  %600 = vmatpush.bf16.msra.mxu0 %v474
  %601 = vmatmul.bf16.gmra.mxu0 %v251
  %v602 = vpop.f32.mrf.mxu0
  %v603 = vadd.f32 %v540, %v602
  %v604 = vpop.f32.mrf.mxu0
  %v605 = vadd.f32 %v542, %v604
  %606 = vmatmul.bf16.gmra.mxu0 %v255
  %v607 = vpop.f32.mrf.mxu0
  %v608 = vadd.f32 %v545, %v607
  %v609 = vpop.f32.mrf.mxu0
  %v610 = vadd.f32 %v547, %v609
  %611 = vmatmul.bf16.gmra.mxu0 %v259
  %v612 = vpop.f32.mrf.mxu0
  %v613 = vadd.f32 %v550, %v612
  %v614 = vpop.f32.mrf.mxu0
  %v615 = vadd.f32 %v552, %v614
  %616 = vmatmul.bf16.gmra.mxu0 %v263
  %v617 = vpop.f32.mrf.mxu0
  %v618 = vadd.f32 %v555, %v617
  %v619 = vpop.f32.mrf.mxu0
  %v620 = vadd.f32 %v557, %v619
  %621 = vmatmul.bf16.gmra.mxu0 %v267
  %v622 = vpop.f32.mrf.mxu0
  %v623 = vadd.f32 %v560, %v622
  %v624 = vpop.f32.mrf.mxu0
  %v625 = vadd.f32 %v562, %v624
  %626 = vmatmul.bf16.gmra.mxu0 %v271
  %v627 = vpop.f32.mrf.mxu0
  %v628 = vadd.f32 %v565, %v627
  %v629 = vpop.f32.mrf.mxu0
  %v630 = vadd.f32 %v567, %v629
  %631 = vmatmul.bf16.gmra.mxu0 %v275
  %v632 = vpop.f32.mrf.mxu0
  %v633 = vadd.f32 %v570, %v632
  %v634 = vpop.f32.mrf.mxu0
  %v635 = vadd.f32 %v572, %v634
  %636 = vmatmul.bf16.gmra.mxu0 %v279
  %v637 = vpop.f32.mrf.mxu0
  %v638 = vadd.f32 %v575, %v637
  %v639 = vpop.f32.mrf.mxu0
  %v640 = vadd.f32 %v577, %v639
  %641 = vmatmul.bf16.gmra.mxu0 %v283
  %v642 = vpop.f32.mrf.mxu0
  %v643 = vadd.f32 %v580, %v642
  %v644 = vpop.f32.mrf.mxu0
  %v645 = vadd.f32 %v582, %v644
  %646 = vmatmul.bf16.gmra.mxu0 %v287
  %v647 = vpop.f32.mrf.mxu0
  %v648 = vadd.f32 %v585, %v647
  %v649 = vpop.f32.mrf.mxu0
  %v650 = vadd.f32 %v587, %v649
  %651 = vmatmul.bf16.gmra.mxu0 %v291
  %v652 = vpop.f32.mrf.mxu0
  %v653 = vadd.f32 %v590, %v652
  %v654 = vpop.f32.mrf.mxu0
  %655 = vdwg.mxu0
  %656 = vmatpush.bf16.msra.mxu0 %v489
  %657 = vmatpush.bf16.msra.mxu0 %v488
  %658 = vmatpush.bf16.msra.mxu0 %v487
  %659 = vmatpush.bf16.msra.mxu0 %v486
  %660 = vmatpush.bf16.msra.mxu0 %v485
  %661 = vmatpush.bf16.msra.mxu0 %v484
  %662 = vmatpush.bf16.msra.mxu0 %v483
  %663 = vmatpush.bf16.msra.mxu0 %v482
  %664 = vmatmul.bf16.gmra.mxu0 %v252
  %v665 = vpop.f32.mrf.mxu0
  %v666 = vadd.f32 %v603, %v665
  %v667 = vpop.f32.mrf.mxu0
  %v668 = vadd.f32 %v605, %v667
  %669 = vmatmul.bf16.gmra.mxu0 %v256
  %v670 = vpop.f32.mrf.mxu0
  %v671 = vadd.f32 %v608, %v670
  %v672 = vpop.f32.mrf.mxu0
  %v673 = vadd.f32 %v610, %v672
  %674 = vmatmul.bf16.gmra.mxu0 %v260
  %v675 = vpop.f32.mrf.mxu0
  %v676 = vadd.f32 %v613, %v675
  %v677 = vpop.f32.mrf.mxu0
  %v678 = vadd.f32 %v615, %v677
  %679 = vmatmul.bf16.gmra.mxu0 %v264
  %v680 = vpop.f32.mrf.mxu0
  %v681 = vadd.f32 %v618, %v680
  %v682 = vpop.f32.mrf.mxu0
  %v683 = vadd.f32 %v620, %v682
  %684 = vmatmul.bf16.gmra.mxu0 %v268
  %v685 = vpop.f32.mrf.mxu0
  %v686 = vadd.f32 %v623, %v685
  %v687 = vpop.f32.mrf.mxu0
  %v688 = vadd.f32 %v625, %v687
  %689 = vmatmul.bf16.gmra.mxu0 %v272
  %v690 = vpop.f32.mrf.mxu0
  %v691 = vadd.f32 %v628, %v690
  %v692 = vpop.f32.mrf.mxu0
  %v693 = vadd.f32 %v630, %v692
  %694 = vmatmul.bf16.gmra.mxu0 %v276
  %v695 = vpop.f32.mrf.mxu0
  %v696 = vadd.f32 %v633, %v695
  %v697 = vpop.f32.mrf.mxu0
  %v698 = vadd.f32 %v635, %v697
  %699 = vmatmul.bf16.gmra.mxu0 %v280
  %v700 = vpop.f32.mrf.mxu0
  %v701 = vadd.f32 %v638, %v700
  %v702 = vpop.f32.mrf.mxu0
  %v703 = vadd.f32 %v640, %v702
  %704 = vmatmul.bf16.gmra.mxu0 %v284
  %v705 = vpop.f32.mrf.mxu0
  %v706 = vadd.f32 %v643, %v705
  %v707 = vpop.f32.mrf.mxu0
  %v708 = vadd.f32 %v645, %v707
  %709 = vmatmul.bf16.gmra.mxu0 %v288
  %v710 = vpop.f32.mrf.mxu0
  %v711 = vadd.f32 %v648, %v710
  %v712 = vpop.f32.mrf.mxu0
  %v713 = vadd.f32 %v650, %v712
  %714 = vmatmul.bf16.gmra.mxu0 %v292
  %v715 = vpop.f32.mrf.mxu0
  %v716 = vadd.f32 %v653, %v715
  %v717 = vpop.f32.mrf.mxu0
  %718 = vdwg.mxu0
  %719 = vmatpush.bf16.msra.mxu0 %v497
  %720 = vmatpush.bf16.msra.mxu0 %v496
  %721 = vmatpush.bf16.msra.mxu0 %v495
  %722 = vmatpush.bf16.msra.mxu0 %v494
  %723 = vmatpush.bf16.msra.mxu0 %v493
  %724 = vmatpush.bf16.msra.mxu0 %v492
  %725 = vmatpush.bf16.msra.mxu0 %v491
  %726 = vmatpush.bf16.msra.mxu0 %v490
  %727 = vmatmul.bf16.gmra.mxu0 %v253
  %v728 = vpop.f32.mrf.mxu0
  %v729 = vadd.f32 %v666, %v728
  %v730 = vpop.f32.mrf.mxu0
  %v731 = vadd.f32 %v668, %v730
  %732 = vmatmul.bf16.gmra.mxu0 %v257
  %v733 = vpop.f32.mrf.mxu0
  %v734 = vadd.f32 %v671, %v733
  %v735 = vpop.f32.mrf.mxu0
  %v736 = vadd.f32 %v673, %v735
  %737 = vmatmul.bf16.gmra.mxu0 %v261
  %v738 = vpop.f32.mrf.mxu0
  %v739 = vadd.f32 %v676, %v738
  %v740 = vpop.f32.mrf.mxu0
  %v741 = vadd.f32 %v678, %v740
  %742 = vmatmul.bf16.gmra.mxu0 %v265
  %v743 = vpop.f32.mrf.mxu0
  %v744 = vadd.f32 %v681, %v743
  %v745 = vpop.f32.mrf.mxu0
  %v746 = vadd.f32 %v683, %v745
  %747 = vmatmul.bf16.gmra.mxu0 %v269
  %v748 = vpop.f32.mrf.mxu0
  %v749 = vadd.f32 %v686, %v748
  %v750 = vpop.f32.mrf.mxu0
  %v751 = vadd.f32 %v688, %v750
  %752 = vmatmul.bf16.gmra.mxu0 %v273
  %v753 = vpop.f32.mrf.mxu0
  %v754 = vadd.f32 %v691, %v753
  %v755 = vpop.f32.mrf.mxu0
  %v756 = vadd.f32 %v693, %v755
  %757 = vmatmul.bf16.gmra.mxu0 %v277
  %v758 = vpop.f32.mrf.mxu0
  %v759 = vadd.f32 %v696, %v758
  %v760 = vpop.f32.mrf.mxu0
  %v761 = vadd.f32 %v698, %v760
  %762 = vmatmul.bf16.gmra.mxu0 %v281
  %v763 = vpop.f32.mrf.mxu0
  %v764 = vadd.f32 %v701, %v763
  %v765 = vpop.f32.mrf.mxu0
  %v766 = vadd.f32 %v703, %v765
  %767 = vmatmul.bf16.gmra.mxu0 %v285
  %v768 = vpop.f32.mrf.mxu0
  %v769 = vadd.f32 %v706, %v768
  %v770 = vpop.f32.mrf.mxu0
  %v771 = vadd.f32 %v708, %v770
  %772 = vmatmul.bf16.gmra.mxu0 %v289
  %v773 = vpop.f32.mrf.mxu0
  %v774 = vadd.f32 %v711, %v773
  %v775 = vpop.f32.mrf.mxu0
  %v776 = vadd.f32 %v713, %v775
  %777 = vmatmul.bf16.gmra.mxu0 %v293
  %v778 = vpop.f32.mrf.mxu0
  %v779 = vadd.f32 %v716, %v778
  %v780 = vpop.f32.mrf.mxu0
  %781 = vdwg.mxu0
  %v782 = vmax.f32 %v729, 0.0
  %v783 = vmax.f32 %v731, 0.0
  %v784 = vmax.f32 %v734, 0.0
  %v785 = vmax.f32 %v736, 0.0
  %v786 = vmax.f32 %v739, 0.0
  %v787 = vmax.f32 %v741, 0.0
  %v788 = vmax.f32 %v744, 0.0
  %v789 = vmax.f32 %v746, 0.0
  %v790 = vmax.f32 %v749, 0.0
  %v791 = vmax.f32 %v751, 0.0
  %v792 = vmax.f32 %v754, 0.0
  %v793 = vmax.f32 %v756, 0.0
  %v794 = vmax.f32 %v759, 0.0
  %v795 = vmax.f32 %v761, 0.0
  %v796 = vmax.f32 %v764, 0.0
  %v797 = vmax.f32 %v766, 0.0
  %v798 = vmax.f32 %v769, 0.0
  %v799 = vmax.f32 %v771, 0.0
  %v800 = vmax.f32 %v774, 0.0
  %v801 = vmax.f32 %v776, 0.0
  %v802 = vmax.f32 %v779, 0.0
  %v803 = vpack.c.bf16 %v782, %v782
  %v804 = vpack.c.bf16 %v783, %v783
  %v805 = vpack.c.bf16 %v784, %v784
  %v806 = vpack.c.bf16 %v785, %v785
  %v807 = vpack.c.bf16 %v786, %v786
  %v808 = vpack.c.bf16 %v787, %v787
  %v809 = vpack.c.bf16 %v788, %v788
  %v810 = vpack.c.bf16 %v789, %v789
  %v811 = vpack.c.bf16 %v790, %v790
  %v812 = vpack.c.bf16 %v791, %v791
  %v813 = vpack.c.bf16 %v792, %v792
  %v814 = vpack.c.bf16 %v793, %v793
  %v815 = vpack.c.bf16 %v794, %v794
  %v816 = vpack.c.bf16 %v795, %v795
  %v817 = vpack.c.bf16 %v796, %v796
  %v818 = vpack.c.bf16 %v797, %v797
  %v819 = vpack.c.bf16 %v798, %v798
  %v820 = vpack.c.bf16 %v799, %v799
  %v821 = vpack.c.bf16 %v800, %v800
  %v822 = vpack.c.bf16 %v801, %v801
  %v823 = vpack.c.bf16 %v802, %v802
  %vm824 = vcmask 519168
  %825 = vst.msk [vmem:[%s3] sm:$0xf] %vm824, %v803
  %826 = vst.msk [vmem:[%s3 + $0x4] sm:$0xf] %vm824, %v804
  %827 = vst.msk [vmem:[%s3 + $0x8] sm:$0xf] %vm824, %v805
  %828 = vst.msk [vmem:[%s3 + $0xc] sm:$0xf] %vm824, %v806
  %829 = vst.msk [vmem:[%s3 + $0x10] sm:$0xf] %vm824, %v807
  %830 = vst.msk [vmem:[%s3 + $0x14] sm:$0xf] %vm824, %v808
  %831 = vst.msk [vmem:[%s3 + $0x18] sm:$0xf] %vm824, %v809
  %832 = vst.msk [vmem:[%s3 + $0x1c] sm:$0xf] %vm824, %v810
  %833 = vst.msk [vmem:[%s3 + $0x20] sm:$0xf] %vm824, %v811
  %834 = vst.msk [vmem:[%s3 + $0x24] sm:$0xf] %vm824, %v812
  %835 = vst.msk [vmem:[%s3 + $0x28] sm:$0xf] %vm824, %v813
  %836 = vst.msk [vmem:[%s3 + $0x2c] sm:$0xf] %vm824, %v814
  %837 = vst.msk [vmem:[%s3 + $0x30] sm:$0xf] %vm824, %v815
  %838 = vst.msk [vmem:[%s3 + $0x34] sm:$0xf] %vm824, %v816
  %839 = vst.msk [vmem:[%s3 + $0x38] sm:$0xf] %vm824, %v817
  %840 = vst.msk [vmem:[%s3 + $0x3c] sm:$0xf] %vm824, %v818
  %841 = vst.msk [vmem:[%s3 + $0x40] sm:$0xf] %vm824, %v819
  %842 = vst.msk [vmem:[%s3 + $0x44] sm:$0xf] %vm824, %v820
  %843 = vst.msk [vmem:[%s3 + $0x48] sm:$0xf] %vm824, %v821
  %844 = vst.msk [vmem:[%s3 + $0x4c] sm:$0xf] %vm824, %v822
  %vm845 = vcmask 516096
  %846 = vst.msk [vmem:[%s3 + $0x50] sm:$0x1] %vm845, %v823
  // Predicated region
  $region14: #{network_forward.5} parent=0 // pred_check
    _
  $region15: #{network_forward.5} parent=0 // pred_check_branch
    %848 = sbr.rel (0) target = $region17
  $region16: #{network_forward.5} parent=0 // pred_region
    _
  $region17: #{network_forward.5} parent=0 // pred_fallthru
    _
  // Predicated region
  $region18: #{network_forward.5} parent=0 // pred_check
    _
  $region19: #{network_forward.5} parent=0 // pred_check_branch
    %850 = sbr.rel (0) target = $region21
  $region20: #{network_forward.5} parent=0 // pred_region
    _
  $region21: #{network_forward.5} parent=0 // pred_fallthru
    _

// kernel: network_forward.6
$region0: #{network_forward.6}
  #allocation0 [shape = 'u32[]', space=smem, size = 0x4, offset = 0x4, fixed_abs, tag = 'smem constant byte address 0x4 - core index']
  #allocation1 [shape = 'u32[72,128]{1,0:T(1,128)}', space=vmem, size = 0x9000, scoped, tag = 'internal scratch']
  %s0 = inlined_call_operand.vmem [shape: bf16[98,576], index: 0, kind: input, shape index: {}]
  %s1 = inlined_call_operand.vmem [shape: bf16[576,64], index: 1, kind: input, shape index: {}]
  %s2 = inlined_call_operand.vmem [shape: f32[1,64], index: 2, kind: input, shape index: {}]
  %s3 = inlined_call_operand.vmem [shape: bf16[98,64], index: 3, kind: output, shape index: {}]
  %s4 = sld [smem:[#allocation0]]
  $region22: #{network_forward.6} parent=0
    _
  %s6 = ssub.s32 1, %s4
  %s7 = scalar_select 0, %s6, %s4
  // Predicated region
  $region2: #{network_forward.6} parent=0 // pred_check
    _
  $region3: #{network_forward.6} parent=0 // pred_check_branch
    %9 = sbr.rel (0) target = $region5
  $region4: #{network_forward.6} parent=0 // pred_region
    _
  $region5: #{network_forward.6} parent=0 // pred_fallthru
    _
  // Predicated region
  $region6: #{network_forward.6} parent=0 // pred_check
    _
  $region7: #{network_forward.6} parent=0 // pred_check_branch
    %11 = sbr.rel (0) target = $region9
  $region8: #{network_forward.6} parent=0 // pred_region
    _
  $region9: #{network_forward.6} parent=0 // pred_fallthru
    _
  // Predicated region
  $region10: #{network_forward.6} parent=0 // pred_check
    _
  $region11: #{network_forward.6} parent=0 // pred_check_branch
    %13 = sbr.rel (0) target = $region13
  $region12: #{network_forward.6} parent=0 // pred_region
    _
  $region13: #{network_forward.6} parent=0 // pred_fallthru
    _
  %v15 = vld [vmem:[%s0] sm:$0xff]
  %v16 = vld [vmem:[%s0 + $0x8] sm:$0xff]
  %v17 = vld [vmem:[%s0 + $0x10] sm:$0xf]
  %v18 = vld [vmem:[%s0 + $0x14] sm:$0xff]
  %v19 = vld [vmem:[%s0 + $0x1c] sm:$0xff]
  %v20 = vld [vmem:[%s0 + $0x24] sm:$0xf]
  %v21 = vld [vmem:[%s0 + $0x28] sm:$0xff]
  %v22 = vld [vmem:[%s0 + $0x30] sm:$0xff]
  %v23 = vld [vmem:[%s0 + $0x38] sm:$0xf]
  %v24 = vld [vmem:[%s0 + $0x3c] sm:$0xff]
  %v25 = vld [vmem:[%s0 + $0x44] sm:$0xff]
  %v26 = vld [vmem:[%s0 + $0x4c] sm:$0xf]
  %v27 = vld [vmem:[%s0 + $0x50] sm:$0xff]
  %v28 = vld [vmem:[%s0 + $0x58] sm:$0xff]
  %v29 = vld [vmem:[%s0 + $0x60] sm:$0xf]
  %v30 = vld [vmem:[%s0 + $0x64] sm:$0xff]
  %v31 = vld [vmem:[%s0 + $0x6c] sm:$0xff]
  %v32 = vld [vmem:[%s0 + $0x74] sm:$0xf]
  %v33 = vld [vmem:[%s0 + $0x78] sm:$0xff]
  %v34 = vld [vmem:[%s0 + $0x80] sm:$0xff]
  %v35 = vld [vmem:[%s0 + $0x88] sm:$0xf]
  %v36 = vld [vmem:[%s0 + $0x8c] sm:$0xff]
  %v37 = vld [vmem:[%s0 + $0x94] sm:$0xff]
  %v38 = vld [vmem:[%s0 + $0x9c] sm:$0xf]
  %v39 = vld [vmem:[%s0 + $0xa0] sm:$0xff]
  %v40 = vld [vmem:[%s0 + $0xa8] sm:$0xff]
  %v41 = vld [vmem:[%s0 + $0xb0] sm:$0xf]
  %v42 = vld [vmem:[%s0 + $0xb4] sm:$0xff]
  %v43 = vld [vmem:[%s0 + $0xbc] sm:$0xff]
  %v44 = vld [vmem:[%s0 + $0xc4] sm:$0xf]
  %v45 = vld [vmem:[%s0 + $0xc8] sm:$0xff]
  %v46 = vld [vmem:[%s0 + $0xd0] sm:$0xff]
  %v47 = vld [vmem:[%s0 + $0xd8] sm:$0xf]
  %v48 = vld [vmem:[%s0 + $0xdc] sm:$0xff]
  %v49 = vld [vmem:[%s0 + $0xe4] sm:$0xff]
  %v50 = vld [vmem:[%s0 + $0xec] sm:$0xf]
  %v51 = vld [vmem:[%s0 + $0xf0] sm:$0x11]
  %v52 = vld [vmem:[%s0 + $0xf8] sm:$0x11]
  %v53 = vld [vmem:[%s0 + $0x100] sm:$0x1]
  %v54 = vld [vmem:[%s1] sm:$0xf]
  %v55 = vld [vmem:[%s1 + $0x4] sm:$0xf]
  %v56 = vld [vmem:[%s1 + $0x8] sm:$0xf]
  %v57 = vld [vmem:[%s1 + $0xc] sm:$0xf]
  %v58 = vld [vmem:[%s1 + $0x10] sm:$0xf]
  %v59 = vld [vmem:[%s1 + $0x14] sm:$0xf]
  %v60 = vld [vmem:[%s1 + $0x18] sm:$0xf]
  %v61 = vld [vmem:[%s1 + $0x1c] sm:$0xf]
  %v62 = vld [vmem:[%s1 + $0x20] sm:$0xf]
  %v63 = vld [vmem:[%s1 + $0x24] sm:$0xf]
  %v64 = vld [vmem:[%s1 + $0x28] sm:$0xf]
  %v65 = vld [vmem:[%s1 + $0x2c] sm:$0xf]
  %v66 = vld [vmem:[%s1 + $0x30] sm:$0xf]
  %v67 = vld [vmem:[%s1 + $0x34] sm:$0xf]
  %v68 = vld [vmem:[%s1 + $0x38] sm:$0xf]
  %v69 = vld [vmem:[%s1 + $0x3c] sm:$0xf]
  %v70 = vld [vmem:[%s1 + $0x40] sm:$0xf]
  %v71 = vld [vmem:[%s1 + $0x44] sm:$0xf]
  %v72 = vld [vmem:[%s1 + $0x48] sm:$0xf]
  %v73 = vld [vmem:[%s1 + $0x4c] sm:$0xf]
  %v74 = vld [vmem:[%s1 + $0x50] sm:$0xf]
  %v75 = vld [vmem:[%s1 + $0x54] sm:$0xf]
  %v76 = vld [vmem:[%s1 + $0x58] sm:$0xf]
  %v77 = vld [vmem:[%s1 + $0x5c] sm:$0xf]
  %v78 = vld [vmem:[%s1 + $0x60] sm:$0xf]
  %v79 = vld [vmem:[%s1 + $0x64] sm:$0xf]
  %v80 = vld [vmem:[%s1 + $0x68] sm:$0xf]
  %v81 = vld [vmem:[%s1 + $0x6c] sm:$0xf]
  %v82 = vld [vmem:[%s1 + $0x70] sm:$0xf]
  %v83 = vld [vmem:[%s1 + $0x74] sm:$0xf]
  %v84 = vld [vmem:[%s1 + $0x78] sm:$0xf]
  %v85 = vld [vmem:[%s1 + $0x7c] sm:$0xf]
  %v86 = vld [vmem:[%s1 + $0x80] sm:$0xf]
  %v87 = vld [vmem:[%s1 + $0x84] sm:$0xf]
  %v88 = vld [vmem:[%s1 + $0x88] sm:$0xf]
  %v89 = vld [vmem:[%s1 + $0x8c] sm:$0xf]
  %v90 = vld [vmem:[%s1 + $0x90] sm:$0xf]
  %v91 = vld [vmem:[%s1 + $0x94] sm:$0xf]
  %v92 = vld [vmem:[%s1 + $0x98] sm:$0xf]
  %v93 = vld [vmem:[%s1 + $0x9c] sm:$0xf]
  %v94 = vld [vmem:[%s1 + $0xa0] sm:$0xf]
  %v95 = vld [vmem:[%s1 + $0xa4] sm:$0xf]
  %v96 = vld [vmem:[%s1 + $0xa8] sm:$0xf]
  %v97 = vld [vmem:[%s1 + $0xac] sm:$0xf]
  %v98 = vld [vmem:[%s1 + $0xb0] sm:$0xf]
  %v99 = vld [vmem:[%s1 + $0xb4] sm:$0xf]
  %v100 = vld [vmem:[%s1 + $0xb8] sm:$0xf]
  %v101 = vld [vmem:[%s1 + $0xbc] sm:$0xf]
  %v102 = vld [vmem:[%s1 + $0xc0] sm:$0xf]
  %v103 = vld [vmem:[%s1 + $0xc4] sm:$0xf]
  %v104 = vld [vmem:[%s1 + $0xc8] sm:$0xf]
  %v105 = vld [vmem:[%s1 + $0xcc] sm:$0xf]
  %v106 = vld [vmem:[%s1 + $0xd0] sm:$0xf]
  %v107 = vld [vmem:[%s1 + $0xd4] sm:$0xf]
  %v108 = vld [vmem:[%s1 + $0xd8] sm:$0xf]
  %v109 = vld [vmem:[%s1 + $0xdc] sm:$0xf]
  %v110 = vld [vmem:[%s1 + $0xe0] sm:$0xf]
  %v111 = vld [vmem:[%s1 + $0xe4] sm:$0xf]
  %v112 = vld [vmem:[%s1 + $0xe8] sm:$0xf]
  %v113 = vld [vmem:[%s1 + $0xec] sm:$0xf]
  %v114 = vld [vmem:[%s1 + $0xf0] sm:$0xf]
  %v115 = vld [vmem:[%s1 + $0xf4] sm:$0xf]
  %v116 = vld [vmem:[%s1 + $0xf8] sm:$0xf]
  %v117 = vld [vmem:[%s1 + $0xfc] sm:$0xf]
  %v118 = vld [vmem:[%s1 + $0x100] sm:$0xf]
  %v119 = vld [vmem:[%s1 + $0x104] sm:$0xf]
  %v120 = vld [vmem:[%s1 + $0x108] sm:$0xf]
  %v121 = vld [vmem:[%s1 + $0x10c] sm:$0xf]
  %v122 = vld [vmem:[%s1 + $0x110] sm:$0xf]
  %v123 = vld [vmem:[%s1 + $0x114] sm:$0xf]
  %v124 = vld [vmem:[%s1 + $0x118] sm:$0xf]
  %v125 = vld [vmem:[%s1 + $0x11c] sm:$0xf]
  %v126 = vld [vmem:[%s2] sm:$0x1]
  %v128 = vperm.slane %v126, 0
  %v169 = vunpack.c.l.b16 %v15
  %v170 = vunpack.c.h.b16 %v15
  %v171 = vunpack.c.l.b16 %v16
  %v172 = vunpack.c.h.b16 %v16
  %v173 = vunpack.c.l.b16 %v17
  %v174 = vunpack.c.l.b16 %v18
  %v175 = vunpack.c.h.b16 %v18
  %v176 = vunpack.c.l.b16 %v19
  %v177 = vunpack.c.h.b16 %v19
  %v178 = vunpack.c.l.b16 %v20
  %v179 = vunpack.c.l.b16 %v21
  %v180 = vunpack.c.h.b16 %v21
  %v181 = vunpack.c.l.b16 %v22
  %v182 = vunpack.c.h.b16 %v22
  %v183 = vunpack.c.l.b16 %v23
  %v184 = vunpack.c.l.b16 %v24
  %v185 = vunpack.c.h.b16 %v24
  %v186 = vunpack.c.l.b16 %v25
  %v187 = vunpack.c.h.b16 %v25
  %v188 = vunpack.c.l.b16 %v26
  %v189 = vunpack.c.l.b16 %v27
  %v190 = vunpack.c.h.b16 %v27
  %v191 = vunpack.c.l.b16 %v28
  %v192 = vunpack.c.h.b16 %v28
  %v193 = vunpack.c.l.b16 %v29
  %v194 = vunpack.c.l.b16 %v30
  %v195 = vunpack.c.h.b16 %v30
  %v196 = vunpack.c.l.b16 %v31
  %v197 = vunpack.c.h.b16 %v31
  %v198 = vunpack.c.l.b16 %v32
  %v199 = vunpack.c.l.b16 %v33
  %v200 = vunpack.c.h.b16 %v33
  %v201 = vunpack.c.l.b16 %v34
  %v202 = vunpack.c.h.b16 %v34
  %v203 = vunpack.c.l.b16 %v35
  %v204 = vunpack.c.l.b16 %v36
  %v205 = vunpack.c.h.b16 %v36
  %v206 = vunpack.c.l.b16 %v37
  %v207 = vunpack.c.h.b16 %v37
  %v208 = vunpack.c.l.b16 %v38
  %v209 = vunpack.c.l.b16 %v39
  %v210 = vunpack.c.h.b16 %v39
  %v211 = vunpack.c.l.b16 %v40
  %v212 = vunpack.c.h.b16 %v40
  %v213 = vunpack.c.l.b16 %v41
  %v214 = vunpack.c.l.b16 %v42
  %v215 = vunpack.c.h.b16 %v42
  %v216 = vunpack.c.l.b16 %v43
  %v217 = vunpack.c.h.b16 %v43
  %v218 = vunpack.c.l.b16 %v44
  %v219 = vunpack.c.l.b16 %v45
  %v220 = vunpack.c.h.b16 %v45
  %v221 = vunpack.c.l.b16 %v46
  %v222 = vunpack.c.h.b16 %v46
  %v223 = vunpack.c.l.b16 %v47
  %v224 = vunpack.c.l.b16 %v48
  %v225 = vunpack.c.h.b16 %v48
  %v226 = vunpack.c.l.b16 %v49
  %v227 = vunpack.c.h.b16 %v49
  %v228 = vunpack.c.l.b16 %v50
  %v229 = vunpack.c.l.b16 %v51
  %v230 = vunpack.c.h.b16 %v51
  %v231 = vunpack.c.l.b16 %v52
  %v232 = vunpack.c.h.b16 %v52
  %v233 = vunpack.c.l.b16 %v53
  %v234 = vpack.c.b16 %v174, %v169
  %v235 = vpack.c.b16 %v175, %v170
  %v236 = vpack.c.b16 %v176, %v171
  %v237 = vpack.c.b16 %v177, %v172
  %v238 = vpack.c.b16 %v178, %v173
  %v239 = vpack.c.b16 %v184, %v179
  %v240 = vpack.c.b16 %v185, %v180
  %v241 = vpack.c.b16 %v186, %v181
  %v242 = vpack.c.b16 %v187, %v182
  %v243 = vpack.c.b16 %v188, %v183
  %v244 = vpack.c.b16 %v194, %v189
  %v245 = vpack.c.b16 %v195, %v190
  %v246 = vpack.c.b16 %v196, %v191
  %v247 = vpack.c.b16 %v197, %v192
  %v248 = vpack.c.b16 %v198, %v193
  %v249 = vpack.c.b16 %v204, %v199
  %v250 = vpack.c.b16 %v205, %v200
  %v251 = vpack.c.b16 %v206, %v201
  %v252 = vpack.c.b16 %v207, %v202
  %v253 = vpack.c.b16 %v208, %v203
  %v254 = vpack.c.b16 %v214, %v209
  %v255 = vpack.c.b16 %v215, %v210
  %v256 = vpack.c.b16 %v216, %v211
  %v257 = vpack.c.b16 %v217, %v212
  %v258 = vpack.c.b16 %v218, %v213
  %v259 = vpack.c.b16 %v224, %v219
  %v260 = vpack.c.b16 %v225, %v220
  %v261 = vpack.c.b16 %v226, %v221
  %v262 = vpack.c.b16 %v227, %v222
  %v263 = vpack.c.b16 %v228, %v223
  %v264 = vpack.c.b16 %v229, %v229
  %v265 = vpack.c.b16 %v230, %v230
  %v266 = vpack.c.b16 %v231, %v231
  %v267 = vpack.c.b16 %v232, %v232
  %v268 = vpack.c.b16 %v233, %v233
  %v369 = vunpack.c.l.b16 %v54
  %v370 = vunpack.c.l.b16 %v55
  %v371 = vunpack.c.l.b16 %v56
  %v372 = vunpack.c.l.b16 %v57
  %v373 = vunpack.c.l.b16 %v58
  %v374 = vunpack.c.l.b16 %v59
  %v375 = vunpack.c.l.b16 %v60
  %v376 = vunpack.c.l.b16 %v61
  %v377 = vunpack.c.l.b16 %v62
  %v378 = vunpack.c.l.b16 %v63
  %v379 = vunpack.c.l.b16 %v64
  %v380 = vunpack.c.l.b16 %v65
  %v381 = vunpack.c.l.b16 %v66
  %v382 = vunpack.c.l.b16 %v67
  %v383 = vunpack.c.l.b16 %v68
  %v384 = vunpack.c.l.b16 %v69
  %v385 = vunpack.c.l.b16 %v70
  %v386 = vunpack.c.l.b16 %v71
  %v387 = vunpack.c.l.b16 %v72
  %v388 = vunpack.c.l.b16 %v73
  %v389 = vunpack.c.l.b16 %v74
  %v390 = vunpack.c.l.b16 %v75
  %v391 = vunpack.c.l.b16 %v76
  %v392 = vunpack.c.l.b16 %v77
  %v393 = vunpack.c.l.b16 %v78
  %v394 = vunpack.c.l.b16 %v79
  %v395 = vunpack.c.l.b16 %v80
  %v396 = vunpack.c.l.b16 %v81
  %v397 = vunpack.c.l.b16 %v82
  %v398 = vunpack.c.l.b16 %v83
  %v399 = vunpack.c.l.b16 %v84
  %v400 = vunpack.c.l.b16 %v85
  %v401 = vunpack.c.l.b16 %v86
  %v402 = vunpack.c.l.b16 %v87
  %v403 = vunpack.c.l.b16 %v88
  %v404 = vunpack.c.l.b16 %v89
  %v405 = vunpack.c.l.b16 %v90
  %v406 = vunpack.c.l.b16 %v91
  %v407 = vunpack.c.l.b16 %v92
  %v408 = vunpack.c.l.b16 %v93
  %v409 = vunpack.c.l.b16 %v94
  %v410 = vunpack.c.l.b16 %v95
  %v411 = vunpack.c.l.b16 %v96
  %v412 = vunpack.c.l.b16 %v97
  %v413 = vunpack.c.l.b16 %v98
  %v414 = vunpack.c.l.b16 %v99
  %v415 = vunpack.c.l.b16 %v100
  %v416 = vunpack.c.l.b16 %v101
  %v417 = vunpack.c.l.b16 %v102
  %v418 = vunpack.c.l.b16 %v103
  %v419 = vunpack.c.l.b16 %v104
  %v420 = vunpack.c.l.b16 %v105
  %v421 = vunpack.c.l.b16 %v106
  %v422 = vunpack.c.l.b16 %v107
  %v423 = vunpack.c.l.b16 %v108
  %v424 = vunpack.c.l.b16 %v109
  %v425 = vunpack.c.l.b16 %v110
  %v426 = vunpack.c.l.b16 %v111
  %v427 = vunpack.c.l.b16 %v112
  %v428 = vunpack.c.l.b16 %v113
  %v429 = vunpack.c.l.b16 %v114
  %v430 = vunpack.c.l.b16 %v115
  %v431 = vunpack.c.l.b16 %v116
  %v432 = vunpack.c.l.b16 %v117
  %v433 = vunpack.c.l.b16 %v118
  %v434 = vunpack.c.l.b16 %v119
  %v435 = vunpack.c.l.b16 %v120
  %v436 = vunpack.c.l.b16 %v121
  %v437 = vunpack.c.l.b16 %v122
  %v438 = vunpack.c.l.b16 %v123
  %v439 = vunpack.c.l.b16 %v124
  %v440 = vunpack.c.l.b16 %v125
  %v441 = vpack.c.b16 %v370, %v369
  %v442 = vpack.c.b16 %v372, %v371
  %v443 = vpack.c.b16 %v374, %v373
  %v444 = vpack.c.b16 %v376, %v375
  %v445 = vpack.c.b16 %v378, %v377
  %v446 = vpack.c.b16 %v380, %v379
  %v447 = vpack.c.b16 %v382, %v381
  %v448 = vpack.c.b16 %v384, %v383
  %v449 = vpack.c.b16 %v386, %v385
  %v450 = vpack.c.b16 %v388, %v387
  %v451 = vpack.c.b16 %v390, %v389
  %v452 = vpack.c.b16 %v392, %v391
  %v453 = vpack.c.b16 %v394, %v393
  %v454 = vpack.c.b16 %v396, %v395
  %v455 = vpack.c.b16 %v398, %v397
  %v456 = vpack.c.b16 %v400, %v399
  %v457 = vpack.c.b16 %v402, %v401
  %v458 = vpack.c.b16 %v404, %v403
  %v459 = vpack.c.b16 %v406, %v405
  %v460 = vpack.c.b16 %v408, %v407
  %v461 = vpack.c.b16 %v410, %v409
  %v462 = vpack.c.b16 %v412, %v411
  %v463 = vpack.c.b16 %v414, %v413
  %v464 = vpack.c.b16 %v416, %v415
  %v465 = vpack.c.b16 %v418, %v417
  %v466 = vpack.c.b16 %v420, %v419
  %v467 = vpack.c.b16 %v422, %v421
  %v468 = vpack.c.b16 %v424, %v423
  %v469 = vpack.c.b16 %v426, %v425
  %v470 = vpack.c.b16 %v428, %v427
  %v471 = vpack.c.b16 %v430, %v429
  %v472 = vpack.c.b16 %v432, %v431
  %v473 = vpack.c.b16 %v434, %v433
  %v474 = vpack.c.b16 %v436, %v435
  %v475 = vpack.c.b16 %v438, %v437
  %v476 = vpack.c.b16 %v440, %v439
  %vm513 = vcmask 523264
  %v515 = vsel %vm513, %v238, 0
  %v518 = vsel %vm513, %v243, 0
  %v521 = vsel %vm513, %v248, 0
  %v524 = vsel %vm513, %v253, 0
  %v527 = vsel %vm513, %v258, 0
  %v530 = vsel %vm513, %v263, 0
  %v533 = vsel %vm513, %v268, 0
  %535 = vmatpush.bf16.msra.mxu0 %v448
  %536 = vmatpush.bf16.msra.mxu0 %v447
  %537 = vmatpush.bf16.msra.mxu0 %v446
  %538 = vmatpush.bf16.msra.mxu0 %v445
  %539 = vmatpush.bf16.msra.mxu0 %v444
  %540 = vmatpush.bf16.msra.mxu0 %v443
  %541 = vmatpush.bf16.msra.mxu0 %v442
  %542 = vmatpush.bf16.msra.mxu0 %v441
  %543 = vmatmul.bf16.gmra.mxu0 %v234
  %v544 = vpop.f32.mrf.mxu0
  %v545 = vadd.f32 %v128, %v544
  %v546 = vpop.f32.mrf.mxu0
  %v547 = vadd.f32 %v128, %v546
  %548 = vmatmul.bf16.gmra.mxu0 %v239
  %v549 = vpop.f32.mrf.mxu0
  %v550 = vadd.f32 %v128, %v549
  %v551 = vpop.f32.mrf.mxu0
  %v552 = vadd.f32 %v128, %v551
  %553 = vmatmul.bf16.gmra.mxu0 %v244
  %v554 = vpop.f32.mrf.mxu0
  %v555 = vadd.f32 %v128, %v554
  %v556 = vpop.f32.mrf.mxu0
  %v557 = vadd.f32 %v128, %v556
  %558 = vmatmul.bf16.gmra.mxu0 %v249
  %v559 = vpop.f32.mrf.mxu0
  %v560 = vadd.f32 %v128, %v559
  %v561 = vpop.f32.mrf.mxu0
  %v562 = vadd.f32 %v128, %v561
  %563 = vmatmul.bf16.gmra.mxu0 %v254
  %v564 = vpop.f32.mrf.mxu0
  %v565 = vadd.f32 %v128, %v564
  %v566 = vpop.f32.mrf.mxu0
  %v567 = vadd.f32 %v128, %v566
  %568 = vmatmul.bf16.gmra.mxu0 %v259
  %v569 = vpop.f32.mrf.mxu0
  %v570 = vadd.f32 %v128, %v569
  %v571 = vpop.f32.mrf.mxu0
  %v572 = vadd.f32 %v128, %v571
  %573 = vmatmul.bf16.gmra.mxu0 %v264
  %v574 = vpop.f32.mrf.mxu0
  %v575 = vadd.f32 %v128, %v574
  %v576 = vpop.f32.mrf.mxu0
  %577 = vdwg.mxu0
  %578 = vmatpush.bf16.msra.mxu0 %v456
  %579 = vmatpush.bf16.msra.mxu0 %v455
  %580 = vmatpush.bf16.msra.mxu0 %v454
  %581 = vmatpush.bf16.msra.mxu0 %v453
  %582 = vmatpush.bf16.msra.mxu0 %v452
  %583 = vmatpush.bf16.msra.mxu0 %v451
  %584 = vmatpush.bf16.msra.mxu0 %v450
  %585 = vmatpush.bf16.msra.mxu0 %v449
  %586 = vmatmul.bf16.gmra.mxu0 %v235
  %v587 = vpop.f32.mrf.mxu0
  %v588 = vadd.f32 %v545, %v587
  %v589 = vpop.f32.mrf.mxu0
  %v590 = vadd.f32 %v547, %v589
  %591 = vmatmul.bf16.gmra.mxu0 %v240
  %v592 = vpop.f32.mrf.mxu0
  %v593 = vadd.f32 %v550, %v592
  %v594 = vpop.f32.mrf.mxu0
  %v595 = vadd.f32 %v552, %v594
  %596 = vmatmul.bf16.gmra.mxu0 %v245
  %v597 = vpop.f32.mrf.mxu0
  %v598 = vadd.f32 %v555, %v597
  %v599 = vpop.f32.mrf.mxu0
  %v600 = vadd.f32 %v557, %v599
  %601 = vmatmul.bf16.gmra.mxu0 %v250
  %v602 = vpop.f32.mrf.mxu0
  %v603 = vadd.f32 %v560, %v602
  %v604 = vpop.f32.mrf.mxu0
  %v605 = vadd.f32 %v562, %v604
  %606 = vmatmul.bf16.gmra.mxu0 %v255
  %v607 = vpop.f32.mrf.mxu0
  %v608 = vadd.f32 %v565, %v607
  %v609 = vpop.f32.mrf.mxu0
  %v610 = vadd.f32 %v567, %v609
  %611 = vmatmul.bf16.gmra.mxu0 %v260
  %v612 = vpop.f32.mrf.mxu0
  %v613 = vadd.f32 %v570, %v612
  %v614 = vpop.f32.mrf.mxu0
  %v615 = vadd.f32 %v572, %v614
  %616 = vmatmul.bf16.gmra.mxu0 %v265
  %v617 = vpop.f32.mrf.mxu0
  %v618 = vadd.f32 %v575, %v617
  %v619 = vpop.f32.mrf.mxu0
  %620 = vdwg.mxu0
  %621 = vmatpush.bf16.msra.mxu0 %v464
  %622 = vmatpush.bf16.msra.mxu0 %v463
  %623 = vmatpush.bf16.msra.mxu0 %v462
  %624 = vmatpush.bf16.msra.mxu0 %v461
  %625 = vmatpush.bf16.msra.mxu0 %v460
  %626 = vmatpush.bf16.msra.mxu0 %v459
  %627 = vmatpush.bf16.msra.mxu0 %v458
  %628 = vmatpush.bf16.msra.mxu0 %v457
  %629 = vmatmul.bf16.gmra.mxu0 %v236
  %v630 = vpop.f32.mrf.mxu0
  %v631 = vadd.f32 %v588, %v630
  %v632 = vpop.f32.mrf.mxu0
  %v633 = vadd.f32 %v590, %v632
  %634 = vmatmul.bf16.gmra.mxu0 %v241
  %v635 = vpop.f32.mrf.mxu0
  %v636 = vadd.f32 %v593, %v635
  %v637 = vpop.f32.mrf.mxu0
  %v638 = vadd.f32 %v595, %v637
  %639 = vmatmul.bf16.gmra.mxu0 %v246
  %v640 = vpop.f32.mrf.mxu0
  %v641 = vadd.f32 %v598, %v640
  %v642 = vpop.f32.mrf.mxu0
  %v643 = vadd.f32 %v600, %v642
  %644 = vmatmul.bf16.gmra.mxu0 %v251
  %v645 = vpop.f32.mrf.mxu0
  %v646 = vadd.f32 %v603, %v645
  %v647 = vpop.f32.mrf.mxu0
  %v648 = vadd.f32 %v605, %v647
  %649 = vmatmul.bf16.gmra.mxu0 %v256
  %v650 = vpop.f32.mrf.mxu0
  %v651 = vadd.f32 %v608, %v650
  %v652 = vpop.f32.mrf.mxu0
  %v653 = vadd.f32 %v610, %v652
  %654 = vmatmul.bf16.gmra.mxu0 %v261
  %v655 = vpop.f32.mrf.mxu0
  %v656 = vadd.f32 %v613, %v655
  %v657 = vpop.f32.mrf.mxu0
  %v658 = vadd.f32 %v615, %v657
  %659 = vmatmul.bf16.gmra.mxu0 %v266
  %v660 = vpop.f32.mrf.mxu0
  %v661 = vadd.f32 %v618, %v660
  %v662 = vpop.f32.mrf.mxu0
  %663 = vdwg.mxu0
  %664 = vmatpush.bf16.msra.mxu0 %v472
  %665 = vmatpush.bf16.msra.mxu0 %v471
  %666 = vmatpush.bf16.msra.mxu0 %v470
  %667 = vmatpush.bf16.msra.mxu0 %v469
  %668 = vmatpush.bf16.msra.mxu0 %v468
  %669 = vmatpush.bf16.msra.mxu0 %v467
  %670 = vmatpush.bf16.msra.mxu0 %v466
  %671 = vmatpush.bf16.msra.mxu0 %v465
  %672 = vmatmul.bf16.gmra.mxu0 %v237
  %v673 = vpop.f32.mrf.mxu0
  %v674 = vadd.f32 %v631, %v673
  %v675 = vpop.f32.mrf.mxu0
  %v676 = vadd.f32 %v633, %v675
  %677 = vmatmul.bf16.gmra.mxu0 %v242
  %v678 = vpop.f32.mrf.mxu0
  %v679 = vadd.f32 %v636, %v678
  %v680 = vpop.f32.mrf.mxu0
  %v681 = vadd.f32 %v638, %v680
  %682 = vmatmul.bf16.gmra.mxu0 %v247
  %v683 = vpop.f32.mrf.mxu0
  %v684 = vadd.f32 %v641, %v683
  %v685 = vpop.f32.mrf.mxu0
  %v686 = vadd.f32 %v643, %v685
  %687 = vmatmul.bf16.gmra.mxu0 %v252
  %v688 = vpop.f32.mrf.mxu0
  %v689 = vadd.f32 %v646, %v688
  %v690 = vpop.f32.mrf.mxu0
  %v691 = vadd.f32 %v648, %v690
  %692 = vmatmul.bf16.gmra.mxu0 %v257
  %v693 = vpop.f32.mrf.mxu0
  %v694 = vadd.f32 %v651, %v693
  %v695 = vpop.f32.mrf.mxu0
  %v696 = vadd.f32 %v653, %v695
  %697 = vmatmul.bf16.gmra.mxu0 %v262
  %v698 = vpop.f32.mrf.mxu0
  %v699 = vadd.f32 %v656, %v698
  %v700 = vpop.f32.mrf.mxu0
  %v701 = vadd.f32 %v658, %v700
  %702 = vmatmul.bf16.gmra.mxu0 %v267
  %v703 = vpop.f32.mrf.mxu0
  %v704 = vadd.f32 %v661, %v703
  %v705 = vpop.f32.mrf.mxu0
  %706 = vdwg.mxu0
  %707 = vmatpush.bf16.msra.mxu0 0
  %708 = vmatpush.bf16.msra.mxu0 0
  %709 = vmatpush.bf16.msra.mxu0 0
  %710 = vmatpush.bf16.msra.mxu0 0
  %711 = vmatpush.bf16.msra.mxu0 %v476
  %712 = vmatpush.bf16.msra.mxu0 %v475
  %713 = vmatpush.bf16.msra.mxu0 %v474
  %714 = vmatpush.bf16.msra.mxu0 %v473
  %715 = vmatmul.bf16.gmra.mxu0 %v515
  %v716 = vpop.f32.mrf.mxu0
  %v717 = vadd.f32 %v674, %v716
  %v718 = vpop.f32.mrf.mxu0
  %v719 = vadd.f32 %v676, %v718
  %720 = vmatmul.bf16.gmra.mxu0 %v518
  %v721 = vpop.f32.mrf.mxu0
  %v722 = vadd.f32 %v679, %v721
  %v723 = vpop.f32.mrf.mxu0
  %v724 = vadd.f32 %v681, %v723
  %725 = vmatmul.bf16.gmra.mxu0 %v521
  %v726 = vpop.f32.mrf.mxu0
  %v727 = vadd.f32 %v684, %v726
  %v728 = vpop.f32.mrf.mxu0
  %v729 = vadd.f32 %v686, %v728
  %730 = vmatmul.bf16.gmra.mxu0 %v524
  %v731 = vpop.f32.mrf.mxu0
  %v732 = vadd.f32 %v689, %v731
  %v733 = vpop.f32.mrf.mxu0
  %v734 = vadd.f32 %v691, %v733
  %735 = vmatmul.bf16.gmra.mxu0 %v527
  %v736 = vpop.f32.mrf.mxu0
  %v737 = vadd.f32 %v694, %v736
  %v738 = vpop.f32.mrf.mxu0
  %v739 = vadd.f32 %v696, %v738
  %740 = vmatmul.bf16.gmra.mxu0 %v530
  %v741 = vpop.f32.mrf.mxu0
  %v742 = vadd.f32 %v699, %v741
  %v743 = vpop.f32.mrf.mxu0
  %v744 = vadd.f32 %v701, %v743
  %745 = vmatmul.bf16.gmra.mxu0 %v533
  %v746 = vpop.f32.mrf.mxu0
  %v747 = vadd.f32 %v704, %v746
  %v748 = vpop.f32.mrf.mxu0
  %749 = vdwg.mxu0
  %v750 = vmax.f32 %v717, 0.0
  %v751 = vmax.f32 %v719, 0.0
  %v752 = vmax.f32 %v722, 0.0
  %v753 = vmax.f32 %v724, 0.0
  %v754 = vmax.f32 %v727, 0.0
  %v755 = vmax.f32 %v729, 0.0
  %v756 = vmax.f32 %v732, 0.0
  %v757 = vmax.f32 %v734, 0.0
  %v758 = vmax.f32 %v737, 0.0
  %v759 = vmax.f32 %v739, 0.0
  %v760 = vmax.f32 %v742, 0.0
  %v761 = vmax.f32 %v744, 0.0
  %v762 = vmax.f32 %v747, 0.0
  %v763 = vpack.c.bf16 %v750, %v750
  %v764 = vpack.c.bf16 %v751, %v751
  %v765 = vpack.c.bf16 %v752, %v752
  %v766 = vpack.c.bf16 %v753, %v753
  %v767 = vpack.c.bf16 %v754, %v754
  %v768 = vpack.c.bf16 %v755, %v755
  %v769 = vpack.c.bf16 %v756, %v756
  %v770 = vpack.c.bf16 %v757, %v757
  %v771 = vpack.c.bf16 %v758, %v758
  %v772 = vpack.c.bf16 %v759, %v759
  %v773 = vpack.c.bf16 %v760, %v760
  %v774 = vpack.c.bf16 %v761, %v761
  %v775 = vpack.c.bf16 %v762, %v762
  %vm776 = vcmask 519168
  %777 = vst.msk [vmem:[%s3] sm:$0xf] %vm776, %v763
  %778 = vst.msk [vmem:[%s3 + $0x4] sm:$0xf] %vm776, %v764
  %779 = vst.msk [vmem:[%s3 + $0x8] sm:$0xf] %vm776, %v765
  %780 = vst.msk [vmem:[%s3 + $0xc] sm:$0xf] %vm776, %v766
  %781 = vst.msk [vmem:[%s3 + $0x10] sm:$0xf] %vm776, %v767
  %782 = vst.msk [vmem:[%s3 + $0x14] sm:$0xf] %vm776, %v768
  %783 = vst.msk [vmem:[%s3 + $0x18] sm:$0xf] %vm776, %v769
  %784 = vst.msk [vmem:[%s3 + $0x1c] sm:$0xf] %vm776, %v770
  %785 = vst.msk [vmem:[%s3 + $0x20] sm:$0xf] %vm776, %v771
  %786 = vst.msk [vmem:[%s3 + $0x24] sm:$0xf] %vm776, %v772
  %787 = vst.msk [vmem:[%s3 + $0x28] sm:$0xf] %vm776, %v773
  %788 = vst.msk [vmem:[%s3 + $0x2c] sm:$0xf] %vm776, %v774
  %vm789 = vcmask 516096
  %790 = vst.msk [vmem:[%s3 + $0x30] sm:$0x1] %vm789, %v775
  // Predicated region
  $region14: #{network_forward.6} parent=0 // pred_check
    _
  $region15: #{network_forward.6} parent=0 // pred_check_branch
    %792 = sbr.rel (0) target = $region17
  $region16: #{network_forward.6} parent=0 // pred_region
    _
  $region17: #{network_forward.6} parent=0 // pred_fallthru
    _
  // Predicated region
  $region18: #{network_forward.6} parent=0 // pred_check
    _
  $region19: #{network_forward.6} parent=0 // pred_check_branch
    %794 = sbr.rel (0) target = $region21
  $region20: #{network_forward.6} parent=0 // pred_region
    _
  $region21: #{network_forward.6} parent=0 // pred_fallthru
    _

// kernel: network_forward.7
$region0: #{network_forward.7}
  #allocation0 [shape = 'u32[]', space=smem, size = 0x4, offset = 0x4, fixed_abs, tag = 'smem constant byte address 0x4 - core index']
  #allocation1 [shape = 'u32[72,128]{1,0:T(1,128)}', space=vmem, size = 0x9000, scoped, tag = 'internal scratch']
  %s0 = inlined_call_operand.vmem [shape: bf16[2,3200], index: 0, kind: input, shape index: {}]
  %s1 = inlined_call_operand.vmem [shape: bf16[3200,512], index: 1, kind: input, shape index: {}]
  %s2 = inlined_call_operand.vmem [shape: f32[1,512], index: 2, kind: input, shape index: {}]
  %s3 = inlined_call_operand.vmem [shape: bf16[6,256,51], index: 3, kind: input, shape index: {}]
  %s4 = inlined_call_operand.vmem [shape: f32[6,1,51], index: 4, kind: input, shape index: {}]
  %s5 = inlined_call_operand.vmem [shape: bf16[256,51], index: 5, kind: input, shape index: {}]
  %s6 = inlined_call_operand.vmem [shape: f32[1,51], index: 6, kind: input, shape index: {}]
  %s7 = inlined_call_operand.hbm [shape: f32[6,2,51], index: 7, kind: output, shape index: {}]
  %s8 = sld [smem:[#allocation0]]
  $region38: #{network_forward.7} parent=0
    _
  %s10 = ssub.s32 1, %s8
  %s11 = scalar_select 0, %s10, %s8
  $region1: #{network_forward.7} parent=0
    #allocation2 [shape = 'u8[6144]{0}', space=vmem, size = 0x1800, scoped, tag = 'output window, operand 0, single buffered']
    #allocation3 [shape = 's32[1]{0}', space=sflag, size = 0x4, scoped, tag = 'scoped memory for network_forward.7']
    %12 = vsyncpa [#allocation3], 0
    // Predicated region
    $region2: #{network_forward.7} parent=1 // pred_check
      _
    $region3: #{network_forward.7} parent=1 // pred_check_branch
      %14 = sbr.rel (0) target = $region5
    $region4: #{network_forward.7} parent=1 // pred_region
      _
    $region5: #{network_forward.7} parent=1 // pred_fallthru
      _
    // Predicated region
    $region6: #{network_forward.7} parent=1 // pred_check
      _
    $region7: #{network_forward.7} parent=1 // pred_check_branch
      %16 = sbr.rel (0) target = $region9
    $region8: #{network_forward.7} parent=1 // pred_region
      _
    $region9: #{network_forward.7} parent=1 // pred_fallthru
      _
    // Predicated region
    $region10: #{network_forward.7} parent=1 // pred_check
      _
    $region11: #{network_forward.7} parent=1 // pred_check_branch
      %18 = sbr.rel (0) target = $region13
    $region12: #{network_forward.7} parent=1 // pred_region
      _
    $region13: #{network_forward.7} parent=1 // pred_fallthru
      _
    // Predicated region
    $region14: #{network_forward.7} parent=1 // pred_check
      _
    $region15: #{network_forward.7} parent=1 // pred_check_branch
      %20 = sbr.rel (0) target = $region17
    $region16: #{network_forward.7} parent=1 // pred_region
      _
    $region17: #{network_forward.7} parent=1 // pred_fallthru
      _
    // Predicated region
    $region18: #{network_forward.7} parent=1 // pred_check
      _
    $region19: #{network_forward.7} parent=1 // pred_check_branch
      %22 = sbr.rel (0) target = $region21
    $region20: #{network_forward.7} parent=1 // pred_region
      _
    $region21: #{network_forward.7} parent=1 // pred_fallthru
      _
    // Predicated region
    $region22: #{network_forward.7} parent=1 // pred_check
      _
    $region23: #{network_forward.7} parent=1 // pred_check_branch
      %24 = sbr.rel (0) target = $region25
    $region24: #{network_forward.7} parent=1 // pred_region
      _
    $region25: #{network_forward.7} parent=1 // pred_fallthru
      _
    // Predicated region
    $region26: #{network_forward.7} parent=1 // pred_check
      _
    $region27: #{network_forward.7} parent=1 // pred_check_branch
      %26 = sbr.rel (0) target = $region29
    $region28: #{network_forward.7} parent=1 // pred_region
      _
    $region29: #{network_forward.7} parent=1 // pred_fallthru
      _
    %v27 = vld [vmem:[%s0] sm:$0xff]
    %v28 = vld [vmem:[%s0 + $0x8] sm:$0xff]
    %v29 = vld [vmem:[%s0 + $0x10] sm:$0xff]
    %v30 = vld [vmem:[%s0 + $0x18] sm:$0x1]
    %v31 = vld [vmem:[%s1] sm:$0xff]
    %v32 = vld [vmem:[%s1 + $0x8] sm:$0xff]
    %v33 = vld [vmem:[%s1 + $0x10] sm:$0xff]
    %v34 = vld [vmem:[%s1 + $0x18] sm:$0xff]
    %v35 = vld [vmem:[%s1 + $0x20] sm:$0xff]
    %v36 = vld [vmem:[%s1 + $0x28] sm:$0xff]
    %v37 = vld [vmem:[%s1 + $0x30] sm:$0xff]
    %v38 = vld [vmem:[%s1 + $0x38] sm:$0xff]
    %v39 = vld [vmem:[%s1 + $0x40] sm:$0xff]
    %v40 = vld [vmem:[%s1 + $0x48] sm:$0xff]
    %v41 = vld [vmem:[%s1 + $0x50] sm:$0xff]
    %v42 = vld [vmem:[%s1 + $0x58] sm:$0xff]
    %v43 = vld [vmem:[%s1 + $0x60] sm:$0xff]
    %v44 = vld [vmem:[%s1 + $0x68] sm:$0xff]
    %v45 = vld [vmem:[%s1 + $0x70] sm:$0xff]
    %v46 = vld [vmem:[%s1 + $0x78] sm:$0xff]
    %v47 = vld [vmem:[%s1 + $0x80] sm:$0xff]
    %v48 = vld [vmem:[%s1 + $0x88] sm:$0xff]
    %v49 = vld [vmem:[%s1 + $0x90] sm:$0xff]
    %v50 = vld [vmem:[%s1 + $0x98] sm:$0xff]
    %v51 = vld [vmem:[%s1 + $0xa0] sm:$0xff]
    %v52 = vld [vmem:[%s1 + $0xa8] sm:$0xff]
    %v53 = vld [vmem:[%s1 + $0xb0] sm:$0xff]
    %v54 = vld [vmem:[%s1 + $0xb8] sm:$0xff]
    %v55 = vld [vmem:[%s1 + $0xc0] sm:$0xff]
    %v56 = vld [vmem:[%s1 + $0xc8] sm:$0xff]
    %v57 = vld [vmem:[%s1 + $0xd0] sm:$0xff]
    %v58 = vld [vmem:[%s1 + $0xd8] sm:$0xff]
    %v59 = vld [vmem:[%s1 + $0xe0] sm:$0xff]
    %v60 = vld [vmem:[%s1 + $0xe8] sm:$0xff]
    %v61 = vld [vmem:[%s1 + $0xf0] sm:$0xff]
    %v62 = vld [vmem:[%s1 + $0xf8] sm:$0xff]
    %v63 = vld [vmem:[%s1 + $0x100] sm:$0xff]
    %v64 = vld [vmem:[%s1 + $0x108] sm:$0xff]
    %v65 = vld [vmem:[%s1 + $0x110] sm:$0xff]
    %v66 = vld [vmem:[%s1 + $0x118] sm:$0xff]
    %v67 = vld [vmem:[%s1 + $0x120] sm:$0xff]
    %v68 = vld [vmem:[%s1 + $0x128] sm:$0xff]
    %v69 = vld [vmem:[%s1 + $0x130] sm:$0xff]
    %v70 = vld [vmem:[%s1 + $0x138] sm:$0xff]
    %v71 = vld [vmem:[%s1 + $0x140] sm:$0xff]
    %v72 = vld [vmem:[%s1 + $0x148] sm:$0xff]
    %v73 = vld [vmem:[%s1 + $0x150] sm:$0xff]
    %v74 = vld [vmem:[%s1 + $0x158] sm:$0xff]
    %v75 = vld [vmem:[%s1 + $0x160] sm:$0xff]
    %v76 = vld [vmem:[%s1 + $0x168] sm:$0xff]
    %v77 = vld [vmem:[%s1 + $0x170] sm:$0xff]
    %v78 = vld [vmem:[%s1 + $0x178] sm:$0xff]
    %v79 = vld [vmem:[%s1 + $0x180] sm:$0xff]
    %v80 = vld [vmem:[%s1 + $0x188] sm:$0xff]
    %v81 = vld [vmem:[%s1 + $0x190] sm:$0xff]
    %v82 = vld [vmem:[%s1 + $0x198] sm:$0xff]
    %v83 = vld [vmem:[%s1 + $0x1a0] sm:$0xff]
    %v84 = vld [vmem:[%s1 + $0x1a8] sm:$0xff]
    %v85 = vld [vmem:[%s1 + $0x1b0] sm:$0xff]
    %v86 = vld [vmem:[%s1 + $0x1b8] sm:$0xff]
    %v87 = vld [vmem:[%s1 + $0x1c0] sm:$0xff]
    %v88 = vld [vmem:[%s1 + $0x1c8] sm:$0xff]
    %v89 = vld [vmem:[%s1 + $0x1d0] sm:$0xff]
    %v90 = vld [vmem:[%s1 + $0x1d8] sm:$0xff]
    %v91 = vld [vmem:[%s1 + $0x1e0] sm:$0xff]
    %v92 = vld [vmem:[%s1 + $0x1e8] sm:$0xff]
    %v93 = vld [vmem:[%s1 + $0x1f0] sm:$0xff]
    %v94 = vld [vmem:[%s1 + $0x1f8] sm:$0xff]
    %v95 = vld [vmem:[%s1 + $0x200] sm:$0xff]
    %v96 = vld [vmem:[%s1 + $0x208] sm:$0xff]
    %v97 = vld [vmem:[%s1 + $0x210] sm:$0xff]
    %v98 = vld [vmem:[%s1 + $0x218] sm:$0xff]
    %v99 = vld [vmem:[%s1 + $0x220] sm:$0xff]
    %v100 = vld [vmem:[%s1 + $0x228] sm:$0xff]
    %v101 = vld [vmem:[%s1 + $0x230] sm:$0xff]
    %v102 = vld [vmem:[%s1 + $0x238] sm:$0xff]
    %v103 = vld [vmem:[%s1 + $0x240] sm:$0xff]
    %v104 = vld [vmem:[%s1 + $0x248] sm:$0xff]
    %v105 = vld [vmem:[%s1 + $0x250] sm:$0xff]
    %v106 = vld [vmem:[%s1 + $0x258] sm:$0xff]
    %v107 = vld [vmem:[%s1 + $0x260] sm:$0xff]
    %v108 = vld [vmem:[%s1 + $0x268] sm:$0xff]
    %v109 = vld [vmem:[%s1 + $0x270] sm:$0xff]
    %v110 = vld [vmem:[%s1 + $0x278] sm:$0xff]
    %v111 = vld [vmem:[%s1 + $0x280] sm:$0xff]
    %v112 = vld [vmem:[%s1 + $0x288] sm:$0xff]
    %v113 = vld [vmem:[%s1 + $0x290] sm:$0xff]
    %v114 = vld [vmem:[%s1 + $0x298] sm:$0xff]
    %v115 = vld [vmem:[%s1 + $0x2a0] sm:$0xff]
    %v116 = vld [vmem:[%s1 + $0x2a8] sm:$0xff]
    %v117 = vld [vmem:[%s1 + $0x2b0] sm:$0xff]
    %v118 = vld [vmem:[%s1 + $0x2b8] sm:$0xff]
    %v119 = vld [vmem:[%s1 + $0x2c0] sm:$0xff]
    %v120 = vld [vmem:[%s1 + $0x2c8] sm:$0xff]
    %v121 = vld [vmem:[%s1 + $0x2d0] sm:$0xff]
    %v122 = vld [vmem:[%s1 + $0x2d8] sm:$0xff]
    %v123 = vld [vmem:[%s1 + $0x2e0] sm:$0xff]
    %v124 = vld [vmem:[%s1 + $0x2e8] sm:$0xff]
    %v125 = vld [vmem:[%s1 + $0x2f0] sm:$0xff]
    %v126 = vld [vmem:[%s1 + $0x2f8] sm:$0xff]
    %v127 = vld [vmem:[%s1 + $0x300] sm:$0xff]
    %v128 = vld [vmem:[%s1 + $0x308] sm:$0xff]
    %v129 = vld [vmem:[%s1 + $0x310] sm:$0xff]
    %v130 = vld [vmem:[%s1 + $0x318] sm:$0xff]
    %v131 = vld [vmem:[%s1 + $0x320] sm:$0xff]
    %v132 = vld [vmem:[%s1 + $0x328] sm:$0xff]
    %v133 = vld [vmem:[%s1 + $0x330] sm:$0xff]
    %v134 = vld [vmem:[%s1 + $0x338] sm:$0xff]
    %v135 = vld [vmem:[%s1 + $0x340] sm:$0xff]
    %v136 = vld [vmem:[%s1 + $0x348] sm:$0xff]
    %v137 = vld [vmem:[%s1 + $0x350] sm:$0xff]
    %v138 = vld [vmem:[%s1 + $0x358] sm:$0xff]
    %v139 = vld [vmem:[%s1 + $0x360] sm:$0xff]
    %v140 = vld [vmem:[%s1 + $0x368] sm:$0xff]
    %v141 = vld [vmem:[%s1 + $0x370] sm:$0xff]
    %v142 = vld [vmem:[%s1 + $0x378] sm:$0xff]
    %v143 = vld [vmem:[%s1 + $0x380] sm:$0xff]
    %v144 = vld [vmem:[%s1 + $0x388] sm:$0xff]
    %v145 = vld [vmem:[%s1 + $0x390] sm:$0xff]
    %v146 = vld [vmem:[%s1 + $0x398] sm:$0xff]
    %v147 = vld [vmem:[%s1 + $0x3a0] sm:$0xff]
    %v148 = vld [vmem:[%s1 + $0x3a8] sm:$0xff]
    %v149 = vld [vmem:[%s1 + $0x3b0] sm:$0xff]
    %v150 = vld [vmem:[%s1 + $0x3b8] sm:$0xff]
    %v151 = vld [vmem:[%s1 + $0x3c0] sm:$0xff]
    %v152 = vld [vmem:[%s1 + $0x3c8] sm:$0xff]
    %v153 = vld [vmem:[%s1 + $0x3d0] sm:$0xff]
    %v154 = vld [vmem:[%s1 + $0x3d8] sm:$0xff]
    %v155 = vld [vmem:[%s1 + $0x3e0] sm:$0xff]
    %v156 = vld [vmem:[%s1 + $0x3e8] sm:$0xff]
    %v157 = vld [vmem:[%s1 + $0x3f0] sm:$0xff]
    %v158 = vld [vmem:[%s1 + $0x3f8] sm:$0xff]
    %v159 = vld [vmem:[%s1 + $0x400] sm:$0xff]
    %v160 = vld [vmem:[%s1 + $0x408] sm:$0xff]
    %v161 = vld [vmem:[%s1 + $0x410] sm:$0xff]
    %v162 = vld [vmem:[%s1 + $0x418] sm:$0xff]
    %v163 = vld [vmem:[%s1 + $0x420] sm:$0xff]
    %v164 = vld [vmem:[%s1 + $0x428] sm:$0xff]
    %v165 = vld [vmem:[%s1 + $0x430] sm:$0xff]
    %v166 = vld [vmem:[%s1 + $0x438] sm:$0xff]
    %v167 = vld [vmem:[%s1 + $0x440] sm:$0xff]
    %v168 = vld [vmem:[%s1 + $0x448] sm:$0xff]
    %v169 = vld [vmem:[%s1 + $0x450] sm:$0xff]
    %v170 = vld [vmem:[%s1 + $0x458] sm:$0xff]
    %v171 = vld [vmem:[%s1 + $0x460] sm:$0xff]
    %v172 = vld [vmem:[%s1 + $0x468] sm:$0xff]
    %v173 = vld [vmem:[%s1 + $0x470] sm:$0xff]
    %v174 = vld [vmem:[%s1 + $0x478] sm:$0xff]
    %v175 = vld [vmem:[%s1 + $0x480] sm:$0xff]
    %v176 = vld [vmem:[%s1 + $0x488] sm:$0xff]
    %v177 = vld [vmem:[%s1 + $0x490] sm:$0xff]
    %v178 = vld [vmem:[%s1 + $0x498] sm:$0xff]
    %v179 = vld [vmem:[%s1 + $0x4a0] sm:$0xff]
    %v180 = vld [vmem:[%s1 + $0x4a8] sm:$0xff]
    %v181 = vld [vmem:[%s1 + $0x4b0] sm:$0xff]
    %v182 = vld [vmem:[%s1 + $0x4b8] sm:$0xff]
    %v183 = vld [vmem:[%s1 + $0x4c0] sm:$0xff]
    %v184 = vld [vmem:[%s1 + $0x4c8] sm:$0xff]
    %v185 = vld [vmem:[%s1 + $0x4d0] sm:$0xff]
    %v186 = vld [vmem:[%s1 + $0x4d8] sm:$0xff]
    %v187 = vld [vmem:[%s1 + $0x4e0] sm:$0xff]
    %v188 = vld [vmem:[%s1 + $0x4e8] sm:$0xff]
    %v189 = vld [vmem:[%s1 + $0x4f0] sm:$0xff]
    %v190 = vld [vmem:[%s1 + $0x4f8] sm:$0xff]
    %v191 = vld [vmem:[%s1 + $0x500] sm:$0xff]
    %v192 = vld [vmem:[%s1 + $0x508] sm:$0xff]
    %v193 = vld [vmem:[%s1 + $0x510] sm:$0xff]
    %v194 = vld [vmem:[%s1 + $0x518] sm:$0xff]
    %v195 = vld [vmem:[%s1 + $0x520] sm:$0xff]
    %v196 = vld [vmem:[%s1 + $0x528] sm:$0xff]
    %v197 = vld [vmem:[%s1 + $0x530] sm:$0xff]
    %v198 = vld [vmem:[%s1 + $0x538] sm:$0xff]
    %v199 = vld [vmem:[%s1 + $0x540] sm:$0xff]
    %v200 = vld [vmem:[%s1 + $0x548] sm:$0xff]
    %v201 = vld [vmem:[%s1 + $0x550] sm:$0xff]
    %v202 = vld [vmem:[%s1 + $0x558] sm:$0xff]
    %v203 = vld [vmem:[%s1 + $0x560] sm:$0xff]
    %v204 = vld [vmem:[%s1 + $0x568] sm:$0xff]
    %v205 = vld [vmem:[%s1 + $0x570] sm:$0xff]
    %v206 = vld [vmem:[%s1 + $0x578] sm:$0xff]
    %v207 = vld [vmem:[%s1 + $0x580] sm:$0xff]
    %v208 = vld [vmem:[%s1 + $0x588] sm:$0xff]
    %v209 = vld [vmem:[%s1 + $0x590] sm:$0xff]
    %v210 = vld [vmem:[%s1 + $0x598] sm:$0xff]
    %v211 = vld [vmem:[%s1 + $0x5a0] sm:$0xff]
    %v212 = vld [vmem:[%s1 + $0x5a8] sm:$0xff]
    %v213 = vld [vmem:[%s1 + $0x5b0] sm:$0xff]
    %v214 = vld [vmem:[%s1 + $0x5b8] sm:$0xff]
    %v215 = vld [vmem:[%s1 + $0x5c0] sm:$0xff]
    %v216 = vld [vmem:[%s1 + $0x5c8] sm:$0xff]
    %v217 = vld [vmem:[%s1 + $0x5d0] sm:$0xff]
    %v218 = vld [vmem:[%s1 + $0x5d8] sm:$0xff]
    %v219 = vld [vmem:[%s1 + $0x5e0] sm:$0xff]
    %v220 = vld [vmem:[%s1 + $0x5e8] sm:$0xff]
    %v221 = vld [vmem:[%s1 + $0x5f0] sm:$0xff]
    %v222 = vld [vmem:[%s1 + $0x5f8] sm:$0xff]
    %v223 = vld [vmem:[%s1 + $0x600] sm:$0xff]
    %v224 = vld [vmem:[%s1 + $0x608] sm:$0xff]
    %v225 = vld [vmem:[%s1 + $0x610] sm:$0xff]
    %v226 = vld [vmem:[%s1 + $0x618] sm:$0xff]
    %v227 = vld [vmem:[%s1 + $0x620] sm:$0xff]
    %v228 = vld [vmem:[%s1 + $0x628] sm:$0xff]
    %v229 = vld [vmem:[%s1 + $0x630] sm:$0xff]
    %v230 = vld [vmem:[%s1 + $0x638] sm:$0xff]
    %v231 = vld [vmem:[%s1 + $0x640] sm:$0xff]
    %v232 = vld [vmem:[%s1 + $0x648] sm:$0xff]
    %v233 = vld [vmem:[%s1 + $0x650] sm:$0xff]
    %v234 = vld [vmem:[%s1 + $0x658] sm:$0xff]
    %v235 = vld [vmem:[%s1 + $0x660] sm:$0xff]
    %v236 = vld [vmem:[%s1 + $0x668] sm:$0xff]
    %v237 = vld [vmem:[%s1 + $0x670] sm:$0xff]
    %v238 = vld [vmem:[%s1 + $0x678] sm:$0xff]
    %v239 = vld [vmem:[%s1 + $0x680] sm:$0xff]
    %v240 = vld [vmem:[%s1 + $0x688] sm:$0xff]
    %v241 = vld [vmem:[%s1 + $0x690] sm:$0xff]
    %v242 = vld [vmem:[%s1 + $0x698] sm:$0xff]
    %v243 = vld [vmem:[%s1 + $0x6a0] sm:$0xff]
    %v244 = vld [vmem:[%s1 + $0x6a8] sm:$0xff]
    %v245 = vld [vmem:[%s1 + $0x6b0] sm:$0xff]
    %v246 = vld [vmem:[%s1 + $0x6b8] sm:$0xff]
    %v247 = vld [vmem:[%s1 + $0x6c0] sm:$0xff]
    %v248 = vld [vmem:[%s1 + $0x6c8] sm:$0xff]
    %v249 = vld [vmem:[%s1 + $0x6d0] sm:$0xff]
    %v250 = vld [vmem:[%s1 + $0x6d8] sm:$0xff]
    %v251 = vld [vmem:[%s1 + $0x6e0] sm:$0xff]
    %v252 = vld [vmem:[%s1 + $0x6e8] sm:$0xff]
    %v253 = vld [vmem:[%s1 + $0x6f0] sm:$0xff]
    %v254 = vld [vmem:[%s1 + $0x6f8] sm:$0xff]
    %v255 = vld [vmem:[%s1 + $0x700] sm:$0xff]
    %v256 = vld [vmem:[%s1 + $0x708] sm:$0xff]
    %v257 = vld [vmem:[%s1 + $0x710] sm:$0xff]
    %v258 = vld [vmem:[%s1 + $0x718] sm:$0xff]
    %v259 = vld [vmem:[%s1 + $0x720] sm:$0xff]
    %v260 = vld [vmem:[%s1 + $0x728] sm:$0xff]
    %v261 = vld [vmem:[%s1 + $0x730] sm:$0xff]
    %v262 = vld [vmem:[%s1 + $0x738] sm:$0xff]
    %v263 = vld [vmem:[%s1 + $0x740] sm:$0xff]
    %v264 = vld [vmem:[%s1 + $0x748] sm:$0xff]
    %v265 = vld [vmem:[%s1 + $0x750] sm:$0xff]
    %v266 = vld [vmem:[%s1 + $0x758] sm:$0xff]
    %v267 = vld [vmem:[%s1 + $0x760] sm:$0xff]
    %v268 = vld [vmem:[%s1 + $0x768] sm:$0xff]
    %v269 = vld [vmem:[%s1 + $0x770] sm:$0xff]
    %v270 = vld [vmem:[%s1 + $0x778] sm:$0xff]
    %v271 = vld [vmem:[%s1 + $0x780] sm:$0xff]
    %v272 = vld [vmem:[%s1 + $0x788] sm:$0xff]
    %v273 = vld [vmem:[%s1 + $0x790] sm:$0xff]
    %v274 = vld [vmem:[%s1 + $0x798] sm:$0xff]
    %v275 = vld [vmem:[%s1 + $0x7a0] sm:$0xff]
    %v276 = vld [vmem:[%s1 + $0x7a8] sm:$0xff]
    %v277 = vld [vmem:[%s1 + $0x7b0] sm:$0xff]
    %v278 = vld [vmem:[%s1 + $0x7b8] sm:$0xff]
    %v279 = vld [vmem:[%s1 + $0x7c0] sm:$0xff]
    %v280 = vld [vmem:[%s1 + $0x7c8] sm:$0xff]
    %v281 = vld [vmem:[%s1 + $0x7d0] sm:$0xff]
    %v282 = vld [vmem:[%s1 + $0x7d8] sm:$0xff]
    %v283 = vld [vmem:[%s1 + $0x7e0] sm:$0xff]
    %v284 = vld [vmem:[%s1 + $0x7e8] sm:$0xff]
    %v285 = vld [vmem:[%s1 + $0x7f0] sm:$0xff]
    %v286 = vld [vmem:[%s1 + $0x7f8] sm:$0xff]
    %v287 = vld [vmem:[%s1 + $0x800] sm:$0xff]
    %v288 = vld [vmem:[%s1 + $0x808] sm:$0xff]
    %v289 = vld [vmem:[%s1 + $0x810] sm:$0xff]
    %v290 = vld [vmem:[%s1 + $0x818] sm:$0xff]
    %v291 = vld [vmem:[%s1 + $0x820] sm:$0xff]
    %v292 = vld [vmem:[%s1 + $0x828] sm:$0xff]
    %v293 = vld [vmem:[%s1 + $0x830] sm:$0xff]
    %v294 = vld [vmem:[%s1 + $0x838] sm:$0xff]
    %v295 = vld [vmem:[%s1 + $0x840] sm:$0xff]
    %v296 = vld [vmem:[%s1 + $0x848] sm:$0xff]
    %v297 = vld [vmem:[%s1 + $0x850] sm:$0xff]
    %v298 = vld [vmem:[%s1 + $0x858] sm:$0xff]
    %v299 = vld [vmem:[%s1 + $0x860] sm:$0xff]
    %v300 = vld [vmem:[%s1 + $0x868] sm:$0xff]
    %v301 = vld [vmem:[%s1 + $0x870] sm:$0xff]
    %v302 = vld [vmem:[%s1 + $0x878] sm:$0xff]
    %v303 = vld [vmem:[%s1 + $0x880] sm:$0xff]
    %v304 = vld [vmem:[%s1 + $0x888] sm:$0xff]
    %v305 = vld [vmem:[%s1 + $0x890] sm:$0xff]
    %v306 = vld [vmem:[%s1 + $0x898] sm:$0xff]
    %v307 = vld [vmem:[%s1 + $0x8a0] sm:$0xff]
    %v308 = vld [vmem:[%s1 + $0x8a8] sm:$0xff]
    %v309 = vld [vmem:[%s1 + $0x8b0] sm:$0xff]
    %v310 = vld [vmem:[%s1 + $0x8b8] sm:$0xff]
    %v311 = vld [vmem:[%s1 + $0x8c0] sm:$0xff]
    %v312 = vld [vmem:[%s1 + $0x8c8] sm:$0xff]
    %v313 = vld [vmem:[%s1 + $0x8d0] sm:$0xff]
    %v314 = vld [vmem:[%s1 + $0x8d8] sm:$0xff]
    %v315 = vld [vmem:[%s1 + $0x8e0] sm:$0xff]
    %v316 = vld [vmem:[%s1 + $0x8e8] sm:$0xff]
    %v317 = vld [vmem:[%s1 + $0x8f0] sm:$0xff]
    %v318 = vld [vmem:[%s1 + $0x8f8] sm:$0xff]
    %v319 = vld [vmem:[%s1 + $0x900] sm:$0xff]
    %v320 = vld [vmem:[%s1 + $0x908] sm:$0xff]
    %v321 = vld [vmem:[%s1 + $0x910] sm:$0xff]
    %v322 = vld [vmem:[%s1 + $0x918] sm:$0xff]
    %v323 = vld [vmem:[%s1 + $0x920] sm:$0xff]
    %v324 = vld [vmem:[%s1 + $0x928] sm:$0xff]
    %v325 = vld [vmem:[%s1 + $0x930] sm:$0xff]
    %v326 = vld [vmem:[%s1 + $0x938] sm:$0xff]
    %v327 = vld [vmem:[%s1 + $0x940] sm:$0xff]
    %v328 = vld [vmem:[%s1 + $0x948] sm:$0xff]
    %v329 = vld [vmem:[%s1 + $0x950] sm:$0xff]
    %v330 = vld [vmem:[%s1 + $0x958] sm:$0xff]
    %v331 = vld [vmem:[%s1 + $0x960] sm:$0xff]
    %v332 = vld [vmem:[%s1 + $0x968] sm:$0xff]
    %v333 = vld [vmem:[%s1 + $0x970] sm:$0xff]
    %v334 = vld [vmem:[%s1 + $0x978] sm:$0xff]
    %v335 = vld [vmem:[%s1 + $0x980] sm:$0xff]
    %v336 = vld [vmem:[%s1 + $0x988] sm:$0xff]
    %v337 = vld [vmem:[%s1 + $0x990] sm:$0xff]
    %v338 = vld [vmem:[%s1 + $0x998] sm:$0xff]
    %v339 = vld [vmem:[%s1 + $0x9a0] sm:$0xff]
    %v340 = vld [vmem:[%s1 + $0x9a8] sm:$0xff]
    %v341 = vld [vmem:[%s1 + $0x9b0] sm:$0xff]
    %v342 = vld [vmem:[%s1 + $0x9b8] sm:$0xff]
    %v343 = vld [vmem:[%s1 + $0x9c0] sm:$0xff]
    %v344 = vld [vmem:[%s1 + $0x9c8] sm:$0xff]
    %v345 = vld [vmem:[%s1 + $0x9d0] sm:$0xff]
    %v346 = vld [vmem:[%s1 + $0x9d8] sm:$0xff]
    %v347 = vld [vmem:[%s1 + $0x9e0] sm:$0xff]
    %v348 = vld [vmem:[%s1 + $0x9e8] sm:$0xff]
    %v349 = vld [vmem:[%s1 + $0x9f0] sm:$0xff]
    %v350 = vld [vmem:[%s1 + $0x9f8] sm:$0xff]
    %v351 = vld [vmem:[%s1 + $0xa00] sm:$0xff]
    %v352 = vld [vmem:[%s1 + $0xa08] sm:$0xff]
    %v353 = vld [vmem:[%s1 + $0xa10] sm:$0xff]
    %v354 = vld [vmem:[%s1 + $0xa18] sm:$0xff]
    %v355 = vld [vmem:[%s1 + $0xa20] sm:$0xff]
    %v356 = vld [vmem:[%s1 + $0xa28] sm:$0xff]
    %v357 = vld [vmem:[%s1 + $0xa30] sm:$0xff]
    %v358 = vld [vmem:[%s1 + $0xa38] sm:$0xff]
    %v359 = vld [vmem:[%s1 + $0xa40] sm:$0xff]
    %v360 = vld [vmem:[%s1 + $0xa48] sm:$0xff]
    %v361 = vld [vmem:[%s1 + $0xa50] sm:$0xff]
    %v362 = vld [vmem:[%s1 + $0xa58] sm:$0xff]
    %v363 = vld [vmem:[%s1 + $0xa60] sm:$0xff]
    %v364 = vld [vmem:[%s1 + $0xa68] sm:$0xff]
    %v365 = vld [vmem:[%s1 + $0xa70] sm:$0xff]
    %v366 = vld [vmem:[%s1 + $0xa78] sm:$0xff]
    %v367 = vld [vmem:[%s1 + $0xa80] sm:$0xff]
    %v368 = vld [vmem:[%s1 + $0xa88] sm:$0xff]
    %v369 = vld [vmem:[%s1 + $0xa90] sm:$0xff]
    %v370 = vld [vmem:[%s1 + $0xa98] sm:$0xff]
    %v371 = vld [vmem:[%s1 + $0xaa0] sm:$0xff]
    %v372 = vld [vmem:[%s1 + $0xaa8] sm:$0xff]
    %v373 = vld [vmem:[%s1 + $0xab0] sm:$0xff]
    %v374 = vld [vmem:[%s1 + $0xab8] sm:$0xff]
    %v375 = vld [vmem:[%s1 + $0xac0] sm:$0xff]
    %v376 = vld [vmem:[%s1 + $0xac8] sm:$0xff]
    %v377 = vld [vmem:[%s1 + $0xad0] sm:$0xff]
    %v378 = vld [vmem:[%s1 + $0xad8] sm:$0xff]
    %v379 = vld [vmem:[%s1 + $0xae0] sm:$0xff]
    %v380 = vld [vmem:[%s1 + $0xae8] sm:$0xff]
    %v381 = vld [vmem:[%s1 + $0xaf0] sm:$0xff]
    %v382 = vld [vmem:[%s1 + $0xaf8] sm:$0xff]
    %v383 = vld [vmem:[%s1 + $0xb00] sm:$0xff]
    %v384 = vld [vmem:[%s1 + $0xb08] sm:$0xff]
    %v385 = vld [vmem:[%s1 + $0xb10] sm:$0xff]
    %v386 = vld [vmem:[%s1 + $0xb18] sm:$0xff]
    %v387 = vld [vmem:[%s1 + $0xb20] sm:$0xff]
    %v388 = vld [vmem:[%s1 + $0xb28] sm:$0xff]
    %v389 = vld [vmem:[%s1 + $0xb30] sm:$0xff]
    %v390 = vld [vmem:[%s1 + $0xb38] sm:$0xff]
    %v391 = vld [vmem:[%s1 + $0xb40] sm:$0xff]
    %v392 = vld [vmem:[%s1 + $0xb48] sm:$0xff]
    %v393 = vld [vmem:[%s1 + $0xb50] sm:$0xff]
    %v394 = vld [vmem:[%s1 + $0xb58] sm:$0xff]
    %v395 = vld [vmem:[%s1 + $0xb60] sm:$0xff]
    %v396 = vld [vmem:[%s1 + $0xb68] sm:$0xff]
    %v397 = vld [vmem:[%s1 + $0xb70] sm:$0xff]
    %v398 = vld [vmem:[%s1 + $0xb78] sm:$0xff]
    %v399 = vld [vmem:[%s1 + $0xb80] sm:$0xff]
    %v400 = vld [vmem:[%s1 + $0xb88] sm:$0xff]
    %v401 = vld [vmem:[%s1 + $0xb90] sm:$0xff]
    %v402 = vld [vmem:[%s1 + $0xb98] sm:$0xff]
    %v403 = vld [vmem:[%s1 + $0xba0] sm:$0xff]
    %v404 = vld [vmem:[%s1 + $0xba8] sm:$0xff]
    %v405 = vld [vmem:[%s1 + $0xbb0] sm:$0xff]
    %v406 = vld [vmem:[%s1 + $0xbb8] sm:$0xff]
    %v407 = vld [vmem:[%s1 + $0xbc0] sm:$0xff]
    %v408 = vld [vmem:[%s1 + $0xbc8] sm:$0xff]
    %v409 = vld [vmem:[%s1 + $0xbd0] sm:$0xff]
    %v410 = vld [vmem:[%s1 + $0xbd8] sm:$0xff]
    %v411 = vld [vmem:[%s1 + $0xbe0] sm:$0xff]
    %v412 = vld [vmem:[%s1 + $0xbe8] sm:$0xff]
    %v413 = vld [vmem:[%s1 + $0xbf0] sm:$0xff]
    %v414 = vld [vmem:[%s1 + $0xbf8] sm:$0xff]
    %v415 = vld [vmem:[%s1 + $0xc00] sm:$0xff]
    %v416 = vld [vmem:[%s1 + $0xc08] sm:$0xff]
    %v417 = vld [vmem:[%s1 + $0xc10] sm:$0xff]
    %v418 = vld [vmem:[%s1 + $0xc18] sm:$0xff]
    %v419 = vld [vmem:[%s1 + $0xc20] sm:$0xff]
    %v420 = vld [vmem:[%s1 + $0xc28] sm:$0xff]
    %v421 = vld [vmem:[%s1 + $0xc30] sm:$0xff]
    %v422 = vld [vmem:[%s1 + $0xc38] sm:$0xff]
    %v423 = vld [vmem:[%s1 + $0xc40] sm:$0xff]
    %v424 = vld [vmem:[%s1 + $0xc48] sm:$0xff]
    %v425 = vld [vmem:[%s1 + $0xc50] sm:$0xff]
    %v426 = vld [vmem:[%s1 + $0xc58] sm:$0xff]
    %v427 = vld [vmem:[%s1 + $0xc60] sm:$0xff]
    %v428 = vld [vmem:[%s1 + $0xc68] sm:$0xff]
    %v429 = vld [vmem:[%s1 + $0xc70] sm:$0xff]
    %v430 = vld [vmem:[%s1 + $0xc78] sm:$0xff]
    %v431 = vld [vmem:[%s1 + $0xc80] sm:$0xff]
    %v432 = vld [vmem:[%s1 + $0xc88] sm:$0xff]
    %v433 = vld [vmem:[%s1 + $0xc90] sm:$0xff]
    %v434 = vld [vmem:[%s1 + $0xc98] sm:$0xff]
    %v435 = vld [vmem:[%s1 + $0xca0] sm:$0xff]
    %v436 = vld [vmem:[%s1 + $0xca8] sm:$0xff]
    %v437 = vld [vmem:[%s1 + $0xcb0] sm:$0xff]
    %v438 = vld [vmem:[%s1 + $0xcb8] sm:$0xff]
    %v439 = vld [vmem:[%s1 + $0xcc0] sm:$0xff]
    %v440 = vld [vmem:[%s1 + $0xcc8] sm:$0xff]
    %v441 = vld [vmem:[%s1 + $0xcd0] sm:$0xff]
    %v442 = vld [vmem:[%s1 + $0xcd8] sm:$0xff]
    %v443 = vld [vmem:[%s1 + $0xce0] sm:$0xff]
    %v444 = vld [vmem:[%s1 + $0xce8] sm:$0xff]
    %v445 = vld [vmem:[%s1 + $0xcf0] sm:$0xff]
    %v446 = vld [vmem:[%s1 + $0xcf8] sm:$0xff]
    %v447 = vld [vmem:[%s1 + $0xd00] sm:$0xff]
    %v448 = vld [vmem:[%s1 + $0xd08] sm:$0xff]
    %v449 = vld [vmem:[%s1 + $0xd10] sm:$0xff]
    %v450 = vld [vmem:[%s1 + $0xd18] sm:$0xff]
    %v451 = vld [vmem:[%s1 + $0xd20] sm:$0xff]
    %v452 = vld [vmem:[%s1 + $0xd28] sm:$0xff]
    %v453 = vld [vmem:[%s1 + $0xd30] sm:$0xff]
    %v454 = vld [vmem:[%s1 + $0xd38] sm:$0xff]
    %v455 = vld [vmem:[%s1 + $0xd40] sm:$0xff]
    %v456 = vld [vmem:[%s1 + $0xd48] sm:$0xff]
    %v457 = vld [vmem:[%s1 + $0xd50] sm:$0xff]
    %v458 = vld [vmem:[%s1 + $0xd58] sm:$0xff]
    %v459 = vld [vmem:[%s1 + $0xd60] sm:$0xff]
    %v460 = vld [vmem:[%s1 + $0xd68] sm:$0xff]
    %v461 = vld [vmem:[%s1 + $0xd70] sm:$0xff]
    %v462 = vld [vmem:[%s1 + $0xd78] sm:$0xff]
    %v463 = vld [vmem:[%s1 + $0xd80] sm:$0xff]
    %v464 = vld [vmem:[%s1 + $0xd88] sm:$0xff]
    %v465 = vld [vmem:[%s1 + $0xd90] sm:$0xff]
    %v466 = vld [vmem:[%s1 + $0xd98] sm:$0xff]
    %v467 = vld [vmem:[%s1 + $0xda0] sm:$0xff]
    %v468 = vld [vmem:[%s1 + $0xda8] sm:$0xff]
    %v469 = vld [vmem:[%s1 + $0xdb0] sm:$0xff]
    %v470 = vld [vmem:[%s1 + $0xdb8] sm:$0xff]
    %v471 = vld [vmem:[%s1 + $0xdc0] sm:$0xff]
    %v472 = vld [vmem:[%s1 + $0xdc8] sm:$0xff]
    %v473 = vld [vmem:[%s1 + $0xdd0] sm:$0xff]
    %v474 = vld [vmem:[%s1 + $0xdd8] sm:$0xff]
    %v475 = vld [vmem:[%s1 + $0xde0] sm:$0xff]
    %v476 = vld [vmem:[%s1 + $0xde8] sm:$0xff]
    %v477 = vld [vmem:[%s1 + $0xdf0] sm:$0xff]
    %v478 = vld [vmem:[%s1 + $0xdf8] sm:$0xff]
    %v479 = vld [vmem:[%s1 + $0xe00] sm:$0xff]
    %v480 = vld [vmem:[%s1 + $0xe08] sm:$0xff]
    %v481 = vld [vmem:[%s1 + $0xe10] sm:$0xff]
    %v482 = vld [vmem:[%s1 + $0xe18] sm:$0xff]
    %v483 = vld [vmem:[%s1 + $0xe20] sm:$0xff]
    %v484 = vld [vmem:[%s1 + $0xe28] sm:$0xff]
    %v485 = vld [vmem:[%s1 + $0xe30] sm:$0xff]
    %v486 = vld [vmem:[%s1 + $0xe38] sm:$0xff]
    %v487 = vld [vmem:[%s1 + $0xe40] sm:$0xff]
    %v488 = vld [vmem:[%s1 + $0xe48] sm:$0xff]
    %v489 = vld [vmem:[%s1 + $0xe50] sm:$0xff]
    %v490 = vld [vmem:[%s1 + $0xe58] sm:$0xff]
    %v491 = vld [vmem:[%s1 + $0xe60] sm:$0xff]
    %v492 = vld [vmem:[%s1 + $0xe68] sm:$0xff]
    %v493 = vld [vmem:[%s1 + $0xe70] sm:$0xff]
    %v494 = vld [vmem:[%s1 + $0xe78] sm:$0xff]
    %v495 = vld [vmem:[%s1 + $0xe80] sm:$0xff]
    %v496 = vld [vmem:[%s1 + $0xe88] sm:$0xff]
    %v497 = vld [vmem:[%s1 + $0xe90] sm:$0xff]
    %v498 = vld [vmem:[%s1 + $0xe98] sm:$0xff]
    %v499 = vld [vmem:[%s1 + $0xea0] sm:$0xff]
    %v500 = vld [vmem:[%s1 + $0xea8] sm:$0xff]
    %v501 = vld [vmem:[%s1 + $0xeb0] sm:$0xff]
    %v502 = vld [vmem:[%s1 + $0xeb8] sm:$0xff]
    %v503 = vld [vmem:[%s1 + $0xec0] sm:$0xff]
    %v504 = vld [vmem:[%s1 + $0xec8] sm:$0xff]
    %v505 = vld [vmem:[%s1 + $0xed0] sm:$0xff]
    %v506 = vld [vmem:[%s1 + $0xed8] sm:$0xff]
    %v507 = vld [vmem:[%s1 + $0xee0] sm:$0xff]
    %v508 = vld [vmem:[%s1 + $0xee8] sm:$0xff]
    %v509 = vld [vmem:[%s1 + $0xef0] sm:$0xff]
    %v510 = vld [vmem:[%s1 + $0xef8] sm:$0xff]
    %v511 = vld [vmem:[%s1 + $0xf00] sm:$0xff]
    %v512 = vld [vmem:[%s1 + $0xf08] sm:$0xff]
    %v513 = vld [vmem:[%s1 + $0xf10] sm:$0xff]
    %v514 = vld [vmem:[%s1 + $0xf18] sm:$0xff]
    %v515 = vld [vmem:[%s1 + $0xf20] sm:$0xff]
    %v516 = vld [vmem:[%s1 + $0xf28] sm:$0xff]
    %v517 = vld [vmem:[%s1 + $0xf30] sm:$0xff]
    %v518 = vld [vmem:[%s1 + $0xf38] sm:$0xff]
    %v519 = vld [vmem:[%s1 + $0xf40] sm:$0xff]
    %v520 = vld [vmem:[%s1 + $0xf48] sm:$0xff]
    %v521 = vld [vmem:[%s1 + $0xf50] sm:$0xff]
    %v522 = vld [vmem:[%s1 + $0xf58] sm:$0xff]
    %v523 = vld [vmem:[%s1 + $0xf60] sm:$0xff]
    %v524 = vld [vmem:[%s1 + $0xf68] sm:$0xff]
    %v525 = vld [vmem:[%s1 + $0xf70] sm:$0xff]
    %v526 = vld [vmem:[%s1 + $0xf78] sm:$0xff]
    %v527 = vld [vmem:[%s1 + $0xf80] sm:$0xff]
    %v528 = vld [vmem:[%s1 + $0xf88] sm:$0xff]
    %v529 = vld [vmem:[%s1 + $0xf90] sm:$0xff]
    %v530 = vld [vmem:[%s1 + $0xf98] sm:$0xff]
    %v531 = vld [vmem:[%s1 + $0xfa0] sm:$0xff]
    %v532 = vld [vmem:[%s1 + $0xfa8] sm:$0xff]
    %v533 = vld [vmem:[%s1 + $0xfb0] sm:$0xff]
    %v534 = vld [vmem:[%s1 + $0xfb8] sm:$0xff]
    %v535 = vld [vmem:[%s1 + $0xfc0] sm:$0xff]
    %v536 = vld [vmem:[%s1 + $0xfc8] sm:$0xff]
    %v537 = vld [vmem:[%s1 + $0xfd0] sm:$0xff]
    %v538 = vld [vmem:[%s1 + $0xfd8] sm:$0xff]
    %v539 = vld [vmem:[%s1 + $0xfe0] sm:$0xff]
    %v540 = vld [vmem:[%s1 + $0xfe8] sm:$0xff]
    %v541 = vld [vmem:[%s1 + $0xff0] sm:$0xff]
    %v542 = vld [vmem:[%s1 + $0xff8] sm:$0xff]
    %v543 = vld [vmem:[%s1 + $0x1000] sm:$0xff]
    %v544 = vld [vmem:[%s1 + $0x1008] sm:$0xff]
    %v545 = vld [vmem:[%s1 + $0x1010] sm:$0xff]
    %v546 = vld [vmem:[%s1 + $0x1018] sm:$0xff]
    %v547 = vld [vmem:[%s1 + $0x1020] sm:$0xff]
    %v548 = vld [vmem:[%s1 + $0x1028] sm:$0xff]
    %v549 = vld [vmem:[%s1 + $0x1030] sm:$0xff]
    %v550 = vld [vmem:[%s1 + $0x1038] sm:$0xff]
    %v551 = vld [vmem:[%s1 + $0x1040] sm:$0xff]
    %v552 = vld [vmem:[%s1 + $0x1048] sm:$0xff]
    %v553 = vld [vmem:[%s1 + $0x1050] sm:$0xff]
    %v554 = vld [vmem:[%s1 + $0x1058] sm:$0xff]
    %v555 = vld [vmem:[%s1 + $0x1060] sm:$0xff]
    %v556 = vld [vmem:[%s1 + $0x1068] sm:$0xff]
    %v557 = vld [vmem:[%s1 + $0x1070] sm:$0xff]
    %v558 = vld [vmem:[%s1 + $0x1078] sm:$0xff]
    %v559 = vld [vmem:[%s1 + $0x1080] sm:$0xff]
    %v560 = vld [vmem:[%s1 + $0x1088] sm:$0xff]
    %v561 = vld [vmem:[%s1 + $0x1090] sm:$0xff]
    %v562 = vld [vmem:[%s1 + $0x1098] sm:$0xff]
    %v563 = vld [vmem:[%s1 + $0x10a0] sm:$0xff]
    %v564 = vld [vmem:[%s1 + $0x10a8] sm:$0xff]
    %v565 = vld [vmem:[%s1 + $0x10b0] sm:$0xff]
    %v566 = vld [vmem:[%s1 + $0x10b8] sm:$0xff]
    %v567 = vld [vmem:[%s1 + $0x10c0] sm:$0xff]
    %v568 = vld [vmem:[%s1 + $0x10c8] sm:$0xff]
    %v569 = vld [vmem:[%s1 + $0x10d0] sm:$0xff]
    %v570 = vld [vmem:[%s1 + $0x10d8] sm:$0xff]
    %v571 = vld [vmem:[%s1 + $0x10e0] sm:$0xff]
    %v572 = vld [vmem:[%s1 + $0x10e8] sm:$0xff]
    %v573 = vld [vmem:[%s1 + $0x10f0] sm:$0xff]
    %v574 = vld [vmem:[%s1 + $0x10f8] sm:$0xff]
    %v575 = vld [vmem:[%s1 + $0x1100] sm:$0xff]
    %v576 = vld [vmem:[%s1 + $0x1108] sm:$0xff]
    %v577 = vld [vmem:[%s1 + $0x1110] sm:$0xff]
    %v578 = vld [vmem:[%s1 + $0x1118] sm:$0xff]
    %v579 = vld [vmem:[%s1 + $0x1120] sm:$0xff]
    %v580 = vld [vmem:[%s1 + $0x1128] sm:$0xff]
    %v581 = vld [vmem:[%s1 + $0x1130] sm:$0xff]
    %v582 = vld [vmem:[%s1 + $0x1138] sm:$0xff]
    %v583 = vld [vmem:[%s1 + $0x1140] sm:$0xff]
    %v584 = vld [vmem:[%s1 + $0x1148] sm:$0xff]
    %v585 = vld [vmem:[%s1 + $0x1150] sm:$0xff]
    %v586 = vld [vmem:[%s1 + $0x1158] sm:$0xff]
    %v587 = vld [vmem:[%s1 + $0x1160] sm:$0xff]
    %v588 = vld [vmem:[%s1 + $0x1168] sm:$0xff]
    %v589 = vld [vmem:[%s1 + $0x1170] sm:$0xff]
    %v590 = vld [vmem:[%s1 + $0x1178] sm:$0xff]
    %v591 = vld [vmem:[%s1 + $0x1180] sm:$0xff]
    %v592 = vld [vmem:[%s1 + $0x1188] sm:$0xff]
    %v593 = vld [vmem:[%s1 + $0x1190] sm:$0xff]
    %v594 = vld [vmem:[%s1 + $0x1198] sm:$0xff]
    %v595 = vld [vmem:[%s1 + $0x11a0] sm:$0xff]
    %v596 = vld [vmem:[%s1 + $0x11a8] sm:$0xff]
    %v597 = vld [vmem:[%s1 + $0x11b0] sm:$0xff]
    %v598 = vld [vmem:[%s1 + $0x11b8] sm:$0xff]
    %v599 = vld [vmem:[%s1 + $0x11c0] sm:$0xff]
    %v600 = vld [vmem:[%s1 + $0x11c8] sm:$0xff]
    %v601 = vld [vmem:[%s1 + $0x11d0] sm:$0xff]
    %v602 = vld [vmem:[%s1 + $0x11d8] sm:$0xff]
    %v603 = vld [vmem:[%s1 + $0x11e0] sm:$0xff]
    %v604 = vld [vmem:[%s1 + $0x11e8] sm:$0xff]
    %v605 = vld [vmem:[%s1 + $0x11f0] sm:$0xff]
    %v606 = vld [vmem:[%s1 + $0x11f8] sm:$0xff]
    %v607 = vld [vmem:[%s1 + $0x1200] sm:$0xff]
    %v608 = vld [vmem:[%s1 + $0x1208] sm:$0xff]
    %v609 = vld [vmem:[%s1 + $0x1210] sm:$0xff]
    %v610 = vld [vmem:[%s1 + $0x1218] sm:$0xff]
    %v611 = vld [vmem:[%s1 + $0x1220] sm:$0xff]
    %v612 = vld [vmem:[%s1 + $0x1228] sm:$0xff]
    %v613 = vld [vmem:[%s1 + $0x1230] sm:$0xff]
    %v614 = vld [vmem:[%s1 + $0x1238] sm:$0xff]
    %v615 = vld [vmem:[%s1 + $0x1240] sm:$0xff]
    %v616 = vld [vmem:[%s1 + $0x1248] sm:$0xff]
    %v617 = vld [vmem:[%s1 + $0x1250] sm:$0xff]
    %v618 = vld [vmem:[%s1 + $0x1258] sm:$0xff]
    %v619 = vld [vmem:[%s1 + $0x1260] sm:$0xff]
    %v620 = vld [vmem:[%s1 + $0x1268] sm:$0xff]
    %v621 = vld [vmem:[%s1 + $0x1270] sm:$0xff]
    %v622 = vld [vmem:[%s1 + $0x1278] sm:$0xff]
    %v623 = vld [vmem:[%s1 + $0x1280] sm:$0xff]
    %v624 = vld [vmem:[%s1 + $0x1288] sm:$0xff]
    %v625 = vld [vmem:[%s1 + $0x1290] sm:$0xff]
    %v626 = vld [vmem:[%s1 + $0x1298] sm:$0xff]
    %v627 = vld [vmem:[%s1 + $0x12a0] sm:$0xff]
    %v628 = vld [vmem:[%s1 + $0x12a8] sm:$0xff]
    %v629 = vld [vmem:[%s1 + $0x12b0] sm:$0xff]
    %v630 = vld [vmem:[%s1 + $0x12b8] sm:$0xff]
    %v631 = vld [vmem:[%s1 + $0x12c0] sm:$0xff]
    %v632 = vld [vmem:[%s1 + $0x12c8] sm:$0xff]
    %v633 = vld [vmem:[%s1 + $0x12d0] sm:$0xff]
    %v634 = vld [vmem:[%s1 + $0x12d8] sm:$0xff]
    %v635 = vld [vmem:[%s1 + $0x12e0] sm:$0xff]
    %v636 = vld [vmem:[%s1 + $0x12e8] sm:$0xff]
    %v637 = vld [vmem:[%s1 + $0x12f0] sm:$0xff]
    %v638 = vld [vmem:[%s1 + $0x12f8] sm:$0xff]
    %v639 = vld [vmem:[%s1 + $0x1300] sm:$0xff]
    %v640 = vld [vmem:[%s1 + $0x1308] sm:$0xff]
    %v641 = vld [vmem:[%s1 + $0x1310] sm:$0xff]
    %v642 = vld [vmem:[%s1 + $0x1318] sm:$0xff]
    %v643 = vld [vmem:[%s1 + $0x1320] sm:$0xff]
    %v644 = vld [vmem:[%s1 + $0x1328] sm:$0xff]
    %v645 = vld [vmem:[%s1 + $0x1330] sm:$0xff]
    %v646 = vld [vmem:[%s1 + $0x1338] sm:$0xff]
    %v647 = vld [vmem:[%s1 + $0x1340] sm:$0xff]
    %v648 = vld [vmem:[%s1 + $0x1348] sm:$0xff]
    %v649 = vld [vmem:[%s1 + $0x1350] sm:$0xff]
    %v650 = vld [vmem:[%s1 + $0x1358] sm:$0xff]
    %v651 = vld [vmem:[%s1 + $0x1360] sm:$0xff]
    %v652 = vld [vmem:[%s1 + $0x1368] sm:$0xff]
    %v653 = vld [vmem:[%s1 + $0x1370] sm:$0xff]
    %v654 = vld [vmem:[%s1 + $0x1378] sm:$0xff]
    %v655 = vld [vmem:[%s1 + $0x1380] sm:$0xff]
    %v656 = vld [vmem:[%s1 + $0x1388] sm:$0xff]
    %v657 = vld [vmem:[%s1 + $0x1390] sm:$0xff]
    %v658 = vld [vmem:[%s1 + $0x1398] sm:$0xff]
    %v659 = vld [vmem:[%s1 + $0x13a0] sm:$0xff]
    %v660 = vld [vmem:[%s1 + $0x13a8] sm:$0xff]
    %v661 = vld [vmem:[%s1 + $0x13b0] sm:$0xff]
    %v662 = vld [vmem:[%s1 + $0x13b8] sm:$0xff]
    %v663 = vld [vmem:[%s1 + $0x13c0] sm:$0xff]
    %v664 = vld [vmem:[%s1 + $0x13c8] sm:$0xff]
    %v665 = vld [vmem:[%s1 + $0x13d0] sm:$0xff]
    %v666 = vld [vmem:[%s1 + $0x13d8] sm:$0xff]
    %v667 = vld [vmem:[%s1 + $0x13e0] sm:$0xff]
    %v668 = vld [vmem:[%s1 + $0x13e8] sm:$0xff]
    %v669 = vld [vmem:[%s1 + $0x13f0] sm:$0xff]
    %v670 = vld [vmem:[%s1 + $0x13f8] sm:$0xff]
    %v671 = vld [vmem:[%s1 + $0x1400] sm:$0xff]
    %v672 = vld [vmem:[%s1 + $0x1408] sm:$0xff]
    %v673 = vld [vmem:[%s1 + $0x1410] sm:$0xff]
    %v674 = vld [vmem:[%s1 + $0x1418] sm:$0xff]
    %v675 = vld [vmem:[%s1 + $0x1420] sm:$0xff]
    %v676 = vld [vmem:[%s1 + $0x1428] sm:$0xff]
    %v677 = vld [vmem:[%s1 + $0x1430] sm:$0xff]
    %v678 = vld [vmem:[%s1 + $0x1438] sm:$0xff]
    %v679 = vld [vmem:[%s1 + $0x1440] sm:$0xff]
    %v680 = vld [vmem:[%s1 + $0x1448] sm:$0xff]
    %v681 = vld [vmem:[%s1 + $0x1450] sm:$0xff]
    %v682 = vld [vmem:[%s1 + $0x1458] sm:$0xff]
    %v683 = vld [vmem:[%s1 + $0x1460] sm:$0xff]
    %v684 = vld [vmem:[%s1 + $0x1468] sm:$0xff]
    %v685 = vld [vmem:[%s1 + $0x1470] sm:$0xff]
    %v686 = vld [vmem:[%s1 + $0x1478] sm:$0xff]
    %v687 = vld [vmem:[%s1 + $0x1480] sm:$0xff]
    %v688 = vld [vmem:[%s1 + $0x1488] sm:$0xff]
    %v689 = vld [vmem:[%s1 + $0x1490] sm:$0xff]
    %v690 = vld [vmem:[%s1 + $0x1498] sm:$0xff]
    %v691 = vld [vmem:[%s1 + $0x14a0] sm:$0xff]
    %v692 = vld [vmem:[%s1 + $0x14a8] sm:$0xff]
    %v693 = vld [vmem:[%s1 + $0x14b0] sm:$0xff]
    %v694 = vld [vmem:[%s1 + $0x14b8] sm:$0xff]
    %v695 = vld [vmem:[%s1 + $0x14c0] sm:$0xff]
    %v696 = vld [vmem:[%s1 + $0x14c8] sm:$0xff]
    %v697 = vld [vmem:[%s1 + $0x14d0] sm:$0xff]
    %v698 = vld [vmem:[%s1 + $0x14d8] sm:$0xff]
    %v699 = vld [vmem:[%s1 + $0x14e0] sm:$0xff]
    %v700 = vld [vmem:[%s1 + $0x14e8] sm:$0xff]
    %v701 = vld [vmem:[%s1 + $0x14f0] sm:$0xff]
    %v702 = vld [vmem:[%s1 + $0x14f8] sm:$0xff]
    %v703 = vld [vmem:[%s1 + $0x1500] sm:$0xff]
    %v704 = vld [vmem:[%s1 + $0x1508] sm:$0xff]
    %v705 = vld [vmem:[%s1 + $0x1510] sm:$0xff]
    %v706 = vld [vmem:[%s1 + $0x1518] sm:$0xff]
    %v707 = vld [vmem:[%s1 + $0x1520] sm:$0xff]
    %v708 = vld [vmem:[%s1 + $0x1528] sm:$0xff]
    %v709 = vld [vmem:[%s1 + $0x1530] sm:$0xff]
    %v710 = vld [vmem:[%s1 + $0x1538] sm:$0xff]
    %v711 = vld [vmem:[%s1 + $0x1540] sm:$0xff]
    %v712 = vld [vmem:[%s1 + $0x1548] sm:$0xff]
    %v713 = vld [vmem:[%s1 + $0x1550] sm:$0xff]
    %v714 = vld [vmem:[%s1 + $0x1558] sm:$0xff]
    %v715 = vld [vmem:[%s1 + $0x1560] sm:$0xff]
    %v716 = vld [vmem:[%s1 + $0x1568] sm:$0xff]
    %v717 = vld [vmem:[%s1 + $0x1570] sm:$0xff]
    %v718 = vld [vmem:[%s1 + $0x1578] sm:$0xff]
    %v719 = vld [vmem:[%s1 + $0x1580] sm:$0xff]
    %v720 = vld [vmem:[%s1 + $0x1588] sm:$0xff]
    %v721 = vld [vmem:[%s1 + $0x1590] sm:$0xff]
    %v722 = vld [vmem:[%s1 + $0x1598] sm:$0xff]
    %v723 = vld [vmem:[%s1 + $0x15a0] sm:$0xff]
    %v724 = vld [vmem:[%s1 + $0x15a8] sm:$0xff]
    %v725 = vld [vmem:[%s1 + $0x15b0] sm:$0xff]
    %v726 = vld [vmem:[%s1 + $0x15b8] sm:$0xff]
    %v727 = vld [vmem:[%s1 + $0x15c0] sm:$0xff]
    %v728 = vld [vmem:[%s1 + $0x15c8] sm:$0xff]
    %v729 = vld [vmem:[%s1 + $0x15d0] sm:$0xff]
    %v730 = vld [vmem:[%s1 + $0x15d8] sm:$0xff]
    %v731 = vld [vmem:[%s1 + $0x15e0] sm:$0xff]
    %v732 = vld [vmem:[%s1 + $0x15e8] sm:$0xff]
    %v733 = vld [vmem:[%s1 + $0x15f0] sm:$0xff]
    %v734 = vld [vmem:[%s1 + $0x15f8] sm:$0xff]
    %v735 = vld [vmem:[%s1 + $0x1600] sm:$0xff]
    %v736 = vld [vmem:[%s1 + $0x1608] sm:$0xff]
    %v737 = vld [vmem:[%s1 + $0x1610] sm:$0xff]
    %v738 = vld [vmem:[%s1 + $0x1618] sm:$0xff]
    %v739 = vld [vmem:[%s1 + $0x1620] sm:$0xff]
    %v740 = vld [vmem:[%s1 + $0x1628] sm:$0xff]
    %v741 = vld [vmem:[%s1 + $0x1630] sm:$0xff]
    %v742 = vld [vmem:[%s1 + $0x1638] sm:$0xff]
    %v743 = vld [vmem:[%s1 + $0x1640] sm:$0xff]
    %v744 = vld [vmem:[%s1 + $0x1648] sm:$0xff]
    %v745 = vld [vmem:[%s1 + $0x1650] sm:$0xff]
    %v746 = vld [vmem:[%s1 + $0x1658] sm:$0xff]
    %v747 = vld [vmem:[%s1 + $0x1660] sm:$0xff]
    %v748 = vld [vmem:[%s1 + $0x1668] sm:$0xff]
    %v749 = vld [vmem:[%s1 + $0x1670] sm:$0xff]
    %v750 = vld [vmem:[%s1 + $0x1678] sm:$0xff]
    %v751 = vld [vmem:[%s1 + $0x1680] sm:$0xff]
    %v752 = vld [vmem:[%s1 + $0x1688] sm:$0xff]
    %v753 = vld [vmem:[%s1 + $0x1690] sm:$0xff]
    %v754 = vld [vmem:[%s1 + $0x1698] sm:$0xff]
    %v755 = vld [vmem:[%s1 + $0x16a0] sm:$0xff]
    %v756 = vld [vmem:[%s1 + $0x16a8] sm:$0xff]
    %v757 = vld [vmem:[%s1 + $0x16b0] sm:$0xff]
    %v758 = vld [vmem:[%s1 + $0x16b8] sm:$0xff]
    %v759 = vld [vmem:[%s1 + $0x16c0] sm:$0xff]
    %v760 = vld [vmem:[%s1 + $0x16c8] sm:$0xff]
    %v761 = vld [vmem:[%s1 + $0x16d0] sm:$0xff]
    %v762 = vld [vmem:[%s1 + $0x16d8] sm:$0xff]
    %v763 = vld [vmem:[%s1 + $0x16e0] sm:$0xff]
    %v764 = vld [vmem:[%s1 + $0x16e8] sm:$0xff]
    %v765 = vld [vmem:[%s1 + $0x16f0] sm:$0xff]
    %v766 = vld [vmem:[%s1 + $0x16f8] sm:$0xff]
    %v767 = vld [vmem:[%s1 + $0x1700] sm:$0xff]
    %v768 = vld [vmem:[%s1 + $0x1708] sm:$0xff]
    %v769 = vld [vmem:[%s1 + $0x1710] sm:$0xff]
    %v770 = vld [vmem:[%s1 + $0x1718] sm:$0xff]
    %v771 = vld [vmem:[%s1 + $0x1720] sm:$0xff]
    %v772 = vld [vmem:[%s1 + $0x1728] sm:$0xff]
    %v773 = vld [vmem:[%s1 + $0x1730] sm:$0xff]
    %v774 = vld [vmem:[%s1 + $0x1738] sm:$0xff]
    %v775 = vld [vmem:[%s1 + $0x1740] sm:$0xff]
    %v776 = vld [vmem:[%s1 + $0x1748] sm:$0xff]
    %v777 = vld [vmem:[%s1 + $0x1750] sm:$0xff]
    %v778 = vld [vmem:[%s1 + $0x1758] sm:$0xff]
    %v779 = vld [vmem:[%s1 + $0x1760] sm:$0xff]
    %v780 = vld [vmem:[%s1 + $0x1768] sm:$0xff]
    %v781 = vld [vmem:[%s1 + $0x1770] sm:$0xff]
    %v782 = vld [vmem:[%s1 + $0x1778] sm:$0xff]
    %v783 = vld [vmem:[%s1 + $0x1780] sm:$0xff]
    %v784 = vld [vmem:[%s1 + $0x1788] sm:$0xff]
    %v785 = vld [vmem:[%s1 + $0x1790] sm:$0xff]
    %v786 = vld [vmem:[%s1 + $0x1798] sm:$0xff]
    %v787 = vld [vmem:[%s1 + $0x17a0] sm:$0xff]
    %v788 = vld [vmem:[%s1 + $0x17a8] sm:$0xff]
    %v789 = vld [vmem:[%s1 + $0x17b0] sm:$0xff]
    %v790 = vld [vmem:[%s1 + $0x17b8] sm:$0xff]
    %v791 = vld [vmem:[%s1 + $0x17c0] sm:$0xff]
    %v792 = vld [vmem:[%s1 + $0x17c8] sm:$0xff]
    %v793 = vld [vmem:[%s1 + $0x17d0] sm:$0xff]
    %v794 = vld [vmem:[%s1 + $0x17d8] sm:$0xff]
    %v795 = vld [vmem:[%s1 + $0x17e0] sm:$0xff]
    %v796 = vld [vmem:[%s1 + $0x17e8] sm:$0xff]
    %v797 = vld [vmem:[%s1 + $0x17f0] sm:$0xff]
    %v798 = vld [vmem:[%s1 + $0x17f8] sm:$0xff]
    %v799 = vld [vmem:[%s1 + $0x1800] sm:$0xff]
    %v800 = vld [vmem:[%s1 + $0x1808] sm:$0xff]
    %v801 = vld [vmem:[%s1 + $0x1810] sm:$0xff]
    %v802 = vld [vmem:[%s1 + $0x1818] sm:$0xff]
    %v803 = vld [vmem:[%s1 + $0x1820] sm:$0xff]
    %v804 = vld [vmem:[%s1 + $0x1828] sm:$0xff]
    %v805 = vld [vmem:[%s1 + $0x1830] sm:$0xff]
    %v806 = vld [vmem:[%s1 + $0x1838] sm:$0xff]
    %v807 = vld [vmem:[%s1 + $0x1840] sm:$0xff]
    %v808 = vld [vmem:[%s1 + $0x1848] sm:$0xff]
    %v809 = vld [vmem:[%s1 + $0x1850] sm:$0xff]
    %v810 = vld [vmem:[%s1 + $0x1858] sm:$0xff]
    %v811 = vld [vmem:[%s1 + $0x1860] sm:$0xff]
    %v812 = vld [vmem:[%s1 + $0x1868] sm:$0xff]
    %v813 = vld [vmem:[%s1 + $0x1870] sm:$0xff]
    %v814 = vld [vmem:[%s1 + $0x1878] sm:$0xff]
    %v815 = vld [vmem:[%s1 + $0x1880] sm:$0xff]
    %v816 = vld [vmem:[%s1 + $0x1888] sm:$0xff]
    %v817 = vld [vmem:[%s1 + $0x1890] sm:$0xff]
    %v818 = vld [vmem:[%s1 + $0x1898] sm:$0xff]
    %v819 = vld [vmem:[%s1 + $0x18a0] sm:$0xff]
    %v820 = vld [vmem:[%s1 + $0x18a8] sm:$0xff]
    %v821 = vld [vmem:[%s1 + $0x18b0] sm:$0xff]
    %v822 = vld [vmem:[%s1 + $0x18b8] sm:$0xff]
    %v823 = vld [vmem:[%s1 + $0x18c0] sm:$0xff]
    %v824 = vld [vmem:[%s1 + $0x18c8] sm:$0xff]
    %v825 = vld [vmem:[%s1 + $0x18d0] sm:$0xff]
    %v826 = vld [vmem:[%s1 + $0x18d8] sm:$0xff]
    %v827 = vld [vmem:[%s1 + $0x18e0] sm:$0xff]
    %v828 = vld [vmem:[%s1 + $0x18e8] sm:$0xff]
    %v829 = vld [vmem:[%s1 + $0x18f0] sm:$0xff]
    %v830 = vld [vmem:[%s1 + $0x18f8] sm:$0xff]
    %v831 = vld [vmem:[%s2] sm:$0xf]
    %v833 = vperm.slane %v831, 0
    %v834 = vperm.slane %v831, 1
    %v835 = vperm.slane %v831, 2
    %v836 = vperm.slane %v831, 3
    %842 = vst [vmem:[#allocation1] ss:$9 sm:$0xff] %v27
    %v843 = vld [vmem:[#allocation1] sm:$0xff]
    %v844 = vld [vmem:[#allocation1 + $0x9] sm:$0xff]
    %v845 = vld [vmem:[#allocation1 + $0x12] sm:$0xff]
    %v846 = vld [vmem:[#allocation1 + $0x1b] sm:$0xff]
    %v847 = vld [vmem:[#allocation1 + $0x24] sm:$0xff]
    %v848 = vld [vmem:[#allocation1 + $0x2d] sm:$0xff]
    %v849 = vld [vmem:[#allocation1 + $0x36] sm:$0xff]
    %v850 = vld [vmem:[#allocation1 + $0x3f] sm:$0xff]
    %852 = vst [vmem:[#allocation1] ss:$9 sm:$0xff] %v28
    %v853 = vld [vmem:[#allocation1] sm:$0xff]
    %v854 = vld [vmem:[#allocation1 + $0x9] sm:$0xff]
    %v855 = vld [vmem:[#allocation1 + $0x12] sm:$0xff]
    %v856 = vld [vmem:[#allocation1 + $0x1b] sm:$0xff]
    %v857 = vld [vmem:[#allocation1 + $0x24] sm:$0xff]
    %v858 = vld [vmem:[#allocation1 + $0x2d] sm:$0xff]
    %v859 = vld [vmem:[#allocation1 + $0x36] sm:$0xff]
    %v860 = vld [vmem:[#allocation1 + $0x3f] sm:$0xff]
    %862 = vst [vmem:[#allocation1] ss:$9 sm:$0xff] %v29
    %v863 = vld [vmem:[#allocation1] sm:$0xff]
    %v864 = vld [vmem:[#allocation1 + $0x9] sm:$0xff]
    %v865 = vld [vmem:[#allocation1 + $0x12] sm:$0xff]
    %v866 = vld [vmem:[#allocation1 + $0x1b] sm:$0xff]
    %v867 = vld [vmem:[#allocation1 + $0x24] sm:$0xff]
    %v868 = vld [vmem:[#allocation1 + $0x2d] sm:$0xff]
    %v869 = vld [vmem:[#allocation1 + $0x36] sm:$0xff]
    %v870 = vld [vmem:[#allocation1 + $0x3f] sm:$0xff]
    %872 = vst [vmem:[#allocation1] ss:$9 sm:$0xff] %v30
    %v873 = vld [vmem:[#allocation1] sm:$0xff]
    %v1699 = vunpack.c.l.b16 %v31
    %v1700 = vunpack.c.h.b16 %v31
    %v1701 = vunpack.c.l.b16 %v32
    %v1702 = vunpack.c.h.b16 %v32
    %v1703 = vunpack.c.l.b16 %v33
    %v1704 = vunpack.c.h.b16 %v33
    %v1705 = vunpack.c.l.b16 %v34
    %v1706 = vunpack.c.h.b16 %v34
    %v1707 = vunpack.c.l.b16 %v35
    %v1708 = vunpack.c.h.b16 %v35
    %v1709 = vunpack.c.l.b16 %v36
    %v1710 = vunpack.c.h.b16 %v36
    %v1711 = vunpack.c.l.b16 %v37
    %v1712 = vunpack.c.h.b16 %v37
    %v1713 = vunpack.c.l.b16 %v38
    %v1714 = vunpack.c.h.b16 %v38
    %v1715 = vunpack.c.l.b16 %v39
    %v1716 = vunpack.c.h.b16 %v39
    %v1717 = vunpack.c.l.b16 %v40
    %v1718 = vunpack.c.h.b16 %v40
    %v1719 = vunpack.c.l.b16 %v41
    %v1720 = vunpack.c.h.b16 %v41
    %v1721 = vunpack.c.l.b16 %v42
    %v1722 = vunpack.c.h.b16 %v42
    %v1723 = vunpack.c.l.b16 %v43
    %v1724 = vunpack.c.h.b16 %v43
    %v1725 = vunpack.c.l.b16 %v44
    %v1726 = vunpack.c.h.b16 %v44
    %v1727 = vunpack.c.l.b16 %v45
    %v1728 = vunpack.c.h.b16 %v45
    %v1729 = vunpack.c.l.b16 %v46
    %v1730 = vunpack.c.h.b16 %v46
    %v1731 = vunpack.c.l.b16 %v47
    %v1732 = vunpack.c.h.b16 %v47
    %v1733 = vunpack.c.l.b16 %v48
    %v1734 = vunpack.c.h.b16 %v48
    %v1735 = vunpack.c.l.b16 %v49
    %v1736 = vunpack.c.h.b16 %v49
    %v1737 = vunpack.c.l.b16 %v50
    %v1738 = vunpack.c.h.b16 %v50
    %v1739 = vunpack.c.l.b16 %v51
    %v1740 = vunpack.c.h.b16 %v51
    %v1741 = vunpack.c.l.b16 %v52
    %v1742 = vunpack.c.h.b16 %v52
    %v1743 = vunpack.c.l.b16 %v53
    %v1744 = vunpack.c.h.b16 %v53
    %v1745 = vunpack.c.l.b16 %v54
    %v1746 = vunpack.c.h.b16 %v54
    %v1747 = vunpack.c.l.b16 %v55
    %v1748 = vunpack.c.h.b16 %v55
    %v1749 = vunpack.c.l.b16 %v56
    %v1750 = vunpack.c.h.b16 %v56
    %v1751 = vunpack.c.l.b16 %v57
    %v1752 = vunpack.c.h.b16 %v57
    %v1753 = vunpack.c.l.b16 %v58
    %v1754 = vunpack.c.h.b16 %v58
    %v1755 = vunpack.c.l.b16 %v59
    %v1756 = vunpack.c.h.b16 %v59
    %v1757 = vunpack.c.l.b16 %v60
    %v1758 = vunpack.c.h.b16 %v60
    %v1759 = vunpack.c.l.b16 %v61
    %v1760 = vunpack.c.h.b16 %v61
    %v1761 = vunpack.c.l.b16 %v62
    %v1762 = vunpack.c.h.b16 %v62
    %v1763 = vunpack.c.l.b16 %v63
    %v1764 = vunpack.c.h.b16 %v63
    %v1765 = vunpack.c.l.b16 %v64
    %v1766 = vunpack.c.h.b16 %v64
    %v1767 = vunpack.c.l.b16 %v65
    %v1768 = vunpack.c.h.b16 %v65
    %v1769 = vunpack.c.l.b16 %v66
    %v1770 = vunpack.c.h.b16 %v66
    %v1771 = vunpack.c.l.b16 %v67
    %v1772 = vunpack.c.h.b16 %v67
    %v1773 = vunpack.c.l.b16 %v68
    %v1774 = vunpack.c.h.b16 %v68
    %v1775 = vunpack.c.l.b16 %v69
    %v1776 = vunpack.c.h.b16 %v69
    %v1777 = vunpack.c.l.b16 %v70
    %v1778 = vunpack.c.h.b16 %v70
    %v1779 = vunpack.c.l.b16 %v71
    %v1780 = vunpack.c.h.b16 %v71
    %v1781 = vunpack.c.l.b16 %v72
    %v1782 = vunpack.c.h.b16 %v72
    %v1783 = vunpack.c.l.b16 %v73
    %v1784 = vunpack.c.h.b16 %v73
    %v1785 = vunpack.c.l.b16 %v74
    %v1786 = vunpack.c.h.b16 %v74
    %v1787 = vunpack.c.l.b16 %v75
    %v1788 = vunpack.c.h.b16 %v75
    %v1789 = vunpack.c.l.b16 %v76
    %v1790 = vunpack.c.h.b16 %v76
    %v1791 = vunpack.c.l.b16 %v77
    %v1792 = vunpack.c.h.b16 %v77
    %v1793 = vunpack.c.l.b16 %v78
    %v1794 = vunpack.c.h.b16 %v78
    %v1795 = vunpack.c.l.b16 %v79
    %v1796 = vunpack.c.h.b16 %v79
    %v1797 = vunpack.c.l.b16 %v80
    %v1798 = vunpack.c.h.b16 %v80
    %v1799 = vunpack.c.l.b16 %v81
    %v1800 = vunpack.c.h.b16 %v81
    %v1801 = vunpack.c.l.b16 %v82
    %v1802 = vunpack.c.h.b16 %v82
    %v1803 = vunpack.c.l.b16 %v83
    %v1804 = vunpack.c.h.b16 %v83
    %v1805 = vunpack.c.l.b16 %v84
    %v1806 = vunpack.c.h.b16 %v84
    %v1807 = vunpack.c.l.b16 %v85
    %v1808 = vunpack.c.h.b16 %v85
    %v1809 = vunpack.c.l.b16 %v86
    %v1810 = vunpack.c.h.b16 %v86
    %v1811 = vunpack.c.l.b16 %v87
    %v1812 = vunpack.c.h.b16 %v87
    %v1813 = vunpack.c.l.b16 %v88
    %v1814 = vunpack.c.h.b16 %v88
    %v1815 = vunpack.c.l.b16 %v89
    %v1816 = vunpack.c.h.b16 %v89
    %v1817 = vunpack.c.l.b16 %v90
    %v1818 = vunpack.c.h.b16 %v90
    %v1819 = vunpack.c.l.b16 %v91
    %v1820 = vunpack.c.h.b16 %v91
    %v1821 = vunpack.c.l.b16 %v92
    %v1822 = vunpack.c.h.b16 %v92
    %v1823 = vunpack.c.l.b16 %v93
    %v1824 = vunpack.c.h.b16 %v93
    %v1825 = vunpack.c.l.b16 %v94
    %v1826 = vunpack.c.h.b16 %v94
    %v1827 = vunpack.c.l.b16 %v95
    %v1828 = vunpack.c.h.b16 %v95
    %v1829 = vunpack.c.l.b16 %v96
    %v1830 = vunpack.c.h.b16 %v96
    %v1831 = vunpack.c.l.b16 %v97
    %v1832 = vunpack.c.h.b16 %v97
    %v1833 = vunpack.c.l.b16 %v98
    %v1834 = vunpack.c.h.b16 %v98
    %v1835 = vunpack.c.l.b16 %v99
    %v1836 = vunpack.c.h.b16 %v99
    %v1837 = vunpack.c.l.b16 %v100
    %v1838 = vunpack.c.h.b16 %v100
    %v1839 = vunpack.c.l.b16 %v101
    %v1840 = vunpack.c.h.b16 %v101
    %v1841 = vunpack.c.l.b16 %v102
    %v1842 = vunpack.c.h.b16 %v102
    %v1843 = vunpack.c.l.b16 %v103
    %v1844 = vunpack.c.h.b16 %v103
    %v1845 = vunpack.c.l.b16 %v104
    %v1846 = vunpack.c.h.b16 %v104
    %v1847 = vunpack.c.l.b16 %v105
    %v1848 = vunpack.c.h.b16 %v105
    %v1849 = vunpack.c.l.b16 %v106
    %v1850 = vunpack.c.h.b16 %v106
    %v1851 = vunpack.c.l.b16 %v107
    %v1852 = vunpack.c.h.b16 %v107
    %v1853 = vunpack.c.l.b16 %v108
    %v1854 = vunpack.c.h.b16 %v108
    %v1855 = vunpack.c.l.b16 %v109
    %v1856 = vunpack.c.h.b16 %v109
    %v1857 = vunpack.c.l.b16 %v110
    %v1858 = vunpack.c.h.b16 %v110
    %v1859 = vunpack.c.l.b16 %v111
    %v1860 = vunpack.c.h.b16 %v111
    %v1861 = vunpack.c.l.b16 %v112
    %v1862 = vunpack.c.h.b16 %v112
    %v1863 = vunpack.c.l.b16 %v113
    %v1864 = vunpack.c.h.b16 %v113
    %v1865 = vunpack.c.l.b16 %v114
    %v1866 = vunpack.c.h.b16 %v114
    %v1867 = vunpack.c.l.b16 %v115
    %v1868 = vunpack.c.h.b16 %v115
    %v1869 = vunpack.c.l.b16 %v116
    %v1870 = vunpack.c.h.b16 %v116
    %v1871 = vunpack.c.l.b16 %v117
    %v1872 = vunpack.c.h.b16 %v117
    %v1873 = vunpack.c.l.b16 %v118
    %v1874 = vunpack.c.h.b16 %v118
    %v1875 = vunpack.c.l.b16 %v119
    %v1876 = vunpack.c.h.b16 %v119
    %v1877 = vunpack.c.l.b16 %v120
    %v1878 = vunpack.c.h.b16 %v120
    %v1879 = vunpack.c.l.b16 %v121
    %v1880 = vunpack.c.h.b16 %v121
    %v1881 = vunpack.c.l.b16 %v122
    %v1882 = vunpack.c.h.b16 %v122
    %v1883 = vunpack.c.l.b16 %v123
    %v1884 = vunpack.c.h.b16 %v123
    %v1885 = vunpack.c.l.b16 %v124
    %v1886 = vunpack.c.h.b16 %v124
    %v1887 = vunpack.c.l.b16 %v125
    %v1888 = vunpack.c.h.b16 %v125
    %v1889 = vunpack.c.l.b16 %v126
    %v1890 = vunpack.c.h.b16 %v126
    %v1891 = vunpack.c.l.b16 %v127
    %v1892 = vunpack.c.h.b16 %v127
    %v1893 = vunpack.c.l.b16 %v128
    %v1894 = vunpack.c.h.b16 %v128
    %v1895 = vunpack.c.l.b16 %v129
    %v1896 = vunpack.c.h.b16 %v129
    %v1897 = vunpack.c.l.b16 %v130
    %v1898 = vunpack.c.h.b16 %v130
    %v1899 = vunpack.c.l.b16 %v131
    %v1900 = vunpack.c.h.b16 %v131
    %v1901 = vunpack.c.l.b16 %v132
    %v1902 = vunpack.c.h.b16 %v132
    %v1903 = vunpack.c.l.b16 %v133
    %v1904 = vunpack.c.h.b16 %v133
    %v1905 = vunpack.c.l.b16 %v134
    %v1906 = vunpack.c.h.b16 %v134
    %v1907 = vunpack.c.l.b16 %v135
    %v1908 = vunpack.c.h.b16 %v135
    %v1909 = vunpack.c.l.b16 %v136
    %v1910 = vunpack.c.h.b16 %v136
    %v1911 = vunpack.c.l.b16 %v137
    %v1912 = vunpack.c.h.b16 %v137
    %v1913 = vunpack.c.l.b16 %v138
    %v1914 = vunpack.c.h.b16 %v138
    %v1915 = vunpack.c.l.b16 %v139
    %v1916 = vunpack.c.h.b16 %v139
    %v1917 = vunpack.c.l.b16 %v140
    %v1918 = vunpack.c.h.b16 %v140
    %v1919 = vunpack.c.l.b16 %v141
    %v1920 = vunpack.c.h.b16 %v141
    %v1921 = vunpack.c.l.b16 %v142
    %v1922 = vunpack.c.h.b16 %v142
    %v1923 = vunpack.c.l.b16 %v143
    %v1924 = vunpack.c.h.b16 %v143
    %v1925 = vunpack.c.l.b16 %v144
    %v1926 = vunpack.c.h.b16 %v144
    %v1927 = vunpack.c.l.b16 %v145
    %v1928 = vunpack.c.h.b16 %v145
    %v1929 = vunpack.c.l.b16 %v146
    %v1930 = vunpack.c.h.b16 %v146
    %v1931 = vunpack.c.l.b16 %v147
    %v1932 = vunpack.c.h.b16 %v147
    %v1933 = vunpack.c.l.b16 %v148
    %v1934 = vunpack.c.h.b16 %v148
    %v1935 = vunpack.c.l.b16 %v149
    %v1936 = vunpack.c.h.b16 %v149
    %v1937 = vunpack.c.l.b16 %v150
    %v1938 = vunpack.c.h.b16 %v150
    %v1939 = vunpack.c.l.b16 %v151
    %v1940 = vunpack.c.h.b16 %v151
    %v1941 = vunpack.c.l.b16 %v152
    %v1942 = vunpack.c.h.b16 %v152
    %v1943 = vunpack.c.l.b16 %v153
    %v1944 = vunpack.c.h.b16 %v153
    %v1945 = vunpack.c.l.b16 %v154
    %v1946 = vunpack.c.h.b16 %v154
    %v1947 = vunpack.c.l.b16 %v155
    %v1948 = vunpack.c.h.b16 %v155
    %v1949 = vunpack.c.l.b16 %v156
    %v1950 = vunpack.c.h.b16 %v156
    %v1951 = vunpack.c.l.b16 %v157
    %v1952 = vunpack.c.h.b16 %v157
    %v1953 = vunpack.c.l.b16 %v158
    %v1954 = vunpack.c.h.b16 %v158
    %v1955 = vunpack.c.l.b16 %v159
    %v1956 = vunpack.c.h.b16 %v159
    %v1957 = vunpack.c.l.b16 %v160
    %v1958 = vunpack.c.h.b16 %v160
    %v1959 = vunpack.c.l.b16 %v161
    %v1960 = vunpack.c.h.b16 %v161
    %v1961 = vunpack.c.l.b16 %v162
    %v1962 = vunpack.c.h.b16 %v162
    %v1963 = vunpack.c.l.b16 %v163
    %v1964 = vunpack.c.h.b16 %v163
    %v1965 = vunpack.c.l.b16 %v164
    %v1966 = vunpack.c.h.b16 %v164
    %v1967 = vunpack.c.l.b16 %v165
    %v1968 = vunpack.c.h.b16 %v165
    %v1969 = vunpack.c.l.b16 %v166
    %v1970 = vunpack.c.h.b16 %v166
    %v1971 = vunpack.c.l.b16 %v167
    %v1972 = vunpack.c.h.b16 %v167
    %v1973 = vunpack.c.l.b16 %v168
    %v1974 = vunpack.c.h.b16 %v168
    %v1975 = vunpack.c.l.b16 %v169
    %v1976 = vunpack.c.h.b16 %v169
    %v1977 = vunpack.c.l.b16 %v170
    %v1978 = vunpack.c.h.b16 %v170
    %v1979 = vunpack.c.l.b16 %v171
    %v1980 = vunpack.c.h.b16 %v171
    %v1981 = vunpack.c.l.b16 %v172
    %v1982 = vunpack.c.h.b16 %v172
    %v1983 = vunpack.c.l.b16 %v173
    %v1984 = vunpack.c.h.b16 %v173
    %v1985 = vunpack.c.l.b16 %v174
    %v1986 = vunpack.c.h.b16 %v174
    %v1987 = vunpack.c.l.b16 %v175
    %v1988 = vunpack.c.h.b16 %v175
    %v1989 = vunpack.c.l.b16 %v176
    %v1990 = vunpack.c.h.b16 %v176
    %v1991 = vunpack.c.l.b16 %v177
    %v1992 = vunpack.c.h.b16 %v177
    %v1993 = vunpack.c.l.b16 %v178
    %v1994 = vunpack.c.h.b16 %v178
    %v1995 = vunpack.c.l.b16 %v179
    %v1996 = vunpack.c.h.b16 %v179
    %v1997 = vunpack.c.l.b16 %v180
    %v1998 = vunpack.c.h.b16 %v180
    %v1999 = vunpack.c.l.b16 %v181
    %v2000 = vunpack.c.h.b16 %v181
    %v2001 = vunpack.c.l.b16 %v182
    %v2002 = vunpack.c.h.b16 %v182
    %v2003 = vunpack.c.l.b16 %v183
    %v2004 = vunpack.c.h.b16 %v183
    %v2005 = vunpack.c.l.b16 %v184
    %v2006 = vunpack.c.h.b16 %v184
    %v2007 = vunpack.c.l.b16 %v185
    %v2008 = vunpack.c.h.b16 %v185
    %v2009 = vunpack.c.l.b16 %v186
    %v2010 = vunpack.c.h.b16 %v186
    %v2011 = vunpack.c.l.b16 %v187
    %v2012 = vunpack.c.h.b16 %v187
    %v2013 = vunpack.c.l.b16 %v188
    %v2014 = vunpack.c.h.b16 %v188
    %v2015 = vunpack.c.l.b16 %v189
    %v2016 = vunpack.c.h.b16 %v189
    %v2017 = vunpack.c.l.b16 %v190
    %v2018 = vunpack.c.h.b16 %v190
    %v2019 = vunpack.c.l.b16 %v191
    %v2020 = vunpack.c.h.b16 %v191
    %v2021 = vunpack.c.l.b16 %v192
    %v2022 = vunpack.c.h.b16 %v192
    %v2023 = vunpack.c.l.b16 %v193
    %v2024 = vunpack.c.h.b16 %v193
    %v2025 = vunpack.c.l.b16 %v194
    %v2026 = vunpack.c.h.b16 %v194
    %v2027 = vunpack.c.l.b16 %v195
    %v2028 = vunpack.c.h.b16 %v195
    %v2029 = vunpack.c.l.b16 %v196
    %v2030 = vunpack.c.h.b16 %v196
    %v2031 = vunpack.c.l.b16 %v197
    %v2032 = vunpack.c.h.b16 %v197
    %v2033 = vunpack.c.l.b16 %v198
    %v2034 = vunpack.c.h.b16 %v198
    %v2035 = vunpack.c.l.b16 %v199
    %v2036 = vunpack.c.h.b16 %v199
    %v2037 = vunpack.c.l.b16 %v200
    %v2038 = vunpack.c.h.b16 %v200
    %v2039 = vunpack.c.l.b16 %v201
    %v2040 = vunpack.c.h.b16 %v201
    %v2041 = vunpack.c.l.b16 %v202
    %v2042 = vunpack.c.h.b16 %v202
    %v2043 = vunpack.c.l.b16 %v203
    %v2044 = vunpack.c.h.b16 %v203
    %v2045 = vunpack.c.l.b16 %v204
    %v2046 = vunpack.c.h.b16 %v204
    %v2047 = vunpack.c.l.b16 %v205
    %v2048 = vunpack.c.h.b16 %v205
    %v2049 = vunpack.c.l.b16 %v206
    %v2050 = vunpack.c.h.b16 %v206
    %v2051 = vunpack.c.l.b16 %v207
    %v2052 = vunpack.c.h.b16 %v207
    %v2053 = vunpack.c.l.b16 %v208
    %v2054 = vunpack.c.h.b16 %v208
    %v2055 = vunpack.c.l.b16 %v209
    %v2056 = vunpack.c.h.b16 %v209
    %v2057 = vunpack.c.l.b16 %v210
    %v2058 = vunpack.c.h.b16 %v210
    %v2059 = vunpack.c.l.b16 %v211
    %v2060 = vunpack.c.h.b16 %v211
    %v2061 = vunpack.c.l.b16 %v212
    %v2062 = vunpack.c.h.b16 %v212
    %v2063 = vunpack.c.l.b16 %v213
    %v2064 = vunpack.c.h.b16 %v213
    %v2065 = vunpack.c.l.b16 %v214
    %v2066 = vunpack.c.h.b16 %v214
    %v2067 = vunpack.c.l.b16 %v215
    %v2068 = vunpack.c.h.b16 %v215
    %v2069 = vunpack.c.l.b16 %v216
    %v2070 = vunpack.c.h.b16 %v216
    %v2071 = vunpack.c.l.b16 %v217
    %v2072 = vunpack.c.h.b16 %v217
    %v2073 = vunpack.c.l.b16 %v218
    %v2074 = vunpack.c.h.b16 %v218
    %v2075 = vunpack.c.l.b16 %v219
    %v2076 = vunpack.c.h.b16 %v219
    %v2077 = vunpack.c.l.b16 %v220
    %v2078 = vunpack.c.h.b16 %v220
    %v2079 = vunpack.c.l.b16 %v221
    %v2080 = vunpack.c.h.b16 %v221
    %v2081 = vunpack.c.l.b16 %v222
    %v2082 = vunpack.c.h.b16 %v222
    %v2083 = vunpack.c.l.b16 %v223
    %v2084 = vunpack.c.h.b16 %v223
    %v2085 = vunpack.c.l.b16 %v224
    %v2086 = vunpack.c.h.b16 %v224
    %v2087 = vunpack.c.l.b16 %v225
    %v2088 = vunpack.c.h.b16 %v225
    %v2089 = vunpack.c.l.b16 %v226
    %v2090 = vunpack.c.h.b16 %v226
    %v2091 = vunpack.c.l.b16 %v227
    %v2092 = vunpack.c.h.b16 %v227
    %v2093 = vunpack.c.l.b16 %v228
    %v2094 = vunpack.c.h.b16 %v228
    %v2095 = vunpack.c.l.b16 %v229
    %v2096 = vunpack.c.h.b16 %v229
    %v2097 = vunpack.c.l.b16 %v230
    %v2098 = vunpack.c.h.b16 %v230
    %v2099 = vunpack.c.l.b16 %v231
    %v2100 = vunpack.c.h.b16 %v231
    %v2101 = vunpack.c.l.b16 %v232
    %v2102 = vunpack.c.h.b16 %v232
    %v2103 = vunpack.c.l.b16 %v233
    %v2104 = vunpack.c.h.b16 %v233
    %v2105 = vunpack.c.l.b16 %v234
    %v2106 = vunpack.c.h.b16 %v234
    %v2107 = vunpack.c.l.b16 %v235
    %v2108 = vunpack.c.h.b16 %v235
    %v2109 = vunpack.c.l.b16 %v236
    %v2110 = vunpack.c.h.b16 %v236
    %v2111 = vunpack.c.l.b16 %v237
    %v2112 = vunpack.c.h.b16 %v237
    %v2113 = vunpack.c.l.b16 %v238
    %v2114 = vunpack.c.h.b16 %v238
    %v2115 = vunpack.c.l.b16 %v239
    %v2116 = vunpack.c.h.b16 %v239
    %v2117 = vunpack.c.l.b16 %v240
    %v2118 = vunpack.c.h.b16 %v240
    %v2119 = vunpack.c.l.b16 %v241
    %v2120 = vunpack.c.h.b16 %v241
    %v2121 = vunpack.c.l.b16 %v242
    %v2122 = vunpack.c.h.b16 %v242
    %v2123 = vunpack.c.l.b16 %v243
    %v2124 = vunpack.c.h.b16 %v243
    %v2125 = vunpack.c.l.b16 %v244
    %v2126 = vunpack.c.h.b16 %v244
    %v2127 = vunpack.c.l.b16 %v245
    %v2128 = vunpack.c.h.b16 %v245
    %v2129 = vunpack.c.l.b16 %v246
    %v2130 = vunpack.c.h.b16 %v246
    %v2131 = vunpack.c.l.b16 %v247
    %v2132 = vunpack.c.h.b16 %v247
    %v2133 = vunpack.c.l.b16 %v248
    %v2134 = vunpack.c.h.b16 %v248
    %v2135 = vunpack.c.l.b16 %v249
    %v2136 = vunpack.c.h.b16 %v249
    %v2137 = vunpack.c.l.b16 %v250
    %v2138 = vunpack.c.h.b16 %v250
    %v2139 = vunpack.c.l.b16 %v251
    %v2140 = vunpack.c.h.b16 %v251
    %v2141 = vunpack.c.l.b16 %v252
    %v2142 = vunpack.c.h.b16 %v252
    %v2143 = vunpack.c.l.b16 %v253
    %v2144 = vunpack.c.h.b16 %v253
    %v2145 = vunpack.c.l.b16 %v254
    %v2146 = vunpack.c.h.b16 %v254
    %v2147 = vunpack.c.l.b16 %v255
    %v2148 = vunpack.c.h.b16 %v255
    %v2149 = vunpack.c.l.b16 %v256
    %v2150 = vunpack.c.h.b16 %v256
    %v2151 = vunpack.c.l.b16 %v257
    %v2152 = vunpack.c.h.b16 %v257
    %v2153 = vunpack.c.l.b16 %v258
    %v2154 = vunpack.c.h.b16 %v258
    %v2155 = vunpack.c.l.b16 %v259
    %v2156 = vunpack.c.h.b16 %v259
    %v2157 = vunpack.c.l.b16 %v260
    %v2158 = vunpack.c.h.b16 %v260
    %v2159 = vunpack.c.l.b16 %v261
    %v2160 = vunpack.c.h.b16 %v261
    %v2161 = vunpack.c.l.b16 %v262
    %v2162 = vunpack.c.h.b16 %v262
    %v2163 = vunpack.c.l.b16 %v263
    %v2164 = vunpack.c.h.b16 %v263
    %v2165 = vunpack.c.l.b16 %v264
    %v2166 = vunpack.c.h.b16 %v264
    %v2167 = vunpack.c.l.b16 %v265
    %v2168 = vunpack.c.h.b16 %v265
    %v2169 = vunpack.c.l.b16 %v266
    %v2170 = vunpack.c.h.b16 %v266
    %v2171 = vunpack.c.l.b16 %v267
    %v2172 = vunpack.c.h.b16 %v267
    %v2173 = vunpack.c.l.b16 %v268
    %v2174 = vunpack.c.h.b16 %v268
    %v2175 = vunpack.c.l.b16 %v269
    %v2176 = vunpack.c.h.b16 %v269
    %v2177 = vunpack.c.l.b16 %v270
    %v2178 = vunpack.c.h.b16 %v270
    %v2179 = vunpack.c.l.b16 %v271
    %v2180 = vunpack.c.h.b16 %v271
    %v2181 = vunpack.c.l.b16 %v272
    %v2182 = vunpack.c.h.b16 %v272
    %v2183 = vunpack.c.l.b16 %v273
    %v2184 = vunpack.c.h.b16 %v273
    %v2185 = vunpack.c.l.b16 %v274
    %v2186 = vunpack.c.h.b16 %v274
    %v2187 = vunpack.c.l.b16 %v275
    %v2188 = vunpack.c.h.b16 %v275
    %v2189 = vunpack.c.l.b16 %v276
    %v2190 = vunpack.c.h.b16 %v276
    %v2191 = vunpack.c.l.b16 %v277
    %v2192 = vunpack.c.h.b16 %v277
    %v2193 = vunpack.c.l.b16 %v278
    %v2194 = vunpack.c.h.b16 %v278
    %v2195 = vunpack.c.l.b16 %v279
    %v2196 = vunpack.c.h.b16 %v279
    %v2197 = vunpack.c.l.b16 %v280
    %v2198 = vunpack.c.h.b16 %v280
    %v2199 = vunpack.c.l.b16 %v281
    %v2200 = vunpack.c.h.b16 %v281
    %v2201 = vunpack.c.l.b16 %v282
    %v2202 = vunpack.c.h.b16 %v282
    %v2203 = vunpack.c.l.b16 %v283
    %v2204 = vunpack.c.h.b16 %v283
    %v2205 = vunpack.c.l.b16 %v284
    %v2206 = vunpack.c.h.b16 %v284
    %v2207 = vunpack.c.l.b16 %v285
    %v2208 = vunpack.c.h.b16 %v285
    %v2209 = vunpack.c.l.b16 %v286
    %v2210 = vunpack.c.h.b16 %v286
    %v2211 = vunpack.c.l.b16 %v287
    %v2212 = vunpack.c.h.b16 %v287
    %v2213 = vunpack.c.l.b16 %v288
    %v2214 = vunpack.c.h.b16 %v288
    %v2215 = vunpack.c.l.b16 %v289
    %v2216 = vunpack.c.h.b16 %v289
    %v2217 = vunpack.c.l.b16 %v290
    %v2218 = vunpack.c.h.b16 %v290
    %v2219 = vunpack.c.l.b16 %v291
    %v2220 = vunpack.c.h.b16 %v291
    %v2221 = vunpack.c.l.b16 %v292
    %v2222 = vunpack.c.h.b16 %v292
    %v2223 = vunpack.c.l.b16 %v293
    %v2224 = vunpack.c.h.b16 %v293
    %v2225 = vunpack.c.l.b16 %v294
    %v2226 = vunpack.c.h.b16 %v294
    %v2227 = vunpack.c.l.b16 %v295
    %v2228 = vunpack.c.h.b16 %v295
    %v2229 = vunpack.c.l.b16 %v296
    %v2230 = vunpack.c.h.b16 %v296
    %v2231 = vunpack.c.l.b16 %v297
    %v2232 = vunpack.c.h.b16 %v297
    %v2233 = vunpack.c.l.b16 %v298
    %v2234 = vunpack.c.h.b16 %v298
    %v2235 = vunpack.c.l.b16 %v299
    %v2236 = vunpack.c.h.b16 %v299
    %v2237 = vunpack.c.l.b16 %v300
    %v2238 = vunpack.c.h.b16 %v300
    %v2239 = vunpack.c.l.b16 %v301
    %v2240 = vunpack.c.h.b16 %v301
    %v2241 = vunpack.c.l.b16 %v302
    %v2242 = vunpack.c.h.b16 %v302
    %v2243 = vunpack.c.l.b16 %v303
    %v2244 = vunpack.c.h.b16 %v303
    %v2245 = vunpack.c.l.b16 %v304
    %v2246 = vunpack.c.h.b16 %v304
    %v2247 = vunpack.c.l.b16 %v305
    %v2248 = vunpack.c.h.b16 %v305
    %v2249 = vunpack.c.l.b16 %v306
    %v2250 = vunpack.c.h.b16 %v306
    %v2251 = vunpack.c.l.b16 %v307
    %v2252 = vunpack.c.h.b16 %v307
    %v2253 = vunpack.c.l.b16 %v308
    %v2254 = vunpack.c.h.b16 %v308
    %v2255 = vunpack.c.l.b16 %v309
    %v2256 = vunpack.c.h.b16 %v309
    %v2257 = vunpack.c.l.b16 %v310
    %v2258 = vunpack.c.h.b16 %v310
    %v2259 = vunpack.c.l.b16 %v311
    %v2260 = vunpack.c.h.b16 %v311
    %v2261 = vunpack.c.l.b16 %v312
    %v2262 = vunpack.c.h.b16 %v312
    %v2263 = vunpack.c.l.b16 %v313
    %v2264 = vunpack.c.h.b16 %v313
    %v2265 = vunpack.c.l.b16 %v314
    %v2266 = vunpack.c.h.b16 %v314
    %v2267 = vunpack.c.l.b16 %v315
    %v2268 = vunpack.c.h.b16 %v315
    %v2269 = vunpack.c.l.b16 %v316
    %v2270 = vunpack.c.h.b16 %v316
    %v2271 = vunpack.c.l.b16 %v317
    %v2272 = vunpack.c.h.b16 %v317
    %v2273 = vunpack.c.l.b16 %v318
    %v2274 = vunpack.c.h.b16 %v318
    %v2275 = vunpack.c.l.b16 %v319
    %v2276 = vunpack.c.h.b16 %v319
    %v2277 = vunpack.c.l.b16 %v320
    %v2278 = vunpack.c.h.b16 %v320
    %v2279 = vunpack.c.l.b16 %v321
    %v2280 = vunpack.c.h.b16 %v321
    %v2281 = vunpack.c.l.b16 %v322
    %v2282 = vunpack.c.h.b16 %v322
    %v2283 = vunpack.c.l.b16 %v323
    %v2284 = vunpack.c.h.b16 %v323
    %v2285 = vunpack.c.l.b16 %v324
    %v2286 = vunpack.c.h.b16 %v324
    %v2287 = vunpack.c.l.b16 %v325
    %v2288 = vunpack.c.h.b16 %v325
    %v2289 = vunpack.c.l.b16 %v326
    %v2290 = vunpack.c.h.b16 %v326
    %v2291 = vunpack.c.l.b16 %v327
    %v2292 = vunpack.c.h.b16 %v327
    %v2293 = vunpack.c.l.b16 %v328
    %v2294 = vunpack.c.h.b16 %v328
    %v2295 = vunpack.c.l.b16 %v329
    %v2296 = vunpack.c.h.b16 %v329
    %v2297 = vunpack.c.l.b16 %v330
    %v2298 = vunpack.c.h.b16 %v330
    %v2299 = vunpack.c.l.b16 %v331
    %v2300 = vunpack.c.h.b16 %v331
    %v2301 = vunpack.c.l.b16 %v332
    %v2302 = vunpack.c.h.b16 %v332
    %v2303 = vunpack.c.l.b16 %v333
    %v2304 = vunpack.c.h.b16 %v333
    %v2305 = vunpack.c.l.b16 %v334
    %v2306 = vunpack.c.h.b16 %v334
    %v2307 = vunpack.c.l.b16 %v335
    %v2308 = vunpack.c.h.b16 %v335
    %v2309 = vunpack.c.l.b16 %v336
    %v2310 = vunpack.c.h.b16 %v336
    %v2311 = vunpack.c.l.b16 %v337
    %v2312 = vunpack.c.h.b16 %v337
    %v2313 = vunpack.c.l.b16 %v338
    %v2314 = vunpack.c.h.b16 %v338
    %v2315 = vunpack.c.l.b16 %v339
    %v2316 = vunpack.c.h.b16 %v339
    %v2317 = vunpack.c.l.b16 %v340
    %v2318 = vunpack.c.h.b16 %v340
    %v2319 = vunpack.c.l.b16 %v341
    %v2320 = vunpack.c.h.b16 %v341
    %v2321 = vunpack.c.l.b16 %v342
    %v2322 = vunpack.c.h.b16 %v342
    %v2323 = vunpack.c.l.b16 %v343
    %v2324 = vunpack.c.h.b16 %v343
    %v2325 = vunpack.c.l.b16 %v344
    %v2326 = vunpack.c.h.b16 %v344
    %v2327 = vunpack.c.l.b16 %v345
    %v2328 = vunpack.c.h.b16 %v345
    %v2329 = vunpack.c.l.b16 %v346
    %v2330 = vunpack.c.h.b16 %v346
    %v2331 = vunpack.c.l.b16 %v347
    %v2332 = vunpack.c.h.b16 %v347
    %v2333 = vunpack.c.l.b16 %v348
    %v2334 = vunpack.c.h.b16 %v348
    %v2335 = vunpack.c.l.b16 %v349
    %v2336 = vunpack.c.h.b16 %v349
    %v2337 = vunpack.c.l.b16 %v350
    %v2338 = vunpack.c.h.b16 %v350
    %v2339 = vunpack.c.l.b16 %v351
    %v2340 = vunpack.c.h.b16 %v351
    %v2341 = vunpack.c.l.b16 %v352
    %v2342 = vunpack.c.h.b16 %v352
    %v2343 = vunpack.c.l.b16 %v353
    %v2344 = vunpack.c.h.b16 %v353
    %v2345 = vunpack.c.l.b16 %v354
    %v2346 = vunpack.c.h.b16 %v354
    %v2347 = vunpack.c.l.b16 %v355
    %v2348 = vunpack.c.h.b16 %v355
    %v2349 = vunpack.c.l.b16 %v356
    %v2350 = vunpack.c.h.b16 %v356
    %v2351 = vunpack.c.l.b16 %v357
    %v2352 = vunpack.c.h.b16 %v357
    %v2353 = vunpack.c.l.b16 %v358
    %v2354 = vunpack.c.h.b16 %v358
    %v2355 = vunpack.c.l.b16 %v359
    %v2356 = vunpack.c.h.b16 %v359
    %v2357 = vunpack.c.l.b16 %v360
    %v2358 = vunpack.c.h.b16 %v360
    %v2359 = vunpack.c.l.b16 %v361
    %v2360 = vunpack.c.h.b16 %v361
    %v2361 = vunpack.c.l.b16 %v362
    %v2362 = vunpack.c.h.b16 %v362
    %v2363 = vunpack.c.l.b16 %v363
    %v2364 = vunpack.c.h.b16 %v363
    %v2365 = vunpack.c.l.b16 %v364
    %v2366 = vunpack.c.h.b16 %v364
    %v2367 = vunpack.c.l.b16 %v365
    %v2368 = vunpack.c.h.b16 %v365
    %v2369 = vunpack.c.l.b16 %v366
    %v2370 = vunpack.c.h.b16 %v366
    %v2371 = vunpack.c.l.b16 %v367
    %v2372 = vunpack.c.h.b16 %v367
    %v2373 = vunpack.c.l.b16 %v368
    %v2374 = vunpack.c.h.b16 %v368
    %v2375 = vunpack.c.l.b16 %v369
    %v2376 = vunpack.c.h.b16 %v369
    %v2377 = vunpack.c.l.b16 %v370
    %v2378 = vunpack.c.h.b16 %v370
    %v2379 = vunpack.c.l.b16 %v371
    %v2380 = vunpack.c.h.b16 %v371
    %v2381 = vunpack.c.l.b16 %v372
    %v2382 = vunpack.c.h.b16 %v372
    %v2383 = vunpack.c.l.b16 %v373
    %v2384 = vunpack.c.h.b16 %v373
    %v2385 = vunpack.c.l.b16 %v374
    %v2386 = vunpack.c.h.b16 %v374
    %v2387 = vunpack.c.l.b16 %v375
    %v2388 = vunpack.c.h.b16 %v375
    %v2389 = vunpack.c.l.b16 %v376
    %v2390 = vunpack.c.h.b16 %v376
    %v2391 = vunpack.c.l.b16 %v377
    %v2392 = vunpack.c.h.b16 %v377
    %v2393 = vunpack.c.l.b16 %v378
    %v2394 = vunpack.c.h.b16 %v378
    %v2395 = vunpack.c.l.b16 %v379
    %v2396 = vunpack.c.h.b16 %v379
    %v2397 = vunpack.c.l.b16 %v380
    %v2398 = vunpack.c.h.b16 %v380
    %v2399 = vunpack.c.l.b16 %v381
    %v2400 = vunpack.c.h.b16 %v381
    %v2401 = vunpack.c.l.b16 %v382
    %v2402 = vunpack.c.h.b16 %v382
    %v2403 = vunpack.c.l.b16 %v383
    %v2404 = vunpack.c.h.b16 %v383
    %v2405 = vunpack.c.l.b16 %v384
    %v2406 = vunpack.c.h.b16 %v384
    %v2407 = vunpack.c.l.b16 %v385
    %v2408 = vunpack.c.h.b16 %v385
    %v2409 = vunpack.c.l.b16 %v386
    %v2410 = vunpack.c.h.b16 %v386
    %v2411 = vunpack.c.l.b16 %v387
    %v2412 = vunpack.c.h.b16 %v387
    %v2413 = vunpack.c.l.b16 %v388
    %v2414 = vunpack.c.h.b16 %v388
    %v2415 = vunpack.c.l.b16 %v389
    %v2416 = vunpack.c.h.b16 %v389
    %v2417 = vunpack.c.l.b16 %v390
    %v2418 = vunpack.c.h.b16 %v390
    %v2419 = vunpack.c.l.b16 %v391
    %v2420 = vunpack.c.h.b16 %v391
    %v2421 = vunpack.c.l.b16 %v392
    %v2422 = vunpack.c.h.b16 %v392
    %v2423 = vunpack.c.l.b16 %v393
    %v2424 = vunpack.c.h.b16 %v393
    %v2425 = vunpack.c.l.b16 %v394
    %v2426 = vunpack.c.h.b16 %v394
    %v2427 = vunpack.c.l.b16 %v395
    %v2428 = vunpack.c.h.b16 %v395
    %v2429 = vunpack.c.l.b16 %v396
    %v2430 = vunpack.c.h.b16 %v396
    %v2431 = vunpack.c.l.b16 %v397
    %v2432 = vunpack.c.h.b16 %v397
    %v2433 = vunpack.c.l.b16 %v398
    %v2434 = vunpack.c.h.b16 %v398
    %v2435 = vunpack.c.l.b16 %v399
    %v2436 = vunpack.c.h.b16 %v399
    %v2437 = vunpack.c.l.b16 %v400
    %v2438 = vunpack.c.h.b16 %v400
    %v2439 = vunpack.c.l.b16 %v401
    %v2440 = vunpack.c.h.b16 %v401
    %v2441 = vunpack.c.l.b16 %v402
    %v2442 = vunpack.c.h.b16 %v402
    %v2443 = vunpack.c.l.b16 %v403
    %v2444 = vunpack.c.h.b16 %v403
    %v2445 = vunpack.c.l.b16 %v404
    %v2446 = vunpack.c.h.b16 %v404
    %v2447 = vunpack.c.l.b16 %v405
    %v2448 = vunpack.c.h.b16 %v405
    %v2449 = vunpack.c.l.b16 %v406
    %v2450 = vunpack.c.h.b16 %v406
    %v2451 = vunpack.c.l.b16 %v407
    %v2452 = vunpack.c.h.b16 %v407
    %v2453 = vunpack.c.l.b16 %v408
    %v2454 = vunpack.c.h.b16 %v408
    %v2455 = vunpack.c.l.b16 %v409
    %v2456 = vunpack.c.h.b16 %v409
    %v2457 = vunpack.c.l.b16 %v410
    %v2458 = vunpack.c.h.b16 %v410
    %v2459 = vunpack.c.l.b16 %v411
    %v2460 = vunpack.c.h.b16 %v411
    %v2461 = vunpack.c.l.b16 %v412
    %v2462 = vunpack.c.h.b16 %v412
    %v2463 = vunpack.c.l.b16 %v413
    %v2464 = vunpack.c.h.b16 %v413
    %v2465 = vunpack.c.l.b16 %v414
    %v2466 = vunpack.c.h.b16 %v414
    %v2467 = vunpack.c.l.b16 %v415
    %v2468 = vunpack.c.h.b16 %v415
    %v2469 = vunpack.c.l.b16 %v416
    %v2470 = vunpack.c.h.b16 %v416
    %v2471 = vunpack.c.l.b16 %v417
    %v2472 = vunpack.c.h.b16 %v417
    %v2473 = vunpack.c.l.b16 %v418
    %v2474 = vunpack.c.h.b16 %v418
    %v2475 = vunpack.c.l.b16 %v419
    %v2476 = vunpack.c.h.b16 %v419
    %v2477 = vunpack.c.l.b16 %v420
    %v2478 = vunpack.c.h.b16 %v420
    %v2479 = vunpack.c.l.b16 %v421
    %v2480 = vunpack.c.h.b16 %v421
    %v2481 = vunpack.c.l.b16 %v422
    %v2482 = vunpack.c.h.b16 %v422
    %v2483 = vunpack.c.l.b16 %v423
    %v2484 = vunpack.c.h.b16 %v423
    %v2485 = vunpack.c.l.b16 %v424
    %v2486 = vunpack.c.h.b16 %v424
    %v2487 = vunpack.c.l.b16 %v425
    %v2488 = vunpack.c.h.b16 %v425
    %v2489 = vunpack.c.l.b16 %v426
    %v2490 = vunpack.c.h.b16 %v426
    %v2491 = vunpack.c.l.b16 %v427
    %v2492 = vunpack.c.h.b16 %v427
    %v2493 = vunpack.c.l.b16 %v428
    %v2494 = vunpack.c.h.b16 %v428
    %v2495 = vunpack.c.l.b16 %v429
    %v2496 = vunpack.c.h.b16 %v429
    %v2497 = vunpack.c.l.b16 %v430
    %v2498 = vunpack.c.h.b16 %v430
    %v2499 = vunpack.c.l.b16 %v431
    %v2500 = vunpack.c.h.b16 %v431
    %v2501 = vunpack.c.l.b16 %v432
    %v2502 = vunpack.c.h.b16 %v432
    %v2503 = vunpack.c.l.b16 %v433
    %v2504 = vunpack.c.h.b16 %v433
    %v2505 = vunpack.c.l.b16 %v434
    %v2506 = vunpack.c.h.b16 %v434
    %v2507 = vunpack.c.l.b16 %v435
    %v2508 = vunpack.c.h.b16 %v435
    %v2509 = vunpack.c.l.b16 %v436
    %v2510 = vunpack.c.h.b16 %v436
    %v2511 = vunpack.c.l.b16 %v437
    %v2512 = vunpack.c.h.b16 %v437
    %v2513 = vunpack.c.l.b16 %v438
    %v2514 = vunpack.c.h.b16 %v438
    %v2515 = vunpack.c.l.b16 %v439
    %v2516 = vunpack.c.h.b16 %v439
    %v2517 = vunpack.c.l.b16 %v440
    %v2518 = vunpack.c.h.b16 %v440
    %v2519 = vunpack.c.l.b16 %v441
    %v2520 = vunpack.c.h.b16 %v441
    %v2521 = vunpack.c.l.b16 %v442
    %v2522 = vunpack.c.h.b16 %v442
    %v2523 = vunpack.c.l.b16 %v443
    %v2524 = vunpack.c.h.b16 %v443
    %v2525 = vunpack.c.l.b16 %v444
    %v2526 = vunpack.c.h.b16 %v444
    %v2527 = vunpack.c.l.b16 %v445
    %v2528 = vunpack.c.h.b16 %v445
    %v2529 = vunpack.c.l.b16 %v446
    %v2530 = vunpack.c.h.b16 %v446
    %v2531 = vunpack.c.l.b16 %v447
    %v2532 = vunpack.c.h.b16 %v447
    %v2533 = vunpack.c.l.b16 %v448
    %v2534 = vunpack.c.h.b16 %v448
    %v2535 = vunpack.c.l.b16 %v449
    %v2536 = vunpack.c.h.b16 %v449
    %v2537 = vunpack.c.l.b16 %v450
    %v2538 = vunpack.c.h.b16 %v450
    %v2539 = vunpack.c.l.b16 %v451
    %v2540 = vunpack.c.h.b16 %v451
    %v2541 = vunpack.c.l.b16 %v452
    %v2542 = vunpack.c.h.b16 %v452
    %v2543 = vunpack.c.l.b16 %v453
    %v2544 = vunpack.c.h.b16 %v453
    %v2545 = vunpack.c.l.b16 %v454
    %v2546 = vunpack.c.h.b16 %v454
    %v2547 = vunpack.c.l.b16 %v455
    %v2548 = vunpack.c.h.b16 %v455
    %v2549 = vunpack.c.l.b16 %v456
    %v2550 = vunpack.c.h.b16 %v456
    %v2551 = vunpack.c.l.b16 %v457
    %v2552 = vunpack.c.h.b16 %v457
    %v2553 = vunpack.c.l.b16 %v458
    %v2554 = vunpack.c.h.b16 %v458
    %v2555 = vunpack.c.l.b16 %v459
    %v2556 = vunpack.c.h.b16 %v459
    %v2557 = vunpack.c.l.b16 %v460
    %v2558 = vunpack.c.h.b16 %v460
    %v2559 = vunpack.c.l.b16 %v461
    %v2560 = vunpack.c.h.b16 %v461
    %v2561 = vunpack.c.l.b16 %v462
    %v2562 = vunpack.c.h.b16 %v462
    %v2563 = vunpack.c.l.b16 %v463
    %v2564 = vunpack.c.h.b16 %v463
    %v2565 = vunpack.c.l.b16 %v464
    %v2566 = vunpack.c.h.b16 %v464
    %v2567 = vunpack.c.l.b16 %v465
    %v2568 = vunpack.c.h.b16 %v465
    %v2569 = vunpack.c.l.b16 %v466
    %v2570 = vunpack.c.h.b16 %v466
    %v2571 = vunpack.c.l.b16 %v467
    %v2572 = vunpack.c.h.b16 %v467
    %v2573 = vunpack.c.l.b16 %v468
    %v2574 = vunpack.c.h.b16 %v468
    %v2575 = vunpack.c.l.b16 %v469
    %v2576 = vunpack.c.h.b16 %v469
    %v2577 = vunpack.c.l.b16 %v470
    %v2578 = vunpack.c.h.b16 %v470
    %v2579 = vunpack.c.l.b16 %v471
    %v2580 = vunpack.c.h.b16 %v471
    %v2581 = vunpack.c.l.b16 %v472
    %v2582 = vunpack.c.h.b16 %v472
    %v2583 = vunpack.c.l.b16 %v473
    %v2584 = vunpack.c.h.b16 %v473
    %v2585 = vunpack.c.l.b16 %v474
    %v2586 = vunpack.c.h.b16 %v474
    %v2587 = vunpack.c.l.b16 %v475
    %v2588 = vunpack.c.h.b16 %v475
    %v2589 = vunpack.c.l.b16 %v476
    %v2590 = vunpack.c.h.b16 %v476
    %v2591 = vunpack.c.l.b16 %v477
    %v2592 = vunpack.c.h.b16 %v477
    %v2593 = vunpack.c.l.b16 %v478
    %v2594 = vunpack.c.h.b16 %v478
    %v2595 = vunpack.c.l.b16 %v479
    %v2596 = vunpack.c.h.b16 %v479
    %v2597 = vunpack.c.l.b16 %v480
    %v2598 = vunpack.c.h.b16 %v480
    %v2599 = vunpack.c.l.b16 %v481
    %v2600 = vunpack.c.h.b16 %v481
    %v2601 = vunpack.c.l.b16 %v482
    %v2602 = vunpack.c.h.b16 %v482
    %v2603 = vunpack.c.l.b16 %v483
    %v2604 = vunpack.c.h.b16 %v483
    %v2605 = vunpack.c.l.b16 %v484
    %v2606 = vunpack.c.h.b16 %v484
    %v2607 = vunpack.c.l.b16 %v485
    %v2608 = vunpack.c.h.b16 %v485
    %v2609 = vunpack.c.l.b16 %v486
    %v2610 = vunpack.c.h.b16 %v486
    %v2611 = vunpack.c.l.b16 %v487
    %v2612 = vunpack.c.h.b16 %v487
    %v2613 = vunpack.c.l.b16 %v488
    %v2614 = vunpack.c.h.b16 %v488
    %v2615 = vunpack.c.l.b16 %v489
    %v2616 = vunpack.c.h.b16 %v489
    %v2617 = vunpack.c.l.b16 %v490
    %v2618 = vunpack.c.h.b16 %v490
    %v2619 = vunpack.c.l.b16 %v491
    %v2620 = vunpack.c.h.b16 %v491
    %v2621 = vunpack.c.l.b16 %v492
    %v2622 = vunpack.c.h.b16 %v492
    %v2623 = vunpack.c.l.b16 %v493
    %v2624 = vunpack.c.h.b16 %v493
    %v2625 = vunpack.c.l.b16 %v494
    %v2626 = vunpack.c.h.b16 %v494
    %v2627 = vunpack.c.l.b16 %v495
    %v2628 = vunpack.c.h.b16 %v495
    %v2629 = vunpack.c.l.b16 %v496
    %v2630 = vunpack.c.h.b16 %v496
    %v2631 = vunpack.c.l.b16 %v497
    %v2632 = vunpack.c.h.b16 %v497
    %v2633 = vunpack.c.l.b16 %v498
    %v2634 = vunpack.c.h.b16 %v498
    %v2635 = vunpack.c.l.b16 %v499
    %v2636 = vunpack.c.h.b16 %v499
    %v2637 = vunpack.c.l.b16 %v500
    %v2638 = vunpack.c.h.b16 %v500
    %v2639 = vunpack.c.l.b16 %v501
    %v2640 = vunpack.c.h.b16 %v501
    %v2641 = vunpack.c.l.b16 %v502
    %v2642 = vunpack.c.h.b16 %v502
    %v2643 = vunpack.c.l.b16 %v503
    %v2644 = vunpack.c.h.b16 %v503
    %v2645 = vunpack.c.l.b16 %v504
    %v2646 = vunpack.c.h.b16 %v504
    %v2647 = vunpack.c.l.b16 %v505
    %v2648 = vunpack.c.h.b16 %v505
    %v2649 = vunpack.c.l.b16 %v506
    %v2650 = vunpack.c.h.b16 %v506
    %v2651 = vunpack.c.l.b16 %v507
    %v2652 = vunpack.c.h.b16 %v507
    %v2653 = vunpack.c.l.b16 %v508
    %v2654 = vunpack.c.h.b16 %v508
    %v2655 = vunpack.c.l.b16 %v509
    %v2656 = vunpack.c.h.b16 %v509
    %v2657 = vunpack.c.l.b16 %v510
    %v2658 = vunpack.c.h.b16 %v510
    %v2659 = vunpack.c.l.b16 %v511
    %v2660 = vunpack.c.h.b16 %v511
    %v2661 = vunpack.c.l.b16 %v512
    %v2662 = vunpack.c.h.b16 %v512
    %v2663 = vunpack.c.l.b16 %v513
    %v2664 = vunpack.c.h.b16 %v513
    %v2665 = vunpack.c.l.b16 %v514
    %v2666 = vunpack.c.h.b16 %v514
    %v2667 = vunpack.c.l.b16 %v515
    %v2668 = vunpack.c.h.b16 %v515
    %v2669 = vunpack.c.l.b16 %v516
    %v2670 = vunpack.c.h.b16 %v516
    %v2671 = vunpack.c.l.b16 %v517
    %v2672 = vunpack.c.h.b16 %v517
    %v2673 = vunpack.c.l.b16 %v518
    %v2674 = vunpack.c.h.b16 %v518
    %v2675 = vunpack.c.l.b16 %v519
    %v2676 = vunpack.c.h.b16 %v519
    %v2677 = vunpack.c.l.b16 %v520
    %v2678 = vunpack.c.h.b16 %v520
    %v2679 = vunpack.c.l.b16 %v521
    %v2680 = vunpack.c.h.b16 %v521
    %v2681 = vunpack.c.l.b16 %v522
    %v2682 = vunpack.c.h.b16 %v522
    %v2683 = vunpack.c.l.b16 %v523
    %v2684 = vunpack.c.h.b16 %v523
    %v2685 = vunpack.c.l.b16 %v524
    %v2686 = vunpack.c.h.b16 %v524
    %v2687 = vunpack.c.l.b16 %v525
    %v2688 = vunpack.c.h.b16 %v525
    %v2689 = vunpack.c.l.b16 %v526
    %v2690 = vunpack.c.h.b16 %v526
    %v2691 = vunpack.c.l.b16 %v527
    %v2692 = vunpack.c.h.b16 %v527
    %v2693 = vunpack.c.l.b16 %v528
    %v2694 = vunpack.c.h.b16 %v528
    %v2695 = vunpack.c.l.b16 %v529
    %v2696 = vunpack.c.h.b16 %v529
    %v2697 = vunpack.c.l.b16 %v530
    %v2698 = vunpack.c.h.b16 %v530
    %v2699 = vunpack.c.l.b16 %v531
    %v2700 = vunpack.c.h.b16 %v531
    %v2701 = vunpack.c.l.b16 %v532
    %v2702 = vunpack.c.h.b16 %v532
    %v2703 = vunpack.c.l.b16 %v533
    %v2704 = vunpack.c.h.b16 %v533
    %v2705 = vunpack.c.l.b16 %v534
    %v2706 = vunpack.c.h.b16 %v534
    %v2707 = vunpack.c.l.b16 %v535
    %v2708 = vunpack.c.h.b16 %v535
    %v2709 = vunpack.c.l.b16 %v536
    %v2710 = vunpack.c.h.b16 %v536
    %v2711 = vunpack.c.l.b16 %v537
    %v2712 = vunpack.c.h.b16 %v537
    %v2713 = vunpack.c.l.b16 %v538
    %v2714 = vunpack.c.h.b16 %v538
    %v2715 = vunpack.c.l.b16 %v539
    %v2716 = vunpack.c.h.b16 %v539
    %v2717 = vunpack.c.l.b16 %v540
    %v2718 = vunpack.c.h.b16 %v540
    %v2719 = vunpack.c.l.b16 %v541
    %v2720 = vunpack.c.h.b16 %v541
    %v2721 = vunpack.c.l.b16 %v542
    %v2722 = vunpack.c.h.b16 %v542
    %v2723 = vunpack.c.l.b16 %v543
    %v2724 = vunpack.c.h.b16 %v543
    %v2725 = vunpack.c.l.b16 %v544
    %v2726 = vunpack.c.h.b16 %v544
    %v2727 = vunpack.c.l.b16 %v545
    %v2728 = vunpack.c.h.b16 %v545
    %v2729 = vunpack.c.l.b16 %v546
    %v2730 = vunpack.c.h.b16 %v546
    %v2731 = vunpack.c.l.b16 %v547
    %v2732 = vunpack.c.h.b16 %v547
    %v2733 = vunpack.c.l.b16 %v548
    %v2734 = vunpack.c.h.b16 %v548
    %v2735 = vunpack.c.l.b16 %v549
    %v2736 = vunpack.c.h.b16 %v549
    %v2737 = vunpack.c.l.b16 %v550
    %v2738 = vunpack.c.h.b16 %v550
    %v2739 = vunpack.c.l.b16 %v551
    %v2740 = vunpack.c.h.b16 %v551
    %v2741 = vunpack.c.l.b16 %v552
    %v2742 = vunpack.c.h.b16 %v552
    %v2743 = vunpack.c.l.b16 %v553
    %v2744 = vunpack.c.h.b16 %v553
    %v2745 = vunpack.c.l.b16 %v554
    %v2746 = vunpack.c.h.b16 %v554
    %v2747 = vunpack.c.l.b16 %v555
    %v2748 = vunpack.c.h.b16 %v555
    %v2749 = vunpack.c.l.b16 %v556
    %v2750 = vunpack.c.h.b16 %v556
    %v2751 = vunpack.c.l.b16 %v557
    %v2752 = vunpack.c.h.b16 %v557
    %v2753 = vunpack.c.l.b16 %v558
    %v2754 = vunpack.c.h.b16 %v558
    %v2755 = vunpack.c.l.b16 %v559
    %v2756 = vunpack.c.h.b16 %v559
    %v2757 = vunpack.c.l.b16 %v560
    %v2758 = vunpack.c.h.b16 %v560
    %v2759 = vunpack.c.l.b16 %v561
    %v2760 = vunpack.c.h.b16 %v561
    %v2761 = vunpack.c.l.b16 %v562
    %v2762 = vunpack.c.h.b16 %v562
    %v2763 = vunpack.c.l.b16 %v563
    %v2764 = vunpack.c.h.b16 %v563
    %v2765 = vunpack.c.l.b16 %v564
    %v2766 = vunpack.c.h.b16 %v564
    %v2767 = vunpack.c.l.b16 %v565
    %v2768 = vunpack.c.h.b16 %v565
    %v2769 = vunpack.c.l.b16 %v566
    %v2770 = vunpack.c.h.b16 %v566
    %v2771 = vunpack.c.l.b16 %v567
    %v2772 = vunpack.c.h.b16 %v567
    %v2773 = vunpack.c.l.b16 %v568
    %v2774 = vunpack.c.h.b16 %v568
    %v2775 = vunpack.c.l.b16 %v569
    %v2776 = vunpack.c.h.b16 %v569
    %v2777 = vunpack.c.l.b16 %v570
    %v2778 = vunpack.c.h.b16 %v570
    %v2779 = vunpack.c.l.b16 %v571
    %v2780 = vunpack.c.h.b16 %v571
    %v2781 = vunpack.c.l.b16 %v572
    %v2782 = vunpack.c.h.b16 %v572
    %v2783 = vunpack.c.l.b16 %v573
    %v2784 = vunpack.c.h.b16 %v573
    %v2785 = vunpack.c.l.b16 %v574
    %v2786 = vunpack.c.h.b16 %v574
    %v2787 = vunpack.c.l.b16 %v575
    %v2788 = vunpack.c.h.b16 %v575
    %v2789 = vunpack.c.l.b16 %v576
    %v2790 = vunpack.c.h.b16 %v576
    %v2791 = vunpack.c.l.b16 %v577
    %v2792 = vunpack.c.h.b16 %v577
    %v2793 = vunpack.c.l.b16 %v578
    %v2794 = vunpack.c.h.b16 %v578
    %v2795 = vunpack.c.l.b16 %v579
    %v2796 = vunpack.c.h.b16 %v579
    %v2797 = vunpack.c.l.b16 %v580
    %v2798 = vunpack.c.h.b16 %v580
    %v2799 = vunpack.c.l.b16 %v581
    %v2800 = vunpack.c.h.b16 %v581
    %v2801 = vunpack.c.l.b16 %v582
    %v2802 = vunpack.c.h.b16 %v582
    %v2803 = vunpack.c.l.b16 %v583
    %v2804 = vunpack.c.h.b16 %v583
    %v2805 = vunpack.c.l.b16 %v584
    %v2806 = vunpack.c.h.b16 %v584
    %v2807 = vunpack.c.l.b16 %v585
    %v2808 = vunpack.c.h.b16 %v585
    %v2809 = vunpack.c.l.b16 %v586
    %v2810 = vunpack.c.h.b16 %v586
    %v2811 = vunpack.c.l.b16 %v587
    %v2812 = vunpack.c.h.b16 %v587
    %v2813 = vunpack.c.l.b16 %v588
    %v2814 = vunpack.c.h.b16 %v588
    %v2815 = vunpack.c.l.b16 %v589
    %v2816 = vunpack.c.h.b16 %v589
    %v2817 = vunpack.c.l.b16 %v590
    %v2818 = vunpack.c.h.b16 %v590
    %v2819 = vunpack.c.l.b16 %v591
    %v2820 = vunpack.c.h.b16 %v591
    %v2821 = vunpack.c.l.b16 %v592
    %v2822 = vunpack.c.h.b16 %v592
    %v2823 = vunpack.c.l.b16 %v593
    %v2824 = vunpack.c.h.b16 %v593
    %v2825 = vunpack.c.l.b16 %v594
    %v2826 = vunpack.c.h.b16 %v594
    %v2827 = vunpack.c.l.b16 %v595
    %v2828 = vunpack.c.h.b16 %v595
    %v2829 = vunpack.c.l.b16 %v596
    %v2830 = vunpack.c.h.b16 %v596
    %v2831 = vunpack.c.l.b16 %v597
    %v2832 = vunpack.c.h.b16 %v597
    %v2833 = vunpack.c.l.b16 %v598
    %v2834 = vunpack.c.h.b16 %v598
    %v2835 = vunpack.c.l.b16 %v599
    %v2836 = vunpack.c.h.b16 %v599
    %v2837 = vunpack.c.l.b16 %v600
    %v2838 = vunpack.c.h.b16 %v600
    %v2839 = vunpack.c.l.b16 %v601
    %v2840 = vunpack.c.h.b16 %v601
    %v2841 = vunpack.c.l.b16 %v602
    %v2842 = vunpack.c.h.b16 %v602
    %v2843 = vunpack.c.l.b16 %v603
    %v2844 = vunpack.c.h.b16 %v603
    %v2845 = vunpack.c.l.b16 %v604
    %v2846 = vunpack.c.h.b16 %v604
    %v2847 = vunpack.c.l.b16 %v605
    %v2848 = vunpack.c.h.b16 %v605
    %v2849 = vunpack.c.l.b16 %v606
    %v2850 = vunpack.c.h.b16 %v606
    %v2851 = vunpack.c.l.b16 %v607
    %v2852 = vunpack.c.h.b16 %v607
    %v2853 = vunpack.c.l.b16 %v608
    %v2854 = vunpack.c.h.b16 %v608
    %v2855 = vunpack.c.l.b16 %v609
    %v2856 = vunpack.c.h.b16 %v609
    %v2857 = vunpack.c.l.b16 %v610
    %v2858 = vunpack.c.h.b16 %v610
    %v2859 = vunpack.c.l.b16 %v611
    %v2860 = vunpack.c.h.b16 %v611
    %v2861 = vunpack.c.l.b16 %v612
    %v2862 = vunpack.c.h.b16 %v612
    %v2863 = vunpack.c.l.b16 %v613
    %v2864 = vunpack.c.h.b16 %v613
    %v2865 = vunpack.c.l.b16 %v614
    %v2866 = vunpack.c.h.b16 %v614
    %v2867 = vunpack.c.l.b16 %v615
    %v2868 = vunpack.c.h.b16 %v615
    %v2869 = vunpack.c.l.b16 %v616
    %v2870 = vunpack.c.h.b16 %v616
    %v2871 = vunpack.c.l.b16 %v617
    %v2872 = vunpack.c.h.b16 %v617
    %v2873 = vunpack.c.l.b16 %v618
    %v2874 = vunpack.c.h.b16 %v618
    %v2875 = vunpack.c.l.b16 %v619
    %v2876 = vunpack.c.h.b16 %v619
    %v2877 = vunpack.c.l.b16 %v620
    %v2878 = vunpack.c.h.b16 %v620
    %v2879 = vunpack.c.l.b16 %v621
    %v2880 = vunpack.c.h.b16 %v621
    %v2881 = vunpack.c.l.b16 %v622
    %v2882 = vunpack.c.h.b16 %v622
    %v2883 = vunpack.c.l.b16 %v623
    %v2884 = vunpack.c.h.b16 %v623
    %v2885 = vunpack.c.l.b16 %v624
    %v2886 = vunpack.c.h.b16 %v624
    %v2887 = vunpack.c.l.b16 %v625
    %v2888 = vunpack.c.h.b16 %v625
    %v2889 = vunpack.c.l.b16 %v626
    %v2890 = vunpack.c.h.b16 %v626
    %v2891 = vunpack.c.l.b16 %v627
    %v2892 = vunpack.c.h.b16 %v627
    %v2893 = vunpack.c.l.b16 %v628
    %v2894 = vunpack.c.h.b16 %v628
    %v2895 = vunpack.c.l.b16 %v629
    %v2896 = vunpack.c.h.b16 %v629
    %v2897 = vunpack.c.l.b16 %v630
    %v2898 = vunpack.c.h.b16 %v630
    %v2899 = vunpack.c.l.b16 %v631
    %v2900 = vunpack.c.h.b16 %v631
    %v2901 = vunpack.c.l.b16 %v632
    %v2902 = vunpack.c.h.b16 %v632
    %v2903 = vunpack.c.l.b16 %v633
    %v2904 = vunpack.c.h.b16 %v633
    %v2905 = vunpack.c.l.b16 %v634
    %v2906 = vunpack.c.h.b16 %v634
    %v2907 = vunpack.c.l.b16 %v635
    %v2908 = vunpack.c.h.b16 %v635
    %v2909 = vunpack.c.l.b16 %v636
    %v2910 = vunpack.c.h.b16 %v636
    %v2911 = vunpack.c.l.b16 %v637
    %v2912 = vunpack.c.h.b16 %v637
    %v2913 = vunpack.c.l.b16 %v638
    %v2914 = vunpack.c.h.b16 %v638
    %v2915 = vunpack.c.l.b16 %v639
    %v2916 = vunpack.c.h.b16 %v639
    %v2917 = vunpack.c.l.b16 %v640
    %v2918 = vunpack.c.h.b16 %v640
    %v2919 = vunpack.c.l.b16 %v641
    %v2920 = vunpack.c.h.b16 %v641
    %v2921 = vunpack.c.l.b16 %v642
    %v2922 = vunpack.c.h.b16 %v642
    %v2923 = vunpack.c.l.b16 %v643
    %v2924 = vunpack.c.h.b16 %v643
    %v2925 = vunpack.c.l.b16 %v644
    %v2926 = vunpack.c.h.b16 %v644
    %v2927 = vunpack.c.l.b16 %v645
    %v2928 = vunpack.c.h.b16 %v645
    %v2929 = vunpack.c.l.b16 %v646
    %v2930 = vunpack.c.h.b16 %v646
    %v2931 = vunpack.c.l.b16 %v647
    %v2932 = vunpack.c.h.b16 %v647
    %v2933 = vunpack.c.l.b16 %v648
    %v2934 = vunpack.c.h.b16 %v648
    %v2935 = vunpack.c.l.b16 %v649
    %v2936 = vunpack.c.h.b16 %v649
    %v2937 = vunpack.c.l.b16 %v650
    %v2938 = vunpack.c.h.b16 %v650
    %v2939 = vunpack.c.l.b16 %v651
    %v2940 = vunpack.c.h.b16 %v651
    %v2941 = vunpack.c.l.b16 %v652
    %v2942 = vunpack.c.h.b16 %v652
    %v2943 = vunpack.c.l.b16 %v653
    %v2944 = vunpack.c.h.b16 %v653
    %v2945 = vunpack.c.l.b16 %v654
    %v2946 = vunpack.c.h.b16 %v654
    %v2947 = vunpack.c.l.b16 %v655
    %v2948 = vunpack.c.h.b16 %v655
    %v2949 = vunpack.c.l.b16 %v656
    %v2950 = vunpack.c.h.b16 %v656
    %v2951 = vunpack.c.l.b16 %v657
    %v2952 = vunpack.c.h.b16 %v657
    %v2953 = vunpack.c.l.b16 %v658
    %v2954 = vunpack.c.h.b16 %v658
    %v2955 = vunpack.c.l.b16 %v659
    %v2956 = vunpack.c.h.b16 %v659
    %v2957 = vunpack.c.l.b16 %v660
    %v2958 = vunpack.c.h.b16 %v660
    %v2959 = vunpack.c.l.b16 %v661
    %v2960 = vunpack.c.h.b16 %v661
    %v2961 = vunpack.c.l.b16 %v662
    %v2962 = vunpack.c.h.b16 %v662
    %v2963 = vunpack.c.l.b16 %v663
    %v2964 = vunpack.c.h.b16 %v663
    %v2965 = vunpack.c.l.b16 %v664
    %v2966 = vunpack.c.h.b16 %v664
    %v2967 = vunpack.c.l.b16 %v665
    %v2968 = vunpack.c.h.b16 %v665
    %v2969 = vunpack.c.l.b16 %v666
    %v2970 = vunpack.c.h.b16 %v666
    %v2971 = vunpack.c.l.b16 %v667
    %v2972 = vunpack.c.h.b16 %v667
    %v2973 = vunpack.c.l.b16 %v668
    %v2974 = vunpack.c.h.b16 %v668
    %v2975 = vunpack.c.l.b16 %v669
    %v2976 = vunpack.c.h.b16 %v669
    %v2977 = vunpack.c.l.b16 %v670
    %v2978 = vunpack.c.h.b16 %v670
    %v2979 = vunpack.c.l.b16 %v671
    %v2980 = vunpack.c.h.b16 %v671
    %v2981 = vunpack.c.l.b16 %v672
    %v2982 = vunpack.c.h.b16 %v672
    %v2983 = vunpack.c.l.b16 %v673
    %v2984 = vunpack.c.h.b16 %v673
    %v2985 = vunpack.c.l.b16 %v674
    %v2986 = vunpack.c.h.b16 %v674
    %v2987 = vunpack.c.l.b16 %v675
    %v2988 = vunpack.c.h.b16 %v675
    %v2989 = vunpack.c.l.b16 %v676
    %v2990 = vunpack.c.h.b16 %v676
    %v2991 = vunpack.c.l.b16 %v677
    %v2992 = vunpack.c.h.b16 %v677
    %v2993 = vunpack.c.l.b16 %v678
    %v2994 = vunpack.c.h.b16 %v678
    %v2995 = vunpack.c.l.b16 %v679
    %v2996 = vunpack.c.h.b16 %v679
    %v2997 = vunpack.c.l.b16 %v680
    %v2998 = vunpack.c.h.b16 %v680
    %v2999 = vunpack.c.l.b16 %v681
    %v3000 = vunpack.c.h.b16 %v681
    %v3001 = vunpack.c.l.b16 %v682
    %v3002 = vunpack.c.h.b16 %v682
    %v3003 = vunpack.c.l.b16 %v683
    %v3004 = vunpack.c.h.b16 %v683
    %v3005 = vunpack.c.l.b16 %v684
    %v3006 = vunpack.c.h.b16 %v684
    %v3007 = vunpack.c.l.b16 %v685
    %v3008 = vunpack.c.h.b16 %v685
    %v3009 = vunpack.c.l.b16 %v686
    %v3010 = vunpack.c.h.b16 %v686
    %v3011 = vunpack.c.l.b16 %v687
    %v3012 = vunpack.c.h.b16 %v687
    %v3013 = vunpack.c.l.b16 %v688
    %v3014 = vunpack.c.h.b16 %v688
    %v3015 = vunpack.c.l.b16 %v689
    %v3016 = vunpack.c.h.b16 %v689
    %v3017 = vunpack.c.l.b16 %v690
    %v3018 = vunpack.c.h.b16 %v690
    %v3019 = vunpack.c.l.b16 %v691
    %v3020 = vunpack.c.h.b16 %v691
    %v3021 = vunpack.c.l.b16 %v692
    %v3022 = vunpack.c.h.b16 %v692
    %v3023 = vunpack.c.l.b16 %v693
    %v3024 = vunpack.c.h.b16 %v693
    %v3025 = vunpack.c.l.b16 %v694
    %v3026 = vunpack.c.h.b16 %v694
    %v3027 = vunpack.c.l.b16 %v695
    %v3028 = vunpack.c.h.b16 %v695
    %v3029 = vunpack.c.l.b16 %v696
    %v3030 = vunpack.c.h.b16 %v696
    %v3031 = vunpack.c.l.b16 %v697
    %v3032 = vunpack.c.h.b16 %v697
    %v3033 = vunpack.c.l.b16 %v698
    %v3034 = vunpack.c.h.b16 %v698
    %v3035 = vunpack.c.l.b16 %v699
    %v3036 = vunpack.c.h.b16 %v699
    %v3037 = vunpack.c.l.b16 %v700
    %v3038 = vunpack.c.h.b16 %v700
    %v3039 = vunpack.c.l.b16 %v701
    %v3040 = vunpack.c.h.b16 %v701
    %v3041 = vunpack.c.l.b16 %v702
    %v3042 = vunpack.c.h.b16 %v702
    %v3043 = vunpack.c.l.b16 %v703
    %v3044 = vunpack.c.h.b16 %v703
    %v3045 = vunpack.c.l.b16 %v704
    %v3046 = vunpack.c.h.b16 %v704
    %v3047 = vunpack.c.l.b16 %v705
    %v3048 = vunpack.c.h.b16 %v705
    %v3049 = vunpack.c.l.b16 %v706
    %v3050 = vunpack.c.h.b16 %v706
    %v3051 = vunpack.c.l.b16 %v707
    %v3052 = vunpack.c.h.b16 %v707
    %v3053 = vunpack.c.l.b16 %v708
    %v3054 = vunpack.c.h.b16 %v708
    %v3055 = vunpack.c.l.b16 %v709
    %v3056 = vunpack.c.h.b16 %v709
    %v3057 = vunpack.c.l.b16 %v710
    %v3058 = vunpack.c.h.b16 %v710
    %v3059 = vunpack.c.l.b16 %v711
    %v3060 = vunpack.c.h.b16 %v711
    %v3061 = vunpack.c.l.b16 %v712
    %v3062 = vunpack.c.h.b16 %v712
    %v3063 = vunpack.c.l.b16 %v713
    %v3064 = vunpack.c.h.b16 %v713
    %v3065 = vunpack.c.l.b16 %v714
    %v3066 = vunpack.c.h.b16 %v714
    %v3067 = vunpack.c.l.b16 %v715
    %v3068 = vunpack.c.h.b16 %v715
    %v3069 = vunpack.c.l.b16 %v716
    %v3070 = vunpack.c.h.b16 %v716
    %v3071 = vunpack.c.l.b16 %v717
    %v3072 = vunpack.c.h.b16 %v717
    %v3073 = vunpack.c.l.b16 %v718
    %v3074 = vunpack.c.h.b16 %v718
    %v3075 = vunpack.c.l.b16 %v719
    %v3076 = vunpack.c.h.b16 %v719
    %v3077 = vunpack.c.l.b16 %v720
    %v3078 = vunpack.c.h.b16 %v720
    %v3079 = vunpack.c.l.b16 %v721
    %v3080 = vunpack.c.h.b16 %v721
    %v3081 = vunpack.c.l.b16 %v722
    %v3082 = vunpack.c.h.b16 %v722
    %v3083 = vunpack.c.l.b16 %v723
    %v3084 = vunpack.c.h.b16 %v723
    %v3085 = vunpack.c.l.b16 %v724
    %v3086 = vunpack.c.h.b16 %v724
    %v3087 = vunpack.c.l.b16 %v725
    %v3088 = vunpack.c.h.b16 %v725
    %v3089 = vunpack.c.l.b16 %v726
    %v3090 = vunpack.c.h.b16 %v726
    %v3091 = vunpack.c.l.b16 %v727
    %v3092 = vunpack.c.h.b16 %v727
    %v3093 = vunpack.c.l.b16 %v728
    %v3094 = vunpack.c.h.b16 %v728
    %v3095 = vunpack.c.l.b16 %v729
    %v3096 = vunpack.c.h.b16 %v729
    %v3097 = vunpack.c.l.b16 %v730
    %v3098 = vunpack.c.h.b16 %v730
    %v3099 = vunpack.c.l.b16 %v731
    %v3100 = vunpack.c.h.b16 %v731
    %v3101 = vunpack.c.l.b16 %v732
    %v3102 = vunpack.c.h.b16 %v732
    %v3103 = vunpack.c.l.b16 %v733
    %v3104 = vunpack.c.h.b16 %v733
    %v3105 = vunpack.c.l.b16 %v734
    %v3106 = vunpack.c.h.b16 %v734
    %v3107 = vunpack.c.l.b16 %v735
    %v3108 = vunpack.c.h.b16 %v735
    %v3109 = vunpack.c.l.b16 %v736
    %v3110 = vunpack.c.h.b16 %v736
    %v3111 = vunpack.c.l.b16 %v737
    %v3112 = vunpack.c.h.b16 %v737
    %v3113 = vunpack.c.l.b16 %v738
    %v3114 = vunpack.c.h.b16 %v738
    %v3115 = vunpack.c.l.b16 %v739
    %v3116 = vunpack.c.h.b16 %v739
    %v3117 = vunpack.c.l.b16 %v740
    %v3118 = vunpack.c.h.b16 %v740
    %v3119 = vunpack.c.l.b16 %v741
    %v3120 = vunpack.c.h.b16 %v741
    %v3121 = vunpack.c.l.b16 %v742
    %v3122 = vunpack.c.h.b16 %v742
    %v3123 = vunpack.c.l.b16 %v743
    %v3124 = vunpack.c.h.b16 %v743
    %v3125 = vunpack.c.l.b16 %v744
    %v3126 = vunpack.c.h.b16 %v744
    %v3127 = vunpack.c.l.b16 %v745
    %v3128 = vunpack.c.h.b16 %v745
    %v3129 = vunpack.c.l.b16 %v746
    %v3130 = vunpack.c.h.b16 %v746
    %v3131 = vunpack.c.l.b16 %v747
    %v3132 = vunpack.c.h.b16 %v747
    %v3133 = vunpack.c.l.b16 %v748
    %v3134 = vunpack.c.h.b16 %v748
    %v3135 = vunpack.c.l.b16 %v749
    %v3136 = vunpack.c.h.b16 %v749
    %v3137 = vunpack.c.l.b16 %v750
    %v3138 = vunpack.c.h.b16 %v750
    %v3139 = vunpack.c.l.b16 %v751
    %v3140 = vunpack.c.h.b16 %v751
    %v3141 = vunpack.c.l.b16 %v752
    %v3142 = vunpack.c.h.b16 %v752
    %v3143 = vunpack.c.l.b16 %v753
    %v3144 = vunpack.c.h.b16 %v753
    %v3145 = vunpack.c.l.b16 %v754
    %v3146 = vunpack.c.h.b16 %v754
    %v3147 = vunpack.c.l.b16 %v755
    %v3148 = vunpack.c.h.b16 %v755
    %v3149 = vunpack.c.l.b16 %v756
    %v3150 = vunpack.c.h.b16 %v756
    %v3151 = vunpack.c.l.b16 %v757
    %v3152 = vunpack.c.h.b16 %v757
    %v3153 = vunpack.c.l.b16 %v758
    %v3154 = vunpack.c.h.b16 %v758
    %v3155 = vunpack.c.l.b16 %v759
    %v3156 = vunpack.c.h.b16 %v759
    %v3157 = vunpack.c.l.b16 %v760
    %v3158 = vunpack.c.h.b16 %v760
    %v3159 = vunpack.c.l.b16 %v761
    %v3160 = vunpack.c.h.b16 %v761
    %v3161 = vunpack.c.l.b16 %v762
    %v3162 = vunpack.c.h.b16 %v762
    %v3163 = vunpack.c.l.b16 %v763
    %v3164 = vunpack.c.h.b16 %v763
    %v3165 = vunpack.c.l.b16 %v764
    %v3166 = vunpack.c.h.b16 %v764
    %v3167 = vunpack.c.l.b16 %v765
    %v3168 = vunpack.c.h.b16 %v765
    %v3169 = vunpack.c.l.b16 %v766
    %v3170 = vunpack.c.h.b16 %v766
    %v3171 = vunpack.c.l.b16 %v767
    %v3172 = vunpack.c.h.b16 %v767
    %v3173 = vunpack.c.l.b16 %v768
    %v3174 = vunpack.c.h.b16 %v768
    %v3175 = vunpack.c.l.b16 %v769
    %v3176 = vunpack.c.h.b16 %v769
    %v3177 = vunpack.c.l.b16 %v770
    %v3178 = vunpack.c.h.b16 %v770
    %v3179 = vunpack.c.l.b16 %v771
    %v3180 = vunpack.c.h.b16 %v771
    %v3181 = vunpack.c.l.b16 %v772
    %v3182 = vunpack.c.h.b16 %v772
    %v3183 = vunpack.c.l.b16 %v773
    %v3184 = vunpack.c.h.b16 %v773
    %v3185 = vunpack.c.l.b16 %v774
    %v3186 = vunpack.c.h.b16 %v774
    %v3187 = vunpack.c.l.b16 %v775
    %v3188 = vunpack.c.h.b16 %v775
    %v3189 = vunpack.c.l.b16 %v776
    %v3190 = vunpack.c.h.b16 %v776
    %v3191 = vunpack.c.l.b16 %v777
    %v3192 = vunpack.c.h.b16 %v777
    %v3193 = vunpack.c.l.b16 %v778
    %v3194 = vunpack.c.h.b16 %v778
    %v3195 = vunpack.c.l.b16 %v779
    %v3196 = vunpack.c.h.b16 %v779
    %v3197 = vunpack.c.l.b16 %v780
    %v3198 = vunpack.c.h.b16 %v780
    %v3199 = vunpack.c.l.b16 %v781
    %v3200 = vunpack.c.h.b16 %v781
    %v3201 = vunpack.c.l.b16 %v782
    %v3202 = vunpack.c.h.b16 %v782
    %v3203 = vunpack.c.l.b16 %v783
    %v3204 = vunpack.c.h.b16 %v783
    %v3205 = vunpack.c.l.b16 %v784
    %v3206 = vunpack.c.h.b16 %v784
    %v3207 = vunpack.c.l.b16 %v785
    %v3208 = vunpack.c.h.b16 %v785
    %v3209 = vunpack.c.l.b16 %v786
    %v3210 = vunpack.c.h.b16 %v786
    %v3211 = vunpack.c.l.b16 %v787
    %v3212 = vunpack.c.h.b16 %v787
    %v3213 = vunpack.c.l.b16 %v788
    %v3214 = vunpack.c.h.b16 %v788
    %v3215 = vunpack.c.l.b16 %v789
    %v3216 = vunpack.c.h.b16 %v789
    %v3217 = vunpack.c.l.b16 %v790
    %v3218 = vunpack.c.h.b16 %v790
    %v3219 = vunpack.c.l.b16 %v791
    %v3220 = vunpack.c.h.b16 %v791
    %v3221 = vunpack.c.l.b16 %v792
    %v3222 = vunpack.c.h.b16 %v792
    %v3223 = vunpack.c.l.b16 %v793
    %v3224 = vunpack.c.h.b16 %v793
    %v3225 = vunpack.c.l.b16 %v794
    %v3226 = vunpack.c.h.b16 %v794
    %v3227 = vunpack.c.l.b16 %v795
    %v3228 = vunpack.c.h.b16 %v795
    %v3229 = vunpack.c.l.b16 %v796
    %v3230 = vunpack.c.h.b16 %v796
    %v3231 = vunpack.c.l.b16 %v797
    %v3232 = vunpack.c.h.b16 %v797
    %v3233 = vunpack.c.l.b16 %v798
    %v3234 = vunpack.c.h.b16 %v798
    %v3235 = vunpack.c.l.b16 %v799
    %v3236 = vunpack.c.h.b16 %v799
    %v3237 = vunpack.c.l.b16 %v800
    %v3238 = vunpack.c.h.b16 %v800
    %v3239 = vunpack.c.l.b16 %v801
    %v3240 = vunpack.c.h.b16 %v801
    %v3241 = vunpack.c.l.b16 %v802
    %v3242 = vunpack.c.h.b16 %v802
    %v3243 = vunpack.c.l.b16 %v803
    %v3244 = vunpack.c.h.b16 %v803
    %v3245 = vunpack.c.l.b16 %v804
    %v3246 = vunpack.c.h.b16 %v804
    %v3247 = vunpack.c.l.b16 %v805
    %v3248 = vunpack.c.h.b16 %v805
    %v3249 = vunpack.c.l.b16 %v806
    %v3250 = vunpack.c.h.b16 %v806
    %v3251 = vunpack.c.l.b16 %v807
    %v3252 = vunpack.c.h.b16 %v807
    %v3253 = vunpack.c.l.b16 %v808
    %v3254 = vunpack.c.h.b16 %v808
    %v3255 = vunpack.c.l.b16 %v809
    %v3256 = vunpack.c.h.b16 %v809
    %v3257 = vunpack.c.l.b16 %v810
    %v3258 = vunpack.c.h.b16 %v810
    %v3259 = vunpack.c.l.b16 %v811
    %v3260 = vunpack.c.h.b16 %v811
    %v3261 = vunpack.c.l.b16 %v812
    %v3262 = vunpack.c.h.b16 %v812
    %v3263 = vunpack.c.l.b16 %v813
    %v3264 = vunpack.c.h.b16 %v813
    %v3265 = vunpack.c.l.b16 %v814
    %v3266 = vunpack.c.h.b16 %v814
    %v3267 = vunpack.c.l.b16 %v815
    %v3268 = vunpack.c.h.b16 %v815
    %v3269 = vunpack.c.l.b16 %v816
    %v3270 = vunpack.c.h.b16 %v816
    %v3271 = vunpack.c.l.b16 %v817
    %v3272 = vunpack.c.h.b16 %v817
    %v3273 = vunpack.c.l.b16 %v818
    %v3274 = vunpack.c.h.b16 %v818
    %v3275 = vunpack.c.l.b16 %v819
    %v3276 = vunpack.c.h.b16 %v819
    %v3277 = vunpack.c.l.b16 %v820
    %v3278 = vunpack.c.h.b16 %v820
    %v3279 = vunpack.c.l.b16 %v821
    %v3280 = vunpack.c.h.b16 %v821
    %v3281 = vunpack.c.l.b16 %v822
    %v3282 = vunpack.c.h.b16 %v822
    %v3283 = vunpack.c.l.b16 %v823
    %v3284 = vunpack.c.h.b16 %v823
    %v3285 = vunpack.c.l.b16 %v824
    %v3286 = vunpack.c.h.b16 %v824
    %v3287 = vunpack.c.l.b16 %v825
    %v3288 = vunpack.c.h.b16 %v825
    %v3289 = vunpack.c.l.b16 %v826
    %v3290 = vunpack.c.h.b16 %v826
    %v3291 = vunpack.c.l.b16 %v827
    %v3292 = vunpack.c.h.b16 %v827
    %v3293 = vunpack.c.l.b16 %v828
    %v3294 = vunpack.c.h.b16 %v828
    %v3295 = vunpack.c.l.b16 %v829
    %v3296 = vunpack.c.h.b16 %v829
    %v3297 = vunpack.c.l.b16 %v830
    %v3298 = vunpack.c.h.b16 %v830
    %v3299 = vpack.c.b16 %v1703, %v1699
    %v3300 = vpack.c.b16 %v1704, %v1700
    %v3301 = vpack.c.b16 %v1705, %v1701
    %v3302 = vpack.c.b16 %v1706, %v1702
    %v3303 = vpack.c.b16 %v1711, %v1707
    %v3304 = vpack.c.b16 %v1712, %v1708
    %v3305 = vpack.c.b16 %v1713, %v1709
    %v3306 = vpack.c.b16 %v1714, %v1710
    %v3307 = vpack.c.b16 %v1719, %v1715
    %v3308 = vpack.c.b16 %v1720, %v1716
    %v3309 = vpack.c.b16 %v1721, %v1717
    %v3310 = vpack.c.b16 %v1722, %v1718
    %v3311 = vpack.c.b16 %v1727, %v1723
    %v3312 = vpack.c.b16 %v1728, %v1724
    %v3313 = vpack.c.b16 %v1729, %v1725
    %v3314 = vpack.c.b16 %v1730, %v1726
    %v3315 = vpack.c.b16 %v1735, %v1731
    %v3316 = vpack.c.b16 %v1736, %v1732
    %v3317 = vpack.c.b16 %v1737, %v1733
    %v3318 = vpack.c.b16 %v1738, %v1734
    %v3319 = vpack.c.b16 %v1743, %v1739
    %v3320 = vpack.c.b16 %v1744, %v1740
    %v3321 = vpack.c.b16 %v1745, %v1741
    %v3322 = vpack.c.b16 %v1746, %v1742
    %v3323 = vpack.c.b16 %v1751, %v1747
    %v3324 = vpack.c.b16 %v1752, %v1748
    %v3325 = vpack.c.b16 %v1753, %v1749
    %v3326 = vpack.c.b16 %v1754, %v1750
    %v3327 = vpack.c.b16 %v1759, %v1755
    %v3328 = vpack.c.b16 %v1760, %v1756
    %v3329 = vpack.c.b16 %v1761, %v1757
    %v3330 = vpack.c.b16 %v1762, %v1758
    %v3331 = vpack.c.b16 %v1767, %v1763
    %v3332 = vpack.c.b16 %v1768, %v1764
    %v3333 = vpack.c.b16 %v1769, %v1765
    %v3334 = vpack.c.b16 %v1770, %v1766
    %v3335 = vpack.c.b16 %v1775, %v1771
    %v3336 = vpack.c.b16 %v1776, %v1772
    %v3337 = vpack.c.b16 %v1777, %v1773
    %v3338 = vpack.c.b16 %v1778, %v1774
    %v3339 = vpack.c.b16 %v1783, %v1779
    %v3340 = vpack.c.b16 %v1784, %v1780
    %v3341 = vpack.c.b16 %v1785, %v1781
    %v3342 = vpack.c.b16 %v1786, %v1782
    %v3343 = vpack.c.b16 %v1791, %v1787
    %v3344 = vpack.c.b16 %v1792, %v1788
    %v3345 = vpack.c.b16 %v1793, %v1789
    %v3346 = vpack.c.b16 %v1794, %v1790
    %v3347 = vpack.c.b16 %v1799, %v1795
    %v3348 = vpack.c.b16 %v1800, %v1796
    %v3349 = vpack.c.b16 %v1801, %v1797
    %v3350 = vpack.c.b16 %v1802, %v1798
    %v3351 = vpack.c.b16 %v1807, %v1803
    %v3352 = vpack.c.b16 %v1808, %v1804
    %v3353 = vpack.c.b16 %v1809, %v1805
    %v3354 = vpack.c.b16 %v1810, %v1806
    %v3355 = vpack.c.b16 %v1815, %v1811
    %v3356 = vpack.c.b16 %v1816, %v1812
    %v3357 = vpack.c.b16 %v1817, %v1813
    %v3358 = vpack.c.b16 %v1818, %v1814
    %v3359 = vpack.c.b16 %v1823, %v1819
    %v3360 = vpack.c.b16 %v1824, %v1820
    %v3361 = vpack.c.b16 %v1825, %v1821
    %v3362 = vpack.c.b16 %v1826, %v1822
    %v3363 = vpack.c.b16 %v1831, %v1827
    %v3364 = vpack.c.b16 %v1832, %v1828
    %v3365 = vpack.c.b16 %v1833, %v1829
    %v3366 = vpack.c.b16 %v1834, %v1830
    %v3367 = vpack.c.b16 %v1839, %v1835
    %v3368 = vpack.c.b16 %v1840, %v1836
    %v3369 = vpack.c.b16 %v1841, %v1837
    %v3370 = vpack.c.b16 %v1842, %v1838
    %v3371 = vpack.c.b16 %v1847, %v1843
    %v3372 = vpack.c.b16 %v1848, %v1844
    %v3373 = vpack.c.b16 %v1849, %v1845
    %v3374 = vpack.c.b16 %v1850, %v1846
    %v3375 = vpack.c.b16 %v1855, %v1851
    %v3376 = vpack.c.b16 %v1856, %v1852
    %v3377 = vpack.c.b16 %v1857, %v1853
    %v3378 = vpack.c.b16 %v1858, %v1854
    %v3379 = vpack.c.b16 %v1863, %v1859
    %v3380 = vpack.c.b16 %v1864, %v1860
    %v3381 = vpack.c.b16 %v1865, %v1861
    %v3382 = vpack.c.b16 %v1866, %v1862
    %v3383 = vpack.c.b16 %v1871, %v1867
    %v3384 = vpack.c.b16 %v1872, %v1868
    %v3385 = vpack.c.b16 %v1873, %v1869
    %v3386 = vpack.c.b16 %v1874, %v1870
    %v3387 = vpack.c.b16 %v1879, %v1875
    %v3388 = vpack.c.b16 %v1880, %v1876
    %v3389 = vpack.c.b16 %v1881, %v1877
    %v3390 = vpack.c.b16 %v1882, %v1878
    %v3391 = vpack.c.b16 %v1887, %v1883
    %v3392 = vpack.c.b16 %v1888, %v1884
    %v3393 = vpack.c.b16 %v1889, %v1885
    %v3394 = vpack.c.b16 %v1890, %v1886
    %v3395 = vpack.c.b16 %v1895, %v1891
    %v3396 = vpack.c.b16 %v1896, %v1892
    %v3397 = vpack.c.b16 %v1897, %v1893
    %v3398 = vpack.c.b16 %v1898, %v1894
    %v3399 = vpack.c.b16 %v1903, %v1899
    %v3400 = vpack.c.b16 %v1904, %v1900
    %v3401 = vpack.c.b16 %v1905, %v1901
    %v3402 = vpack.c.b16 %v1906, %v1902
    %v3403 = vpack.c.b16 %v1911, %v1907
    %v3404 = vpack.c.b16 %v1912, %v1908
    %v3405 = vpack.c.b16 %v1913, %v1909
    %v3406 = vpack.c.b16 %v1914, %v1910
    %v3407 = vpack.c.b16 %v1919, %v1915
    %v3408 = vpack.c.b16 %v1920, %v1916
    %v3409 = vpack.c.b16 %v1921, %v1917
    %v3410 = vpack.c.b16 %v1922, %v1918
    %v3411 = vpack.c.b16 %v1927, %v1923
    %v3412 = vpack.c.b16 %v1928, %v1924
    %v3413 = vpack.c.b16 %v1929, %v1925
    %v3414 = vpack.c.b16 %v1930, %v1926
    %v3415 = vpack.c.b16 %v1935, %v1931
    %v3416 = vpack.c.b16 %v1936, %v1932
    %v3417 = vpack.c.b16 %v1937, %v1933
    %v3418 = vpack.c.b16 %v1938, %v1934
    %v3419 = vpack.c.b16 %v1943, %v1939
    %v3420 = vpack.c.b16 %v1944, %v1940
    %v3421 = vpack.c.b16 %v1945, %v1941
    %v3422 = vpack.c.b16 %v1946, %v1942
    %v3423 = vpack.c.b16 %v1951, %v1947
    %v3424 = vpack.c.b16 %v1952, %v1948
    %v3425 = vpack.c.b16 %v1953, %v1949
    %v3426 = vpack.c.b16 %v1954, %v1950
    %v3427 = vpack.c.b16 %v1959, %v1955
    %v3428 = vpack.c.b16 %v1960, %v1956
    %v3429 = vpack.c.b16 %v1961, %v1957
    %v3430 = vpack.c.b16 %v1962, %v1958
    %v3431 = vpack.c.b16 %v1967, %v1963
    %v3432 = vpack.c.b16 %v1968, %v1964
    %v3433 = vpack.c.b16 %v1969, %v1965
    %v3434 = vpack.c.b16 %v1970, %v1966
    %v3435 = vpack.c.b16 %v1975, %v1971
    %v3436 = vpack.c.b16 %v1976, %v1972
    %v3437 = vpack.c.b16 %v1977, %v1973
    %v3438 = vpack.c.b16 %v1978, %v1974
    %v3439 = vpack.c.b16 %v1983, %v1979
    %v3440 = vpack.c.b16 %v1984, %v1980
    %v3441 = vpack.c.b16 %v1985, %v1981
    %v3442 = vpack.c.b16 %v1986, %v1982
    %v3443 = vpack.c.b16 %v1991, %v1987
    %v3444 = vpack.c.b16 %v1992, %v1988
    %v3445 = vpack.c.b16 %v1993, %v1989
    %v3446 = vpack.c.b16 %v1994, %v1990
    %v3447 = vpack.c.b16 %v1999, %v1995
    %v3448 = vpack.c.b16 %v2000, %v1996
    %v3449 = vpack.c.b16 %v2001, %v1997
    %v3450 = vpack.c.b16 %v2002, %v1998
    %v3451 = vpack.c.b16 %v2007, %v2003
    %v3452 = vpack.c.b16 %v2008, %v2004
    %v3453 = vpack.c.b16 %v2009, %v2005
    %v3454 = vpack.c.b16 %v2010, %v2006
    %v3455 = vpack.c.b16 %v2015, %v2011
    %v3456 = vpack.c.b16 %v2016, %v2012
    %v3457 = vpack.c.b16 %v2017, %v2013
    %v3458 = vpack.c.b16 %v2018, %v2014
    %v3459 = vpack.c.b16 %v2023, %v2019
    %v3460 = vpack.c.b16 %v2024, %v2020
    %v3461 = vpack.c.b16 %v2025, %v2021
    %v3462 = vpack.c.b16 %v2026, %v2022
    %v3463 = vpack.c.b16 %v2031, %v2027
    %v3464 = vpack.c.b16 %v2032, %v2028
    %v3465 = vpack.c.b16 %v2033, %v2029
    %v3466 = vpack.c.b16 %v2034, %v2030
    %v3467 = vpack.c.b16 %v2039, %v2035
    %v3468 = vpack.c.b16 %v2040, %v2036
    %v3469 = vpack.c.b16 %v2041, %v2037
    %v3470 = vpack.c.b16 %v2042, %v2038
    %v3471 = vpack.c.b16 %v2047, %v2043
    %v3472 = vpack.c.b16 %v2048, %v2044
    %v3473 = vpack.c.b16 %v2049, %v2045
    %v3474 = vpack.c.b16 %v2050, %v2046
    %v3475 = vpack.c.b16 %v2055, %v2051
    %v3476 = vpack.c.b16 %v2056, %v2052
    %v3477 = vpack.c.b16 %v2057, %v2053
    %v3478 = vpack.c.b16 %v2058, %v2054
    %v3479 = vpack.c.b16 %v2063, %v2059
    %v3480 = vpack.c.b16 %v2064, %v2060
    %v3481 = vpack.c.b16 %v2065, %v2061
    %v3482 = vpack.c.b16 %v2066, %v2062
    %v3483 = vpack.c.b16 %v2071, %v2067
    %v3484 = vpack.c.b16 %v2072, %v2068
    %v3485 = vpack.c.b16 %v2073, %v2069
    %v3486 = vpack.c.b16 %v2074, %v2070
    %v3487 = vpack.c.b16 %v2079, %v2075
    %v3488 = vpack.c.b16 %v2080, %v2076
    %v3489 = vpack.c.b16 %v2081, %v2077
    %v3490 = vpack.c.b16 %v2082, %v2078
    %v3491 = vpack.c.b16 %v2087, %v2083
    %v3492 = vpack.c.b16 %v2088, %v2084
    %v3493 = vpack.c.b16 %v2089, %v2085
    %v3494 = vpack.c.b16 %v2090, %v2086
    %v3495 = vpack.c.b16 %v2095, %v2091
    %v3496 = vpack.c.b16 %v2096, %v2092
    %v3497 = vpack.c.b16 %v2097, %v2093
    %v3498 = vpack.c.b16 %v2098, %v2094
    %v3499 = vpack.c.b16 %v2103, %v2099
    %v3500 = vpack.c.b16 %v2104, %v2100
    %v3501 = vpack.c.b16 %v2105, %v2101
    %v3502 = vpack.c.b16 %v2106, %v2102
    %v3503 = vpack.c.b16 %v2111, %v2107
    %v3504 = vpack.c.b16 %v2112, %v2108
    %v3505 = vpack.c.b16 %v2113, %v2109
    %v3506 = vpack.c.b16 %v2114, %v2110
    %v3507 = vpack.c.b16 %v2119, %v2115
    %v3508 = vpack.c.b16 %v2120, %v2116
    %v3509 = vpack.c.b16 %v2121, %v2117
    %v3510 = vpack.c.b16 %v2122, %v2118
    %v3511 = vpack.c.b16 %v2127, %v2123
    %v3512 = vpack.c.b16 %v2128, %v2124
    %v3513 = vpack.c.b16 %v2129, %v2125
    %v3514 = vpack.c.b16 %v2130, %v2126
    %v3515 = vpack.c.b16 %v2135, %v2131
    %v3516 = vpack.c.b16 %v2136, %v2132
    %v3517 = vpack.c.b16 %v2137, %v2133
    %v3518 = vpack.c.b16 %v2138, %v2134
    %v3519 = vpack.c.b16 %v2143, %v2139
    %v3520 = vpack.c.b16 %v2144, %v2140
    %v3521 = vpack.c.b16 %v2145, %v2141
    %v3522 = vpack.c.b16 %v2146, %v2142
    %v3523 = vpack.c.b16 %v2151, %v2147
    %v3524 = vpack.c.b16 %v2152, %v2148
    %v3525 = vpack.c.b16 %v2153, %v2149
    %v3526 = vpack.c.b16 %v2154, %v2150
    %v3527 = vpack.c.b16 %v2159, %v2155
    %v3528 = vpack.c.b16 %v2160, %v2156
    %v3529 = vpack.c.b16 %v2161, %v2157
    %v3530 = vpack.c.b16 %v2162, %v2158
    %v3531 = vpack.c.b16 %v2167, %v2163
    %v3532 = vpack.c.b16 %v2168, %v2164
    %v3533 = vpack.c.b16 %v2169, %v2165
    %v3534 = vpack.c.b16 %v2170, %v2166
    %v3535 = vpack.c.b16 %v2175, %v2171
    %v3536 = vpack.c.b16 %v2176, %v2172
    %v3537 = vpack.c.b16 %v2177, %v2173
    %v3538 = vpack.c.b16 %v2178, %v2174
    %v3539 = vpack.c.b16 %v2183, %v2179
    %v3540 = vpack.c.b16 %v2184, %v2180
    %v3541 = vpack.c.b16 %v2185, %v2181
    %v3542 = vpack.c.b16 %v2186, %v2182
    %v3543 = vpack.c.b16 %v2191, %v2187
    %v3544 = vpack.c.b16 %v2192, %v2188
    %v3545 = vpack.c.b16 %v2193, %v2189
    %v3546 = vpack.c.b16 %v2194, %v2190
    %v3547 = vpack.c.b16 %v2199, %v2195
    %v3548 = vpack.c.b16 %v2200, %v2196
    %v3549 = vpack.c.b16 %v2201, %v2197
    %v3550 = vpack.c.b16 %v2202, %v2198
    %v3551 = vpack.c.b16 %v2207, %v2203
    %v3552 = vpack.c.b16 %v2208, %v2204
    %v3553 = vpack.c.b16 %v2209, %v2205
    %v3554 = vpack.c.b16 %v2210, %v2206
    %v3555 = vpack.c.b16 %v2215, %v2211
    %v3556 = vpack.c.b16 %v2216, %v2212
    %v3557 = vpack.c.b16 %v2217, %v2213
    %v3558 = vpack.c.b16 %v2218, %v2214
    %v3559 = vpack.c.b16 %v2223, %v2219
    %v3560 = vpack.c.b16 %v2224, %v2220
    %v3561 = vpack.c.b16 %v2225, %v2221
    %v3562 = vpack.c.b16 %v2226, %v2222
    %v3563 = vpack.c.b16 %v2231, %v2227
    %v3564 = vpack.c.b16 %v2232, %v2228
    %v3565 = vpack.c.b16 %v2233, %v2229
    %v3566 = vpack.c.b16 %v2234, %v2230
    %v3567 = vpack.c.b16 %v2239, %v2235
    %v3568 = vpack.c.b16 %v2240, %v2236
    %v3569 = vpack.c.b16 %v2241, %v2237
    %v3570 = vpack.c.b16 %v2242, %v2238
    %v3571 = vpack.c.b16 %v2247, %v2243
    %v3572 = vpack.c.b16 %v2248, %v2244
    %v3573 = vpack.c.b16 %v2249, %v2245
    %v3574 = vpack.c.b16 %v2250, %v2246
    %v3575 = vpack.c.b16 %v2255, %v2251
    %v3576 = vpack.c.b16 %v2256, %v2252
    %v3577 = vpack.c.b16 %v2257, %v2253
    %v3578 = vpack.c.b16 %v2258, %v2254
    %v3579 = vpack.c.b16 %v2263, %v2259
    %v3580 = vpack.c.b16 %v2264, %v2260
    %v3581 = vpack.c.b16 %v2265, %v2261
    %v3582 = vpack.c.b16 %v2266, %v2262
    %v3583 = vpack.c.b16 %v2271, %v2267
    %v3584 = vpack.c.b16 %v2272, %v2268
    %v3585 = vpack.c.b16 %v2273, %v2269
    %v3586 = vpack.c.b16 %v2274, %v2270
    %v3587 = vpack.c.b16 %v2279, %v2275
    %v3588 = vpack.c.b16 %v2280, %v2276
    %v3589 = vpack.c.b16 %v2281, %v2277
    %v3590 = vpack.c.b16 %v2282, %v2278
    %v3591 = vpack.c.b16 %v2287, %v2283
    %v3592 = vpack.c.b16 %v2288, %v2284
    %v3593 = vpack.c.b16 %v2289, %v2285
    %v3594 = vpack.c.b16 %v2290, %v2286
    %v3595 = vpack.c.b16 %v2295, %v2291
    %v3596 = vpack.c.b16 %v2296, %v2292
    %v3597 = vpack.c.b16 %v2297, %v2293
    %v3598 = vpack.c.b16 %v2298, %v2294
    %v3599 = vpack.c.b16 %v2303, %v2299
    %v3600 = vpack.c.b16 %v2304, %v2300
    %v3601 = vpack.c.b16 %v2305, %v2301
    %v3602 = vpack.c.b16 %v2306, %v2302
    %v3603 = vpack.c.b16 %v2311, %v2307
    %v3604 = vpack.c.b16 %v2312, %v2308
    %v3605 = vpack.c.b16 %v2313, %v2309
    %v3606 = vpack.c.b16 %v2314, %v2310
    %v3607 = vpack.c.b16 %v2319, %v2315
    %v3608 = vpack.c.b16 %v2320, %v2316
    %v3609 = vpack.c.b16 %v2321, %v2317
    %v3610 = vpack.c.b16 %v2322, %v2318
    %v3611 = vpack.c.b16 %v2327, %v2323
    %v3612 = vpack.c.b16 %v2328, %v2324
    %v3613 = vpack.c.b16 %v2329, %v2325
    %v3614 = vpack.c.b16 %v2330, %v2326
    %v3615 = vpack.c.b16 %v2335, %v2331
    %v3616 = vpack.c.b16 %v2336, %v2332
    %v3617 = vpack.c.b16 %v2337, %v2333
    %v3618 = vpack.c.b16 %v2338, %v2334
    %v3619 = vpack.c.b16 %v2343, %v2339
    %v3620 = vpack.c.b16 %v2344, %v2340
    %v3621 = vpack.c.b16 %v2345, %v2341
    %v3622 = vpack.c.b16 %v2346, %v2342
    %v3623 = vpack.c.b16 %v2351, %v2347
    %v3624 = vpack.c.b16 %v2352, %v2348
    %v3625 = vpack.c.b16 %v2353, %v2349
    %v3626 = vpack.c.b16 %v2354, %v2350
    %v3627 = vpack.c.b16 %v2359, %v2355
    %v3628 = vpack.c.b16 %v2360, %v2356
    %v3629 = vpack.c.b16 %v2361, %v2357
    %v3630 = vpack.c.b16 %v2362, %v2358
    %v3631 = vpack.c.b16 %v2367, %v2363
    %v3632 = vpack.c.b16 %v2368, %v2364
    %v3633 = vpack.c.b16 %v2369, %v2365
    %v3634 = vpack.c.b16 %v2370, %v2366
    %v3635 = vpack.c.b16 %v2375, %v2371
    %v3636 = vpack.c.b16 %v2376, %v2372
    %v3637 = vpack.c.b16 %v2377, %v2373
    %v3638 = vpack.c.b16 %v2378, %v2374
    %v3639 = vpack.c.b16 %v2383, %v2379
    %v3640 = vpack.c.b16 %v2384, %v2380
    %v3641 = vpack.c.b16 %v2385, %v2381
    %v3642 = vpack.c.b16 %v2386, %v2382
    %v3643 = vpack.c.b16 %v2391, %v2387
    %v3644 = vpack.c.b16 %v2392, %v2388
    %v3645 = vpack.c.b16 %v2393, %v2389
    %v3646 = vpack.c.b16 %v2394, %v2390
    %v3647 = vpack.c.b16 %v2399, %v2395
    %v3648 = vpack.c.b16 %v2400, %v2396
    %v3649 = vpack.c.b16 %v2401, %v2397
    %v3650 = vpack.c.b16 %v2402, %v2398
    %v3651 = vpack.c.b16 %v2407, %v2403
    %v3652 = vpack.c.b16 %v2408, %v2404
    %v3653 = vpack.c.b16 %v2409, %v2405
    %v3654 = vpack.c.b16 %v2410, %v2406
    %v3655 = vpack.c.b16 %v2415, %v2411
    %v3656 = vpack.c.b16 %v2416, %v2412
    %v3657 = vpack.c.b16 %v2417, %v2413
    %v3658 = vpack.c.b16 %v2418, %v2414
    %v3659 = vpack.c.b16 %v2423, %v2419
    %v3660 = vpack.c.b16 %v2424, %v2420
    %v3661 = vpack.c.b16 %v2425, %v2421
    %v3662 = vpack.c.b16 %v2426, %v2422
    %v3663 = vpack.c.b16 %v2431, %v2427
    %v3664 = vpack.c.b16 %v2432, %v2428
    %v3665 = vpack.c.b16 %v2433, %v2429
    %v3666 = vpack.c.b16 %v2434, %v2430
    %v3667 = vpack.c.b16 %v2439, %v2435
    %v3668 = vpack.c.b16 %v2440, %v2436
    %v3669 = vpack.c.b16 %v2441, %v2437
    %v3670 = vpack.c.b16 %v2442, %v2438
    %v3671 = vpack.c.b16 %v2447, %v2443
    %v3672 = vpack.c.b16 %v2448, %v2444
    %v3673 = vpack.c.b16 %v2449, %v2445
    %v3674 = vpack.c.b16 %v2450, %v2446
    %v3675 = vpack.c.b16 %v2455, %v2451
    %v3676 = vpack.c.b16 %v2456, %v2452
    %v3677 = vpack.c.b16 %v2457, %v2453
    %v3678 = vpack.c.b16 %v2458, %v2454
    %v3679 = vpack.c.b16 %v2463, %v2459
    %v3680 = vpack.c.b16 %v2464, %v2460
    %v3681 = vpack.c.b16 %v2465, %v2461
    %v3682 = vpack.c.b16 %v2466, %v2462
    %v3683 = vpack.c.b16 %v2471, %v2467
    %v3684 = vpack.c.b16 %v2472, %v2468
    %v3685 = vpack.c.b16 %v2473, %v2469
    %v3686 = vpack.c.b16 %v2474, %v2470
    %v3687 = vpack.c.b16 %v2479, %v2475
    %v3688 = vpack.c.b16 %v2480, %v2476
    %v3689 = vpack.c.b16 %v2481, %v2477
    %v3690 = vpack.c.b16 %v2482, %v2478
    %v3691 = vpack.c.b16 %v2487, %v2483
    %v3692 = vpack.c.b16 %v2488, %v2484
    %v3693 = vpack.c.b16 %v2489, %v2485
    %v3694 = vpack.c.b16 %v2490, %v2486
    %v3695 = vpack.c.b16 %v2495, %v2491
    %v3696 = vpack.c.b16 %v2496, %v2492
    %v3697 = vpack.c.b16 %v2497, %v2493
    %v3698 = vpack.c.b16 %v2498, %v2494
    %v3699 = vpack.c.b16 %v2503, %v2499
    %v3700 = vpack.c.b16 %v2504, %v2500
    %v3701 = vpack.c.b16 %v2505, %v2501
    %v3702 = vpack.c.b16 %v2506, %v2502
    %v3703 = vpack.c.b16 %v2511, %v2507
    %v3704 = vpack.c.b16 %v2512, %v2508
    %v3705 = vpack.c.b16 %v2513, %v2509
    %v3706 = vpack.c.b16 %v2514, %v2510
    %v3707 = vpack.c.b16 %v2519, %v2515
    %v3708 = vpack.c.b16 %v2520, %v2516
    %v3709 = vpack.c.b16 %v2521, %v2517
    %v3710 = vpack.c.b16 %v2522, %v2518
    %v3711 = vpack.c.b16 %v2527, %v2523
    %v3712 = vpack.c.b16 %v2528, %v2524
    %v3713 = vpack.c.b16 %v2529, %v2525
    %v3714 = vpack.c.b16 %v2530, %v2526
    %v3715 = vpack.c.b16 %v2535, %v2531
    %v3716 = vpack.c.b16 %v2536, %v2532
    %v3717 = vpack.c.b16 %v2537, %v2533
    %v3718 = vpack.c.b16 %v2538, %v2534
    %v3719 = vpack.c.b16 %v2543, %v2539
    %v3720 = vpack.c.b16 %v2544, %v2540
    %v3721 = vpack.c.b16 %v2545, %v2541
    %v3722 = vpack.c.b16 %v2546, %v2542
    %v3723 = vpack.c.b16 %v2551, %v2547
    %v3724 = vpack.c.b16 %v2552, %v2548
    %v3725 = vpack.c.b16 %v2553, %v2549
    %v3726 = vpack.c.b16 %v2554, %v2550
    %v3727 = vpack.c.b16 %v2559, %v2555
    %v3728 = vpack.c.b16 %v2560, %v2556
    %v3729 = vpack.c.b16 %v2561, %v2557
    %v3730 = vpack.c.b16 %v2562, %v2558
    %v3731 = vpack.c.b16 %v2567, %v2563
    %v3732 = vpack.c.b16 %v2568, %v2564
    %v3733 = vpack.c.b16 %v2569, %v2565
    %v3734 = vpack.c.b16 %v2570, %v2566
    %v3735 = vpack.c.b16 %v2575, %v2571
    %v3736 = vpack.c.b16 %v2576, %v2572
    %v3737 = vpack.c.b16 %v2577, %v2573
    %v3738 = vpack.c.b16 %v2578, %v2574
    %v3739 = vpack.c.b16 %v2583, %v2579
    %v3740 = vpack.c.b16 %v2584, %v2580
    %v3741 = vpack.c.b16 %v2585, %v2581
    %v3742 = vpack.c.b16 %v2586, %v2582
    %v3743 = vpack.c.b16 %v2591, %v2587
    %v3744 = vpack.c.b16 %v2592, %v2588
    %v3745 = vpack.c.b16 %v2593, %v2589
    %v3746 = vpack.c.b16 %v2594, %v2590
    %v3747 = vpack.c.b16 %v2599, %v2595
    %v3748 = vpack.c.b16 %v2600, %v2596
    %v3749 = vpack.c.b16 %v2601, %v2597
    %v3750 = vpack.c.b16 %v2602, %v2598
    %v3751 = vpack.c.b16 %v2607, %v2603
    %v3752 = vpack.c.b16 %v2608, %v2604
    %v3753 = vpack.c.b16 %v2609, %v2605
    %v3754 = vpack.c.b16 %v2610, %v2606
    %v3755 = vpack.c.b16 %v2615, %v2611
    %v3756 = vpack.c.b16 %v2616, %v2612
    %v3757 = vpack.c.b16 %v2617, %v2613
    %v3758 = vpack.c.b16 %v2618, %v2614
    %v3759 = vpack.c.b16 %v2623, %v2619
    %v3760 = vpack.c.b16 %v2624, %v2620
    %v3761 = vpack.c.b16 %v2625, %v2621
    %v3762 = vpack.c.b16 %v2626, %v2622
    %v3763 = vpack.c.b16 %v2631, %v2627
    %v3764 = vpack.c.b16 %v2632, %v2628
    %v3765 = vpack.c.b16 %v2633, %v2629
    %v3766 = vpack.c.b16 %v2634, %v2630
    %v3767 = vpack.c.b16 %v2639, %v2635
    %v3768 = vpack.c.b16 %v2640, %v2636
    %v3769 = vpack.c.b16 %v2641, %v2637
    %v3770 = vpack.c.b16 %v2642, %v2638
    %v3771 = vpack.c.b16 %v2647, %v2643
    %v3772 = vpack.c.b16 %v2648, %v2644
    %v3773 = vpack.c.b16 %v2649, %v2645
    %v3774 = vpack.c.b16 %v2650, %v2646
    %v3775 = vpack.c.b16 %v2655, %v2651
    %v3776 = vpack.c.b16 %v2656, %v2652
    %v3777 = vpack.c.b16 %v2657, %v2653
    %v3778 = vpack.c.b16 %v2658, %v2654
    %v3779 = vpack.c.b16 %v2663, %v2659
    %v3780 = vpack.c.b16 %v2664, %v2660
    %v3781 = vpack.c.b16 %v2665, %v2661
    %v3782 = vpack.c.b16 %v2666, %v2662
    %v3783 = vpack.c.b16 %v2671, %v2667
    %v3784 = vpack.c.b16 %v2672, %v2668
    %v3785 = vpack.c.b16 %v2673, %v2669
    %v3786 = vpack.c.b16 %v2674, %v2670
    %v3787 = vpack.c.b16 %v2679, %v2675
    %v3788 = vpack.c.b16 %v2680, %v2676
    %v3789 = vpack.c.b16 %v2681, %v2677
    %v3790 = vpack.c.b16 %v2682, %v2678
    %v3791 = vpack.c.b16 %v2687, %v2683
    %v3792 = vpack.c.b16 %v2688, %v2684
    %v3793 = vpack.c.b16 %v2689, %v2685
    %v3794 = vpack.c.b16 %v2690, %v2686
    %v3795 = vpack.c.b16 %v2695, %v2691
    %v3796 = vpack.c.b16 %v2696, %v2692
    %v3797 = vpack.c.b16 %v2697, %v2693
    %v3798 = vpack.c.b16 %v2698, %v2694
    %v3799 = vpack.c.b16 %v2703, %v2699
    %v3800 = vpack.c.b16 %v2704, %v2700
    %v3801 = vpack.c.b16 %v2705, %v2701
    %v3802 = vpack.c.b16 %v2706, %v2702
    %v3803 = vpack.c.b16 %v2711, %v2707
    %v3804 = vpack.c.b16 %v2712, %v2708
    %v3805 = vpack.c.b16 %v2713, %v2709
    %v3806 = vpack.c.b16 %v2714, %v2710
    %v3807 = vpack.c.b16 %v2719, %v2715
    %v3808 = vpack.c.b16 %v2720, %v2716
    %v3809 = vpack.c.b16 %v2721, %v2717
    %v3810 = vpack.c.b16 %v2722, %v2718
    %v3811 = vpack.c.b16 %v2727, %v2723
    %v3812 = vpack.c.b16 %v2728, %v2724
    %v3813 = vpack.c.b16 %v2729, %v2725
    %v3814 = vpack.c.b16 %v2730, %v2726
    %v3815 = vpack.c.b16 %v2735, %v2731
    %v3816 = vpack.c.b16 %v2736, %v2732
    %v3817 = vpack.c.b16 %v2737, %v2733
    %v3818 = vpack.c.b16 %v2738, %v2734
    %v3819 = vpack.c.b16 %v2743, %v2739
    %v3820 = vpack.c.b16 %v2744, %v2740
    %v3821 = vpack.c.b16 %v2745, %v2741
    %v3822 = vpack.c.b16 %v2746, %v2742
    %v3823 = vpack.c.b16 %v2751, %v2747
    %v3824 = vpack.c.b16 %v2752, %v2748
    %v3825 = vpack.c.b16 %v2753, %v2749
    %v3826 = vpack.c.b16 %v2754, %v2750
    %v3827 = vpack.c.b16 %v2759, %v2755
    %v3828 = vpack.c.b16 %v2760, %v2756
    %v3829 = vpack.c.b16 %v2761, %v2757
    %v3830 = vpack.c.b16 %v2762, %v2758
    %v3831 = vpack.c.b16 %v2767, %v2763
    %v3832 = vpack.c.b16 %v2768, %v2764
    %v3833 = vpack.c.b16 %v2769, %v2765
    %v3834 = vpack.c.b16 %v2770, %v2766
    %v3835 = vpack.c.b16 %v2775, %v2771
    %v3836 = vpack.c.b16 %v2776, %v2772
    %v3837 = vpack.c.b16 %v2777, %v2773
    %v3838 = vpack.c.b16 %v2778, %v2774
    %v3839 = vpack.c.b16 %v2783, %v2779
    %v3840 = vpack.c.b16 %v2784, %v2780
    %v3841 = vpack.c.b16 %v2785, %v2781
    %v3842 = vpack.c.b16 %v2786, %v2782
    %v3843 = vpack.c.b16 %v2791, %v2787
    %v3844 = vpack.c.b16 %v2792, %v2788
    %v3845 = vpack.c.b16 %v2793, %v2789
    %v3846 = vpack.c.b16 %v2794, %v2790
    %v3847 = vpack.c.b16 %v2799, %v2795
    %v3848 = vpack.c.b16 %v2800, %v2796
    %v3849 = vpack.c.b16 %v2801, %v2797
    %v3850 = vpack.c.b16 %v2802, %v2798
    %v3851 = vpack.c.b16 %v2807, %v2803
    %v3852 = vpack.c.b16 %v2808, %v2804
    %v3853 = vpack.c.b16 %v2809, %v2805
    %v3854 = vpack.c.b16 %v2810, %v2806
    %v3855 = vpack.c.b16 %v2815, %v2811
    %v3856 = vpack.c.b16 %v2816, %v2812
    %v3857 = vpack.c.b16 %v2817, %v2813
    %v3858 = vpack.c.b16 %v2818, %v2814
    %v3859 = vpack.c.b16 %v2823, %v2819
    %v3860 = vpack.c.b16 %v2824, %v2820
    %v3861 = vpack.c.b16 %v2825, %v2821
    %v3862 = vpack.c.b16 %v2826, %v2822
    %v3863 = vpack.c.b16 %v2831, %v2827
    %v3864 = vpack.c.b16 %v2832, %v2828
    %v3865 = vpack.c.b16 %v2833, %v2829
    %v3866 = vpack.c.b16 %v2834, %v2830
    %v3867 = vpack.c.b16 %v2839, %v2835
    %v3868 = vpack.c.b16 %v2840, %v2836
    %v3869 = vpack.c.b16 %v2841, %v2837
    %v3870 = vpack.c.b16 %v2842, %v2838
    %v3871 = vpack.c.b16 %v2847, %v2843
    %v3872 = vpack.c.b16 %v2848, %v2844
    %v3873 = vpack.c.b16 %v2849, %v2845
    %v3874 = vpack.c.b16 %v2850, %v2846
    %v3875 = vpack.c.b16 %v2855, %v2851
    %v3876 = vpack.c.b16 %v2856, %v2852
    %v3877 = vpack.c.b16 %v2857, %v2853
    %v3878 = vpack.c.b16 %v2858, %v2854
    %v3879 = vpack.c.b16 %v2863, %v2859
    %v3880 = vpack.c.b16 %v2864, %v2860
    %v3881 = vpack.c.b16 %v2865, %v2861
    %v3882 = vpack.c.b16 %v2866, %v2862
    %v3883 = vpack.c.b16 %v2871, %v2867
    %v3884 = vpack.c.b16 %v2872, %v2868
    %v3885 = vpack.c.b16 %v2873, %v2869
    %v3886 = vpack.c.b16 %v2874, %v2870
    %v3887 = vpack.c.b16 %v2879, %v2875
    %v3888 = vpack.c.b16 %v2880, %v2876
    %v3889 = vpack.c.b16 %v2881, %v2877
    %v3890 = vpack.c.b16 %v2882, %v2878
    %v3891 = vpack.c.b16 %v2887, %v2883
    %v3892 = vpack.c.b16 %v2888, %v2884
    %v3893 = vpack.c.b16 %v2889, %v2885
    %v3894 = vpack.c.b16 %v2890, %v2886
    %v3895 = vpack.c.b16 %v2895, %v2891
    %v3896 = vpack.c.b16 %v2896, %v2892
    %v3897 = vpack.c.b16 %v2897, %v2893
    %v3898 = vpack.c.b16 %v2898, %v2894
    %v3899 = vpack.c.b16 %v2903, %v2899
    %v3900 = vpack.c.b16 %v2904, %v2900
    %v3901 = vpack.c.b16 %v2905, %v2901
    %v3902 = vpack.c.b16 %v2906, %v2902
    %v3903 = vpack.c.b16 %v2911, %v2907
    %v3904 = vpack.c.b16 %v2912, %v2908
    %v3905 = vpack.c.b16 %v2913, %v2909
    %v3906 = vpack.c.b16 %v2914, %v2910
    %v3907 = vpack.c.b16 %v2919, %v2915
    %v3908 = vpack.c.b16 %v2920, %v2916
    %v3909 = vpack.c.b16 %v2921, %v2917
    %v3910 = vpack.c.b16 %v2922, %v2918
    %v3911 = vpack.c.b16 %v2927, %v2923
    %v3912 = vpack.c.b16 %v2928, %v2924
    %v3913 = vpack.c.b16 %v2929, %v2925
    %v3914 = vpack.c.b16 %v2930, %v2926
    %v3915 = vpack.c.b16 %v2935, %v2931
    %v3916 = vpack.c.b16 %v2936, %v2932
    %v3917 = vpack.c.b16 %v2937, %v2933
    %v3918 = vpack.c.b16 %v2938, %v2934
    %v3919 = vpack.c.b16 %v2943, %v2939
    %v3920 = vpack.c.b16 %v2944, %v2940
    %v3921 = vpack.c.b16 %v2945, %v2941
    %v3922 = vpack.c.b16 %v2946, %v2942
    %v3923 = vpack.c.b16 %v2951, %v2947
    %v3924 = vpack.c.b16 %v2952, %v2948
    %v3925 = vpack.c.b16 %v2953, %v2949
    %v3926 = vpack.c.b16 %v2954, %v2950
    %v3927 = vpack.c.b16 %v2959, %v2955
    %v3928 = vpack.c.b16 %v2960, %v2956
    %v3929 = vpack.c.b16 %v2961, %v2957
    %v3930 = vpack.c.b16 %v2962, %v2958
    %v3931 = vpack.c.b16 %v2967, %v2963
    %v3932 = vpack.c.b16 %v2968, %v2964
    %v3933 = vpack.c.b16 %v2969, %v2965
    %v3934 = vpack.c.b16 %v2970, %v2966
    %v3935 = vpack.c.b16 %v2975, %v2971
    %v3936 = vpack.c.b16 %v2976, %v2972
    %v3937 = vpack.c.b16 %v2977, %v2973
    %v3938 = vpack.c.b16 %v2978, %v2974
    %v3939 = vpack.c.b16 %v2983, %v2979
    %v3940 = vpack.c.b16 %v2984, %v2980
    %v3941 = vpack.c.b16 %v2985, %v2981
    %v3942 = vpack.c.b16 %v2986, %v2982
    %v3943 = vpack.c.b16 %v2991, %v2987
    %v3944 = vpack.c.b16 %v2992, %v2988
    %v3945 = vpack.c.b16 %v2993, %v2989
    %v3946 = vpack.c.b16 %v2994, %v2990
    %v3947 = vpack.c.b16 %v2999, %v2995
    %v3948 = vpack.c.b16 %v3000, %v2996
    %v3949 = vpack.c.b16 %v3001, %v2997
    %v3950 = vpack.c.b16 %v3002, %v2998
    %v3951 = vpack.c.b16 %v3007, %v3003
    %v3952 = vpack.c.b16 %v3008, %v3004
    %v3953 = vpack.c.b16 %v3009, %v3005
    %v3954 = vpack.c.b16 %v3010, %v3006
    %v3955 = vpack.c.b16 %v3015, %v3011
    %v3956 = vpack.c.b16 %v3016, %v3012
    %v3957 = vpack.c.b16 %v3017, %v3013
    %v3958 = vpack.c.b16 %v3018, %v3014
    %v3959 = vpack.c.b16 %v3023, %v3019
    %v3960 = vpack.c.b16 %v3024, %v3020
    %v3961 = vpack.c.b16 %v3025, %v3021
    %v3962 = vpack.c.b16 %v3026, %v3022
    %v3963 = vpack.c.b16 %v3031, %v3027
    %v3964 = vpack.c.b16 %v3032, %v3028
    %v3965 = vpack.c.b16 %v3033, %v3029
    %v3966 = vpack.c.b16 %v3034, %v3030
    %v3967 = vpack.c.b16 %v3039, %v3035
    %v3968 = vpack.c.b16 %v3040, %v3036
    %v3969 = vpack.c.b16 %v3041, %v3037
    %v3970 = vpack.c.b16 %v3042, %v3038
    %v3971 = vpack.c.b16 %v3047, %v3043
    %v3972 = vpack.c.b16 %v3048, %v3044
    %v3973 = vpack.c.b16 %v3049, %v3045
    %v3974 = vpack.c.b16 %v3050, %v3046
    %v3975 = vpack.c.b16 %v3055, %v3051
    %v3976 = vpack.c.b16 %v3056, %v3052
    %v3977 = vpack.c.b16 %v3057, %v3053
    %v3978 = vpack.c.b16 %v3058, %v3054
    %v3979 = vpack.c.b16 %v3063, %v3059
    %v3980 = vpack.c.b16 %v3064, %v3060
    %v3981 = vpack.c.b16 %v3065, %v3061
    %v3982 = vpack.c.b16 %v3066, %v3062
    %v3983 = vpack.c.b16 %v3071, %v3067
    %v3984 = vpack.c.b16 %v3072, %v3068
    %v3985 = vpack.c.b16 %v3073, %v3069
    %v3986 = vpack.c.b16 %v3074, %v3070
    %v3987 = vpack.c.b16 %v3079, %v3075
    %v3988 = vpack.c.b16 %v3080, %v3076
    %v3989 = vpack.c.b16 %v3081, %v3077
    %v3990 = vpack.c.b16 %v3082, %v3078
    %v3991 = vpack.c.b16 %v3087, %v3083
    %v3992 = vpack.c.b16 %v3088, %v3084
    %v3993 = vpack.c.b16 %v3089, %v3085
    %v3994 = vpack.c.b16 %v3090, %v3086
    %v3995 = vpack.c.b16 %v3095, %v3091
    %v3996 = vpack.c.b16 %v3096, %v3092
    %v3997 = vpack.c.b16 %v3097, %v3093
    %v3998 = vpack.c.b16 %v3098, %v3094
    %v3999 = vpack.c.b16 %v3103, %v3099
    %v4000 = vpack.c.b16 %v3104, %v3100
    %v4001 = vpack.c.b16 %v3105, %v3101
    %v4002 = vpack.c.b16 %v3106, %v3102
    %v4003 = vpack.c.b16 %v3111, %v3107
    %v4004 = vpack.c.b16 %v3112, %v3108
    %v4005 = vpack.c.b16 %v3113, %v3109
    %v4006 = vpack.c.b16 %v3114, %v3110
    %v4007 = vpack.c.b16 %v3119, %v3115
    %v4008 = vpack.c.b16 %v3120, %v3116
    %v4009 = vpack.c.b16 %v3121, %v3117
    %v4010 = vpack.c.b16 %v3122, %v3118
    %v4011 = vpack.c.b16 %v3127, %v3123
    %v4012 = vpack.c.b16 %v3128, %v3124
    %v4013 = vpack.c.b16 %v3129, %v3125
    %v4014 = vpack.c.b16 %v3130, %v3126
    %v4015 = vpack.c.b16 %v3135, %v3131
    %v4016 = vpack.c.b16 %v3136, %v3132
    %v4017 = vpack.c.b16 %v3137, %v3133
    %v4018 = vpack.c.b16 %v3138, %v3134
    %v4019 = vpack.c.b16 %v3143, %v3139
    %v4020 = vpack.c.b16 %v3144, %v3140
    %v4021 = vpack.c.b16 %v3145, %v3141
    %v4022 = vpack.c.b16 %v3146, %v3142
    %v4023 = vpack.c.b16 %v3151, %v3147
    %v4024 = vpack.c.b16 %v3152, %v3148
    %v4025 = vpack.c.b16 %v3153, %v3149
    %v4026 = vpack.c.b16 %v3154, %v3150
    %v4027 = vpack.c.b16 %v3159, %v3155
    %v4028 = vpack.c.b16 %v3160, %v3156
    %v4029 = vpack.c.b16 %v3161, %v3157
    %v4030 = vpack.c.b16 %v3162, %v3158
    %v4031 = vpack.c.b16 %v3167, %v3163
    %v4032 = vpack.c.b16 %v3168, %v3164
    %v4033 = vpack.c.b16 %v3169, %v3165
    %v4034 = vpack.c.b16 %v3170, %v3166
    %v4035 = vpack.c.b16 %v3175, %v3171
    %v4036 = vpack.c.b16 %v3176, %v3172
    %v4037 = vpack.c.b16 %v3177, %v3173
    %v4038 = vpack.c.b16 %v3178, %v3174
    %v4039 = vpack.c.b16 %v3183, %v3179
    %v4040 = vpack.c.b16 %v3184, %v3180
    %v4041 = vpack.c.b16 %v3185, %v3181
    %v4042 = vpack.c.b16 %v3186, %v3182
    %v4043 = vpack.c.b16 %v3191, %v3187
    %v4044 = vpack.c.b16 %v3192, %v3188
    %v4045 = vpack.c.b16 %v3193, %v3189
    %v4046 = vpack.c.b16 %v3194, %v3190
    %v4047 = vpack.c.b16 %v3199, %v3195
    %v4048 = vpack.c.b16 %v3200, %v3196
    %v4049 = vpack.c.b16 %v3201, %v3197
    %v4050 = vpack.c.b16 %v3202, %v3198
    %v4051 = vpack.c.b16 %v3207, %v3203
    %v4052 = vpack.c.b16 %v3208, %v3204
    %v4053 = vpack.c.b16 %v3209, %v3205
    %v4054 = vpack.c.b16 %v3210, %v3206
    %v4055 = vpack.c.b16 %v3215, %v3211
    %v4056 = vpack.c.b16 %v3216, %v3212
    %v4057 = vpack.c.b16 %v3217, %v3213
    %v4058 = vpack.c.b16 %v3218, %v3214
    %v4059 = vpack.c.b16 %v3223, %v3219
    %v4060 = vpack.c.b16 %v3224, %v3220
    %v4061 = vpack.c.b16 %v3225, %v3221
    %v4062 = vpack.c.b16 %v3226, %v3222
    %v4063 = vpack.c.b16 %v3231, %v3227
    %v4064 = vpack.c.b16 %v3232, %v3228
    %v4065 = vpack.c.b16 %v3233, %v3229
    %v4066 = vpack.c.b16 %v3234, %v3230
    %v4067 = vpack.c.b16 %v3239, %v3235
    %v4068 = vpack.c.b16 %v3240, %v3236
    %v4069 = vpack.c.b16 %v3241, %v3237
    %v4070 = vpack.c.b16 %v3242, %v3238
    %v4071 = vpack.c.b16 %v3247, %v3243
    %v4072 = vpack.c.b16 %v3248, %v3244
    %v4073 = vpack.c.b16 %v3249, %v3245
    %v4074 = vpack.c.b16 %v3250, %v3246
    %v4075 = vpack.c.b16 %v3255, %v3251
    %v4076 = vpack.c.b16 %v3256, %v3252
    %v4077 = vpack.c.b16 %v3257, %v3253
    %v4078 = vpack.c.b16 %v3258, %v3254
    %v4079 = vpack.c.b16 %v3263, %v3259
    %v4080 = vpack.c.b16 %v3264, %v3260
    %v4081 = vpack.c.b16 %v3265, %v3261
    %v4082 = vpack.c.b16 %v3266, %v3262
    %v4083 = vpack.c.b16 %v3271, %v3267
    %v4084 = vpack.c.b16 %v3272, %v3268
    %v4085 = vpack.c.b16 %v3273, %v3269
    %v4086 = vpack.c.b16 %v3274, %v3270
    %v4087 = vpack.c.b16 %v3279, %v3275
    %v4088 = vpack.c.b16 %v3280, %v3276
    %v4089 = vpack.c.b16 %v3281, %v3277
    %v4090 = vpack.c.b16 %v3282, %v3278
    %v4091 = vpack.c.b16 %v3287, %v3283
    %v4092 = vpack.c.b16 %v3288, %v3284
    %v4093 = vpack.c.b16 %v3289, %v3285
    %v4094 = vpack.c.b16 %v3290, %v3286
    %v4095 = vpack.c.b16 %v3295, %v3291
    %v4096 = vpack.c.b16 %v3296, %v3292
    %v4097 = vpack.c.b16 %v3297, %v3293
    %v4098 = vpack.c.b16 %v3298, %v3294
    %4899 = vmatpush.bf16.msra.mxu0 %v3327
    %4900 = vmatpush.bf16.msra.mxu0 %v3323
    %4901 = vmatpush.bf16.msra.mxu0 %v3319
    %4902 = vmatpush.bf16.msra.mxu0 %v3315
    %4903 = vmatpush.bf16.msra.mxu0 %v3311
    %4904 = vmatpush.bf16.msra.mxu0 %v3307
    %4905 = vmatpush.bf16.msra.mxu0 %v3303
    %4906 = vmatpush.bf16.msra.mxu0 %v3299
    %4907 = vmatmul.bf16.gmra.mxu0 %v843
    %v4908 = vpop.f32.mrf.mxu0
    %v4909 = vadd.f32 %v833, %v4908
    %v4910 = vpop.f32.mrf.mxu0
    %4911 = vdwg.mxu0
    %4912 = vmatpush.bf16.msra.mxu0 %v3359
    %4913 = vmatpush.bf16.msra.mxu0 %v3355
    %4914 = vmatpush.bf16.msra.mxu0 %v3351
    %4915 = vmatpush.bf16.msra.mxu0 %v3347
    %4916 = vmatpush.bf16.msra.mxu0 %v3343
    %4917 = vmatpush.bf16.msra.mxu0 %v3339
    %4918 = vmatpush.bf16.msra.mxu0 %v3335
    %4919 = vmatpush.bf16.msra.mxu0 %v3331
    %4920 = vmatmul.bf16.gmra.mxu0 %v844
    %v4921 = vpop.f32.mrf.mxu0
    %v4922 = vadd.f32 %v4909, %v4921
    %v4923 = vpop.f32.mrf.mxu0
    %4924 = vdwg.mxu0
    %4925 = vmatpush.bf16.msra.mxu0 %v3391
    %4926 = vmatpush.bf16.msra.mxu0 %v3387
    %4927 = vmatpush.bf16.msra.mxu0 %v3383
    %4928 = vmatpush.bf16.msra.mxu0 %v3379
    %4929 = vmatpush.bf16.msra.mxu0 %v3375
    %4930 = vmatpush.bf16.msra.mxu0 %v3371
    %4931 = vmatpush.bf16.msra.mxu0 %v3367
    %4932 = vmatpush.bf16.msra.mxu0 %v3363
    %4933 = vmatmul.bf16.gmra.mxu0 %v845
    %v4934 = vpop.f32.mrf.mxu0
    %v4935 = vadd.f32 %v4922, %v4934
    %v4936 = vpop.f32.mrf.mxu0
    %4937 = vdwg.mxu0
    %4938 = vmatpush.bf16.msra.mxu0 %v3423
    %4939 = vmatpush.bf16.msra.mxu0 %v3419
    %4940 = vmatpush.bf16.msra.mxu0 %v3415
    %4941 = vmatpush.bf16.msra.mxu0 %v3411
    %4942 = vmatpush.bf16.msra.mxu0 %v3407
    %4943 = vmatpush.bf16.msra.mxu0 %v3403
    %4944 = vmatpush.bf16.msra.mxu0 %v3399
    %4945 = vmatpush.bf16.msra.mxu0 %v3395
    %4946 = vmatmul.bf16.gmra.mxu0 %v846
    %v4947 = vpop.f32.mrf.mxu0
    %v4948 = vadd.f32 %v4935, %v4947
    %v4949 = vpop.f32.mrf.mxu0
    %4950 = vdwg.mxu0
    %4951 = vmatpush.bf16.msra.mxu0 %v3455
    %4952 = vmatpush.bf16.msra.mxu0 %v3451
    %4953 = vmatpush.bf16.msra.mxu0 %v3447
    %4954 = vmatpush.bf16.msra.mxu0 %v3443
    %4955 = vmatpush.bf16.msra.mxu0 %v3439
    %4956 = vmatpush.bf16.msra.mxu0 %v3435
    %4957 = vmatpush.bf16.msra.mxu0 %v3431
    %4958 = vmatpush.bf16.msra.mxu0 %v3427
    %4959 = vmatmul.bf16.gmra.mxu0 %v847
    %v4960 = vpop.f32.mrf.mxu0
    %v4961 = vadd.f32 %v4948, %v4960
    %v4962 = vpop.f32.mrf.mxu0
    %4963 = vdwg.mxu0
    %4964 = vmatpush.bf16.msra.mxu0 %v3487
    %4965 = vmatpush.bf16.msra.mxu0 %v3483
    %4966 = vmatpush.bf16.msra.mxu0 %v3479
    %4967 = vmatpush.bf16.msra.mxu0 %v3475
    %4968 = vmatpush.bf16.msra.mxu0 %v3471
    %4969 = vmatpush.bf16.msra.mxu0 %v3467
    %4970 = vmatpush.bf16.msra.mxu0 %v3463
    %4971 = vmatpush.bf16.msra.mxu0 %v3459
    %4972 = vmatmul.bf16.gmra.mxu0 %v848
    %v4973 = vpop.f32.mrf.mxu0
    %v4974 = vadd.f32 %v4961, %v4973
    %v4975 = vpop.f32.mrf.mxu0
    %4976 = vdwg.mxu0
    %4977 = vmatpush.bf16.msra.mxu0 %v3519
    %4978 = vmatpush.bf16.msra.mxu0 %v3515
    %4979 = vmatpush.bf16.msra.mxu0 %v3511
    %4980 = vmatpush.bf16.msra.mxu0 %v3507
    %4981 = vmatpush.bf16.msra.mxu0 %v3503
    %4982 = vmatpush.bf16.msra.mxu0 %v3499
    %4983 = vmatpush.bf16.msra.mxu0 %v3495
    %4984 = vmatpush.bf16.msra.mxu0 %v3491
    %4985 = vmatmul.bf16.gmra.mxu0 %v849
    %v4986 = vpop.f32.mrf.mxu0
    %v4987 = vadd.f32 %v4974, %v4986
    %v4988 = vpop.f32.mrf.mxu0
    %4989 = vdwg.mxu0
    %4990 = vmatpush.bf16.msra.mxu0 %v3551
    %4991 = vmatpush.bf16.msra.mxu0 %v3547
    %4992 = vmatpush.bf16.msra.mxu0 %v3543
    %4993 = vmatpush.bf16.msra.mxu0 %v3539
    %4994 = vmatpush.bf16.msra.mxu0 %v3535
    %4995 = vmatpush.bf16.msra.mxu0 %v3531
    %4996 = vmatpush.bf16.msra.mxu0 %v3527
    %4997 = vmatpush.bf16.msra.mxu0 %v3523
    %4998 = vmatmul.bf16.gmra.mxu0 %v850
    %v4999 = vpop.f32.mrf.mxu0
    %v5000 = vadd.f32 %v4987, %v4999
    %v5001 = vpop.f32.mrf.mxu0
    %5002 = vdwg.mxu0
    %5003 = vmatpush.bf16.msra.mxu0 %v3583
    %5004 = vmatpush.bf16.msra.mxu0 %v3579
    %5005 = vmatpush.bf16.msra.mxu0 %v3575
    %5006 = vmatpush.bf16.msra.mxu0 %v3571
    %5007 = vmatpush.bf16.msra.mxu0 %v3567
    %5008 = vmatpush.bf16.msra.mxu0 %v3563
    %5009 = vmatpush.bf16.msra.mxu0 %v3559
    %5010 = vmatpush.bf16.msra.mxu0 %v3555
    %5011 = vmatmul.bf16.gmra.mxu0 %v853
    %v5012 = vpop.f32.mrf.mxu0
    %v5013 = vadd.f32 %v5000, %v5012
    %v5014 = vpop.f32.mrf.mxu0
    %5015 = vdwg.mxu0
    %5016 = vmatpush.bf16.msra.mxu0 %v3615
    %5017 = vmatpush.bf16.msra.mxu0 %v3611
    %5018 = vmatpush.bf16.msra.mxu0 %v3607
    %5019 = vmatpush.bf16.msra.mxu0 %v3603
    %5020 = vmatpush.bf16.msra.mxu0 %v3599
    %5021 = vmatpush.bf16.msra.mxu0 %v3595
    %5022 = vmatpush.bf16.msra.mxu0 %v3591
    %5023 = vmatpush.bf16.msra.mxu0 %v3587
    %5024 = vmatmul.bf16.gmra.mxu0 %v854
    %v5025 = vpop.f32.mrf.mxu0
    %v5026 = vadd.f32 %v5013, %v5025
    %v5027 = vpop.f32.mrf.mxu0
    %5028 = vdwg.mxu0
    %5029 = vmatpush.bf16.msra.mxu0 %v3647
    %5030 = vmatpush.bf16.msra.mxu0 %v3643
    %5031 = vmatpush.bf16.msra.mxu0 %v3639
    %5032 = vmatpush.bf16.msra.mxu0 %v3635
    %5033 = vmatpush.bf16.msra.mxu0 %v3631
    %5034 = vmatpush.bf16.msra.mxu0 %v3627
    %5035 = vmatpush.bf16.msra.mxu0 %v3623
    %5036 = vmatpush.bf16.msra.mxu0 %v3619
    %5037 = vmatmul.bf16.gmra.mxu0 %v855
    %v5038 = vpop.f32.mrf.mxu0
    %v5039 = vadd.f32 %v5026, %v5038
    %v5040 = vpop.f32.mrf.mxu0
    %5041 = vdwg.mxu0
    %5042 = vmatpush.bf16.msra.mxu0 %v3679
    %5043 = vmatpush.bf16.msra.mxu0 %v3675
    %5044 = vmatpush.bf16.msra.mxu0 %v3671
    %5045 = vmatpush.bf16.msra.mxu0 %v3667
    %5046 = vmatpush.bf16.msra.mxu0 %v3663
    %5047 = vmatpush.bf16.msra.mxu0 %v3659
    %5048 = vmatpush.bf16.msra.mxu0 %v3655
    %5049 = vmatpush.bf16.msra.mxu0 %v3651
    %5050 = vmatmul.bf16.gmra.mxu0 %v856
    %v5051 = vpop.f32.mrf.mxu0
    %v5052 = vadd.f32 %v5039, %v5051
    %v5053 = vpop.f32.mrf.mxu0
    %5054 = vdwg.mxu0
    %5055 = vmatpush.bf16.msra.mxu0 %v3711
    %5056 = vmatpush.bf16.msra.mxu0 %v3707
    %5057 = vmatpush.bf16.msra.mxu0 %v3703
    %5058 = vmatpush.bf16.msra.mxu0 %v3699
    %5059 = vmatpush.bf16.msra.mxu0 %v3695
    %5060 = vmatpush.bf16.msra.mxu0 %v3691
    %5061 = vmatpush.bf16.msra.mxu0 %v3687
    %5062 = vmatpush.bf16.msra.mxu0 %v3683
    %5063 = vmatmul.bf16.gmra.mxu0 %v857
    %v5064 = vpop.f32.mrf.mxu0
    %v5065 = vadd.f32 %v5052, %v5064
    %v5066 = vpop.f32.mrf.mxu0
    %5067 = vdwg.mxu0
    %5068 = vmatpush.bf16.msra.mxu0 %v3743
    %5069 = vmatpush.bf16.msra.mxu0 %v3739
    %5070 = vmatpush.bf16.msra.mxu0 %v3735
    %5071 = vmatpush.bf16.msra.mxu0 %v3731
    %5072 = vmatpush.bf16.msra.mxu0 %v3727
    %5073 = vmatpush.bf16.msra.mxu0 %v3723
    %5074 = vmatpush.bf16.msra.mxu0 %v3719
    %5075 = vmatpush.bf16.msra.mxu0 %v3715
    %5076 = vmatmul.bf16.gmra.mxu0 %v858
    %v5077 = vpop.f32.mrf.mxu0
    %v5078 = vadd.f32 %v5065, %v5077
    %v5079 = vpop.f32.mrf.mxu0
    %5080 = vdwg.mxu0
    %5081 = vmatpush.bf16.msra.mxu0 %v3775
    %5082 = vmatpush.bf16.msra.mxu0 %v3771
    %5083 = vmatpush.bf16.msra.mxu0 %v3767
    %5084 = vmatpush.bf16.msra.mxu0 %v3763
    %5085 = vmatpush.bf16.msra.mxu0 %v3759
    %5086 = vmatpush.bf16.msra.mxu0 %v3755
    %5087 = vmatpush.bf16.msra.mxu0 %v3751
    %5088 = vmatpush.bf16.msra.mxu0 %v3747
    %5089 = vmatmul.bf16.gmra.mxu0 %v859
    %v5090 = vpop.f32.mrf.mxu0
    %v5091 = vadd.f32 %v5078, %v5090
    %v5092 = vpop.f32.mrf.mxu0
    %5093 = vdwg.mxu0
    %5094 = vmatpush.bf16.msra.mxu0 %v3807
    %5095 = vmatpush.bf16.msra.mxu0 %v3803
    %5096 = vmatpush.bf16.msra.mxu0 %v3799
    %5097 = vmatpush.bf16.msra.mxu0 %v3795
    %5098 = vmatpush.bf16.msra.mxu0 %v3791
    %5099 = vmatpush.bf16.msra.mxu0 %v3787
    %5100 = vmatpush.bf16.msra.mxu0 %v3783
    %5101 = vmatpush.bf16.msra.mxu0 %v3779
    %5102 = vmatmul.bf16.gmra.mxu0 %v860
    %v5103 = vpop.f32.mrf.mxu0
    %v5104 = vadd.f32 %v5091, %v5103
    %v5105 = vpop.f32.mrf.mxu0
    %5106 = vdwg.mxu0
    %5107 = vmatpush.bf16.msra.mxu0 %v3839
    %5108 = vmatpush.bf16.msra.mxu0 %v3835
    %5109 = vmatpush.bf16.msra.mxu0 %v3831
    %5110 = vmatpush.bf16.msra.mxu0 %v3827
    %5111 = vmatpush.bf16.msra.mxu0 %v3823
    %5112 = vmatpush.bf16.msra.mxu0 %v3819
    %5113 = vmatpush.bf16.msra.mxu0 %v3815
    %5114 = vmatpush.bf16.msra.mxu0 %v3811
    %5115 = vmatmul.bf16.gmra.mxu0 %v863
    %v5116 = vpop.f32.mrf.mxu0
    %v5117 = vadd.f32 %v5104, %v5116
    %v5118 = vpop.f32.mrf.mxu0
    %5119 = vdwg.mxu0
    %5120 = vmatpush.bf16.msra.mxu0 %v3871
    %5121 = vmatpush.bf16.msra.mxu0 %v3867
    %5122 = vmatpush.bf16.msra.mxu0 %v3863
    %5123 = vmatpush.bf16.msra.mxu0 %v3859
    %5124 = vmatpush.bf16.msra.mxu0 %v3855
    %5125 = vmatpush.bf16.msra.mxu0 %v3851
    %5126 = vmatpush.bf16.msra.mxu0 %v3847
    %5127 = vmatpush.bf16.msra.mxu0 %v3843
    %5128 = vmatmul.bf16.gmra.mxu0 %v864
    %v5129 = vpop.f32.mrf.mxu0
    %v5130 = vadd.f32 %v5117, %v5129
    %v5131 = vpop.f32.mrf.mxu0
    %5132 = vdwg.mxu0
    %5133 = vmatpush.bf16.msra.mxu0 %v3903
    %5134 = vmatpush.bf16.msra.mxu0 %v3899
    %5135 = vmatpush.bf16.msra.mxu0 %v3895
    %5136 = vmatpush.bf16.msra.mxu0 %v3891
    %5137 = vmatpush.bf16.msra.mxu0 %v3887
    %5138 = vmatpush.bf16.msra.mxu0 %v3883
    %5139 = vmatpush.bf16.msra.mxu0 %v3879
    %5140 = vmatpush.bf16.msra.mxu0 %v3875
    %5141 = vmatmul.bf16.gmra.mxu0 %v865
    %v5142 = vpop.f32.mrf.mxu0
    %v5143 = vadd.f32 %v5130, %v5142
    %v5144 = vpop.f32.mrf.mxu0
    %5145 = vdwg.mxu0
    %5146 = vmatpush.bf16.msra.mxu0 %v3935
    %5147 = vmatpush.bf16.msra.mxu0 %v3931
    %5148 = vmatpush.bf16.msra.mxu0 %v3927
    %5149 = vmatpush.bf16.msra.mxu0 %v3923
    %5150 = vmatpush.bf16.msra.mxu0 %v3919
    %5151 = vmatpush.bf16.msra.mxu0 %v3915
    %5152 = vmatpush.bf16.msra.mxu0 %v3911
    %5153 = vmatpush.bf16.msra.mxu0 %v3907
    %5154 = vmatmul.bf16.gmra.mxu0 %v866
    %v5155 = vpop.f32.mrf.mxu0
    %v5156 = vadd.f32 %v5143, %v5155
    %v5157 = vpop.f32.mrf.mxu0
    %5158 = vdwg.mxu0
    %5159 = vmatpush.bf16.msra.mxu0 %v3967
    %5160 = vmatpush.bf16.msra.mxu0 %v3963
    %5161 = vmatpush.bf16.msra.mxu0 %v3959
    %5162 = vmatpush.bf16.msra.mxu0 %v3955
    %5163 = vmatpush.bf16.msra.mxu0 %v3951
    %5164 = vmatpush.bf16.msra.mxu0 %v3947
    %5165 = vmatpush.bf16.msra.mxu0 %v3943
    %5166 = vmatpush.bf16.msra.mxu0 %v3939
    %5167 = vmatmul.bf16.gmra.mxu0 %v867
    %v5168 = vpop.f32.mrf.mxu0
    %v5169 = vadd.f32 %v5156, %v5168
    %v5170 = vpop.f32.mrf.mxu0
    %5171 = vdwg.mxu0
    %5172 = vmatpush.bf16.msra.mxu0 %v3999
    %5173 = vmatpush.bf16.msra.mxu0 %v3995
    %5174 = vmatpush.bf16.msra.mxu0 %v3991
    %5175 = vmatpush.bf16.msra.mxu0 %v3987
    %5176 = vmatpush.bf16.msra.mxu0 %v3983
    %5177 = vmatpush.bf16.msra.mxu0 %v3979
    %5178 = vmatpush.bf16.msra.mxu0 %v3975
    %5179 = vmatpush.bf16.msra.mxu0 %v3971
    %5180 = vmatmul.bf16.gmra.mxu0 %v868
    %v5181 = vpop.f32.mrf.mxu0
    %v5182 = vadd.f32 %v5169, %v5181
    %v5183 = vpop.f32.mrf.mxu0
    %5184 = vdwg.mxu0
    %5185 = vmatpush.bf16.msra.mxu0 %v4031
    %5186 = vmatpush.bf16.msra.mxu0 %v4027
    %5187 = vmatpush.bf16.msra.mxu0 %v4023
    %5188 = vmatpush.bf16.msra.mxu0 %v4019
    %5189 = vmatpush.bf16.msra.mxu0 %v4015
    %5190 = vmatpush.bf16.msra.mxu0 %v4011
    %5191 = vmatpush.bf16.msra.mxu0 %v4007
    %5192 = vmatpush.bf16.msra.mxu0 %v4003
    %5193 = vmatmul.bf16.gmra.mxu0 %v869
    %v5194 = vpop.f32.mrf.mxu0
    %v5195 = vadd.f32 %v5182, %v5194
    %v5196 = vpop.f32.mrf.mxu0
    %5197 = vdwg.mxu0
    %5198 = vmatpush.bf16.msra.mxu0 %v4063
    %5199 = vmatpush.bf16.msra.mxu0 %v4059
    %5200 = vmatpush.bf16.msra.mxu0 %v4055
    %5201 = vmatpush.bf16.msra.mxu0 %v4051
    %5202 = vmatpush.bf16.msra.mxu0 %v4047
    %5203 = vmatpush.bf16.msra.mxu0 %v4043
    %5204 = vmatpush.bf16.msra.mxu0 %v4039
    %5205 = vmatpush.bf16.msra.mxu0 %v4035
    %5206 = vmatmul.bf16.gmra.mxu0 %v870
    %v5207 = vpop.f32.mrf.mxu0
    %v5208 = vadd.f32 %v5195, %v5207
    %v5209 = vpop.f32.mrf.mxu0
    %5210 = vdwg.mxu0
    %5211 = vmatpush.bf16.msra.mxu0 %v4095
    %5212 = vmatpush.bf16.msra.mxu0 %v4091
    %5213 = vmatpush.bf16.msra.mxu0 %v4087
    %5214 = vmatpush.bf16.msra.mxu0 %v4083
    %5215 = vmatpush.bf16.msra.mxu0 %v4079
    %5216 = vmatpush.bf16.msra.mxu0 %v4075
    %5217 = vmatpush.bf16.msra.mxu0 %v4071
    %5218 = vmatpush.bf16.msra.mxu0 %v4067
    %5219 = vmatmul.bf16.gmra.mxu0 %v873
    %v5220 = vpop.f32.mrf.mxu0
    %v5221 = vadd.f32 %v5208, %v5220
    %v5222 = vpop.f32.mrf.mxu0
    %5223 = vdwg.mxu0
    %5224 = vmatpush.bf16.msra.mxu0 %v3328
    %5225 = vmatpush.bf16.msra.mxu0 %v3324
    %5226 = vmatpush.bf16.msra.mxu0 %v3320
    %5227 = vmatpush.bf16.msra.mxu0 %v3316
    %5228 = vmatpush.bf16.msra.mxu0 %v3312
    %5229 = vmatpush.bf16.msra.mxu0 %v3308
    %5230 = vmatpush.bf16.msra.mxu0 %v3304
    %5231 = vmatpush.bf16.msra.mxu0 %v3300
    %5232 = vmatmul.bf16.gmra.mxu0 %v843
    %v5233 = vpop.f32.mrf.mxu0
    %v5234 = vadd.f32 %v834, %v5233
    %v5235 = vpop.f32.mrf.mxu0
    %5236 = vdwg.mxu0
    %5237 = vmatpush.bf16.msra.mxu0 %v3360
    %5238 = vmatpush.bf16.msra.mxu0 %v3356
    %5239 = vmatpush.bf16.msra.mxu0 %v3352
    %5240 = vmatpush.bf16.msra.mxu0 %v3348
    %5241 = vmatpush.bf16.msra.mxu0 %v3344
    %5242 = vmatpush.bf16.msra.mxu0 %v3340
    %5243 = vmatpush.bf16.msra.mxu0 %v3336
    %5244 = vmatpush.bf16.msra.mxu0 %v3332
    %5245 = vmatmul.bf16.gmra.mxu0 %v844
    %v5246 = vpop.f32.mrf.mxu0
    %v5247 = vadd.f32 %v5234, %v5246
    %v5248 = vpop.f32.mrf.mxu0
    %5249 = vdwg.mxu0
    %5250 = vmatpush.bf16.msra.mxu0 %v3392
    %5251 = vmatpush.bf16.msra.mxu0 %v3388
    %5252 = vmatpush.bf16.msra.mxu0 %v3384
    %5253 = vmatpush.bf16.msra.mxu0 %v3380
    %5254 = vmatpush.bf16.msra.mxu0 %v3376
    %5255 = vmatpush.bf16.msra.mxu0 %v3372
    %5256 = vmatpush.bf16.msra.mxu0 %v3368
    %5257 = vmatpush.bf16.msra.mxu0 %v3364
    %5258 = vmatmul.bf16.gmra.mxu0 %v845
    %v5259 = vpop.f32.mrf.mxu0
    %v5260 = vadd.f32 %v5247, %v5259
    %v5261 = vpop.f32.mrf.mxu0
    %5262 = vdwg.mxu0
    %5263 = vmatpush.bf16.msra.mxu0 %v3424
    %5264 = vmatpush.bf16.msra.mxu0 %v3420
    %5265 = vmatpush.bf16.msra.mxu0 %v3416
    %5266 = vmatpush.bf16.msra.mxu0 %v3412
    %5267 = vmatpush.bf16.msra.mxu0 %v3408
    %5268 = vmatpush.bf16.msra.mxu0 %v3404
    %5269 = vmatpush.bf16.msra.mxu0 %v3400
    %5270 = vmatpush.bf16.msra.mxu0 %v3396
    %5271 = vmatmul.bf16.gmra.mxu0 %v846
    %v5272 = vpop.f32.mrf.mxu0
    %v5273 = vadd.f32 %v5260, %v5272
    %v5274 = vpop.f32.mrf.mxu0
    %5275 = vdwg.mxu0
    %5276 = vmatpush.bf16.msra.mxu0 %v3456
    %5277 = vmatpush.bf16.msra.mxu0 %v3452
    %5278 = vmatpush.bf16.msra.mxu0 %v3448
    %5279 = vmatpush.bf16.msra.mxu0 %v3444
    %5280 = vmatpush.bf16.msra.mxu0 %v3440
    %5281 = vmatpush.bf16.msra.mxu0 %v3436
    %5282 = vmatpush.bf16.msra.mxu0 %v3432
    %5283 = vmatpush.bf16.msra.mxu0 %v3428
    %5284 = vmatmul.bf16.gmra.mxu0 %v847
    %v5285 = vpop.f32.mrf.mxu0
    %v5286 = vadd.f32 %v5273, %v5285
    %v5287 = vpop.f32.mrf.mxu0
    %5288 = vdwg.mxu0
    %5289 = vmatpush.bf16.msra.mxu0 %v3488
    %5290 = vmatpush.bf16.msra.mxu0 %v3484
    %5291 = vmatpush.bf16.msra.mxu0 %v3480
    %5292 = vmatpush.bf16.msra.mxu0 %v3476
    %5293 = vmatpush.bf16.msra.mxu0 %v3472
    %5294 = vmatpush.bf16.msra.mxu0 %v3468
    %5295 = vmatpush.bf16.msra.mxu0 %v3464
    %5296 = vmatpush.bf16.msra.mxu0 %v3460
    %5297 = vmatmul.bf16.gmra.mxu0 %v848
    %v5298 = vpop.f32.mrf.mxu0
    %v5299 = vadd.f32 %v5286, %v5298
    %v5300 = vpop.f32.mrf.mxu0
    %5301 = vdwg.mxu0
    %5302 = vmatpush.bf16.msra.mxu0 %v3520
    %5303 = vmatpush.bf16.msra.mxu0 %v3516
    %5304 = vmatpush.bf16.msra.mxu0 %v3512
    %5305 = vmatpush.bf16.msra.mxu0 %v3508
    %5306 = vmatpush.bf16.msra.mxu0 %v3504
    %5307 = vmatpush.bf16.msra.mxu0 %v3500
    %5308 = vmatpush.bf16.msra.mxu0 %v3496
    %5309 = vmatpush.bf16.msra.mxu0 %v3492
    %5310 = vmatmul.bf16.gmra.mxu0 %v849
    %v5311 = vpop.f32.mrf.mxu0
    %v5312 = vadd.f32 %v5299, %v5311
    %v5313 = vpop.f32.mrf.mxu0
    %5314 = vdwg.mxu0
    %5315 = vmatpush.bf16.msra.mxu0 %v3552
    %5316 = vmatpush.bf16.msra.mxu0 %v3548
    %5317 = vmatpush.bf16.msra.mxu0 %v3544
    %5318 = vmatpush.bf16.msra.mxu0 %v3540
    %5319 = vmatpush.bf16.msra.mxu0 %v3536
    %5320 = vmatpush.bf16.msra.mxu0 %v3532
    %5321 = vmatpush.bf16.msra.mxu0 %v3528
    %5322 = vmatpush.bf16.msra.mxu0 %v3524
    %5323 = vmatmul.bf16.gmra.mxu0 %v850
    %v5324 = vpop.f32.mrf.mxu0
    %v5325 = vadd.f32 %v5312, %v5324
    %v5326 = vpop.f32.mrf.mxu0
    %5327 = vdwg.mxu0
    %5328 = vmatpush.bf16.msra.mxu0 %v3584
    %5329 = vmatpush.bf16.msra.mxu0 %v3580
    %5330 = vmatpush.bf16.msra.mxu0 %v3576
    %5331 = vmatpush.bf16.msra.mxu0 %v3572
    %5332 = vmatpush.bf16.msra.mxu0 %v3568
    %5333 = vmatpush.bf16.msra.mxu0 %v3564
    %5334 = vmatpush.bf16.msra.mxu0 %v3560
    %5335 = vmatpush.bf16.msra.mxu0 %v3556
    %5336 = vmatmul.bf16.gmra.mxu0 %v853
    %v5337 = vpop.f32.mrf.mxu0
    %v5338 = vadd.f32 %v5325, %v5337
    %v5339 = vpop.f32.mrf.mxu0
    %5340 = vdwg.mxu0
    %5341 = vmatpush.bf16.msra.mxu0 %v3616
    %5342 = vmatpush.bf16.msra.mxu0 %v3612
    %5343 = vmatpush.bf16.msra.mxu0 %v3608
    %5344 = vmatpush.bf16.msra.mxu0 %v3604
    %5345 = vmatpush.bf16.msra.mxu0 %v3600
    %5346 = vmatpush.bf16.msra.mxu0 %v3596
    %5347 = vmatpush.bf16.msra.mxu0 %v3592
    %5348 = vmatpush.bf16.msra.mxu0 %v3588
    %5349 = vmatmul.bf16.gmra.mxu0 %v854
    %v5350 = vpop.f32.mrf.mxu0
    %v5351 = vadd.f32 %v5338, %v5350
    %v5352 = vpop.f32.mrf.mxu0
    %5353 = vdwg.mxu0
    %5354 = vmatpush.bf16.msra.mxu0 %v3648
    %5355 = vmatpush.bf16.msra.mxu0 %v3644
    %5356 = vmatpush.bf16.msra.mxu0 %v3640
    %5357 = vmatpush.bf16.msra.mxu0 %v3636
    %5358 = vmatpush.bf16.msra.mxu0 %v3632
    %5359 = vmatpush.bf16.msra.mxu0 %v3628
    %5360 = vmatpush.bf16.msra.mxu0 %v3624
    %5361 = vmatpush.bf16.msra.mxu0 %v3620
    %5362 = vmatmul.bf16.gmra.mxu0 %v855
    %v5363 = vpop.f32.mrf.mxu0
    %v5364 = vadd.f32 %v5351, %v5363
    %v5365 = vpop.f32.mrf.mxu0
    %5366 = vdwg.mxu0
    %5367 = vmatpush.bf16.msra.mxu0 %v3680
    %5368 = vmatpush.bf16.msra.mxu0 %v3676
    %5369 = vmatpush.bf16.msra.mxu0 %v3672
    %5370 = vmatpush.bf16.msra.mxu0 %v3668
    %5371 = vmatpush.bf16.msra.mxu0 %v3664
    %5372 = vmatpush.bf16.msra.mxu0 %v3660
    %5373 = vmatpush.bf16.msra.mxu0 %v3656
    %5374 = vmatpush.bf16.msra.mxu0 %v3652
    %5375 = vmatmul.bf16.gmra.mxu0 %v856
    %v5376 = vpop.f32.mrf.mxu0
    %v5377 = vadd.f32 %v5364, %v5376
    %v5378 = vpop.f32.mrf.mxu0
    %5379 = vdwg.mxu0
    %5380 = vmatpush.bf16.msra.mxu0 %v3712
    %5381 = vmatpush.bf16.msra.mxu0 %v3708
    %5382 = vmatpush.bf16.msra.mxu0 %v3704
    %5383 = vmatpush.bf16.msra.mxu0 %v3700
    %5384 = vmatpush.bf16.msra.mxu0 %v3696
    %5385 = vmatpush.bf16.msra.mxu0 %v3692
    %5386 = vmatpush.bf16.msra.mxu0 %v3688
    %5387 = vmatpush.bf16.msra.mxu0 %v3684
    %5388 = vmatmul.bf16.gmra.mxu0 %v857
    %v5389 = vpop.f32.mrf.mxu0
    %v5390 = vadd.f32 %v5377, %v5389
    %v5391 = vpop.f32.mrf.mxu0
    %5392 = vdwg.mxu0
    %5393 = vmatpush.bf16.msra.mxu0 %v3744
    %5394 = vmatpush.bf16.msra.mxu0 %v3740
    %5395 = vmatpush.bf16.msra.mxu0 %v3736
    %5396 = vmatpush.bf16.msra.mxu0 %v3732
    %5397 = vmatpush.bf16.msra.mxu0 %v3728
    %5398 = vmatpush.bf16.msra.mxu0 %v3724
    %5399 = vmatpush.bf16.msra.mxu0 %v3720
    %5400 = vmatpush.bf16.msra.mxu0 %v3716
    %5401 = vmatmul.bf16.gmra.mxu0 %v858
    %v5402 = vpop.f32.mrf.mxu0
    %v5403 = vadd.f32 %v5390, %v5402
    %v5404 = vpop.f32.mrf.mxu0
    %5405 = vdwg.mxu0
    %5406 = vmatpush.bf16.msra.mxu0 %v3776
    %5407 = vmatpush.bf16.msra.mxu0 %v3772
    %5408 = vmatpush.bf16.msra.mxu0 %v3768
    %5409 = vmatpush.bf16.msra.mxu0 %v3764
    %5410 = vmatpush.bf16.msra.mxu0 %v3760
    %5411 = vmatpush.bf16.msra.mxu0 %v3756
    %5412 = vmatpush.bf16.msra.mxu0 %v3752
    %5413 = vmatpush.bf16.msra.mxu0 %v3748
    %5414 = vmatmul.bf16.gmra.mxu0 %v859
    %v5415 = vpop.f32.mrf.mxu0
    %v5416 = vadd.f32 %v5403, %v5415
    %v5417 = vpop.f32.mrf.mxu0
    %5418 = vdwg.mxu0
    %5419 = vmatpush.bf16.msra.mxu0 %v3808
    %5420 = vmatpush.bf16.msra.mxu0 %v3804
    %5421 = vmatpush.bf16.msra.mxu0 %v3800
    %5422 = vmatpush.bf16.msra.mxu0 %v3796
    %5423 = vmatpush.bf16.msra.mxu0 %v3792
    %5424 = vmatpush.bf16.msra.mxu0 %v3788
    %5425 = vmatpush.bf16.msra.mxu0 %v3784
    %5426 = vmatpush.bf16.msra.mxu0 %v3780
    %5427 = vmatmul.bf16.gmra.mxu0 %v860
    %v5428 = vpop.f32.mrf.mxu0
    %v5429 = vadd.f32 %v5416, %v5428
    %v5430 = vpop.f32.mrf.mxu0
    %5431 = vdwg.mxu0
    %5432 = vmatpush.bf16.msra.mxu0 %v3840
    %5433 = vmatpush.bf16.msra.mxu0 %v3836
    %5434 = vmatpush.bf16.msra.mxu0 %v3832
    %5435 = vmatpush.bf16.msra.mxu0 %v3828
    %5436 = vmatpush.bf16.msra.mxu0 %v3824
    %5437 = vmatpush.bf16.msra.mxu0 %v3820
    %5438 = vmatpush.bf16.msra.mxu0 %v3816
    %5439 = vmatpush.bf16.msra.mxu0 %v3812
    %5440 = vmatmul.bf16.gmra.mxu0 %v863
    %v5441 = vpop.f32.mrf.mxu0
    %v5442 = vadd.f32 %v5429, %v5441
    %v5443 = vpop.f32.mrf.mxu0
    %5444 = vdwg.mxu0
    %5445 = vmatpush.bf16.msra.mxu0 %v3872
    %5446 = vmatpush.bf16.msra.mxu0 %v3868
    %5447 = vmatpush.bf16.msra.mxu0 %v3864
    %5448 = vmatpush.bf16.msra.mxu0 %v3860
    %5449 = vmatpush.bf16.msra.mxu0 %v3856
    %5450 = vmatpush.bf16.msra.mxu0 %v3852
    %5451 = vmatpush.bf16.msra.mxu0 %v3848
    %5452 = vmatpush.bf16.msra.mxu0 %v3844
    %5453 = vmatmul.bf16.gmra.mxu0 %v864
    %v5454 = vpop.f32.mrf.mxu0
    %v5455 = vadd.f32 %v5442, %v5454
    %v5456 = vpop.f32.mrf.mxu0
    %5457 = vdwg.mxu0
    %5458 = vmatpush.bf16.msra.mxu0 %v3904
    %5459 = vmatpush.bf16.msra.mxu0 %v3900
    %5460 = vmatpush.bf16.msra.mxu0 %v3896
    %5461 = vmatpush.bf16.msra.mxu0 %v3892
    %5462 = vmatpush.bf16.msra.mxu0 %v3888
    %5463 = vmatpush.bf16.msra.mxu0 %v3884
    %5464 = vmatpush.bf16.msra.mxu0 %v3880
    %5465 = vmatpush.bf16.msra.mxu0 %v3876
    %5466 = vmatmul.bf16.gmra.mxu0 %v865
    %v5467 = vpop.f32.mrf.mxu0
    %v5468 = vadd.f32 %v5455, %v5467
    %v5469 = vpop.f32.mrf.mxu0
    %5470 = vdwg.mxu0
    %5471 = vmatpush.bf16.msra.mxu0 %v3936
    %5472 = vmatpush.bf16.msra.mxu0 %v3932
    %5473 = vmatpush.bf16.msra.mxu0 %v3928
    %5474 = vmatpush.bf16.msra.mxu0 %v3924
    %5475 = vmatpush.bf16.msra.mxu0 %v3920
    %5476 = vmatpush.bf16.msra.mxu0 %v3916
    %5477 = vmatpush.bf16.msra.mxu0 %v3912
    %5478 = vmatpush.bf16.msra.mxu0 %v3908
    %5479 = vmatmul.bf16.gmra.mxu0 %v866
    %v5480 = vpop.f32.mrf.mxu0
    %v5481 = vadd.f32 %v5468, %v5480
    %v5482 = vpop.f32.mrf.mxu0
    %5483 = vdwg.mxu0
    %5484 = vmatpush.bf16.msra.mxu0 %v3968
    %5485 = vmatpush.bf16.msra.mxu0 %v3964
    %5486 = vmatpush.bf16.msra.mxu0 %v3960
    %5487 = vmatpush.bf16.msra.mxu0 %v3956
    %5488 = vmatpush.bf16.msra.mxu0 %v3952
    %5489 = vmatpush.bf16.msra.mxu0 %v3948
    %5490 = vmatpush.bf16.msra.mxu0 %v3944
    %5491 = vmatpush.bf16.msra.mxu0 %v3940
    %5492 = vmatmul.bf16.gmra.mxu0 %v867
    %v5493 = vpop.f32.mrf.mxu0
    %v5494 = vadd.f32 %v5481, %v5493
    %v5495 = vpop.f32.mrf.mxu0
    %5496 = vdwg.mxu0
    %5497 = vmatpush.bf16.msra.mxu0 %v4000
    %5498 = vmatpush.bf16.msra.mxu0 %v3996
    %5499 = vmatpush.bf16.msra.mxu0 %v3992
    %5500 = vmatpush.bf16.msra.mxu0 %v3988
    %5501 = vmatpush.bf16.msra.mxu0 %v3984
    %5502 = vmatpush.bf16.msra.mxu0 %v3980
    %5503 = vmatpush.bf16.msra.mxu0 %v3976
    %5504 = vmatpush.bf16.msra.mxu0 %v3972
    %5505 = vmatmul.bf16.gmra.mxu0 %v868
    %v5506 = vpop.f32.mrf.mxu0
    %v5507 = vadd.f32 %v5494, %v5506
    %v5508 = vpop.f32.mrf.mxu0
    %5509 = vdwg.mxu0
    %5510 = vmatpush.bf16.msra.mxu0 %v4032
    %5511 = vmatpush.bf16.msra.mxu0 %v4028
    %5512 = vmatpush.bf16.msra.mxu0 %v4024
    %5513 = vmatpush.bf16.msra.mxu0 %v4020
    %5514 = vmatpush.bf16.msra.mxu0 %v4016
    %5515 = vmatpush.bf16.msra.mxu0 %v4012
    %5516 = vmatpush.bf16.msra.mxu0 %v4008
    %5517 = vmatpush.bf16.msra.mxu0 %v4004
    %5518 = vmatmul.bf16.gmra.mxu0 %v869
    %v5519 = vpop.f32.mrf.mxu0
    %v5520 = vadd.f32 %v5507, %v5519
    %v5521 = vpop.f32.mrf.mxu0
    %5522 = vdwg.mxu0
    %5523 = vmatpush.bf16.msra.mxu0 %v4064
    %5524 = vmatpush.bf16.msra.mxu0 %v4060
    %5525 = vmatpush.bf16.msra.mxu0 %v4056
    %5526 = vmatpush.bf16.msra.mxu0 %v4052
    %5527 = vmatpush.bf16.msra.mxu0 %v4048
    %5528 = vmatpush.bf16.msra.mxu0 %v4044
    %5529 = vmatpush.bf16.msra.mxu0 %v4040
    %5530 = vmatpush.bf16.msra.mxu0 %v4036
    %5531 = vmatmul.bf16.gmra.mxu0 %v870
    %v5532 = vpop.f32.mrf.mxu0
    %v5533 = vadd.f32 %v5520, %v5532
    %v5534 = vpop.f32.mrf.mxu0
    %5535 = vdwg.mxu0
    %5536 = vmatpush.bf16.msra.mxu0 %v4096
    %5537 = vmatpush.bf16.msra.mxu0 %v4092
    %5538 = vmatpush.bf16.msra.mxu0 %v4088
    %5539 = vmatpush.bf16.msra.mxu0 %v4084
    %5540 = vmatpush.bf16.msra.mxu0 %v4080
    %5541 = vmatpush.bf16.msra.mxu0 %v4076
    %5542 = vmatpush.bf16.msra.mxu0 %v4072
    %5543 = vmatpush.bf16.msra.mxu0 %v4068
    %5544 = vmatmul.bf16.gmra.mxu0 %v873
    %v5545 = vpop.f32.mrf.mxu0
    %v5546 = vadd.f32 %v5533, %v5545
    %v5547 = vpop.f32.mrf.mxu0
    %5548 = vdwg.mxu0
    %5549 = vmatpush.bf16.msra.mxu0 %v3329
    %5550 = vmatpush.bf16.msra.mxu0 %v3325
    %5551 = vmatpush.bf16.msra.mxu0 %v3321
    %5552 = vmatpush.bf16.msra.mxu0 %v3317
    %5553 = vmatpush.bf16.msra.mxu0 %v3313
    %5554 = vmatpush.bf16.msra.mxu0 %v3309
    %5555 = vmatpush.bf16.msra.mxu0 %v3305
    %5556 = vmatpush.bf16.msra.mxu0 %v3301
    %5557 = vmatmul.bf16.gmra.mxu0 %v843
    %v5558 = vpop.f32.mrf.mxu0
    %v5559 = vadd.f32 %v835, %v5558
    %v5560 = vpop.f32.mrf.mxu0
    %5561 = vdwg.mxu0
    %5562 = vmatpush.bf16.msra.mxu0 %v3361
    %5563 = vmatpush.bf16.msra.mxu0 %v3357
    %5564 = vmatpush.bf16.msra.mxu0 %v3353
    %5565 = vmatpush.bf16.msra.mxu0 %v3349
    %5566 = vmatpush.bf16.msra.mxu0 %v3345
    %5567 = vmatpush.bf16.msra.mxu0 %v3341
    %5568 = vmatpush.bf16.msra.mxu0 %v3337
    %5569 = vmatpush.bf16.msra.mxu0 %v3333
    %5570 = vmatmul.bf16.gmra.mxu0 %v844
    %v5571 = vpop.f32.mrf.mxu0
    %v5572 = vadd.f32 %v5559, %v5571
    %v5573 = vpop.f32.mrf.mxu0
    %5574 = vdwg.mxu0
    %5575 = vmatpush.bf16.msra.mxu0 %v3393
    %5576 = vmatpush.bf16.msra.mxu0 %v3389
    %5577 = vmatpush.bf16.msra.mxu0 %v3385
    %5578 = vmatpush.bf16.msra.mxu0 %v3381
    %5579 = vmatpush.bf16.msra.mxu0 %v3377
    %5580 = vmatpush.bf16.msra.mxu0 %v3373
    %5581 = vmatpush.bf16.msra.mxu0 %v3369
    %5582 = vmatpush.bf16.msra.mxu0 %v3365
    %5583 = vmatmul.bf16.gmra.mxu0 %v845
    %v5584 = vpop.f32.mrf.mxu0
    %v5585 = vadd.f32 %v5572, %v5584
    %v5586 = vpop.f32.mrf.mxu0
    %5587 = vdwg.mxu0
    %5588 = vmatpush.bf16.msra.mxu0 %v3425
    %5589 = vmatpush.bf16.msra.mxu0 %v3421
    %5590 = vmatpush.bf16.msra.mxu0 %v3417
    %5591 = vmatpush.bf16.msra.mxu0 %v3413
    %5592 = vmatpush.bf16.msra.mxu0 %v3409
    %5593 = vmatpush.bf16.msra.mxu0 %v3405
    %5594 = vmatpush.bf16.msra.mxu0 %v3401
    %5595 = vmatpush.bf16.msra.mxu0 %v3397
    %5596 = vmatmul.bf16.gmra.mxu0 %v846
    %v5597 = vpop.f32.mrf.mxu0
    %v5598 = vadd.f32 %v5585, %v5597
    %v5599 = vpop.f32.mrf.mxu0
    %5600 = vdwg.mxu0
    %5601 = vmatpush.bf16.msra.mxu0 %v3457
    %5602 = vmatpush.bf16.msra.mxu0 %v3453
    %5603 = vmatpush.bf16.msra.mxu0 %v3449
    %5604 = vmatpush.bf16.msra.mxu0 %v3445
    %5605 = vmatpush.bf16.msra.mxu0 %v3441
    %5606 = vmatpush.bf16.msra.mxu0 %v3437
    %5607 = vmatpush.bf16.msra.mxu0 %v3433
    %5608 = vmatpush.bf16.msra.mxu0 %v3429
    %5609 = vmatmul.bf16.gmra.mxu0 %v847
    %v5610 = vpop.f32.mrf.mxu0
    %v5611 = vadd.f32 %v5598, %v5610
    %v5612 = vpop.f32.mrf.mxu0
    %5613 = vdwg.mxu0
    %5614 = vmatpush.bf16.msra.mxu0 %v3489
    %5615 = vmatpush.bf16.msra.mxu0 %v3485
    %5616 = vmatpush.bf16.msra.mxu0 %v3481
    %5617 = vmatpush.bf16.msra.mxu0 %v3477
    %5618 = vmatpush.bf16.msra.mxu0 %v3473
    %5619 = vmatpush.bf16.msra.mxu0 %v3469
    %5620 = vmatpush.bf16.msra.mxu0 %v3465
    %5621 = vmatpush.bf16.msra.mxu0 %v3461
    %5622 = vmatmul.bf16.gmra.mxu0 %v848
    %v5623 = vpop.f32.mrf.mxu0
    %v5624 = vadd.f32 %v5611, %v5623
    %v5625 = vpop.f32.mrf.mxu0
    %5626 = vdwg.mxu0
    %5627 = vmatpush.bf16.msra.mxu0 %v3521
    %5628 = vmatpush.bf16.msra.mxu0 %v3517
    %5629 = vmatpush.bf16.msra.mxu0 %v3513
    %5630 = vmatpush.bf16.msra.mxu0 %v3509
    %5631 = vmatpush.bf16.msra.mxu0 %v3505
    %5632 = vmatpush.bf16.msra.mxu0 %v3501
    %5633 = vmatpush.bf16.msra.mxu0 %v3497
    %5634 = vmatpush.bf16.msra.mxu0 %v3493
    %5635 = vmatmul.bf16.gmra.mxu0 %v849
    %v5636 = vpop.f32.mrf.mxu0
    %v5637 = vadd.f32 %v5624, %v5636
    %v5638 = vpop.f32.mrf.mxu0
    %5639 = vdwg.mxu0
    %5640 = vmatpush.bf16.msra.mxu0 %v3553
    %5641 = vmatpush.bf16.msra.mxu0 %v3549
    %5642 = vmatpush.bf16.msra.mxu0 %v3545
    %5643 = vmatpush.bf16.msra.mxu0 %v3541
    %5644 = vmatpush.bf16.msra.mxu0 %v3537
    %5645 = vmatpush.bf16.msra.mxu0 %v3533
    %5646 = vmatpush.bf16.msra.mxu0 %v3529
    %5647 = vmatpush.bf16.msra.mxu0 %v3525
    %5648 = vmatmul.bf16.gmra.mxu0 %v850
    %v5649 = vpop.f32.mrf.mxu0
    %v5650 = vadd.f32 %v5637, %v5649
    %v5651 = vpop.f32.mrf.mxu0
    %5652 = vdwg.mxu0
    %5653 = vmatpush.bf16.msra.mxu0 %v3585
    %5654 = vmatpush.bf16.msra.mxu0 %v3581
    %5655 = vmatpush.bf16.msra.mxu0 %v3577
    %5656 = vmatpush.bf16.msra.mxu0 %v3573
    %5657 = vmatpush.bf16.msra.mxu0 %v3569
    %5658 = vmatpush.bf16.msra.mxu0 %v3565
    %5659 = vmatpush.bf16.msra.mxu0 %v3561
    %5660 = vmatpush.bf16.msra.mxu0 %v3557
    %5661 = vmatmul.bf16.gmra.mxu0 %v853
    %v5662 = vpop.f32.mrf.mxu0
    %v5663 = vadd.f32 %v5650, %v5662
    %v5664 = vpop.f32.mrf.mxu0
    %5665 = vdwg.mxu0
    %5666 = vmatpush.bf16.msra.mxu0 %v3617
    %5667 = vmatpush.bf16.msra.mxu0 %v3613
    %5668 = vmatpush.bf16.msra.mxu0 %v3609
    %5669 = vmatpush.bf16.msra.mxu0 %v3605
    %5670 = vmatpush.bf16.msra.mxu0 %v3601
    %5671 = vmatpush.bf16.msra.mxu0 %v3597
    %5672 = vmatpush.bf16.msra.mxu0 %v3593
    %5673 = vmatpush.bf16.msra.mxu0 %v3589
    %5674 = vmatmul.bf16.gmra.mxu0 %v854
    %v5675 = vpop.f32.mrf.mxu0
    %v5676 = vadd.f32 %v5663, %v5675
    %v5677 = vpop.f32.mrf.mxu0
    %5678 = vdwg.mxu0
    %5679 = vmatpush.bf16.msra.mxu0 %v3649
    %5680 = vmatpush.bf16.msra.mxu0 %v3645
    %5681 = vmatpush.bf16.msra.mxu0 %v3641
    %5682 = vmatpush.bf16.msra.mxu0 %v3637
    %5683 = vmatpush.bf16.msra.mxu0 %v3633
    %5684 = vmatpush.bf16.msra.mxu0 %v3629
    %5685 = vmatpush.bf16.msra.mxu0 %v3625
    %5686 = vmatpush.bf16.msra.mxu0 %v3621
    %5687 = vmatmul.bf16.gmra.mxu0 %v855
    %v5688 = vpop.f32.mrf.mxu0
    %v5689 = vadd.f32 %v5676, %v5688
    %v5690 = vpop.f32.mrf.mxu0
    %5691 = vdwg.mxu0
    %5692 = vmatpush.bf16.msra.mxu0 %v3681
    %5693 = vmatpush.bf16.msra.mxu0 %v3677
    %5694 = vmatpush.bf16.msra.mxu0 %v3673
    %5695 = vmatpush.bf16.msra.mxu0 %v3669
    %5696 = vmatpush.bf16.msra.mxu0 %v3665
    %5697 = vmatpush.bf16.msra.mxu0 %v3661
    %5698 = vmatpush.bf16.msra.mxu0 %v3657
    %5699 = vmatpush.bf16.msra.mxu0 %v3653
    %5700 = vmatmul.bf16.gmra.mxu0 %v856
    %v5701 = vpop.f32.mrf.mxu0
    %v5702 = vadd.f32 %v5689, %v5701
    %v5703 = vpop.f32.mrf.mxu0
    %5704 = vdwg.mxu0
    %5705 = vmatpush.bf16.msra.mxu0 %v3713
    %5706 = vmatpush.bf16.msra.mxu0 %v3709
    %5707 = vmatpush.bf16.msra.mxu0 %v3705
    %5708 = vmatpush.bf16.msra.mxu0 %v3701
    %5709 = vmatpush.bf16.msra.mxu0 %v3697
    %5710 = vmatpush.bf16.msra.mxu0 %v3693
    %5711 = vmatpush.bf16.msra.mxu0 %v3689
    %5712 = vmatpush.bf16.msra.mxu0 %v3685
    %5713 = vmatmul.bf16.gmra.mxu0 %v857
    %v5714 = vpop.f32.mrf.mxu0
    %v5715 = vadd.f32 %v5702, %v5714
    %v5716 = vpop.f32.mrf.mxu0
    %5717 = vdwg.mxu0
    %5718 = vmatpush.bf16.msra.mxu0 %v3745
    %5719 = vmatpush.bf16.msra.mxu0 %v3741
    %5720 = vmatpush.bf16.msra.mxu0 %v3737
    %5721 = vmatpush.bf16.msra.mxu0 %v3733
    %5722 = vmatpush.bf16.msra.mxu0 %v3729
    %5723 = vmatpush.bf16.msra.mxu0 %v3725
    %5724 = vmatpush.bf16.msra.mxu0 %v3721
    %5725 = vmatpush.bf16.msra.mxu0 %v3717
    %5726 = vmatmul.bf16.gmra.mxu0 %v858
    %v5727 = vpop.f32.mrf.mxu0
    %v5728 = vadd.f32 %v5715, %v5727
    %v5729 = vpop.f32.mrf.mxu0
    %5730 = vdwg.mxu0
    %5731 = vmatpush.bf16.msra.mxu0 %v3777
    %5732 = vmatpush.bf16.msra.mxu0 %v3773
    %5733 = vmatpush.bf16.msra.mxu0 %v3769
    %5734 = vmatpush.bf16.msra.mxu0 %v3765
    %5735 = vmatpush.bf16.msra.mxu0 %v3761
    %5736 = vmatpush.bf16.msra.mxu0 %v3757
    %5737 = vmatpush.bf16.msra.mxu0 %v3753
    %5738 = vmatpush.bf16.msra.mxu0 %v3749
    %5739 = vmatmul.bf16.gmra.mxu0 %v859
    %v5740 = vpop.f32.mrf.mxu0
    %v5741 = vadd.f32 %v5728, %v5740
    %v5742 = vpop.f32.mrf.mxu0
    %5743 = vdwg.mxu0
    %5744 = vmatpush.bf16.msra.mxu0 %v3809
    %5745 = vmatpush.bf16.msra.mxu0 %v3805
    %5746 = vmatpush.bf16.msra.mxu0 %v3801
    %5747 = vmatpush.bf16.msra.mxu0 %v3797
    %5748 = vmatpush.bf16.msra.mxu0 %v3793
    %5749 = vmatpush.bf16.msra.mxu0 %v3789
    %5750 = vmatpush.bf16.msra.mxu0 %v3785
    %5751 = vmatpush.bf16.msra.mxu0 %v3781
    %5752 = vmatmul.bf16.gmra.mxu0 %v860
    %v5753 = vpop.f32.mrf.mxu0
    %v5754 = vadd.f32 %v5741, %v5753
    %v5755 = vpop.f32.mrf.mxu0
    %5756 = vdwg.mxu0
    %5757 = vmatpush.bf16.msra.mxu0 %v3841
    %5758 = vmatpush.bf16.msra.mxu0 %v3837
    %5759 = vmatpush.bf16.msra.mxu0 %v3833
    %5760 = vmatpush.bf16.msra.mxu0 %v3829
    %5761 = vmatpush.bf16.msra.mxu0 %v3825
    %5762 = vmatpush.bf16.msra.mxu0 %v3821
    %5763 = vmatpush.bf16.msra.mxu0 %v3817
    %5764 = vmatpush.bf16.msra.mxu0 %v3813
    %5765 = vmatmul.bf16.gmra.mxu0 %v863
    %v5766 = vpop.f32.mrf.mxu0
    %v5767 = vadd.f32 %v5754, %v5766
    %v5768 = vpop.f32.mrf.mxu0
    %5769 = vdwg.mxu0
    %5770 = vmatpush.bf16.msra.mxu0 %v3873
    %5771 = vmatpush.bf16.msra.mxu0 %v3869
    %5772 = vmatpush.bf16.msra.mxu0 %v3865
    %5773 = vmatpush.bf16.msra.mxu0 %v3861
    %5774 = vmatpush.bf16.msra.mxu0 %v3857
    %5775 = vmatpush.bf16.msra.mxu0 %v3853
    %5776 = vmatpush.bf16.msra.mxu0 %v3849
    %5777 = vmatpush.bf16.msra.mxu0 %v3845
    %5778 = vmatmul.bf16.gmra.mxu0 %v864
    %v5779 = vpop.f32.mrf.mxu0
    %v5780 = vadd.f32 %v5767, %v5779
    %v5781 = vpop.f32.mrf.mxu0
    %5782 = vdwg.mxu0
    %5783 = vmatpush.bf16.msra.mxu0 %v3905
    %5784 = vmatpush.bf16.msra.mxu0 %v3901
    %5785 = vmatpush.bf16.msra.mxu0 %v3897
    %5786 = vmatpush.bf16.msra.mxu0 %v3893
    %5787 = vmatpush.bf16.msra.mxu0 %v3889
    %5788 = vmatpush.bf16.msra.mxu0 %v3885
    %5789 = vmatpush.bf16.msra.mxu0 %v3881
    %5790 = vmatpush.bf16.msra.mxu0 %v3877
    %5791 = vmatmul.bf16.gmra.mxu0 %v865
    %v5792 = vpop.f32.mrf.mxu0
    %v5793 = vadd.f32 %v5780, %v5792
    %v5794 = vpop.f32.mrf.mxu0
    %5795 = vdwg.mxu0
    %5796 = vmatpush.bf16.msra.mxu0 %v3937
    %5797 = vmatpush.bf16.msra.mxu0 %v3933
    %5798 = vmatpush.bf16.msra.mxu0 %v3929
    %5799 = vmatpush.bf16.msra.mxu0 %v3925
    %5800 = vmatpush.bf16.msra.mxu0 %v3921
    %5801 = vmatpush.bf16.msra.mxu0 %v3917
    %5802 = vmatpush.bf16.msra.mxu0 %v3913
    %5803 = vmatpush.bf16.msra.mxu0 %v3909
    %5804 = vmatmul.bf16.gmra.mxu0 %v866
    %v5805 = vpop.f32.mrf.mxu0
    %v5806 = vadd.f32 %v5793, %v5805
    %v5807 = vpop.f32.mrf.mxu0
    %5808 = vdwg.mxu0
    %5809 = vmatpush.bf16.msra.mxu0 %v3969
    %5810 = vmatpush.bf16.msra.mxu0 %v3965
    %5811 = vmatpush.bf16.msra.mxu0 %v3961
    %5812 = vmatpush.bf16.msra.mxu0 %v3957
    %5813 = vmatpush.bf16.msra.mxu0 %v3953
    %5814 = vmatpush.bf16.msra.mxu0 %v3949
    %5815 = vmatpush.bf16.msra.mxu0 %v3945
    %5816 = vmatpush.bf16.msra.mxu0 %v3941
    %5817 = vmatmul.bf16.gmra.mxu0 %v867
    %v5818 = vpop.f32.mrf.mxu0
    %v5819 = vadd.f32 %v5806, %v5818
    %v5820 = vpop.f32.mrf.mxu0
    %5821 = vdwg.mxu0
    %5822 = vmatpush.bf16.msra.mxu0 %v4001
    %5823 = vmatpush.bf16.msra.mxu0 %v3997
    %5824 = vmatpush.bf16.msra.mxu0 %v3993
    %5825 = vmatpush.bf16.msra.mxu0 %v3989
    %5826 = vmatpush.bf16.msra.mxu0 %v3985
    %5827 = vmatpush.bf16.msra.mxu0 %v3981
    %5828 = vmatpush.bf16.msra.mxu0 %v3977
    %5829 = vmatpush.bf16.msra.mxu0 %v3973
    %5830 = vmatmul.bf16.gmra.mxu0 %v868
    %v5831 = vpop.f32.mrf.mxu0
    %v5832 = vadd.f32 %v5819, %v5831
    %v5833 = vpop.f32.mrf.mxu0
    %5834 = vdwg.mxu0
    %5835 = vmatpush.bf16.msra.mxu0 %v4033
    %5836 = vmatpush.bf16.msra.mxu0 %v4029
    %5837 = vmatpush.bf16.msra.mxu0 %v4025
    %5838 = vmatpush.bf16.msra.mxu0 %v4021
    %5839 = vmatpush.bf16.msra.mxu0 %v4017
    %5840 = vmatpush.bf16.msra.mxu0 %v4013
    %5841 = vmatpush.bf16.msra.mxu0 %v4009
    %5842 = vmatpush.bf16.msra.mxu0 %v4005
    %5843 = vmatmul.bf16.gmra.mxu0 %v869
    %v5844 = vpop.f32.mrf.mxu0
    %v5845 = vadd.f32 %v5832, %v5844
    %v5846 = vpop.f32.mrf.mxu0
    %5847 = vdwg.mxu0
    %5848 = vmatpush.bf16.msra.mxu0 %v4065
    %5849 = vmatpush.bf16.msra.mxu0 %v4061
    %5850 = vmatpush.bf16.msra.mxu0 %v4057
    %5851 = vmatpush.bf16.msra.mxu0 %v4053
    %5852 = vmatpush.bf16.msra.mxu0 %v4049
    %5853 = vmatpush.bf16.msra.mxu0 %v4045
    %5854 = vmatpush.bf16.msra.mxu0 %v4041
    %5855 = vmatpush.bf16.msra.mxu0 %v4037
    %5856 = vmatmul.bf16.gmra.mxu0 %v870
    %v5857 = vpop.f32.mrf.mxu0
    %v5858 = vadd.f32 %v5845, %v5857
    %v5859 = vpop.f32.mrf.mxu0
    %5860 = vdwg.mxu0
    %5861 = vmatpush.bf16.msra.mxu0 %v4097
    %5862 = vmatpush.bf16.msra.mxu0 %v4093
    %5863 = vmatpush.bf16.msra.mxu0 %v4089
    %5864 = vmatpush.bf16.msra.mxu0 %v4085
    %5865 = vmatpush.bf16.msra.mxu0 %v4081
    %5866 = vmatpush.bf16.msra.mxu0 %v4077
    %5867 = vmatpush.bf16.msra.mxu0 %v4073
    %5868 = vmatpush.bf16.msra.mxu0 %v4069
    %5869 = vmatmul.bf16.gmra.mxu0 %v873
    %v5870 = vpop.f32.mrf.mxu0
    %v5871 = vadd.f32 %v5858, %v5870
    %v5872 = vpop.f32.mrf.mxu0
    %5873 = vdwg.mxu0
    %5874 = vmatpush.bf16.msra.mxu0 %v3330
    %5875 = vmatpush.bf16.msra.mxu0 %v3326
    %5876 = vmatpush.bf16.msra.mxu0 %v3322
    %5877 = vmatpush.bf16.msra.mxu0 %v3318
    %5878 = vmatpush.bf16.msra.mxu0 %v3314
    %5879 = vmatpush.bf16.msra.mxu0 %v3310
    %5880 = vmatpush.bf16.msra.mxu0 %v3306
    %5881 = vmatpush.bf16.msra.mxu0 %v3302
    %5882 = vmatmul.bf16.gmra.mxu0 %v843
    %v5883 = vpop.f32.mrf.mxu0
    %v5884 = vadd.f32 %v836, %v5883
    %v5885 = vpop.f32.mrf.mxu0
    %5886 = vdwg.mxu0
    %5887 = vmatpush.bf16.msra.mxu0 %v3362
    %5888 = vmatpush.bf16.msra.mxu0 %v3358
    %5889 = vmatpush.bf16.msra.mxu0 %v3354
    %5890 = vmatpush.bf16.msra.mxu0 %v3350
    %5891 = vmatpush.bf16.msra.mxu0 %v3346
    %5892 = vmatpush.bf16.msra.mxu0 %v3342
    %5893 = vmatpush.bf16.msra.mxu0 %v3338
    %5894 = vmatpush.bf16.msra.mxu0 %v3334
    %5895 = vmatmul.bf16.gmra.mxu0 %v844
    %v5896 = vpop.f32.mrf.mxu0
    %v5897 = vadd.f32 %v5884, %v5896
    %v5898 = vpop.f32.mrf.mxu0
    %5899 = vdwg.mxu0
    %5900 = vmatpush.bf16.msra.mxu0 %v3394
    %5901 = vmatpush.bf16.msra.mxu0 %v3390
    %5902 = vmatpush.bf16.msra.mxu0 %v3386
    %5903 = vmatpush.bf16.msra.mxu0 %v3382
    %5904 = vmatpush.bf16.msra.mxu0 %v3378
    %5905 = vmatpush.bf16.msra.mxu0 %v3374
    %5906 = vmatpush.bf16.msra.mxu0 %v3370
    %5907 = vmatpush.bf16.msra.mxu0 %v3366
    %5908 = vmatmul.bf16.gmra.mxu0 %v845
    %v5909 = vpop.f32.mrf.mxu0
    %v5910 = vadd.f32 %v5897, %v5909
    %v5911 = vpop.f32.mrf.mxu0
    %5912 = vdwg.mxu0
    %5913 = vmatpush.bf16.msra.mxu0 %v3426
    %5914 = vmatpush.bf16.msra.mxu0 %v3422
    %5915 = vmatpush.bf16.msra.mxu0 %v3418
    %5916 = vmatpush.bf16.msra.mxu0 %v3414
    %5917 = vmatpush.bf16.msra.mxu0 %v3410
    %5918 = vmatpush.bf16.msra.mxu0 %v3406
    %5919 = vmatpush.bf16.msra.mxu0 %v3402
    %5920 = vmatpush.bf16.msra.mxu0 %v3398
    %5921 = vmatmul.bf16.gmra.mxu0 %v846
    %v5922 = vpop.f32.mrf.mxu0
    %v5923 = vadd.f32 %v5910, %v5922
    %v5924 = vpop.f32.mrf.mxu0
    %5925 = vdwg.mxu0
    %5926 = vmatpush.bf16.msra.mxu0 %v3458
    %5927 = vmatpush.bf16.msra.mxu0 %v3454
    %5928 = vmatpush.bf16.msra.mxu0 %v3450
    %5929 = vmatpush.bf16.msra.mxu0 %v3446
    %5930 = vmatpush.bf16.msra.mxu0 %v3442
    %5931 = vmatpush.bf16.msra.mxu0 %v3438
    %5932 = vmatpush.bf16.msra.mxu0 %v3434
    %5933 = vmatpush.bf16.msra.mxu0 %v3430
    %5934 = vmatmul.bf16.gmra.mxu0 %v847
    %v5935 = vpop.f32.mrf.mxu0
    %v5936 = vadd.f32 %v5923, %v5935
    %v5937 = vpop.f32.mrf.mxu0
    %5938 = vdwg.mxu0
    %5939 = vmatpush.bf16.msra.mxu0 %v3490
    %5940 = vmatpush.bf16.msra.mxu0 %v3486
    %5941 = vmatpush.bf16.msra.mxu0 %v3482
    %5942 = vmatpush.bf16.msra.mxu0 %v3478
    %5943 = vmatpush.bf16.msra.mxu0 %v3474
    %5944 = vmatpush.bf16.msra.mxu0 %v3470
    %5945 = vmatpush.bf16.msra.mxu0 %v3466
    %5946 = vmatpush.bf16.msra.mxu0 %v3462
    %5947 = vmatmul.bf16.gmra.mxu0 %v848
    %v5948 = vpop.f32.mrf.mxu0
    %v5949 = vadd.f32 %v5936, %v5948
    %v5950 = vpop.f32.mrf.mxu0
    %5951 = vdwg.mxu0
    %5952 = vmatpush.bf16.msra.mxu0 %v3522
    %5953 = vmatpush.bf16.msra.mxu0 %v3518
    %5954 = vmatpush.bf16.msra.mxu0 %v3514
    %5955 = vmatpush.bf16.msra.mxu0 %v3510
    %5956 = vmatpush.bf16.msra.mxu0 %v3506
    %5957 = vmatpush.bf16.msra.mxu0 %v3502
    %5958 = vmatpush.bf16.msra.mxu0 %v3498
    %5959 = vmatpush.bf16.msra.mxu0 %v3494
    %5960 = vmatmul.bf16.gmra.mxu0 %v849
    %v5961 = vpop.f32.mrf.mxu0
    %v5962 = vadd.f32 %v5949, %v5961
    %v5963 = vpop.f32.mrf.mxu0
    %5964 = vdwg.mxu0
    %5965 = vmatpush.bf16.msra.mxu0 %v3554
    %5966 = vmatpush.bf16.msra.mxu0 %v3550
    %5967 = vmatpush.bf16.msra.mxu0 %v3546
    %5968 = vmatpush.bf16.msra.mxu0 %v3542
    %5969 = vmatpush.bf16.msra.mxu0 %v3538
    %5970 = vmatpush.bf16.msra.mxu0 %v3534
    %5971 = vmatpush.bf16.msra.mxu0 %v3530
    %5972 = vmatpush.bf16.msra.mxu0 %v3526
    %5973 = vmatmul.bf16.gmra.mxu0 %v850
    %v5974 = vpop.f32.mrf.mxu0
    %v5975 = vadd.f32 %v5962, %v5974
    %v5976 = vpop.f32.mrf.mxu0
    %5977 = vdwg.mxu0
    %5978 = vmatpush.bf16.msra.mxu0 %v3586
    %5979 = vmatpush.bf16.msra.mxu0 %v3582
    %5980 = vmatpush.bf16.msra.mxu0 %v3578
    %5981 = vmatpush.bf16.msra.mxu0 %v3574
    %5982 = vmatpush.bf16.msra.mxu0 %v3570
    %5983 = vmatpush.bf16.msra.mxu0 %v3566
    %5984 = vmatpush.bf16.msra.mxu0 %v3562
    %5985 = vmatpush.bf16.msra.mxu0 %v3558
    %5986 = vmatmul.bf16.gmra.mxu0 %v853
    %v5987 = vpop.f32.mrf.mxu0
    %v5988 = vadd.f32 %v5975, %v5987
    %v5989 = vpop.f32.mrf.mxu0
    %5990 = vdwg.mxu0
    %5991 = vmatpush.bf16.msra.mxu0 %v3618
    %5992 = vmatpush.bf16.msra.mxu0 %v3614
    %5993 = vmatpush.bf16.msra.mxu0 %v3610
    %5994 = vmatpush.bf16.msra.mxu0 %v3606
    %5995 = vmatpush.bf16.msra.mxu0 %v3602
    %5996 = vmatpush.bf16.msra.mxu0 %v3598
    %5997 = vmatpush.bf16.msra.mxu0 %v3594
    %5998 = vmatpush.bf16.msra.mxu0 %v3590
    %5999 = vmatmul.bf16.gmra.mxu0 %v854
    %v6000 = vpop.f32.mrf.mxu0
    %v6001 = vadd.f32 %v5988, %v6000
    %v6002 = vpop.f32.mrf.mxu0
    %6003 = vdwg.mxu0
    %6004 = vmatpush.bf16.msra.mxu0 %v3650
    %6005 = vmatpush.bf16.msra.mxu0 %v3646
    %6006 = vmatpush.bf16.msra.mxu0 %v3642
    %6007 = vmatpush.bf16.msra.mxu0 %v3638
    %6008 = vmatpush.bf16.msra.mxu0 %v3634
    %6009 = vmatpush.bf16.msra.mxu0 %v3630
    %6010 = vmatpush.bf16.msra.mxu0 %v3626
    %6011 = vmatpush.bf16.msra.mxu0 %v3622
    %6012 = vmatmul.bf16.gmra.mxu0 %v855
    %v6013 = vpop.f32.mrf.mxu0
    %v6014 = vadd.f32 %v6001, %v6013
    %v6015 = vpop.f32.mrf.mxu0
    %6016 = vdwg.mxu0
    %6017 = vmatpush.bf16.msra.mxu0 %v3682
    %6018 = vmatpush.bf16.msra.mxu0 %v3678
    %6019 = vmatpush.bf16.msra.mxu0 %v3674
    %6020 = vmatpush.bf16.msra.mxu0 %v3670
    %6021 = vmatpush.bf16.msra.mxu0 %v3666
    %6022 = vmatpush.bf16.msra.mxu0 %v3662
    %6023 = vmatpush.bf16.msra.mxu0 %v3658
    %6024 = vmatpush.bf16.msra.mxu0 %v3654
    %6025 = vmatmul.bf16.gmra.mxu0 %v856
    %v6026 = vpop.f32.mrf.mxu0
    %v6027 = vadd.f32 %v6014, %v6026
    %v6028 = vpop.f32.mrf.mxu0
    %6029 = vdwg.mxu0
    %6030 = vmatpush.bf16.msra.mxu0 %v3714
    %6031 = vmatpush.bf16.msra.mxu0 %v3710
    %6032 = vmatpush.bf16.msra.mxu0 %v3706
    %6033 = vmatpush.bf16.msra.mxu0 %v3702
    %6034 = vmatpush.bf16.msra.mxu0 %v3698
    %6035 = vmatpush.bf16.msra.mxu0 %v3694
    %6036 = vmatpush.bf16.msra.mxu0 %v3690
    %6037 = vmatpush.bf16.msra.mxu0 %v3686
    %6038 = vmatmul.bf16.gmra.mxu0 %v857
    %v6039 = vpop.f32.mrf.mxu0
    %v6040 = vadd.f32 %v6027, %v6039
    %v6041 = vpop.f32.mrf.mxu0
    %6042 = vdwg.mxu0
    %6043 = vmatpush.bf16.msra.mxu0 %v3746
    %6044 = vmatpush.bf16.msra.mxu0 %v3742
    %6045 = vmatpush.bf16.msra.mxu0 %v3738
    %6046 = vmatpush.bf16.msra.mxu0 %v3734
    %6047 = vmatpush.bf16.msra.mxu0 %v3730
    %6048 = vmatpush.bf16.msra.mxu0 %v3726
    %6049 = vmatpush.bf16.msra.mxu0 %v3722
    %6050 = vmatpush.bf16.msra.mxu0 %v3718
    %6051 = vmatmul.bf16.gmra.mxu0 %v858
    %v6052 = vpop.f32.mrf.mxu0
    %v6053 = vadd.f32 %v6040, %v6052
    %v6054 = vpop.f32.mrf.mxu0
    %6055 = vdwg.mxu0
    %6056 = vmatpush.bf16.msra.mxu0 %v3778
    %6057 = vmatpush.bf16.msra.mxu0 %v3774
    %6058 = vmatpush.bf16.msra.mxu0 %v3770
    %6059 = vmatpush.bf16.msra.mxu0 %v3766
    %6060 = vmatpush.bf16.msra.mxu0 %v3762
    %6061 = vmatpush.bf16.msra.mxu0 %v3758
    %6062 = vmatpush.bf16.msra.mxu0 %v3754
    %6063 = vmatpush.bf16.msra.mxu0 %v3750
    %6064 = vmatmul.bf16.gmra.mxu0 %v859
    %v6065 = vpop.f32.mrf.mxu0
    %v6066 = vadd.f32 %v6053, %v6065
    %v6067 = vpop.f32.mrf.mxu0
    %6068 = vdwg.mxu0
    %6069 = vmatpush.bf16.msra.mxu0 %v3810
    %6070 = vmatpush.bf16.msra.mxu0 %v3806
    %6071 = vmatpush.bf16.msra.mxu0 %v3802
    %6072 = vmatpush.bf16.msra.mxu0 %v3798
    %6073 = vmatpush.bf16.msra.mxu0 %v3794
    %6074 = vmatpush.bf16.msra.mxu0 %v3790
    %6075 = vmatpush.bf16.msra.mxu0 %v3786
    %6076 = vmatpush.bf16.msra.mxu0 %v3782
    %6077 = vmatmul.bf16.gmra.mxu0 %v860
    %v6078 = vpop.f32.mrf.mxu0
    %v6079 = vadd.f32 %v6066, %v6078
    %v6080 = vpop.f32.mrf.mxu0
    %6081 = vdwg.mxu0
    %6082 = vmatpush.bf16.msra.mxu0 %v3842
    %6083 = vmatpush.bf16.msra.mxu0 %v3838
    %6084 = vmatpush.bf16.msra.mxu0 %v3834
    %6085 = vmatpush.bf16.msra.mxu0 %v3830
    %6086 = vmatpush.bf16.msra.mxu0 %v3826
    %6087 = vmatpush.bf16.msra.mxu0 %v3822
    %6088 = vmatpush.bf16.msra.mxu0 %v3818
    %6089 = vmatpush.bf16.msra.mxu0 %v3814
    %6090 = vmatmul.bf16.gmra.mxu0 %v863
    %v6091 = vpop.f32.mrf.mxu0
    %v6092 = vadd.f32 %v6079, %v6091
    %v6093 = vpop.f32.mrf.mxu0
    %6094 = vdwg.mxu0
    %6095 = vmatpush.bf16.msra.mxu0 %v3874
    %6096 = vmatpush.bf16.msra.mxu0 %v3870
    %6097 = vmatpush.bf16.msra.mxu0 %v3866
    %6098 = vmatpush.bf16.msra.mxu0 %v3862
    %6099 = vmatpush.bf16.msra.mxu0 %v3858
    %6100 = vmatpush.bf16.msra.mxu0 %v3854
    %6101 = vmatpush.bf16.msra.mxu0 %v3850
    %6102 = vmatpush.bf16.msra.mxu0 %v3846
    %6103 = vmatmul.bf16.gmra.mxu0 %v864
    %v6104 = vpop.f32.mrf.mxu0
    %v6105 = vadd.f32 %v6092, %v6104
    %v6106 = vpop.f32.mrf.mxu0
    %6107 = vdwg.mxu0
    %6108 = vmatpush.bf16.msra.mxu0 %v3906
    %6109 = vmatpush.bf16.msra.mxu0 %v3902
    %6110 = vmatpush.bf16.msra.mxu0 %v3898
    %6111 = vmatpush.bf16.msra.mxu0 %v3894
    %6112 = vmatpush.bf16.msra.mxu0 %v3890
    %6113 = vmatpush.bf16.msra.mxu0 %v3886
    %6114 = vmatpush.bf16.msra.mxu0 %v3882
    %6115 = vmatpush.bf16.msra.mxu0 %v3878
    %6116 = vmatmul.bf16.gmra.mxu0 %v865
    %v6117 = vpop.f32.mrf.mxu0
    %v6118 = vadd.f32 %v6105, %v6117
    %v6119 = vpop.f32.mrf.mxu0
    %6120 = vdwg.mxu0
    %6121 = vmatpush.bf16.msra.mxu0 %v3938
    %6122 = vmatpush.bf16.msra.mxu0 %v3934
    %6123 = vmatpush.bf16.msra.mxu0 %v3930
    %6124 = vmatpush.bf16.msra.mxu0 %v3926
    %6125 = vmatpush.bf16.msra.mxu0 %v3922
    %6126 = vmatpush.bf16.msra.mxu0 %v3918
    %6127 = vmatpush.bf16.msra.mxu0 %v3914
    %6128 = vmatpush.bf16.msra.mxu0 %v3910
    %6129 = vmatmul.bf16.gmra.mxu0 %v866
    %v6130 = vpop.f32.mrf.mxu0
    %v6131 = vadd.f32 %v6118, %v6130
    %v6132 = vpop.f32.mrf.mxu0
    %6133 = vdwg.mxu0
    %6134 = vmatpush.bf16.msra.mxu0 %v3970
    %6135 = vmatpush.bf16.msra.mxu0 %v3966
    %6136 = vmatpush.bf16.msra.mxu0 %v3962
    %6137 = vmatpush.bf16.msra.mxu0 %v3958
    %6138 = vmatpush.bf16.msra.mxu0 %v3954
    %6139 = vmatpush.bf16.msra.mxu0 %v3950
    %6140 = vmatpush.bf16.msra.mxu0 %v3946
    %6141 = vmatpush.bf16.msra.mxu0 %v3942
    %6142 = vmatmul.bf16.gmra.mxu0 %v867
    %v6143 = vpop.f32.mrf.mxu0
    %v6144 = vadd.f32 %v6131, %v6143
    %v6145 = vpop.f32.mrf.mxu0
    %6146 = vdwg.mxu0
    %6147 = vmatpush.bf16.msra.mxu0 %v4002
    %6148 = vmatpush.bf16.msra.mxu0 %v3998
    %6149 = vmatpush.bf16.msra.mxu0 %v3994
    %6150 = vmatpush.bf16.msra.mxu0 %v3990
    %6151 = vmatpush.bf16.msra.mxu0 %v3986
    %6152 = vmatpush.bf16.msra.mxu0 %v3982
    %6153 = vmatpush.bf16.msra.mxu0 %v3978
    %6154 = vmatpush.bf16.msra.mxu0 %v3974
    %6155 = vmatmul.bf16.gmra.mxu0 %v868
    %v6156 = vpop.f32.mrf.mxu0
    %v6157 = vadd.f32 %v6144, %v6156
    %v6158 = vpop.f32.mrf.mxu0
    %6159 = vdwg.mxu0
    %6160 = vmatpush.bf16.msra.mxu0 %v4034
    %6161 = vmatpush.bf16.msra.mxu0 %v4030
    %6162 = vmatpush.bf16.msra.mxu0 %v4026
    %6163 = vmatpush.bf16.msra.mxu0 %v4022
    %6164 = vmatpush.bf16.msra.mxu0 %v4018
    %6165 = vmatpush.bf16.msra.mxu0 %v4014
    %6166 = vmatpush.bf16.msra.mxu0 %v4010
    %6167 = vmatpush.bf16.msra.mxu0 %v4006
    %6168 = vmatmul.bf16.gmra.mxu0 %v869
    %v6169 = vpop.f32.mrf.mxu0
    %v6170 = vadd.f32 %v6157, %v6169
    %v6171 = vpop.f32.mrf.mxu0
    %6172 = vdwg.mxu0
    %6173 = vmatpush.bf16.msra.mxu0 %v4066
    %6174 = vmatpush.bf16.msra.mxu0 %v4062
    %6175 = vmatpush.bf16.msra.mxu0 %v4058
    %6176 = vmatpush.bf16.msra.mxu0 %v4054
    %6177 = vmatpush.bf16.msra.mxu0 %v4050
    %6178 = vmatpush.bf16.msra.mxu0 %v4046
    %6179 = vmatpush.bf16.msra.mxu0 %v4042
    %6180 = vmatpush.bf16.msra.mxu0 %v4038
    %6181 = vmatmul.bf16.gmra.mxu0 %v870
    %v6182 = vpop.f32.mrf.mxu0
    %v6183 = vadd.f32 %v6170, %v6182
    %v6184 = vpop.f32.mrf.mxu0
    %6185 = vdwg.mxu0
    %6186 = vmatpush.bf16.msra.mxu0 %v4098
    %6187 = vmatpush.bf16.msra.mxu0 %v4094
    %6188 = vmatpush.bf16.msra.mxu0 %v4090
    %6189 = vmatpush.bf16.msra.mxu0 %v4086
    %6190 = vmatpush.bf16.msra.mxu0 %v4082
    %6191 = vmatpush.bf16.msra.mxu0 %v4078
    %6192 = vmatpush.bf16.msra.mxu0 %v4074
    %6193 = vmatpush.bf16.msra.mxu0 %v4070
    %6194 = vmatmul.bf16.gmra.mxu0 %v873
    %v6195 = vpop.f32.mrf.mxu0
    %v6196 = vadd.f32 %v6183, %v6195
    %v6197 = vpop.f32.mrf.mxu0
    %6198 = vdwg.mxu0
    %v6199 = vmax.f32 %v5221, 0.0
    %v6200 = vmax.f32 %v5546, 0.0
    %v6201 = vmax.f32 %v5871, 0.0
    %v6202 = vmax.f32 %v6196, 0.0
    %v6203 = vpack.c.bf16 %v6200, %v6199
    %v6204 = vpack.c.bf16 %v6202, %v6201
    %v6205 = vld [vmem:[%s5] sm:$0xf]
    %v6206 = vld [vmem:[%s5 + $0x4] sm:$0xf]
    %v6207 = vld [vmem:[%s5 + $0x8] sm:$0xf]
    %v6208 = vld [vmem:[%s5 + $0xc] sm:$0xf]
    %v6209 = vld [vmem:[%s5 + $0x10] sm:$0xf]
    %v6210 = vld [vmem:[%s5 + $0x14] sm:$0xf]
    %v6211 = vld [vmem:[%s5 + $0x18] sm:$0xf]
    %v6212 = vld [vmem:[%s5 + $0x1c] sm:$0xf]
    %v6213 = vld [vmem:[%s5 + $0x20] sm:$0xf]
    %v6214 = vld [vmem:[%s5 + $0x24] sm:$0xf]
    %v6215 = vld [vmem:[%s5 + $0x28] sm:$0xf]
    %v6216 = vld [vmem:[%s5 + $0x2c] sm:$0xf]
    %v6217 = vld [vmem:[%s5 + $0x30] sm:$0xf]
    %v6218 = vld [vmem:[%s5 + $0x34] sm:$0xf]
    %v6219 = vld [vmem:[%s5 + $0x38] sm:$0xf]
    %v6220 = vld [vmem:[%s5 + $0x3c] sm:$0xf]
    %v6221 = vld [vmem:[%s5 + $0x40] sm:$0xf]
    %v6222 = vld [vmem:[%s5 + $0x44] sm:$0xf]
    %v6223 = vld [vmem:[%s5 + $0x48] sm:$0xf]
    %v6224 = vld [vmem:[%s5 + $0x4c] sm:$0xf]
    %v6225 = vld [vmem:[%s5 + $0x50] sm:$0xf]
    %v6226 = vld [vmem:[%s5 + $0x54] sm:$0xf]
    %v6227 = vld [vmem:[%s5 + $0x58] sm:$0xf]
    %v6228 = vld [vmem:[%s5 + $0x5c] sm:$0xf]
    %v6229 = vld [vmem:[%s5 + $0x60] sm:$0xf]
    %v6230 = vld [vmem:[%s5 + $0x64] sm:$0xf]
    %v6231 = vld [vmem:[%s5 + $0x68] sm:$0xf]
    %v6232 = vld [vmem:[%s5 + $0x6c] sm:$0xf]
    %v6233 = vld [vmem:[%s5 + $0x70] sm:$0xf]
    %v6234 = vld [vmem:[%s5 + $0x74] sm:$0xf]
    %v6235 = vld [vmem:[%s5 + $0x78] sm:$0xf]
    %v6236 = vld [vmem:[%s5 + $0x7c] sm:$0xf]
    %v6237 = vld [vmem:[%s6] sm:$0x1]
    %v6239 = vperm.slane %v6237, 0
    %v6242 = vunpack.c.l.b16 %v6204
    %v6243 = vunpack.c.h.b16 %v6204
    %v6244 = vpack.c.b16 %v6242, %v6242
    %v6245 = vpack.c.b16 %v6243, %v6243
    %v6280 = vunpack.c.l.b16 %v6205
    %v6281 = vunpack.c.l.b16 %v6206
    %v6282 = vunpack.c.l.b16 %v6207
    %v6283 = vunpack.c.l.b16 %v6208
    %v6284 = vunpack.c.l.b16 %v6209
    %v6285 = vunpack.c.l.b16 %v6210
    %v6286 = vunpack.c.l.b16 %v6211
    %v6287 = vunpack.c.l.b16 %v6212
    %v6288 = vunpack.c.l.b16 %v6213
    %v6289 = vunpack.c.l.b16 %v6214
    %v6290 = vunpack.c.l.b16 %v6215
    %v6291 = vunpack.c.l.b16 %v6216
    %v6292 = vunpack.c.l.b16 %v6217
    %v6293 = vunpack.c.l.b16 %v6218
    %v6294 = vunpack.c.l.b16 %v6219
    %v6295 = vunpack.c.l.b16 %v6220
    %v6296 = vunpack.c.l.b16 %v6221
    %v6297 = vunpack.c.l.b16 %v6222
    %v6298 = vunpack.c.l.b16 %v6223
    %v6299 = vunpack.c.l.b16 %v6224
    %v6300 = vunpack.c.l.b16 %v6225
    %v6301 = vunpack.c.l.b16 %v6226
    %v6302 = vunpack.c.l.b16 %v6227
    %v6303 = vunpack.c.l.b16 %v6228
    %v6304 = vunpack.c.l.b16 %v6229
    %v6305 = vunpack.c.l.b16 %v6230
    %v6306 = vunpack.c.l.b16 %v6231
    %v6307 = vunpack.c.l.b16 %v6232
    %v6308 = vunpack.c.l.b16 %v6233
    %v6309 = vunpack.c.l.b16 %v6234
    %v6310 = vunpack.c.l.b16 %v6235
    %v6311 = vunpack.c.l.b16 %v6236
    %v6312 = vpack.c.b16 %v6281, %v6280
    %v6313 = vpack.c.b16 %v6283, %v6282
    %v6314 = vpack.c.b16 %v6285, %v6284
    %v6315 = vpack.c.b16 %v6287, %v6286
    %v6316 = vpack.c.b16 %v6289, %v6288
    %v6317 = vpack.c.b16 %v6291, %v6290
    %v6318 = vpack.c.b16 %v6293, %v6292
    %v6319 = vpack.c.b16 %v6295, %v6294
    %v6320 = vpack.c.b16 %v6297, %v6296
    %v6321 = vpack.c.b16 %v6299, %v6298
    %v6322 = vpack.c.b16 %v6301, %v6300
    %v6323 = vpack.c.b16 %v6303, %v6302
    %v6324 = vpack.c.b16 %v6305, %v6304
    %v6325 = vpack.c.b16 %v6307, %v6306
    %v6326 = vpack.c.b16 %v6309, %v6308
    %v6327 = vpack.c.b16 %v6311, %v6310
    %6344 = vmatpush.bf16.msra.mxu0 %v6319
    %6345 = vmatpush.bf16.msra.mxu0 %v6318
    %6346 = vmatpush.bf16.msra.mxu0 %v6317
    %6347 = vmatpush.bf16.msra.mxu0 %v6316
    %6348 = vmatpush.bf16.msra.mxu0 %v6315
    %6349 = vmatpush.bf16.msra.mxu0 %v6314
    %6350 = vmatpush.bf16.msra.mxu0 %v6313
    %6351 = vmatpush.bf16.msra.mxu0 %v6312
    %6352 = vmatmul.bf16.gmra.mxu0 %v6244
    %v6353 = vpop.f32.mrf.mxu0
    %v6354 = vadd.f32 %v6239, %v6353
    %v6355 = vpop.f32.mrf.mxu0
    %6356 = vdwg.mxu0
    %6357 = vmatpush.bf16.msra.mxu0 %v6327
    %6358 = vmatpush.bf16.msra.mxu0 %v6326
    %6359 = vmatpush.bf16.msra.mxu0 %v6325
    %6360 = vmatpush.bf16.msra.mxu0 %v6324
    %6361 = vmatpush.bf16.msra.mxu0 %v6323
    %6362 = vmatpush.bf16.msra.mxu0 %v6322
    %6363 = vmatpush.bf16.msra.mxu0 %v6321
    %6364 = vmatpush.bf16.msra.mxu0 %v6320
    %6365 = vmatmul.bf16.gmra.mxu0 %v6245
    %v6366 = vpop.f32.mrf.mxu0
    %v6367 = vadd.f32 %v6354, %v6366
    %v6368 = vpop.f32.mrf.mxu0
    %6369 = vdwg.mxu0
    %v6370 = vld [vmem:[%s3] sm:$0xf]
    %v6371 = vld [vmem:[%s3 + $0x4] sm:$0xf]
    %v6372 = vld [vmem:[%s3 + $0x8] sm:$0xf]
    %v6373 = vld [vmem:[%s3 + $0xc] sm:$0xf]
    %v6374 = vld [vmem:[%s3 + $0x10] sm:$0xf]
    %v6375 = vld [vmem:[%s3 + $0x14] sm:$0xf]
    %v6376 = vld [vmem:[%s3 + $0x18] sm:$0xf]
    %v6377 = vld [vmem:[%s3 + $0x1c] sm:$0xf]
    %v6378 = vld [vmem:[%s3 + $0x20] sm:$0xf]
    %v6379 = vld [vmem:[%s3 + $0x24] sm:$0xf]
    %v6380 = vld [vmem:[%s3 + $0x28] sm:$0xf]
    %v6381 = vld [vmem:[%s3 + $0x2c] sm:$0xf]
    %v6382 = vld [vmem:[%s3 + $0x30] sm:$0xf]
    %v6383 = vld [vmem:[%s3 + $0x34] sm:$0xf]
    %v6384 = vld [vmem:[%s3 + $0x38] sm:$0xf]
    %v6385 = vld [vmem:[%s3 + $0x3c] sm:$0xf]
    %v6386 = vld [vmem:[%s3 + $0x40] sm:$0xf]
    %v6387 = vld [vmem:[%s3 + $0x44] sm:$0xf]
    %v6388 = vld [vmem:[%s3 + $0x48] sm:$0xf]
    %v6389 = vld [vmem:[%s3 + $0x4c] sm:$0xf]
    %v6390 = vld [vmem:[%s3 + $0x50] sm:$0xf]
    %v6391 = vld [vmem:[%s3 + $0x54] sm:$0xf]
    %v6392 = vld [vmem:[%s3 + $0x58] sm:$0xf]
    %v6393 = vld [vmem:[%s3 + $0x5c] sm:$0xf]
    %v6394 = vld [vmem:[%s3 + $0x60] sm:$0xf]
    %v6395 = vld [vmem:[%s3 + $0x64] sm:$0xf]
    %v6396 = vld [vmem:[%s3 + $0x68] sm:$0xf]
    %v6397 = vld [vmem:[%s3 + $0x6c] sm:$0xf]
    %v6398 = vld [vmem:[%s3 + $0x70] sm:$0xf]
    %v6399 = vld [vmem:[%s3 + $0x74] sm:$0xf]
    %v6400 = vld [vmem:[%s3 + $0x78] sm:$0xf]
    %v6401 = vld [vmem:[%s3 + $0x7c] sm:$0xf]
    %v6402 = vld [vmem:[%s4] sm:$0x1]
    %v6404 = vperm.slane %v6402, 0
    %v6407 = vunpack.c.l.b16 %v6203
    %v6408 = vunpack.c.h.b16 %v6203
    %v6409 = vpack.c.b16 %v6407, %v6407
    %v6410 = vpack.c.b16 %v6408, %v6408
    %v6445 = vunpack.c.l.b16 %v6370
    %v6446 = vunpack.c.l.b16 %v6371
    %v6447 = vunpack.c.l.b16 %v6372
    %v6448 = vunpack.c.l.b16 %v6373
    %v6449 = vunpack.c.l.b16 %v6374
    %v6450 = vunpack.c.l.b16 %v6375
    %v6451 = vunpack.c.l.b16 %v6376
    %v6452 = vunpack.c.l.b16 %v6377
    %v6453 = vunpack.c.l.b16 %v6378
    %v6454 = vunpack.c.l.b16 %v6379
    %v6455 = vunpack.c.l.b16 %v6380
    %v6456 = vunpack.c.l.b16 %v6381
    %v6457 = vunpack.c.l.b16 %v6382
    %v6458 = vunpack.c.l.b16 %v6383
    %v6459 = vunpack.c.l.b16 %v6384
    %v6460 = vunpack.c.l.b16 %v6385
    %v6461 = vunpack.c.l.b16 %v6386
    %v6462 = vunpack.c.l.b16 %v6387
    %v6463 = vunpack.c.l.b16 %v6388
    %v6464 = vunpack.c.l.b16 %v6389
    %v6465 = vunpack.c.l.b16 %v6390
    %v6466 = vunpack.c.l.b16 %v6391
    %v6467 = vunpack.c.l.b16 %v6392
    %v6468 = vunpack.c.l.b16 %v6393
    %v6469 = vunpack.c.l.b16 %v6394
    %v6470 = vunpack.c.l.b16 %v6395
    %v6471 = vunpack.c.l.b16 %v6396
    %v6472 = vunpack.c.l.b16 %v6397
    %v6473 = vunpack.c.l.b16 %v6398
    %v6474 = vunpack.c.l.b16 %v6399
    %v6475 = vunpack.c.l.b16 %v6400
    %v6476 = vunpack.c.l.b16 %v6401
    %v6477 = vpack.c.b16 %v6446, %v6445
    %v6478 = vpack.c.b16 %v6448, %v6447
    %v6479 = vpack.c.b16 %v6450, %v6449
    %v6480 = vpack.c.b16 %v6452, %v6451
    %v6481 = vpack.c.b16 %v6454, %v6453
    %v6482 = vpack.c.b16 %v6456, %v6455
    %v6483 = vpack.c.b16 %v6458, %v6457
    %v6484 = vpack.c.b16 %v6460, %v6459
    %v6485 = vpack.c.b16 %v6462, %v6461
    %v6486 = vpack.c.b16 %v6464, %v6463
    %v6487 = vpack.c.b16 %v6466, %v6465
    %v6488 = vpack.c.b16 %v6468, %v6467
    %v6489 = vpack.c.b16 %v6470, %v6469
    %v6490 = vpack.c.b16 %v6472, %v6471
    %v6491 = vpack.c.b16 %v6474, %v6473
    %v6492 = vpack.c.b16 %v6476, %v6475
    %6509 = vmatpush.bf16.msra.mxu0 %v6484
    %6510 = vmatpush.bf16.msra.mxu0 %v6483
    %6511 = vmatpush.bf16.msra.mxu0 %v6482
    %6512 = vmatpush.bf16.msra.mxu0 %v6481
    %6513 = vmatpush.bf16.msra.mxu0 %v6480
    %6514 = vmatpush.bf16.msra.mxu0 %v6479
    %6515 = vmatpush.bf16.msra.mxu0 %v6478
    %6516 = vmatpush.bf16.msra.mxu0 %v6477
    %6517 = vmatmul.bf16.gmra.mxu0 %v6409
    %v6518 = vpop.f32.mrf.mxu0
    %v6519 = vadd.f32 %v6404, %v6518
    %v6520 = vpop.f32.mrf.mxu0
    %6521 = vdwg.mxu0
    %6522 = vmatpush.bf16.msra.mxu0 %v6492
    %6523 = vmatpush.bf16.msra.mxu0 %v6491
    %6524 = vmatpush.bf16.msra.mxu0 %v6490
    %6525 = vmatpush.bf16.msra.mxu0 %v6489
    %6526 = vmatpush.bf16.msra.mxu0 %v6488
    %6527 = vmatpush.bf16.msra.mxu0 %v6487
    %6528 = vmatpush.bf16.msra.mxu0 %v6486
    %6529 = vmatpush.bf16.msra.mxu0 %v6485
    %6530 = vmatmul.bf16.gmra.mxu0 %v6410
    %v6531 = vpop.f32.mrf.mxu0
    %v6532 = vadd.f32 %v6519, %v6531
    %v6533 = vpop.f32.mrf.mxu0
    %6534 = vdwg.mxu0
    %s6535 = scalar_lea.vmem %s3, 128
    %v6536 = vld [vmem:[%s6535] sm:$0xf]
    %v6537 = vld [vmem:[%s6535 + $0x4] sm:$0xf]
    %v6538 = vld [vmem:[%s6535 + $0x8] sm:$0xf]
    %v6539 = vld [vmem:[%s6535 + $0xc] sm:$0xf]
    %v6540 = vld [vmem:[%s6535 + $0x10] sm:$0xf]
    %v6541 = vld [vmem:[%s6535 + $0x14] sm:$0xf]
    %v6542 = vld [vmem:[%s6535 + $0x18] sm:$0xf]
    %v6543 = vld [vmem:[%s6535 + $0x1c] sm:$0xf]
    %v6544 = vld [vmem:[%s6535 + $0x20] sm:$0xf]
    %v6545 = vld [vmem:[%s6535 + $0x24] sm:$0xf]
    %v6546 = vld [vmem:[%s6535 + $0x28] sm:$0xf]
    %v6547 = vld [vmem:[%s6535 + $0x2c] sm:$0xf]
    %v6548 = vld [vmem:[%s6535 + $0x30] sm:$0xf]
    %v6549 = vld [vmem:[%s6535 + $0x34] sm:$0xf]
    %v6550 = vld [vmem:[%s6535 + $0x38] sm:$0xf]
    %v6551 = vld [vmem:[%s6535 + $0x3c] sm:$0xf]
    %v6552 = vld [vmem:[%s6535 + $0x40] sm:$0xf]
    %v6553 = vld [vmem:[%s6535 + $0x44] sm:$0xf]
    %v6554 = vld [vmem:[%s6535 + $0x48] sm:$0xf]
    %v6555 = vld [vmem:[%s6535 + $0x4c] sm:$0xf]
    %v6556 = vld [vmem:[%s6535 + $0x50] sm:$0xf]
    %v6557 = vld [vmem:[%s6535 + $0x54] sm:$0xf]
    %v6558 = vld [vmem:[%s6535 + $0x58] sm:$0xf]
    %v6559 = vld [vmem:[%s6535 + $0x5c] sm:$0xf]
    %v6560 = vld [vmem:[%s6535 + $0x60] sm:$0xf]
    %v6561 = vld [vmem:[%s6535 + $0x64] sm:$0xf]
    %v6562 = vld [vmem:[%s6535 + $0x68] sm:$0xf]
    %v6563 = vld [vmem:[%s6535 + $0x6c] sm:$0xf]
    %v6564 = vld [vmem:[%s6535 + $0x70] sm:$0xf]
    %v6565 = vld [vmem:[%s6535 + $0x74] sm:$0xf]
    %v6566 = vld [vmem:[%s6535 + $0x78] sm:$0xf]
    %v6567 = vld [vmem:[%s6535 + $0x7c] sm:$0xf]
    %s6568 = scalar_lea.vmem %s4, 1
    %v6569 = vld [vmem:[%s6568] sm:$0x1]
    %v6571 = vperm.slane %v6569, 0
    %v6605 = vunpack.c.l.b16 %v6536
    %v6606 = vunpack.c.l.b16 %v6537
    %v6607 = vunpack.c.l.b16 %v6538
    %v6608 = vunpack.c.l.b16 %v6539
    %v6609 = vunpack.c.l.b16 %v6540
    %v6610 = vunpack.c.l.b16 %v6541
    %v6611 = vunpack.c.l.b16 %v6542
    %v6612 = vunpack.c.l.b16 %v6543
    %v6613 = vunpack.c.l.b16 %v6544
    %v6614 = vunpack.c.l.b16 %v6545
    %v6615 = vunpack.c.l.b16 %v6546
    %v6616 = vunpack.c.l.b16 %v6547
    %v6617 = vunpack.c.l.b16 %v6548
    %v6618 = vunpack.c.l.b16 %v6549
    %v6619 = vunpack.c.l.b16 %v6550
    %v6620 = vunpack.c.l.b16 %v6551
    %v6621 = vunpack.c.l.b16 %v6552
    %v6622 = vunpack.c.l.b16 %v6553
    %v6623 = vunpack.c.l.b16 %v6554
    %v6624 = vunpack.c.l.b16 %v6555
    %v6625 = vunpack.c.l.b16 %v6556
    %v6626 = vunpack.c.l.b16 %v6557
    %v6627 = vunpack.c.l.b16 %v6558
    %v6628 = vunpack.c.l.b16 %v6559
    %v6629 = vunpack.c.l.b16 %v6560
    %v6630 = vunpack.c.l.b16 %v6561
    %v6631 = vunpack.c.l.b16 %v6562
    %v6632 = vunpack.c.l.b16 %v6563
    %v6633 = vunpack.c.l.b16 %v6564
    %v6634 = vunpack.c.l.b16 %v6565
    %v6635 = vunpack.c.l.b16 %v6566
    %v6636 = vunpack.c.l.b16 %v6567
    %v6637 = vpack.c.b16 %v6606, %v6605
    %v6638 = vpack.c.b16 %v6608, %v6607
    %v6639 = vpack.c.b16 %v6610, %v6609
    %v6640 = vpack.c.b16 %v6612, %v6611
    %v6641 = vpack.c.b16 %v6614, %v6613
    %v6642 = vpack.c.b16 %v6616, %v6615
    %v6643 = vpack.c.b16 %v6618, %v6617
    %v6644 = vpack.c.b16 %v6620, %v6619
    %v6645 = vpack.c.b16 %v6622, %v6621
    %v6646 = vpack.c.b16 %v6624, %v6623
    %v6647 = vpack.c.b16 %v6626, %v6625
    %v6648 = vpack.c.b16 %v6628, %v6627
    %v6649 = vpack.c.b16 %v6630, %v6629
    %v6650 = vpack.c.b16 %v6632, %v6631
    %v6651 = vpack.c.b16 %v6634, %v6633
    %v6652 = vpack.c.b16 %v6636, %v6635
    %6669 = vmatpush.bf16.msra.mxu0 %v6644
    %6670 = vmatpush.bf16.msra.mxu0 %v6643
    %6671 = vmatpush.bf16.msra.mxu0 %v6642
    %6672 = vmatpush.bf16.msra.mxu0 %v6641
    %6673 = vmatpush.bf16.msra.mxu0 %v6640
    %6674 = vmatpush.bf16.msra.mxu0 %v6639
    %6675 = vmatpush.bf16.msra.mxu0 %v6638
    %6676 = vmatpush.bf16.msra.mxu0 %v6637
    %6677 = vmatmul.bf16.gmra.mxu0 %v6409
    %v6678 = vpop.f32.mrf.mxu0
    %v6679 = vadd.f32 %v6571, %v6678
    %v6680 = vpop.f32.mrf.mxu0
    %6681 = vdwg.mxu0
    %6682 = vmatpush.bf16.msra.mxu0 %v6652
    %6683 = vmatpush.bf16.msra.mxu0 %v6651
    %6684 = vmatpush.bf16.msra.mxu0 %v6650
    %6685 = vmatpush.bf16.msra.mxu0 %v6649
    %6686 = vmatpush.bf16.msra.mxu0 %v6648
    %6687 = vmatpush.bf16.msra.mxu0 %v6647
    %6688 = vmatpush.bf16.msra.mxu0 %v6646
    %6689 = vmatpush.bf16.msra.mxu0 %v6645
    %6690 = vmatmul.bf16.gmra.mxu0 %v6410
    %v6691 = vpop.f32.mrf.mxu0
    %v6692 = vadd.f32 %v6679, %v6691
    %v6693 = vpop.f32.mrf.mxu0
    %6694 = vdwg.mxu0
    %s6695 = scalar_lea.vmem %s3, 256
    %v6696 = vld [vmem:[%s6695] sm:$0xf]
    %v6697 = vld [vmem:[%s6695 + $0x4] sm:$0xf]
    %v6698 = vld [vmem:[%s6695 + $0x8] sm:$0xf]
    %v6699 = vld [vmem:[%s6695 + $0xc] sm:$0xf]
    %v6700 = vld [vmem:[%s6695 + $0x10] sm:$0xf]
    %v6701 = vld [vmem:[%s6695 + $0x14] sm:$0xf]
    %v6702 = vld [vmem:[%s6695 + $0x18] sm:$0xf]
    %v6703 = vld [vmem:[%s6695 + $0x1c] sm:$0xf]
    %v6704 = vld [vmem:[%s6695 + $0x20] sm:$0xf]
    %v6705 = vld [vmem:[%s6695 + $0x24] sm:$0xf]
    %v6706 = vld [vmem:[%s6695 + $0x28] sm:$0xf]
    %v6707 = vld [vmem:[%s6695 + $0x2c] sm:$0xf]
    %v6708 = vld [vmem:[%s6695 + $0x30] sm:$0xf]
    %v6709 = vld [vmem:[%s6695 + $0x34] sm:$0xf]
    %v6710 = vld [vmem:[%s6695 + $0x38] sm:$0xf]
    %v6711 = vld [vmem:[%s6695 + $0x3c] sm:$0xf]
    %v6712 = vld [vmem:[%s6695 + $0x40] sm:$0xf]
    %v6713 = vld [vmem:[%s6695 + $0x44] sm:$0xf]
    %v6714 = vld [vmem:[%s6695 + $0x48] sm:$0xf]
    %v6715 = vld [vmem:[%s6695 + $0x4c] sm:$0xf]
    %v6716 = vld [vmem:[%s6695 + $0x50] sm:$0xf]
    %v6717 = vld [vmem:[%s6695 + $0x54] sm:$0xf]
    %v6718 = vld [vmem:[%s6695 + $0x58] sm:$0xf]
    %v6719 = vld [vmem:[%s6695 + $0x5c] sm:$0xf]
    %v6720 = vld [vmem:[%s6695 + $0x60] sm:$0xf]
    %v6721 = vld [vmem:[%s6695 + $0x64] sm:$0xf]
    %v6722 = vld [vmem:[%s6695 + $0x68] sm:$0xf]
    %v6723 = vld [vmem:[%s6695 + $0x6c] sm:$0xf]
    %v6724 = vld [vmem:[%s6695 + $0x70] sm:$0xf]
    %v6725 = vld [vmem:[%s6695 + $0x74] sm:$0xf]
    %v6726 = vld [vmem:[%s6695 + $0x78] sm:$0xf]
    %v6727 = vld [vmem:[%s6695 + $0x7c] sm:$0xf]
    %s6728 = scalar_lea.vmem %s4, 2
    %v6729 = vld [vmem:[%s6728] sm:$0x1]
    %v6731 = vperm.slane %v6729, 0
    %v6765 = vunpack.c.l.b16 %v6696
    %v6766 = vunpack.c.l.b16 %v6697
    %v6767 = vunpack.c.l.b16 %v6698
    %v6768 = vunpack.c.l.b16 %v6699
    %v6769 = vunpack.c.l.b16 %v6700
    %v6770 = vunpack.c.l.b16 %v6701
    %v6771 = vunpack.c.l.b16 %v6702
    %v6772 = vunpack.c.l.b16 %v6703
    %v6773 = vunpack.c.l.b16 %v6704
    %v6774 = vunpack.c.l.b16 %v6705
    %v6775 = vunpack.c.l.b16 %v6706
    %v6776 = vunpack.c.l.b16 %v6707
    %v6777 = vunpack.c.l.b16 %v6708
    %v6778 = vunpack.c.l.b16 %v6709
    %v6779 = vunpack.c.l.b16 %v6710
    %v6780 = vunpack.c.l.b16 %v6711
    %v6781 = vunpack.c.l.b16 %v6712
    %v6782 = vunpack.c.l.b16 %v6713
    %v6783 = vunpack.c.l.b16 %v6714
    %v6784 = vunpack.c.l.b16 %v6715
    %v6785 = vunpack.c.l.b16 %v6716
    %v6786 = vunpack.c.l.b16 %v6717
    %v6787 = vunpack.c.l.b16 %v6718
    %v6788 = vunpack.c.l.b16 %v6719
    %v6789 = vunpack.c.l.b16 %v6720
    %v6790 = vunpack.c.l.b16 %v6721
    %v6791 = vunpack.c.l.b16 %v6722
    %v6792 = vunpack.c.l.b16 %v6723
    %v6793 = vunpack.c.l.b16 %v6724
    %v6794 = vunpack.c.l.b16 %v6725
    %v6795 = vunpack.c.l.b16 %v6726
    %v6796 = vunpack.c.l.b16 %v6727
    %v6797 = vpack.c.b16 %v6766, %v6765
    %v6798 = vpack.c.b16 %v6768, %v6767
    %v6799 = vpack.c.b16 %v6770, %v6769
    %v6800 = vpack.c.b16 %v6772, %v6771
    %v6801 = vpack.c.b16 %v6774, %v6773
    %v6802 = vpack.c.b16 %v6776, %v6775
    %v6803 = vpack.c.b16 %v6778, %v6777
    %v6804 = vpack.c.b16 %v6780, %v6779
    %v6805 = vpack.c.b16 %v6782, %v6781
    %v6806 = vpack.c.b16 %v6784, %v6783
    %v6807 = vpack.c.b16 %v6786, %v6785
    %v6808 = vpack.c.b16 %v6788, %v6787
    %v6809 = vpack.c.b16 %v6790, %v6789
    %v6810 = vpack.c.b16 %v6792, %v6791
    %v6811 = vpack.c.b16 %v6794, %v6793
    %v6812 = vpack.c.b16 %v6796, %v6795
    %6829 = vmatpush.bf16.msra.mxu0 %v6804
    %6830 = vmatpush.bf16.msra.mxu0 %v6803
    %6831 = vmatpush.bf16.msra.mxu0 %v6802
    %6832 = vmatpush.bf16.msra.mxu0 %v6801
    %6833 = vmatpush.bf16.msra.mxu0 %v6800
    %6834 = vmatpush.bf16.msra.mxu0 %v6799
    %6835 = vmatpush.bf16.msra.mxu0 %v6798
    %6836 = vmatpush.bf16.msra.mxu0 %v6797
    %6837 = vmatmul.bf16.gmra.mxu0 %v6409
    %v6838 = vpop.f32.mrf.mxu0
    %v6839 = vadd.f32 %v6731, %v6838
    %v6840 = vpop.f32.mrf.mxu0
    %6841 = vdwg.mxu0
    %6842 = vmatpush.bf16.msra.mxu0 %v6812
    %6843 = vmatpush.bf16.msra.mxu0 %v6811
    %6844 = vmatpush.bf16.msra.mxu0 %v6810
    %6845 = vmatpush.bf16.msra.mxu0 %v6809
    %6846 = vmatpush.bf16.msra.mxu0 %v6808
    %6847 = vmatpush.bf16.msra.mxu0 %v6807
    %6848 = vmatpush.bf16.msra.mxu0 %v6806
    %6849 = vmatpush.bf16.msra.mxu0 %v6805
    %6850 = vmatmul.bf16.gmra.mxu0 %v6410
    %v6851 = vpop.f32.mrf.mxu0
    %v6852 = vadd.f32 %v6839, %v6851
    %v6853 = vpop.f32.mrf.mxu0
    %6854 = vdwg.mxu0
    %s6855 = scalar_lea.vmem %s3, 384
    %v6856 = vld [vmem:[%s6855] sm:$0xf]
    %v6857 = vld [vmem:[%s6855 + $0x4] sm:$0xf]
    %v6858 = vld [vmem:[%s6855 + $0x8] sm:$0xf]
    %v6859 = vld [vmem:[%s6855 + $0xc] sm:$0xf]
    %v6860 = vld [vmem:[%s6855 + $0x10] sm:$0xf]
    %v6861 = vld [vmem:[%s6855 + $0x14] sm:$0xf]
    %v6862 = vld [vmem:[%s6855 + $0x18] sm:$0xf]
    %v6863 = vld [vmem:[%s6855 + $0x1c] sm:$0xf]
    %v6864 = vld [vmem:[%s6855 + $0x20] sm:$0xf]
    %v6865 = vld [vmem:[%s6855 + $0x24] sm:$0xf]
    %v6866 = vld [vmem:[%s6855 + $0x28] sm:$0xf]
    %v6867 = vld [vmem:[%s6855 + $0x2c] sm:$0xf]
    %v6868 = vld [vmem:[%s6855 + $0x30] sm:$0xf]
    %v6869 = vld [vmem:[%s6855 + $0x34] sm:$0xf]
    %v6870 = vld [vmem:[%s6855 + $0x38] sm:$0xf]
    %v6871 = vld [vmem:[%s6855 + $0x3c] sm:$0xf]
    %v6872 = vld [vmem:[%s6855 + $0x40] sm:$0xf]
    %v6873 = vld [vmem:[%s6855 + $0x44] sm:$0xf]
    %v6874 = vld [vmem:[%s6855 + $0x48] sm:$0xf]
    %v6875 = vld [vmem:[%s6855 + $0x4c] sm:$0xf]
    %v6876 = vld [vmem:[%s6855 + $0x50] sm:$0xf]
    %v6877 = vld [vmem:[%s6855 + $0x54] sm:$0xf]
    %v6878 = vld [vmem:[%s6855 + $0x58] sm:$0xf]
    %v6879 = vld [vmem:[%s6855 + $0x5c] sm:$0xf]
    %v6880 = vld [vmem:[%s6855 + $0x60] sm:$0xf]
    %v6881 = vld [vmem:[%s6855 + $0x64] sm:$0xf]
    %v6882 = vld [vmem:[%s6855 + $0x68] sm:$0xf]
    %v6883 = vld [vmem:[%s6855 + $0x6c] sm:$0xf]
    %v6884 = vld [vmem:[%s6855 + $0x70] sm:$0xf]
    %v6885 = vld [vmem:[%s6855 + $0x74] sm:$0xf]
    %v6886 = vld [vmem:[%s6855 + $0x78] sm:$0xf]
    %v6887 = vld [vmem:[%s6855 + $0x7c] sm:$0xf]
    %s6888 = scalar_lea.vmem %s4, 3
    %v6889 = vld [vmem:[%s6888] sm:$0x1]
    %v6891 = vperm.slane %v6889, 0
    %v6925 = vunpack.c.l.b16 %v6856
    %v6926 = vunpack.c.l.b16 %v6857
    %v6927 = vunpack.c.l.b16 %v6858
    %v6928 = vunpack.c.l.b16 %v6859
    %v6929 = vunpack.c.l.b16 %v6860
    %v6930 = vunpack.c.l.b16 %v6861
    %v6931 = vunpack.c.l.b16 %v6862
    %v6932 = vunpack.c.l.b16 %v6863
    %v6933 = vunpack.c.l.b16 %v6864
    %v6934 = vunpack.c.l.b16 %v6865
    %v6935 = vunpack.c.l.b16 %v6866
    %v6936 = vunpack.c.l.b16 %v6867
    %v6937 = vunpack.c.l.b16 %v6868
    %v6938 = vunpack.c.l.b16 %v6869
    %v6939 = vunpack.c.l.b16 %v6870
    %v6940 = vunpack.c.l.b16 %v6871
    %v6941 = vunpack.c.l.b16 %v6872
    %v6942 = vunpack.c.l.b16 %v6873
    %v6943 = vunpack.c.l.b16 %v6874
    %v6944 = vunpack.c.l.b16 %v6875
    %v6945 = vunpack.c.l.b16 %v6876
    %v6946 = vunpack.c.l.b16 %v6877
    %v6947 = vunpack.c.l.b16 %v6878
    %v6948 = vunpack.c.l.b16 %v6879
    %v6949 = vunpack.c.l.b16 %v6880
    %v6950 = vunpack.c.l.b16 %v6881
    %v6951 = vunpack.c.l.b16 %v6882
    %v6952 = vunpack.c.l.b16 %v6883
    %v6953 = vunpack.c.l.b16 %v6884
    %v6954 = vunpack.c.l.b16 %v6885
    %v6955 = vunpack.c.l.b16 %v6886
    %v6956 = vunpack.c.l.b16 %v6887
    %v6957 = vpack.c.b16 %v6926, %v6925
    %v6958 = vpack.c.b16 %v6928, %v6927
    %v6959 = vpack.c.b16 %v6930, %v6929
    %v6960 = vpack.c.b16 %v6932, %v6931
    %v6961 = vpack.c.b16 %v6934, %v6933
    %v6962 = vpack.c.b16 %v6936, %v6935
    %v6963 = vpack.c.b16 %v6938, %v6937
    %v6964 = vpack.c.b16 %v6940, %v6939
    %v6965 = vpack.c.b16 %v6942, %v6941
    %v6966 = vpack.c.b16 %v6944, %v6943
    %v6967 = vpack.c.b16 %v6946, %v6945
    %v6968 = vpack.c.b16 %v6948, %v6947
    %v6969 = vpack.c.b16 %v6950, %v6949
    %v6970 = vpack.c.b16 %v6952, %v6951
    %v6971 = vpack.c.b16 %v6954, %v6953
    %v6972 = vpack.c.b16 %v6956, %v6955
    %6989 = vmatpush.bf16.msra.mxu0 %v6964
    %6990 = vmatpush.bf16.msra.mxu0 %v6963
    %6991 = vmatpush.bf16.msra.mxu0 %v6962
    %6992 = vmatpush.bf16.msra.mxu0 %v6961
    %6993 = vmatpush.bf16.msra.mxu0 %v6960
    %6994 = vmatpush.bf16.msra.mxu0 %v6959
    %6995 = vmatpush.bf16.msra.mxu0 %v6958
    %6996 = vmatpush.bf16.msra.mxu0 %v6957
    %6997 = vmatmul.bf16.gmra.mxu0 %v6409
    %v6998 = vpop.f32.mrf.mxu0
    %v6999 = vadd.f32 %v6891, %v6998
    %v7000 = vpop.f32.mrf.mxu0
    %7001 = vdwg.mxu0
    %7002 = vmatpush.bf16.msra.mxu0 %v6972
    %7003 = vmatpush.bf16.msra.mxu0 %v6971
    %7004 = vmatpush.bf16.msra.mxu0 %v6970
    %7005 = vmatpush.bf16.msra.mxu0 %v6969
    %7006 = vmatpush.bf16.msra.mxu0 %v6968
    %7007 = vmatpush.bf16.msra.mxu0 %v6967
    %7008 = vmatpush.bf16.msra.mxu0 %v6966
    %7009 = vmatpush.bf16.msra.mxu0 %v6965
    %7010 = vmatmul.bf16.gmra.mxu0 %v6410
    %v7011 = vpop.f32.mrf.mxu0
    %v7012 = vadd.f32 %v6999, %v7011
    %v7013 = vpop.f32.mrf.mxu0
    %7014 = vdwg.mxu0
    %s7015 = scalar_lea.vmem %s3, 512
    %v7016 = vld [vmem:[%s7015] sm:$0xf]
    %v7017 = vld [vmem:[%s7015 + $0x4] sm:$0xf]
    %v7018 = vld [vmem:[%s7015 + $0x8] sm:$0xf]
    %v7019 = vld [vmem:[%s7015 + $0xc] sm:$0xf]
    %v7020 = vld [vmem:[%s7015 + $0x10] sm:$0xf]
    %v7021 = vld [vmem:[%s7015 + $0x14] sm:$0xf]
    %v7022 = vld [vmem:[%s7015 + $0x18] sm:$0xf]
    %v7023 = vld [vmem:[%s7015 + $0x1c] sm:$0xf]
    %v7024 = vld [vmem:[%s7015 + $0x20] sm:$0xf]
    %v7025 = vld [vmem:[%s7015 + $0x24] sm:$0xf]
    %v7026 = vld [vmem:[%s7015 + $0x28] sm:$0xf]
    %v7027 = vld [vmem:[%s7015 + $0x2c] sm:$0xf]
    %v7028 = vld [vmem:[%s7015 + $0x30] sm:$0xf]
    %v7029 = vld [vmem:[%s7015 + $0x34] sm:$0xf]
    %v7030 = vld [vmem:[%s7015 + $0x38] sm:$0xf]
    %v7031 = vld [vmem:[%s7015 + $0x3c] sm:$0xf]
    %v7032 = vld [vmem:[%s7015 + $0x40] sm:$0xf]
    %v7033 = vld [vmem:[%s7015 + $0x44] sm:$0xf]
    %v7034 = vld [vmem:[%s7015 + $0x48] sm:$0xf]
    %v7035 = vld [vmem:[%s7015 + $0x4c] sm:$0xf]
    %v7036 = vld [vmem:[%s7015 + $0x50] sm:$0xf]
    %v7037 = vld [vmem:[%s7015 + $0x54] sm:$0xf]
    %v7038 = vld [vmem:[%s7015 + $0x58] sm:$0xf]
    %v7039 = vld [vmem:[%s7015 + $0x5c] sm:$0xf]
    %v7040 = vld [vmem:[%s7015 + $0x60] sm:$0xf]
    %v7041 = vld [vmem:[%s7015 + $0x64] sm:$0xf]
    %v7042 = vld [vmem:[%s7015 + $0x68] sm:$0xf]
    %v7043 = vld [vmem:[%s7015 + $0x6c] sm:$0xf]
    %v7044 = vld [vmem:[%s7015 + $0x70] sm:$0xf]
    %v7045 = vld [vmem:[%s7015 + $0x74] sm:$0xf]
    %v7046 = vld [vmem:[%s7015 + $0x78] sm:$0xf]
    %v7047 = vld [vmem:[%s7015 + $0x7c] sm:$0xf]
    %s7048 = scalar_lea.vmem %s4, 4
    %v7049 = vld [vmem:[%s7048] sm:$0x1]
    %v7051 = vperm.slane %v7049, 0
    %v7085 = vunpack.c.l.b16 %v7016
    %v7086 = vunpack.c.l.b16 %v7017
    %v7087 = vunpack.c.l.b16 %v7018
    %v7088 = vunpack.c.l.b16 %v7019
    %v7089 = vunpack.c.l.b16 %v7020
    %v7090 = vunpack.c.l.b16 %v7021
    %v7091 = vunpack.c.l.b16 %v7022
    %v7092 = vunpack.c.l.b16 %v7023
    %v7093 = vunpack.c.l.b16 %v7024
    %v7094 = vunpack.c.l.b16 %v7025
    %v7095 = vunpack.c.l.b16 %v7026
    %v7096 = vunpack.c.l.b16 %v7027
    %v7097 = vunpack.c.l.b16 %v7028
    %v7098 = vunpack.c.l.b16 %v7029
    %v7099 = vunpack.c.l.b16 %v7030
    %v7100 = vunpack.c.l.b16 %v7031
    %v7101 = vunpack.c.l.b16 %v7032
    %v7102 = vunpack.c.l.b16 %v7033
    %v7103 = vunpack.c.l.b16 %v7034
    %v7104 = vunpack.c.l.b16 %v7035
    %v7105 = vunpack.c.l.b16 %v7036
    %v7106 = vunpack.c.l.b16 %v7037
    %v7107 = vunpack.c.l.b16 %v7038
    %v7108 = vunpack.c.l.b16 %v7039
    %v7109 = vunpack.c.l.b16 %v7040
    %v7110 = vunpack.c.l.b16 %v7041
    %v7111 = vunpack.c.l.b16 %v7042
    %v7112 = vunpack.c.l.b16 %v7043
    %v7113 = vunpack.c.l.b16 %v7044
    %v7114 = vunpack.c.l.b16 %v7045
    %v7115 = vunpack.c.l.b16 %v7046
    %v7116 = vunpack.c.l.b16 %v7047
    %v7117 = vpack.c.b16 %v7086, %v7085
    %v7118 = vpack.c.b16 %v7088, %v7087
    %v7119 = vpack.c.b16 %v7090, %v7089
    %v7120 = vpack.c.b16 %v7092, %v7091
    %v7121 = vpack.c.b16 %v7094, %v7093
    %v7122 = vpack.c.b16 %v7096, %v7095
    %v7123 = vpack.c.b16 %v7098, %v7097
    %v7124 = vpack.c.b16 %v7100, %v7099
    %v7125 = vpack.c.b16 %v7102, %v7101
    %v7126 = vpack.c.b16 %v7104, %v7103
    %v7127 = vpack.c.b16 %v7106, %v7105
    %v7128 = vpack.c.b16 %v7108, %v7107
    %v7129 = vpack.c.b16 %v7110, %v7109
    %v7130 = vpack.c.b16 %v7112, %v7111
    %v7131 = vpack.c.b16 %v7114, %v7113
    %v7132 = vpack.c.b16 %v7116, %v7115
    %7149 = vmatpush.bf16.msra.mxu0 %v7124
    %7150 = vmatpush.bf16.msra.mxu0 %v7123
    %7151 = vmatpush.bf16.msra.mxu0 %v7122
    %7152 = vmatpush.bf16.msra.mxu0 %v7121
    %7153 = vmatpush.bf16.msra.mxu0 %v7120
    %7154 = vmatpush.bf16.msra.mxu0 %v7119
    %7155 = vmatpush.bf16.msra.mxu0 %v7118
    %7156 = vmatpush.bf16.msra.mxu0 %v7117
    %7157 = vmatmul.bf16.gmra.mxu0 %v6409
    %v7158 = vpop.f32.mrf.mxu0
    %v7159 = vadd.f32 %v7051, %v7158
    %v7160 = vpop.f32.mrf.mxu0
    %7161 = vdwg.mxu0
    %7162 = vmatpush.bf16.msra.mxu0 %v7132
    %7163 = vmatpush.bf16.msra.mxu0 %v7131
    %7164 = vmatpush.bf16.msra.mxu0 %v7130
    %7165 = vmatpush.bf16.msra.mxu0 %v7129
    %7166 = vmatpush.bf16.msra.mxu0 %v7128
    %7167 = vmatpush.bf16.msra.mxu0 %v7127
    %7168 = vmatpush.bf16.msra.mxu0 %v7126
    %7169 = vmatpush.bf16.msra.mxu0 %v7125
    %7170 = vmatmul.bf16.gmra.mxu0 %v6410
    %v7171 = vpop.f32.mrf.mxu0
    %v7172 = vadd.f32 %v7159, %v7171
    %v7173 = vpop.f32.mrf.mxu0
    %7174 = vdwg.mxu0
    %s7175 = scalar_lea.vmem %s3, 640
    %v7176 = vld [vmem:[%s7175] sm:$0xf]
    %v7177 = vld [vmem:[%s7175 + $0x4] sm:$0xf]
    %v7178 = vld [vmem:[%s7175 + $0x8] sm:$0xf]
    %v7179 = vld [vmem:[%s7175 + $0xc] sm:$0xf]
    %v7180 = vld [vmem:[%s7175 + $0x10] sm:$0xf]
    %v7181 = vld [vmem:[%s7175 + $0x14] sm:$0xf]
    %v7182 = vld [vmem:[%s7175 + $0x18] sm:$0xf]
    %v7183 = vld [vmem:[%s7175 + $0x1c] sm:$0xf]
    %v7184 = vld [vmem:[%s7175 + $0x20] sm:$0xf]
    %v7185 = vld [vmem:[%s7175 + $0x24] sm:$0xf]
    %v7186 = vld [vmem:[%s7175 + $0x28] sm:$0xf]
    %v7187 = vld [vmem:[%s7175 + $0x2c] sm:$0xf]
    %v7188 = vld [vmem:[%s7175 + $0x30] sm:$0xf]
    %v7189 = vld [vmem:[%s7175 + $0x34] sm:$0xf]
    %v7190 = vld [vmem:[%s7175 + $0x38] sm:$0xf]
    %v7191 = vld [vmem:[%s7175 + $0x3c] sm:$0xf]
    %v7192 = vld [vmem:[%s7175 + $0x40] sm:$0xf]
    %v7193 = vld [vmem:[%s7175 + $0x44] sm:$0xf]
    %v7194 = vld [vmem:[%s7175 + $0x48] sm:$0xf]
    %v7195 = vld [vmem:[%s7175 + $0x4c] sm:$0xf]
    %v7196 = vld [vmem:[%s7175 + $0x50] sm:$0xf]
    %v7197 = vld [vmem:[%s7175 + $0x54] sm:$0xf]
    %v7198 = vld [vmem:[%s7175 + $0x58] sm:$0xf]
    %v7199 = vld [vmem:[%s7175 + $0x5c] sm:$0xf]
    %v7200 = vld [vmem:[%s7175 + $0x60] sm:$0xf]
    %v7201 = vld [vmem:[%s7175 + $0x64] sm:$0xf]
    %v7202 = vld [vmem:[%s7175 + $0x68] sm:$0xf]
    %v7203 = vld [vmem:[%s7175 + $0x6c] sm:$0xf]
    %v7204 = vld [vmem:[%s7175 + $0x70] sm:$0xf]
    %v7205 = vld [vmem:[%s7175 + $0x74] sm:$0xf]
    %v7206 = vld [vmem:[%s7175 + $0x78] sm:$0xf]
    %v7207 = vld [vmem:[%s7175 + $0x7c] sm:$0xf]
    %s7208 = scalar_lea.vmem %s4, 5
    %v7209 = vld [vmem:[%s7208] sm:$0x1]
    %v7211 = vperm.slane %v7209, 0
    %v7245 = vunpack.c.l.b16 %v7176
    %v7246 = vunpack.c.l.b16 %v7177
    %v7247 = vunpack.c.l.b16 %v7178
    %v7248 = vunpack.c.l.b16 %v7179
    %v7249 = vunpack.c.l.b16 %v7180
    %v7250 = vunpack.c.l.b16 %v7181
    %v7251 = vunpack.c.l.b16 %v7182
    %v7252 = vunpack.c.l.b16 %v7183
    %v7253 = vunpack.c.l.b16 %v7184
    %v7254 = vunpack.c.l.b16 %v7185
    %v7255 = vunpack.c.l.b16 %v7186
    %v7256 = vunpack.c.l.b16 %v7187
    %v7257 = vunpack.c.l.b16 %v7188
    %v7258 = vunpack.c.l.b16 %v7189
    %v7259 = vunpack.c.l.b16 %v7190
    %v7260 = vunpack.c.l.b16 %v7191
    %v7261 = vunpack.c.l.b16 %v7192
    %v7262 = vunpack.c.l.b16 %v7193
    %v7263 = vunpack.c.l.b16 %v7194
    %v7264 = vunpack.c.l.b16 %v7195
    %v7265 = vunpack.c.l.b16 %v7196
    %v7266 = vunpack.c.l.b16 %v7197
    %v7267 = vunpack.c.l.b16 %v7198
    %v7268 = vunpack.c.l.b16 %v7199
    %v7269 = vunpack.c.l.b16 %v7200
    %v7270 = vunpack.c.l.b16 %v7201
    %v7271 = vunpack.c.l.b16 %v7202
    %v7272 = vunpack.c.l.b16 %v7203
    %v7273 = vunpack.c.l.b16 %v7204
    %v7274 = vunpack.c.l.b16 %v7205
    %v7275 = vunpack.c.l.b16 %v7206
    %v7276 = vunpack.c.l.b16 %v7207
    %v7277 = vpack.c.b16 %v7246, %v7245
    %v7278 = vpack.c.b16 %v7248, %v7247
    %v7279 = vpack.c.b16 %v7250, %v7249
    %v7280 = vpack.c.b16 %v7252, %v7251
    %v7281 = vpack.c.b16 %v7254, %v7253
    %v7282 = vpack.c.b16 %v7256, %v7255
    %v7283 = vpack.c.b16 %v7258, %v7257
    %v7284 = vpack.c.b16 %v7260, %v7259
    %v7285 = vpack.c.b16 %v7262, %v7261
    %v7286 = vpack.c.b16 %v7264, %v7263
    %v7287 = vpack.c.b16 %v7266, %v7265
    %v7288 = vpack.c.b16 %v7268, %v7267
    %v7289 = vpack.c.b16 %v7270, %v7269
    %v7290 = vpack.c.b16 %v7272, %v7271
    %v7291 = vpack.c.b16 %v7274, %v7273
    %v7292 = vpack.c.b16 %v7276, %v7275
    %7309 = vmatpush.bf16.msra.mxu0 %v7284
    %7310 = vmatpush.bf16.msra.mxu0 %v7283
    %7311 = vmatpush.bf16.msra.mxu0 %v7282
    %7312 = vmatpush.bf16.msra.mxu0 %v7281
    %7313 = vmatpush.bf16.msra.mxu0 %v7280
    %7314 = vmatpush.bf16.msra.mxu0 %v7279
    %7315 = vmatpush.bf16.msra.mxu0 %v7278
    %7316 = vmatpush.bf16.msra.mxu0 %v7277
    %7317 = vmatmul.bf16.gmra.mxu0 %v6409
    %v7318 = vpop.f32.mrf.mxu0
    %v7319 = vadd.f32 %v7211, %v7318
    %v7320 = vpop.f32.mrf.mxu0
    %7321 = vdwg.mxu0
    %7322 = vmatpush.bf16.msra.mxu0 %v7292
    %7323 = vmatpush.bf16.msra.mxu0 %v7291
    %7324 = vmatpush.bf16.msra.mxu0 %v7290
    %7325 = vmatpush.bf16.msra.mxu0 %v7289
    %7326 = vmatpush.bf16.msra.mxu0 %v7288
    %7327 = vmatpush.bf16.msra.mxu0 %v7287
    %7328 = vmatpush.bf16.msra.mxu0 %v7286
    %7329 = vmatpush.bf16.msra.mxu0 %v7285
    %7330 = vmatmul.bf16.gmra.mxu0 %v6410
    %v7331 = vpop.f32.mrf.mxu0
    %v7332 = vadd.f32 %v7319, %v7331
    %v7333 = vpop.f32.mrf.mxu0
    %7334 = vdwg.mxu0
    %v7335 = vadd.f32 %v6532, %v6692
    %v7336 = vadd.f32 %v7335, %v6852
    %v7337 = vadd.f32 %v7336, %v7012
    %v7338 = vadd.f32 %v7337, %v7172
    %v7339 = vadd.f32 %v7338, %v7332
    %v7340 = vmul.f32 %v7339, 0.16666667
    %v7341 = vadd.f32 %v6367, %v6532
    %v7342 = vsub.f32 %v7341, %v7340
    %v7343 = vadd.f32 %v6367, %v6692
    %v7344 = vsub.f32 %v7343, %v7340
    %v7345 = vadd.f32 %v6367, %v6852
    %v7346 = vsub.f32 %v7345, %v7340
    %v7347 = vadd.f32 %v6367, %v7012
    %v7348 = vsub.f32 %v7347, %v7340
    %v7349 = vadd.f32 %v6367, %v7172
    %v7350 = vsub.f32 %v7349, %v7340
    %v7351 = vadd.f32 %v6367, %v7332
    %v7352 = vsub.f32 %v7351, %v7340
    %vm7353 = vcmask 410624
    %v7354 = vsel %vm7353, %v7342, -inf
    %7355 = vmax.xlane.f32.xlu0 %v7354
    %v7356 = vpop.xlane.xlu0 %7355
    %v7357 = vsub.f32 %v7342, %v7356
    %v7358 = vmul.f32 %v7357, 1.442695
    %v7359 = vpow.pop %v7358
    %v7360 = vsel %vm7353, %v7359, 0.0
    %7361 = vadd.xlane.f32.xlu0 %v7360
    %v7362 = vpop.xlane.xlu0 %7361
    %v7363 = vlog2.pop %v7362
    %v7364 = vmul.f32 %v7363, 0.6931472
    %v7365 = vadd.f32 %v7356, %v7364
    %v7366 = vsub.f32 %v7342, %v7365
    %7367 = vst.msk [vmem:[#allocation2] sm:$0x3] %vm7353, %v7366
    %v7368 = vsel %vm7353, %v7344, -inf
    %7369 = vmax.xlane.f32.xlu0 %v7368
    %v7370 = vpop.xlane.xlu0 %7369
    %v7371 = vsub.f32 %v7344, %v7370
    %v7372 = vmul.f32 %v7371, 1.442695
    %v7373 = vpow.pop %v7372
    %v7374 = vsel %vm7353, %v7373, 0.0
    %7375 = vadd.xlane.f32.xlu0 %v7374
    %v7376 = vpop.xlane.xlu0 %7375
    %v7377 = vlog2.pop %v7376
    %v7378 = vmul.f32 %v7377, 0.6931472
    %v7379 = vadd.f32 %v7370, %v7378
    %v7380 = vsub.f32 %v7344, %v7379
    %s7381 = scalar_lea.vmem [#allocation2], 2
    %7382 = vst.msk [vmem:[%s7381] sm:$0x3] %vm7353, %v7380
    %v7383 = vsel %vm7353, %v7346, -inf
    %7384 = vmax.xlane.f32.xlu0 %v7383
    %v7385 = vpop.xlane.xlu0 %7384
    %v7386 = vsub.f32 %v7346, %v7385
    %v7387 = vmul.f32 %v7386, 1.442695
    %v7388 = vpow.pop %v7387
    %v7389 = vsel %vm7353, %v7388, 0.0
    %7390 = vadd.xlane.f32.xlu0 %v7389
    %v7391 = vpop.xlane.xlu0 %7390
    %v7392 = vlog2.pop %v7391
    %v7393 = vmul.f32 %v7392, 0.6931472
    %v7394 = vadd.f32 %v7385, %v7393
    %v7395 = vsub.f32 %v7346, %v7394
    %s7396 = scalar_lea.vmem [#allocation2], 4
    %7397 = vst.msk [vmem:[%s7396] sm:$0x3] %vm7353, %v7395
    %v7398 = vsel %vm7353, %v7348, -inf
    %7399 = vmax.xlane.f32.xlu0 %v7398
    %v7400 = vpop.xlane.xlu0 %7399
    %v7401 = vsub.f32 %v7348, %v7400
    %v7402 = vmul.f32 %v7401, 1.442695
    %v7403 = vpow.pop %v7402
    %v7404 = vsel %vm7353, %v7403, 0.0
    %7405 = vadd.xlane.f32.xlu0 %v7404
    %v7406 = vpop.xlane.xlu0 %7405
    %v7407 = vlog2.pop %v7406
    %v7408 = vmul.f32 %v7407, 0.6931472
    %v7409 = vadd.f32 %v7400, %v7408
    %v7410 = vsub.f32 %v7348, %v7409
    %s7411 = scalar_lea.vmem [#allocation2], 6
    %7412 = vst.msk [vmem:[%s7411] sm:$0x3] %vm7353, %v7410
    %v7413 = vsel %vm7353, %v7350, -inf
    %7414 = vmax.xlane.f32.xlu0 %v7413
    %v7415 = vpop.xlane.xlu0 %7414
    %v7416 = vsub.f32 %v7350, %v7415
    %v7417 = vmul.f32 %v7416, 1.442695
    %v7418 = vpow.pop %v7417
    %v7419 = vsel %vm7353, %v7418, 0.0
    %7420 = vadd.xlane.f32.xlu0 %v7419
    %v7421 = vpop.xlane.xlu0 %7420
    %v7422 = vlog2.pop %v7421
    %v7423 = vmul.f32 %v7422, 0.6931472
    %v7424 = vadd.f32 %v7415, %v7423
    %v7425 = vsub.f32 %v7350, %v7424
    %s7426 = scalar_lea.vmem [#allocation2], 8
    %7427 = vst.msk [vmem:[%s7426] sm:$0x3] %vm7353, %v7425
    %v7428 = vsel %vm7353, %v7352, -inf
    %7429 = vmax.xlane.f32.xlu0 %v7428
    %v7430 = vpop.xlane.xlu0 %7429
    %v7431 = vsub.f32 %v7352, %v7430
    %v7432 = vmul.f32 %v7431, 1.442695
    %v7433 = vpow.pop %v7432
    %v7434 = vsel %vm7353, %v7433, 0.0
    %7435 = vadd.xlane.f32.xlu0 %v7434
    %v7436 = vpop.xlane.xlu0 %7435
    %v7437 = vlog2.pop %v7436
    %v7438 = vmul.f32 %v7437, 0.6931472
    %v7439 = vadd.f32 %v7430, %v7438
    %v7440 = vsub.f32 %v7352, %v7439
    %s7441 = scalar_lea.vmem [#allocation2], 10
    %7442 = vst.msk [vmem:[%s7441] sm:$0x3] %vm7353, %v7440
    // Predicated region
    $region30: #{network_forward.7} parent=1 // pred_check
      _
    $region31: #{network_forward.7} parent=1 // pred_check_branch
      %7444 = sbr.rel (0) target = $region33
    $region32: #{network_forward.7} parent=1 // pred_region
      %7446 = vsyncadd [#allocation3], 0
      %s7447 = sshll.u32 [#allocation2], 4
      %s7448 = int_to_ptr.vmem [resolvable:$true] %s7447
      %s7449 = sshll.u32 %s7, 4
      %s7450 = int_to_ptr.hbm [resolvable:$true] %s7449
      %7455 = dma.vmem_to_hbm [thread:$0]  %s7448, 192, %s7450, [#allocation3], 32, 32, 2
    $region33: #{network_forward.7} parent=1 // pred_fallthru
      _
    // Predicated region
    $region34: #{network_forward.7} parent=1 // pred_check
      _
    $region35: #{network_forward.7} parent=1 // pred_check_branch
      %7457 = sbr.rel (0) target = $region37
    $region36: #{network_forward.7} parent=1 // pred_region
      %7459 = dma.done [#allocation3], 192
    $region37: #{network_forward.7} parent=1 // pred_fallthru
      _
    %7460 = vsyncpa [#allocation3], 1

</llo_original>
